<compile_context>
chip_gen: v5e
topology: v5e:2x2
jax: 0.10.0
libtpu: 0.0.40
codegen_flags: <defaults>
</compile_context>

<pallas_src>
import functools

import jax
import jax.numpy as jnp
from jax.experimental import pallas as pl
from jax.experimental.pallas import tpu as pltpu


def _round_up(x, m):
    return ((x + m - 1) // m) * m


# ----------------------------------------------------------------------------
# In-kernel exact GELU (erf-based, like PyTorch F.gelu default)
# ----------------------------------------------------------------------------
_SQRT_HALF = 0.7071067811865476


def _erf(x):
    # Abramowitz & Stegun 7.1.26 polynomial approximation, |err| < 1.5e-7.
    a1, a2, a3, a4, a5 = (0.254829592, -0.284496736, 1.421413741,
                          -1.453152027, 1.061405429)
    p = 0.3275911
    s = jnp.where(x < 0.0, -1.0, 1.0)
    z = x * s                                       # |x|
    t = 1.0 / (1.0 + p * z)
    poly = ((((a5 * t + a4) * t + a3) * t + a2) * t + a1) * t
    return s * (1.0 - poly * jnp.exp(-z * z))


def _gelu(x):
    return 0.5 * x * (1.0 + _erf(x * _SQRT_HALF))


# ----------------------------------------------------------------------------
# Fused MLP kernel
# ----------------------------------------------------------------------------
def _mlp_kernel(x_ref, w1_ref, b1_ref, w2_ref, b2_ref, w3_ref, b3_ref,
                w4_ref, b4_ref, o_ref, acc_ref):
    k = pl.program_id(0)

    @pl.when(k == 0)
    def _():
        acc_ref[...] = jnp.zeros_like(acc_ref)

    # dense1 partial product: bf16 operands on the MXU, f32 accumulation.
    acc_ref[...] += jnp.dot(x_ref[...], w1_ref[...],
                            preferred_element_type=jnp.float32)

    @pl.when(k == pl.num_programs(0) - 1)
    def _():
        # h1 = gelu(dense1(x))
        h1 = _gelu(acc_ref[...] + b1_ref[...])                      # (Mp, H) f32
        # a = gelu(linears[0](h1))
        a = _gelu(jnp.dot(h1.astype(jnp.bfloat16), w2_ref[...],
                          preferred_element_type=jnp.float32) + b2_ref[...])
        # h3 = gelu(linears[1](a)) + h1   (residual)
        h3 = _gelu(jnp.dot(a.astype(jnp.bfloat16), w3_ref[...],
                           preferred_element_type=jnp.float32) + b3_ref[...]) + h1
        # logits = dense3(h3)   (N padded to 128 lanes; sliced in the wrapper)
        out = jnp.dot(h3.astype(jnp.bfloat16), w4_ref[...],
                      preferred_element_type=jnp.float32) + b4_ref[...]
        o_ref[...] = out.astype(o_ref.dtype)


def mlp_forward(params, x, *, num_classes):
    """Fused MLPModel forward.  x: (B, ...) -> (B, num_classes)."""
    B = x.shape[0]
    xf = x.reshape(B, -1).astype(jnp.bfloat16)       # flatten(start_dim=1), bf16 MXU operand
    K = xf.shape[1]

    Kp, H = params["w1"].shape                       # K padded at init time
    Np = params["w4"].shape[1]                       # classes padded to 128 lanes

    # Pad batch rows to a bf16-friendly sublane multiple; slice off afterwards.
    Mp = max(_round_up(B, 16), 16)
    xf = jnp.pad(xf, ((0, Mp - B), (0, Kp - K)))

    # K tile for dense1: whole K if it fits comfortably, else 4096-wide chunks
    # (Kp is padded to a multiple of 4096 in that case).
    tk = Kp if Kp <= 4096 else 4096
    grid = (Kp // tk,)

    out = pl.pallas_call(
        _mlp_kernel,
        out_shape=jax.ShapeDtypeStruct((Mp, Np), jnp.float32),
        grid=grid,
        in_specs=[
            pl.BlockSpec((Mp, tk), lambda k: (0, k)),   # x tile (streamed over K)
            pl.BlockSpec((tk, H), lambda k: (k, 0)),    # w1 tile (streamed over K)
            pl.BlockSpec((1, H), lambda k: (0, 0)),     # b1 (resident)
            pl.BlockSpec((H, H), lambda k: (0, 0)),     # w2 (resident)
            pl.BlockSpec((1, H), lambda k: (0, 0)),     # b2
            pl.BlockSpec((H, H), lambda k: (0, 0)),     # w3
            pl.BlockSpec((1, H), lambda k: (0, 0)),     # b3
            pl.BlockSpec((H, Np), lambda k: (0, 0)),    # w4 (lane-padded)
            pl.BlockSpec((1, Np), lambda k: (0, 0)),    # b4
        ],
        out_specs=pl.BlockSpec((Mp, Np), lambda k: (0, 0)),
        scratch_shapes=[pltpu.VMEM((Mp, H), jnp.float32)],
        compiler_params=pltpu.CompilerParams(
            # Single reduction axis over K; nothing worth sharding across TCs
            # at this batch size.
            dimension_semantics=("arbitrary",),
        ),
    )(xf, params["w1"], params["b1"], params["w2"], params["b2"],
      params["w3"], params["b3"], params["w4"], params["b4"])

    return out[:B, :num_classes]


# ----------------------------------------------------------------------------
# Parameter prep (PyTorch-like uniform fan-in init, already in matmul layout)
# ----------------------------------------------------------------------------
def init_params(seed, num_input, num_classes, hidden_dim=512):
    K, H = num_input, hidden_dim
    Kp = _round_up(K, 256) if K <= 4096 else _round_up(K, 4096)
    Np = _round_up(num_classes, 128)

    keys = iter(jax.random.split(jax.random.PRNGKey(seed), 8))

    def _linear(fin, fout):
        bound = 1.0 / fin ** 0.5
        w = jax.random.uniform(next(keys), (fin, fout), jnp.float32, -bound, bound)
        b = jax.random.uniform(next(keys), (fout,), jnp.float32, -bound, bound)
        return w, b

    w1, b1 = _linear(K, H)              # dense1
    w2, b2 = _linear(H, H)              # linears[0]
    w3, b3 = _linear(H, H)              # linears[1]
    w4, b4 = _linear(H, num_classes)    # dense3

    # Weights pre-transposed to (in, out) and cast to bf16 once here (not in
    # the jitted hot path); biases stay f32 for the in-kernel epilogue.
    return {
        "w1": jnp.pad(w1, ((0, Kp - K), (0, 0))).astype(jnp.bfloat16),
        "b1": b1.reshape(1, H),
        "w2": w2.astype(jnp.bfloat16),
        "b2": b2.reshape(1, H),
        "w3": w3.astype(jnp.bfloat16),
        "b3": b3.reshape(1, H),
        "w4": jnp.pad(w4, ((0, 0), (0, Np - num_classes))).astype(jnp.bfloat16),
        "b4": jnp.pad(b4, (0, Np - num_classes)).reshape(1, Np),
    }


# ----------------------------------------------------------------------------
# Main
# ----------------------------------------------------------------------------
if __name__ == "__main__":
    NUM_CLASSES = 2
    HIDDEN = 512
    B, S, F = 2, 8, 256                 # x flattens to (2, 2048): small stand-in
    NUM_INPUT = S * F                   # for the module's 8 * 18432 default

    params = init_params(seed=0, num_input=NUM_INPUT,
                         num_classes=NUM_CLASSES, hidden_dim=HIDDEN)

    x = jax.random.normal(jax.random.PRNGKey(0), (B, S, F), jnp.float32)

    fwd = jax.jit(functools.partial(mlp_forward, num_classes=NUM_CLASSES))
    out = fwd(params, x)
    out = jax.block_until_ready(out)
    assert out.shape == (B, NUM_CLASSES)
    print("KERNEL_OK")
</pallas_src>

<mosaic_0001>
module attributes {stable_mosaic.version = 11 : i64} {
  func.func @_mlp_kernel(%arg0: i32, %arg1: memref<16x2048xbf16, #tpu.memory_space<vmem>>, %arg2: memref<2048x512xbf16, #tpu.memory_space<vmem>>, %arg3: memref<1x512xf32, #tpu.memory_space<vmem>>, %arg4: memref<512x512xbf16, #tpu.memory_space<vmem>>, %arg5: memref<1x512xf32, #tpu.memory_space<vmem>>, %arg6: memref<512x512xbf16, #tpu.memory_space<vmem>>, %arg7: memref<1x512xf32, #tpu.memory_space<vmem>>, %arg8: memref<512x128xbf16, #tpu.memory_space<vmem>>, %arg9: memref<1x128xf32, #tpu.memory_space<vmem>>, %arg10: memref<16x128xf32, #tpu.memory_space<vmem>>, %arg11: memref<16x512xf32, #tpu.memory_space<vmem>>) attributes {dimension_semantics = [#tpu.dimension_semantics<arbitrary>], iteration_bounds = array<i64: 1>, scalar_prefetch = 0 : i64, scratch_operands = 1 : i64, tpu.core_type = #tpu.core_type<tc>, window_params = [{transform_indices = @transform_0, window_bounds = array<i64: 16, 2048>}, {transform_indices = @transform_1, window_bounds = array<i64: 2048, 512>}, {pipeline_mode = #tpu.pipeline_mode<synchronous>, transform_indices = @transform_2, window_bounds = array<i64: 1, 512>}, {pipeline_mode = #tpu.pipeline_mode<synchronous>, transform_indices = @transform_3, window_bounds = array<i64: 512, 512>}, {pipeline_mode = #tpu.pipeline_mode<synchronous>, transform_indices = @transform_4, window_bounds = array<i64: 1, 512>}, {pipeline_mode = #tpu.pipeline_mode<synchronous>, transform_indices = @transform_5, window_bounds = array<i64: 512, 512>}, {pipeline_mode = #tpu.pipeline_mode<synchronous>, transform_indices = @transform_6, window_bounds = array<i64: 1, 512>}, {pipeline_mode = #tpu.pipeline_mode<synchronous>, transform_indices = @transform_7, window_bounds = array<i64: 512, 128>}, {pipeline_mode = #tpu.pipeline_mode<synchronous>, transform_indices = @transform_8, window_bounds = array<i64: 1, 128>}, {pipeline_mode = #tpu.pipeline_mode<synchronous>, transform_indices = @transform_9, window_bounds = array<i64: 16, 128>}]} {
    %c0_i32 = arith.constant 0 : i32
    %0 = arith.cmpi eq, %arg0, %c0_i32 : i32
    %1 = arith.extui %0 : i1 to i32
    %c0_i32_0 = arith.constant 0 : i32
    %2 = arith.cmpi ne, %1, %c0_i32_0 : i32
    scf.if %2 {
      %cst_10 = arith.constant 0.000000e+00 : f32
      %12 = vector.broadcast %cst_10 : f32 to vector<16x512xf32>
      %c0_11 = arith.constant 0 : index
      %c0_12 = arith.constant 0 : index
      %13 = vector.load %arg11[%c0_11, %c0_12] : memref<16x512xf32, #tpu.memory_space<vmem>>, vector<16x512xf32>
      tpu.vector_store %arg11[%c0_11, %c0_12], %12 {strides = array<i32>} : memref<16x512xf32, #tpu.memory_space<vmem>>, vector<16x512xf32>,
    } else {
    }
    %c0 = arith.constant 0 : index
    %c0_1 = arith.constant 0 : index
    %3 = vector.load %arg11[%c0, %c0_1] : memref<16x512xf32, #tpu.memory_space<vmem>>, vector<16x512xf32>
    %c0_2 = arith.constant 0 : index
    %c0_3 = arith.constant 0 : index
    %4 = vector.load %arg1[%c0_2, %c0_3] : memref<16x2048xbf16, #tpu.memory_space<vmem>>, vector<16x2048xbf16>
    %c0_4 = arith.constant 0 : index
    %c0_5 = arith.constant 0 : index
    %5 = vector.load %arg2[%c0_4, %c0_5] : memref<2048x512xbf16, #tpu.memory_space<vmem>>, vector<2048x512xbf16>
    %cst = arith.constant dense<0.000000e+00> : vector<16x512xf32>
    %6 = tpu.matmul %4, %5, %cst {dimension_numbers = #tpu.dot_dimension_numbers<[1], [0], [0], [1], [0, 0, 1, 1], [], []>} : vector<16x2048xbf16>, vector<2048x512xbf16>, vector<16x512xf32> -> vector<16x512xf32>
    %7 = arith.addf %3, %6 : vector<16x512xf32>
    %c0_6 = arith.constant 0 : index
    %c0_7 = arith.constant 0 : index
    %8 = vector.load %arg11[%c0_6, %c0_7] : memref<16x512xf32, #tpu.memory_space<vmem>>, vector<16x512xf32>
    tpu.vector_store %arg11[%c0_6, %c0_7], %7 {strides = array<i32>} : memref<16x512xf32, #tpu.memory_space<vmem>>, vector<16x512xf32>,
    %c0_i32_8 = arith.constant 0 : i32
    %9 = arith.cmpi eq, %arg0, %c0_i32_8 : i32
    %10 = arith.extui %9 : i1 to i32
    %c0_i32_9 = arith.constant 0 : i32
    %11 = arith.cmpi ne, %10, %c0_i32_9 : i32
    scf.if %11 {
      %c0_10 = arith.constant 0 : index
      %c0_11 = arith.constant 0 : index
      %12 = vector.load %arg11[%c0_10, %c0_11] : memref<16x512xf32, #tpu.memory_space<vmem>>, vector<16x512xf32>
      %c0_12 = arith.constant 0 : index
      %c0_13 = arith.constant 0 : index
      %13 = vector.load %arg3[%c0_12, %c0_13] : memref<1x512xf32, #tpu.memory_space<vmem>>, vector<1x512xf32>
      %14 = vector.broadcast %13 : vector<1x512xf32> to vector<16x512xf32>
      %15 = arith.addf %12, %14 : vector<16x512xf32>
      %cst_14 = arith.constant 5.000000e-01 : f32
      %16 = vector.broadcast %cst_14 : f32 to vector<16x512xf32>
      %17 = arith.mulf %16, %15 : vector<16x512xf32>
      %cst_15 = arith.constant 0.707106769 : f32
      %18 = vector.broadcast %cst_15 : f32 to vector<16x512xf32>
      %19 = arith.mulf %15, %18 : vector<16x512xf32>
      %cst_16 = arith.constant 0.000000e+00 : f32
      %20 = vector.broadcast %cst_16 : f32 to vector<16x512xf32>
      %21 = arith.cmpf olt, %19, %20 : vector<16x512xf32>
      %cst_17 = arith.constant -1.000000e+00 : f32
      %cst_18 = arith.constant 1.000000e+00 : f32
      %22 = vector.broadcast %cst_17 : f32 to vector<16x512xf32>
      %23 = vector.broadcast %cst_18 : f32 to vector<16x512xf32>
      %24 = arith.select %21, %22, %23 : vector<16x512xi1>, vector<16x512xf32>
      %25 = arith.mulf %19, %24 : vector<16x512xf32>
      %cst_19 = arith.constant 0.327591091 : f32
      %26 = vector.broadcast %cst_19 : f32 to vector<16x512xf32>
      %27 = arith.mulf %26, %25 : vector<16x512xf32>
      %cst_20 = arith.constant 1.000000e+00 : f32
      %28 = vector.broadcast %cst_20 : f32 to vector<16x512xf32>
      %29 = arith.addf %28, %27 : vector<16x512xf32>
      %cst_21 = arith.constant 1.000000e+00 : f32
      %30 = vector.broadcast %cst_21 : f32 to vector<16x512xf32>
      %31 = arith.divf %30, %29 : vector<16x512xf32>
      %cst_22 = arith.constant 1.06140542 : f32
      %32 = vector.broadcast %cst_22 : f32 to vector<16x512xf32>
      %33 = arith.mulf %32, %31 : vector<16x512xf32>
      %cst_23 = arith.constant -1.45315206 : f32
      %34 = vector.broadcast %cst_23 : f32 to vector<16x512xf32>
      %35 = arith.addf %33, %34 : vector<16x512xf32>
      %36 = arith.mulf %35, %31 : vector<16x512xf32>
      %cst_24 = arith.constant 1.42141378 : f32
      %37 = vector.broadcast %cst_24 : f32 to vector<16x512xf32>
      %38 = arith.addf %36, %37 : vector<16x512xf32>
      %39 = arith.mulf %38, %31 : vector<16x512xf32>
      %cst_25 = arith.constant -0.284496725 : f32
      %40 = vector.broadcast %cst_25 : f32 to vector<16x512xf32>
      %41 = arith.addf %39, %40 : vector<16x512xf32>
      %42 = arith.mulf %41, %31 : vector<16x512xf32>
      %cst_26 = arith.constant 0.254829586 : f32
      %43 = vector.broadcast %cst_26 : f32 to vector<16x512xf32>
      %44 = arith.addf %42, %43 : vector<16x512xf32>
      %45 = arith.mulf %44, %31 : vector<16x512xf32>
      %cst_27 = arith.constant 0.000000e+00 : f32
      %46 = vector.broadcast %cst_27 : f32 to vector<16x512xf32>
      %47 = arith.subf %46, %25 : vector<16x512xf32>
      %48 = arith.mulf %47, %25 : vector<16x512xf32>
      %49 = math.exp %48 : vector<16x512xf32>
      %50 = arith.mulf %45, %49 : vector<16x512xf32>
      %cst_28 = arith.constant 1.000000e+00 : f32
      %51 = vector.broadcast %cst_28 : f32 to vector<16x512xf32>
      %52 = arith.subf %51, %50 : vector<16x512xf32>
      %53 = arith.mulf %24, %52 : vector<16x512xf32>
      %cst_29 = arith.constant 1.000000e+00 : f32
      %54 = vector.broadcast %cst_29 : f32 to vector<16x512xf32>
      %55 = arith.addf %54, %53 : vector<16x512xf32>
      %56 = arith.mulf %17, %55 : vector<16x512xf32>
      %57 = arith.truncf %56 : vector<16x512xf32> to vector<16x512xbf16>
      %c0_30 = arith.constant 0 : index
      %c0_31 = arith.constant 0 : index
      %58 = vector.load %arg4[%c0_30, %c0_31] : memref<512x512xbf16, #tpu.memory_space<vmem>>, vector<512x512xbf16>
      %cst_32 = arith.constant dense<0.000000e+00> : vector<16x512xf32>
      %59 = tpu.matmul %57, %58, %cst_32 {dimension_numbers = #tpu.dot_dimension_numbers<[1], [0], [0], [1], [0, 0, 1, 1], [], []>} : vector<16x512xbf16>, vector<512x512xbf16>, vector<16x512xf32> -> vector<16x512xf32>
      %c0_33 = arith.constant 0 : index
      %c0_34 = arith.constant 0 : index
      %60 = vector.load %arg5[%c0_33, %c0_34] : memref<1x512xf32, #tpu.memory_space<vmem>>, vector<1x512xf32>
      %61 = vector.broadcast %60 : vector<1x512xf32> to vector<16x512xf32>
      %62 = arith.addf %59, %61 : vector<16x512xf32>
      %cst_35 = arith.constant 5.000000e-01 : f32
      %63 = vector.broadcast %cst_35 : f32 to vector<16x512xf32>
      %64 = arith.mulf %63, %62 : vector<16x512xf32>
      %cst_36 = arith.constant 0.707106769 : f32
      %65 = vector.broadcast %cst_36 : f32 to vector<16x512xf32>
      %66 = arith.mulf %62, %65 : vector<16x512xf32>
      %cst_37 = arith.constant 0.000000e+00 : f32
      %67 = vector.broadcast %cst_37 : f32 to vector<16x512xf32>
      %68 = arith.cmpf olt, %66, %67 : vector<16x512xf32>
      %cst_38 = arith.constant -1.000000e+00 : f32
      %cst_39 = arith.constant 1.000000e+00 : f32
      %69 = vector.broadcast %cst_38 : f32 to vector<16x512xf32>
      %70 = vector.broadcast %cst_39 : f32 to vector<16x512xf32>
      %71 = arith.select %68, %69, %70 : vector<16x512xi1>, vector<16x512xf32>
      %72 = arith.mulf %66, %71 : vector<16x512xf32>
      %cst_40 = arith.constant 0.327591091 : f32
      %73 = vector.broadcast %cst_40 : f32 to vector<16x512xf32>
      %74 = arith.mulf %73, %72 : vector<16x512xf32>
      %cst_41 = arith.constant 1.000000e+00 : f32
      %75 = vector.broadcast %cst_41 : f32 to vector<16x512xf32>
      %76 = arith.addf %75, %74 : vector<16x512xf32>
      %cst_42 = arith.constant 1.000000e+00 : f32
      %77 = vector.broadcast %cst_42 : f32 to vector<16x512xf32>
      %78 = arith.divf %77, %76 : vector<16x512xf32>
      %cst_43 = arith.constant 1.06140542 : f32
      %79 = vector.broadcast %cst_43 : f32 to vector<16x512xf32>
      %80 = arith.mulf %79, %78 : vector<16x512xf32>
      %cst_44 = arith.constant -1.45315206 : f32
      %81 = vector.broadcast %cst_44 : f32 to vector<16x512xf32>
      %82 = arith.addf %80, %81 : vector<16x512xf32>
      %83 = arith.mulf %82, %78 : vector<16x512xf32>
      %cst_45 = arith.constant 1.42141378 : f32
      %84 = vector.broadcast %cst_45 : f32 to vector<16x512xf32>
      %85 = arith.addf %83, %84 : vector<16x512xf32>
      %86 = arith.mulf %85, %78 : vector<16x512xf32>
      %cst_46 = arith.constant -0.284496725 : f32
      %87 = vector.broadcast %cst_46 : f32 to vector<16x512xf32>
      %88 = arith.addf %86, %87 : vector<16x512xf32>
      %89 = arith.mulf %88, %78 : vector<16x512xf32>
      %cst_47 = arith.constant 0.254829586 : f32
      %90 = vector.broadcast %cst_47 : f32 to vector<16x512xf32>
      %91 = arith.addf %89, %90 : vector<16x512xf32>
      %92 = arith.mulf %91, %78 : vector<16x512xf32>
      %cst_48 = arith.constant 0.000000e+00 : f32
      %93 = vector.broadcast %cst_48 : f32 to vector<16x512xf32>
      %94 = arith.subf %93, %72 : vector<16x512xf32>
      %95 = arith.mulf %94, %72 : vector<16x512xf32>
      %96 = math.exp %95 : vector<16x512xf32>
      %97 = arith.mulf %92, %96 : vector<16x512xf32>
      %cst_49 = arith.constant 1.000000e+00 : f32
      %98 = vector.broadcast %cst_49 : f32 to vector<16x512xf32>
      %99 = arith.subf %98, %97 : vector<16x512xf32>
      %100 = arith.mulf %71, %99 : vector<16x512xf32>
      %cst_50 = arith.constant 1.000000e+00 : f32
      %101 = vector.broadcast %cst_50 : f32 to vector<16x512xf32>
      %102 = arith.addf %101, %100 : vector<16x512xf32>
      %103 = arith.mulf %64, %102 : vector<16x512xf32>
      %104 = arith.truncf %103 : vector<16x512xf32> to vector<16x512xbf16>
      %c0_51 = arith.constant 0 : index
      %c0_52 = arith.constant 0 : index
      %105 = vector.load %arg6[%c0_51, %c0_52] : memref<512x512xbf16, #tpu.memory_space<vmem>>, vector<512x512xbf16>
      %cst_53 = arith.constant dense<0.000000e+00> : vector<16x512xf32>
      %106 = tpu.matmul %104, %105, %cst_53 {dimension_numbers = #tpu.dot_dimension_numbers<[1], [0], [0], [1], [0, 0, 1, 1], [], []>} : vector<16x512xbf16>, vector<512x512xbf16>, vector<16x512xf32> -> vector<16x512xf32>
      %c0_54 = arith.constant 0 : index
      %c0_55 = arith.constant 0 : index
      %107 = vector.load %arg7[%c0_54, %c0_55] : memref<1x512xf32, #tpu.memory_space<vmem>>, vector<1x512xf32>
      %108 = vector.broadcast %107 : vector<1x512xf32> to vector<16x512xf32>
      %109 = arith.addf %106, %108 : vector<16x512xf32>
      %cst_56 = arith.constant 5.000000e-01 : f32
      %110 = vector.broadcast %cst_56 : f32 to vector<16x512xf32>
      %111 = arith.mulf %110, %109 : vector<16x512xf32>
      %cst_57 = arith.constant 0.707106769 : f32
      %112 = vector.broadcast %cst_57 : f32 to vector<16x512xf32>
      %113 = arith.mulf %109, %112 : vector<16x512xf32>
      %cst_58 = arith.constant 0.000000e+00 : f32
      %114 = vector.broadcast %cst_58 : f32 to vector<16x512xf32>
      %115 = arith.cmpf olt, %113, %114 : vector<16x512xf32>
      %cst_59 = arith.constant -1.000000e+00 : f32
      %cst_60 = arith.constant 1.000000e+00 : f32
      %116 = vector.broadcast %cst_59 : f32 to vector<16x512xf32>
      %117 = vector.broadcast %cst_60 : f32 to vector<16x512xf32>
      %118 = arith.select %115, %116, %117 : vector<16x512xi1>, vector<16x512xf32>
      %119 = arith.mulf %113, %118 : vector<16x512xf32>
      %cst_61 = arith.constant 0.327591091 : f32
      %120 = vector.broadcast %cst_61 : f32 to vector<16x512xf32>
      %121 = arith.mulf %120, %119 : vector<16x512xf32>
      %cst_62 = arith.constant 1.000000e+00 : f32
      %122 = vector.broadcast %cst_62 : f32 to vector<16x512xf32>
      %123 = arith.addf %122, %121 : vector<16x512xf32>
      %cst_63 = arith.constant 1.000000e+00 : f32
      %124 = vector.broadcast %cst_63 : f32 to vector<16x512xf32>
      %125 = arith.divf %124, %123 : vector<16x512xf32>
      %cst_64 = arith.constant 1.06140542 : f32
      %126 = vector.broadcast %cst_64 : f32 to vector<16x512xf32>
      %127 = arith.mulf %126, %125 : vector<16x512xf32>
      %cst_65 = arith.constant -1.45315206 : f32
      %128 = vector.broadcast %cst_65 : f32 to vector<16x512xf32>
      %129 = arith.addf %127, %128 : vector<16x512xf32>
      %130 = arith.mulf %129, %125 : vector<16x512xf32>
      %cst_66 = arith.constant 1.42141378 : f32
      %131 = vector.broadcast %cst_66 : f32 to vector<16x512xf32>
      %132 = arith.addf %130, %131 : vector<16x512xf32>
      %133 = arith.mulf %132, %125 : vector<16x512xf32>
      %cst_67 = arith.constant -0.284496725 : f32
      %134 = vector.broadcast %cst_67 : f32 to vector<16x512xf32>
      %135 = arith.addf %133, %134 : vector<16x512xf32>
      %136 = arith.mulf %135, %125 : vector<16x512xf32>
      %cst_68 = arith.constant 0.254829586 : f32
      %137 = vector.broadcast %cst_68 : f32 to vector<16x512xf32>
      %138 = arith.addf %136, %137 : vector<16x512xf32>
      %139 = arith.mulf %138, %125 : vector<16x512xf32>
      %cst_69 = arith.constant 0.000000e+00 : f32
      %140 = vector.broadcast %cst_69 : f32 to vector<16x512xf32>
      %141 = arith.subf %140, %119 : vector<16x512xf32>
      %142 = arith.mulf %141, %119 : vector<16x512xf32>
      %143 = math.exp %142 : vector<16x512xf32>
      %144 = arith.mulf %139, %143 : vector<16x512xf32>
      %cst_70 = arith.constant 1.000000e+00 : f32
      %145 = vector.broadcast %cst_70 : f32 to vector<16x512xf32>
      %146 = arith.subf %145, %144 : vector<16x512xf32>
      %147 = arith.mulf %118, %146 : vector<16x512xf32>
      %cst_71 = arith.constant 1.000000e+00 : f32
      %148 = vector.broadcast %cst_71 : f32 to vector<16x512xf32>
      %149 = arith.addf %148, %147 : vector<16x512xf32>
      %150 = arith.mulf %111, %149 : vector<16x512xf32>
      %151 = arith.addf %150, %56 : vector<16x512xf32>
      %152 = arith.truncf %151 : vector<16x512xf32> to vector<16x512xbf16>
      %c0_72 = arith.constant 0 : index
      %c0_73 = arith.constant 0 : index
      %153 = vector.load %arg8[%c0_72, %c0_73] : memref<512x128xbf16, #tpu.memory_space<vmem>>, vector<512x128xbf16>
      %cst_74 = arith.constant dense<0.000000e+00> : vector<16x128xf32>
      %154 = tpu.matmul %152, %153, %cst_74 {dimension_numbers = #tpu.dot_dimension_numbers<[1], [0], [0], [1], [0, 0, 1, 1], [], []>} : vector<16x512xbf16>, vector<512x128xbf16>, vector<16x128xf32> -> vector<16x128xf32>
      %c0_75 = arith.constant 0 : index
      %c0_76 = arith.constant 0 : index
      %155 = vector.load %arg9[%c0_75, %c0_76] : memref<1x128xf32, #tpu.memory_space<vmem>>, vector<1x128xf32>
      %156 = vector.broadcast %155 : vector<1x128xf32> to vector<16x128xf32>
      %157 = arith.addf %154, %156 : vector<16x128xf32>
      %c0_77 = arith.constant 0 : index
      %c0_78 = arith.constant 0 : index
      %158 = vector.load %arg10[%c0_77, %c0_78] : memref<16x128xf32, #tpu.memory_space<vmem>>, vector<16x128xf32>
      tpu.vector_store %arg10[%c0_77, %c0_78], %157 {strides = array<i32>} : memref<16x128xf32, #tpu.memory_space<vmem>>, vector<16x128xf32>,
    } else {
    }
    return
  }
  func.func @transform_0(%arg0: i32) -> (i32, i32) {
    %c0_i32 = arith.constant 0 : i32
    %c0_i32_0 = arith.constant 0 : i32
    return %c0_i32, %arg0 : i32, i32
  }
  func.func @transform_1(%arg0: i32) -> (i32, i32) {
    %c0_i32 = arith.constant 0 : i32
    %c0_i32_0 = arith.constant 0 : i32
    return %arg0, %c0_i32 : i32, i32
  }
  func.func @transform_2(%arg0: i32) -> (i32, i32) {
    %c0_i32 = arith.constant 0 : i32
    %c0_i32_0 = arith.constant 0 : i32
    %c0_i32_1 = arith.constant 0 : i32
    return %c0_i32, %c0_i32_0 : i32, i32
  }
  func.func @transform_3(%arg0: i32) -> (i32, i32) {
    %c0_i32 = arith.constant 0 : i32
    %c0_i32_0 = arith.constant 0 : i32
    %c0_i32_1 = arith.constant 0 : i32
    return %c0_i32, %c0_i32_0 : i32, i32
  }
  func.func @transform_4(%arg0: i32) -> (i32, i32) {
    %c0_i32 = arith.constant 0 : i32
    %c0_i32_0 = arith.constant 0 : i32
    %c0_i32_1 = arith.constant 0 : i32
    return %c0_i32, %c0_i32_0 : i32, i32
  }
  func.func @transform_5(%arg0: i32) -> (i32, i32) {
    %c0_i32 = arith.constant 0 : i32
    %c0_i32_0 = arith.constant 0 : i32
    %c0_i32_1 = arith.constant 0 : i32
    return %c0_i32, %c0_i32_0 : i32, i32
  }
  func.func @transform_6(%arg0: i32) -> (i32, i32) {
    %c0_i32 = arith.constant 0 : i32
    %c0_i32_0 = arith.constant 0 : i32
    %c0_i32_1 = arith.constant 0 : i32
    return %c0_i32, %c0_i32_0 : i32, i32
  }
  func.func @transform_7(%arg0: i32) -> (i32, i32) {
    %c0_i32 = arith.constant 0 : i32
    %c0_i32_0 = arith.constant 0 : i32
    %c0_i32_1 = arith.constant 0 : i32
    return %c0_i32, %c0_i32_0 : i32, i32
  }
  func.func @transform_8(%arg0: i32) -> (i32, i32) {
    %c0_i32 = arith.constant 0 : i32
    %c0_i32_0 = arith.constant 0 : i32
    %c0_i32_1 = arith.constant 0 : i32
    return %c0_i32, %c0_i32_0 : i32, i32
  }
  func.func @transform_9(%arg0: i32) -> (i32, i32) {
    %c0_i32 = arith.constant 0 : i32
    %c0_i32_0 = arith.constant 0 : i32
    %c0_i32_1 = arith.constant 0 : i32
    return %c0_i32, %c0_i32_0 : i32, i32
  }
}

</mosaic_0001>

<llo_original>
// kernel: mlp_forward.1
$region0: #{mlp_forward.1}
  #allocation0 [shape = 'u32[]', space=smem, size = 0x4, offset = 0x4, fixed_abs, tag = 'smem constant byte address 0x4 - core index']
  #allocation1 [shape = 'u32[72,128]{1,0:T(1,128)}', space=vmem, size = 0x9000, scoped, tag = 'internal scratch']
  #allocation2 [shape = 'f32[16,512]{1,0:T(8,128)}', space=vmem, size = 0x8000, scoped, tag = 'scratch operand']
  %s0 = inlined_call_operand.vmem [shape: bf16[16,2048], index: 0, kind: input, shape index: {}]
  %s1 = inlined_call_operand.hbm [shape: bf16[2048,512], index: 1, kind: input, shape index: {}]
  %s2 = inlined_call_operand.hbm [shape: f32[1,512], index: 2, kind: input, shape index: {}]
  %s3 = inlined_call_operand.hbm [shape: bf16[512,512], index: 3, kind: input, shape index: {}]
  %s4 = inlined_call_operand.hbm [shape: f32[1,512], index: 4, kind: input, shape index: {}]
  %s5 = inlined_call_operand.hbm [shape: bf16[512,512], index: 5, kind: input, shape index: {}]
  %s6 = inlined_call_operand.hbm [shape: f32[1,512], index: 6, kind: input, shape index: {}]
  %s7 = inlined_call_operand.hbm [shape: bf16[512,128], index: 7, kind: input, shape index: {}]
  %s8 = inlined_call_operand.hbm [shape: f32[1,128], index: 8, kind: input, shape index: {}]
  %s9 = inlined_call_operand.vmem [shape: f32[16,128], index: 9, kind: output, shape index: {}]
  %s10 = sld [smem:[#allocation0]]
  $region86: #{mlp_forward.1} parent=0
    _
  %s12 = ssub.s32 1, %s10
  %s13 = scalar_select 0, %s12, %s10
  $region1: #{mlp_forward.1} parent=0
    #allocation3 [shape = 'u8[2097152]{0}', space=vmem, size = 0x200000, scoped, tag = 'input window, operand 1, single buffered']
    #allocation4 [shape = 's32[1]{0}', space=sflag, size = 0x4, scoped, tag = 'scoped memory for mlp_forward.1']
    #allocation5 [shape = 'u8[2048]{0}', space=vmem, size = 0x800, scoped, tag = 'input window, operand 2, single buffered']
    #allocation6 [shape = 's32[1]{0}', space=sflag, size = 0x4, scoped, tag = 'scoped memory for mlp_forward.1']
    #allocation7 [shape = 'u8[524288]{0}', space=vmem, size = 0x80000, scoped, tag = 'input window, operand 3, single buffered']
    #allocation8 [shape = 'u8[2048]{0}', space=vmem, size = 0x800, scoped, tag = 'input window, operand 4, single buffered']
    #allocation9 [shape = 's32[1]{0}', space=sflag, size = 0x4, scoped, tag = 'scoped memory for mlp_forward.1']
    #allocation10 [shape = 'u8[524288]{0}', space=vmem, size = 0x80000, scoped, tag = 'input window, operand 5, single buffered']
    #allocation11 [shape = 'u8[2048]{0}', space=vmem, size = 0x800, scoped, tag = 'input window, operand 6, single buffered']
    #allocation12 [shape = 's32[1]{0}', space=sflag, size = 0x4, scoped, tag = 'scoped memory for mlp_forward.1']
    #allocation13 [shape = 'u8[131072]{0}', space=vmem, size = 0x20000, scoped, tag = 'input window, operand 7, single buffered']
    #allocation14 [shape = 'u8[512]{0}', space=vmem, size = 0x400, scoped, tag = 'input window, operand 8, single buffered']
    #allocation15 [shape = 's32[1]{0}', space=sflag, size = 0x4, scoped, tag = 'scoped memory for mlp_forward.1']
    %14 = vsyncpa [#allocation4], 0
    %15 = vsyncpa [#allocation6], 0
    %16 = vsyncpa [#allocation9], 0
    %17 = vsyncpa [#allocation12], 0
    %18 = vsyncpa [#allocation15], 0
    // Predicated region
    $region2: #{mlp_forward.1} parent=1 // pred_check
      _
    $region3: #{mlp_forward.1} parent=1 // pred_check_branch
      %20 = sbr.rel (0) target = $region5
    $region4: #{mlp_forward.1} parent=1 // pred_region
      _
    $region5: #{mlp_forward.1} parent=1 // pred_fallthru
      _
    // Predicated region
    $region6: #{mlp_forward.1} parent=1 // pred_check
      _
    $region7: #{mlp_forward.1} parent=1 // pred_check_branch
      %22 = sbr.rel (0) target = $region9
    $region8: #{mlp_forward.1} parent=1 // pred_region
      %24 = vsyncadd [#allocation4], 0
      %s25 = sshll.u32 %s1, 4
      %s26 = int_to_ptr.hbm [resolvable:$true] %s25
      %s27 = sshll.u32 [#allocation3], 4
      %s28 = int_to_ptr.vmem [resolvable:$true] %s27
      %33 = dma.hbm_to_vmem [thread:$0]  %s26, 65536, %s28, [#allocation4], 256, 256, 16
    $region9: #{mlp_forward.1} parent=1 // pred_fallthru
      _
    // Predicated region
    $region10: #{mlp_forward.1} parent=1 // pred_check
      _
    $region11: #{mlp_forward.1} parent=1 // pred_check_branch
      %35 = sbr.rel (0) target = $region13
    $region12: #{mlp_forward.1} parent=1 // pred_region
      %37 = vsyncadd [#allocation6], 0
      %s39 = sshll.u32 %s2, 4
      %s40 = int_to_ptr.hbm [resolvable:$true] %s39
      %s41 = sshll.u32 [#allocation5], 4
      %s42 = int_to_ptr.vmem [resolvable:$true] %s41
      %44 = dma.hbm_to_vmem [thread:$0]  %s40, 64, %s42, [#allocation6]
    $region13: #{mlp_forward.1} parent=1 // pred_fallthru
      _
    // Predicated region
    $region14: #{mlp_forward.1} parent=1 // pred_check
      _
    $region15: #{mlp_forward.1} parent=1 // pred_check_branch
      %46 = sbr.rel (0) target = $region17
    $region16: #{mlp_forward.1} parent=1 // pred_region
      %48 = vsyncadd [#allocation6], 0
      %s49 = sshll.u32 %s3, 4
      %s50 = int_to_ptr.hbm [resolvable:$true] %s49
      %s51 = sshll.u32 [#allocation7], 4
      %s52 = int_to_ptr.vmem [resolvable:$true] %s51
      %57 = dma.hbm_to_vmem [thread:$0]  %s50, 16384, %s52, [#allocation6], 256, 256, 16
    $region17: #{mlp_forward.1} parent=1 // pred_fallthru
      _
    // Predicated region
    $region18: #{mlp_forward.1} parent=1 // pred_check
      _
    $region19: #{mlp_forward.1} parent=1 // pred_check_branch
      %59 = sbr.rel (0) target = $region21
    $region20: #{mlp_forward.1} parent=1 // pred_region
      %61 = vsyncadd [#allocation9], 0
      %s63 = sshll.u32 %s4, 4
      %s64 = int_to_ptr.hbm [resolvable:$true] %s63
      %s65 = sshll.u32 [#allocation8], 4
      %s66 = int_to_ptr.vmem [resolvable:$true] %s65
      %68 = dma.hbm_to_vmem [thread:$0]  %s64, 64, %s66, [#allocation9]
    $region21: #{mlp_forward.1} parent=1 // pred_fallthru
      _
    // Predicated region
    $region22: #{mlp_forward.1} parent=1 // pred_check
      _
    $region23: #{mlp_forward.1} parent=1 // pred_check_branch
      %70 = sbr.rel (0) target = $region25
    $region24: #{mlp_forward.1} parent=1 // pred_region
      %72 = vsyncadd [#allocation9], 0
      %s73 = sshll.u32 %s5, 4
      %s74 = int_to_ptr.hbm [resolvable:$true] %s73
      %s75 = sshll.u32 [#allocation10], 4
      %s76 = int_to_ptr.vmem [resolvable:$true] %s75
      %81 = dma.hbm_to_vmem [thread:$0]  %s74, 16384, %s76, [#allocation9], 256, 256, 16
    $region25: #{mlp_forward.1} parent=1 // pred_fallthru
      _
    // Predicated region
    $region26: #{mlp_forward.1} parent=1 // pred_check
      _
    $region27: #{mlp_forward.1} parent=1 // pred_check_branch
      %83 = sbr.rel (0) target = $region29
    $region28: #{mlp_forward.1} parent=1 // pred_region
      %85 = vsyncadd [#allocation12], 0
      %s87 = sshll.u32 %s6, 4
      %s88 = int_to_ptr.hbm [resolvable:$true] %s87
      %s89 = sshll.u32 [#allocation11], 4
      %s90 = int_to_ptr.vmem [resolvable:$true] %s89
      %92 = dma.hbm_to_vmem [thread:$0]  %s88, 64, %s90, [#allocation12]
    $region29: #{mlp_forward.1} parent=1 // pred_fallthru
      _
    // Predicated region
    $region30: #{mlp_forward.1} parent=1 // pred_check
      _
    $region31: #{mlp_forward.1} parent=1 // pred_check_branch
      %94 = sbr.rel (0) target = $region33
    $region32: #{mlp_forward.1} parent=1 // pred_region
      %96 = vsyncadd [#allocation12], 0
      %s97 = sshll.u32 %s7, 4
      %s98 = int_to_ptr.hbm [resolvable:$true] %s97
      %s99 = sshll.u32 [#allocation13], 4
      %s100 = int_to_ptr.vmem [resolvable:$true] %s99
      %105 = dma.hbm_to_vmem [thread:$0]  %s98, 4096, %s100, [#allocation12], 64, 64, 4
    $region33: #{mlp_forward.1} parent=1 // pred_fallthru
      _
    // Predicated region
    $region34: #{mlp_forward.1} parent=1 // pred_check
      _
    $region35: #{mlp_forward.1} parent=1 // pred_check_branch
      %107 = sbr.rel (0) target = $region37
    $region36: #{mlp_forward.1} parent=1 // pred_region
      %109 = vsyncadd [#allocation15], 0
      %s111 = sshll.u32 %s8, 4
      %s112 = int_to_ptr.hbm [resolvable:$true] %s111
      %s113 = sshll.u32 [#allocation14], 4
      %s114 = int_to_ptr.vmem [resolvable:$true] %s113
      %116 = dma.hbm_to_vmem [thread:$0]  %s112, 16, %s114, [#allocation15]
    $region37: #{mlp_forward.1} parent=1 // pred_fallthru
      _
    // Predicated region
    $region38: #{mlp_forward.1} parent=1 // pred_check
      _
    $region39: #{mlp_forward.1} parent=1 // pred_check_branch
      %118 = sbr.rel (0) target = $region41
    $region40: #{mlp_forward.1} parent=1 // pred_region
      %120 = dma.done [#allocation4], 65536
    $region41: #{mlp_forward.1} parent=1 // pred_fallthru
      _
    // Predicated region
    $region42: #{mlp_forward.1} parent=1 // pred_check
      _
    $region43: #{mlp_forward.1} parent=1 // pred_check_branch
      %122 = sbr.rel (0) target = $region45
    $region44: #{mlp_forward.1} parent=1 // pred_region
      %124 = dma.done [#allocation6], 64
    $region45: #{mlp_forward.1} parent=1 // pred_fallthru
      _
    // Predicated region
    $region46: #{mlp_forward.1} parent=1 // pred_check
      _
    $region47: #{mlp_forward.1} parent=1 // pred_check_branch
      %126 = sbr.rel (0) target = $region49
    $region48: #{mlp_forward.1} parent=1 // pred_region
      %128 = dma.done [#allocation6], 16384
    $region49: #{mlp_forward.1} parent=1 // pred_fallthru
      _
    // Predicated region
    $region50: #{mlp_forward.1} parent=1 // pred_check
      _
    $region51: #{mlp_forward.1} parent=1 // pred_check_branch
      %130 = sbr.rel (0) target = $region53
    $region52: #{mlp_forward.1} parent=1 // pred_region
      %132 = dma.done [#allocation9], 64
    $region53: #{mlp_forward.1} parent=1 // pred_fallthru
      _
    // Predicated region
    $region54: #{mlp_forward.1} parent=1 // pred_check
      _
    $region55: #{mlp_forward.1} parent=1 // pred_check_branch
      %134 = sbr.rel (0) target = $region57
    $region56: #{mlp_forward.1} parent=1 // pred_region
      %136 = dma.done [#allocation9], 16384
    $region57: #{mlp_forward.1} parent=1 // pred_fallthru
      _
    // Predicated region
    $region58: #{mlp_forward.1} parent=1 // pred_check
      _
    $region59: #{mlp_forward.1} parent=1 // pred_check_branch
      %138 = sbr.rel (0) target = $region61
    $region60: #{mlp_forward.1} parent=1 // pred_region
      %140 = dma.done [#allocation12], 64
    $region61: #{mlp_forward.1} parent=1 // pred_fallthru
      _
    // Predicated region
    $region62: #{mlp_forward.1} parent=1 // pred_check
      _
    $region63: #{mlp_forward.1} parent=1 // pred_check_branch
      %142 = sbr.rel (0) target = $region65
    $region64: #{mlp_forward.1} parent=1 // pred_region
      %144 = dma.done [#allocation12], 4096
    $region65: #{mlp_forward.1} parent=1 // pred_fallthru
      _
    // Predicated region
    $region66: #{mlp_forward.1} parent=1 // pred_check
      _
    $region67: #{mlp_forward.1} parent=1 // pred_check_branch
      %146 = sbr.rel (0) target = $region69
    $region68: #{mlp_forward.1} parent=1 // pred_region
      %148 = dma.done [#allocation15], 16
    $region69: #{mlp_forward.1} parent=1 // pred_fallthru
      _
    %p149 = scmp.eq.s32.totalorder 0, 0
    // Predicated region
    $region70: #{mlp_forward.1} parent=1 // pred_check
      %p150 = pneg %p149
    $region71: #{mlp_forward.1} parent=1 // pred_check_branch
      %152 = sbr.rel (%p150) target = $region73
    $region72: #{mlp_forward.1} parent=1 // pred_region
      %153 = vst [vmem:[#allocation2] sm:$0xff] 0.0
      %154 = vst [vmem:[#allocation2 + $0x8] sm:$0xff] 0.0
      %155 = vst [vmem:[#allocation2 + $0x10] sm:$0xff] 0.0
      %156 = vst [vmem:[#allocation2 + $0x18] sm:$0xff] 0.0
      %157 = vst [vmem:[#allocation2 + $0x20] sm:$0xff] 0.0
      %158 = vst [vmem:[#allocation2 + $0x28] sm:$0xff] 0.0
      %159 = vst [vmem:[#allocation2 + $0x30] sm:$0xff] 0.0
      %160 = vst [vmem:[#allocation2 + $0x38] sm:$0xff] 0.0
    $region73: #{mlp_forward.1} parent=1 // pred_fallthru
      _
    %v161 = vld [vmem:[#allocation2] sm:$0xff]
    %v162 = vld [vmem:[#allocation2 + $0x8] sm:$0xff]
    %v163 = vld [vmem:[#allocation2 + $0x10] sm:$0xff]
    %v164 = vld [vmem:[#allocation2 + $0x18] sm:$0xff]
    %v165 = vld [vmem:[#allocation2 + $0x20] sm:$0xff]
    %v166 = vld [vmem:[#allocation2 + $0x28] sm:$0xff]
    %v167 = vld [vmem:[#allocation2 + $0x30] sm:$0xff]
    %v168 = vld [vmem:[#allocation2 + $0x38] sm:$0xff]
    %v169 = vld [vmem:[%s0] sm:$0xff]
    %v170 = vld [vmem:[%s0 + $0x8] sm:$0xff]
    %v171 = vld [vmem:[%s0 + $0x10] sm:$0xff]
    %v172 = vld [vmem:[%s0 + $0x18] sm:$0xff]
    %v173 = vld [vmem:[%s0 + $0x20] sm:$0xff]
    %v174 = vld [vmem:[%s0 + $0x28] sm:$0xff]
    %v175 = vld [vmem:[%s0 + $0x30] sm:$0xff]
    %v176 = vld [vmem:[%s0 + $0x38] sm:$0xff]
    %v177 = vld [vmem:[%s0 + $0x40] sm:$0xff]
    %v178 = vld [vmem:[%s0 + $0x48] sm:$0xff]
    %v179 = vld [vmem:[%s0 + $0x50] sm:$0xff]
    %v180 = vld [vmem:[%s0 + $0x58] sm:$0xff]
    %v181 = vld [vmem:[%s0 + $0x60] sm:$0xff]
    %v182 = vld [vmem:[%s0 + $0x68] sm:$0xff]
    %v183 = vld [vmem:[%s0 + $0x70] sm:$0xff]
    %v184 = vld [vmem:[%s0 + $0x78] sm:$0xff]
    %v185 = vld [vmem:[#allocation3] sm:$0xff]
    %v186 = vld [vmem:[#allocation3 + $0x8] sm:$0xff]
    %v187 = vld [vmem:[#allocation3 + $0x10] sm:$0xff]
    %v188 = vld [vmem:[#allocation3 + $0x18] sm:$0xff]
    %v189 = vld [vmem:[#allocation3 + $0x20] sm:$0xff]
    %v190 = vld [vmem:[#allocation3 + $0x28] sm:$0xff]
    %v191 = vld [vmem:[#allocation3 + $0x30] sm:$0xff]
    %v192 = vld [vmem:[#allocation3 + $0x38] sm:$0xff]
    %v193 = vld [vmem:[#allocation3 + $0x40] sm:$0xff]
    %v194 = vld [vmem:[#allocation3 + $0x48] sm:$0xff]
    %v195 = vld [vmem:[#allocation3 + $0x50] sm:$0xff]
    %v196 = vld [vmem:[#allocation3 + $0x58] sm:$0xff]
    %v197 = vld [vmem:[#allocation3 + $0x60] sm:$0xff]
    %v198 = vld [vmem:[#allocation3 + $0x68] sm:$0xff]
    %v199 = vld [vmem:[#allocation3 + $0x70] sm:$0xff]
    %v200 = vld [vmem:[#allocation3 + $0x78] sm:$0xff]
    %v201 = vld [vmem:[#allocation3 + $0x80] sm:$0xff]
    %v202 = vld [vmem:[#allocation3 + $0x88] sm:$0xff]
    %v203 = vld [vmem:[#allocation3 + $0x90] sm:$0xff]
    %v204 = vld [vmem:[#allocation3 + $0x98] sm:$0xff]
    %v205 = vld [vmem:[#allocation3 + $0xa0] sm:$0xff]
    %v206 = vld [vmem:[#allocation3 + $0xa8] sm:$0xff]
    %v207 = vld [vmem:[#allocation3 + $0xb0] sm:$0xff]
    %v208 = vld [vmem:[#allocation3 + $0xb8] sm:$0xff]
    %v209 = vld [vmem:[#allocation3 + $0xc0] sm:$0xff]
    %v210 = vld [vmem:[#allocation3 + $0xc8] sm:$0xff]
    %v211 = vld [vmem:[#allocation3 + $0xd0] sm:$0xff]
    %v212 = vld [vmem:[#allocation3 + $0xd8] sm:$0xff]
    %v213 = vld [vmem:[#allocation3 + $0xe0] sm:$0xff]
    %v214 = vld [vmem:[#allocation3 + $0xe8] sm:$0xff]
    %v215 = vld [vmem:[#allocation3 + $0xf0] sm:$0xff]
    %v216 = vld [vmem:[#allocation3 + $0xf8] sm:$0xff]
    %v217 = vld [vmem:[#allocation3 + $0x100] sm:$0xff]
    %v218 = vld [vmem:[#allocation3 + $0x108] sm:$0xff]
    %v219 = vld [vmem:[#allocation3 + $0x110] sm:$0xff]
    %v220 = vld [vmem:[#allocation3 + $0x118] sm:$0xff]
    %v221 = vld [vmem:[#allocation3 + $0x120] sm:$0xff]
    %v222 = vld [vmem:[#allocation3 + $0x128] sm:$0xff]
    %v223 = vld [vmem:[#allocation3 + $0x130] sm:$0xff]
    %v224 = vld [vmem:[#allocation3 + $0x138] sm:$0xff]
    %v225 = vld [vmem:[#allocation3 + $0x140] sm:$0xff]
    %v226 = vld [vmem:[#allocation3 + $0x148] sm:$0xff]
    %v227 = vld [vmem:[#allocation3 + $0x150] sm:$0xff]
    %v228 = vld [vmem:[#allocation3 + $0x158] sm:$0xff]
    %v229 = vld [vmem:[#allocation3 + $0x160] sm:$0xff]
    %v230 = vld [vmem:[#allocation3 + $0x168] sm:$0xff]
    %v231 = vld [vmem:[#allocation3 + $0x170] sm:$0xff]
    %v232 = vld [vmem:[#allocation3 + $0x178] sm:$0xff]
    %v233 = vld [vmem:[#allocation3 + $0x180] sm:$0xff]
    %v234 = vld [vmem:[#allocation3 + $0x188] sm:$0xff]
    %v235 = vld [vmem:[#allocation3 + $0x190] sm:$0xff]
    %v236 = vld [vmem:[#allocation3 + $0x198] sm:$0xff]
    %v237 = vld [vmem:[#allocation3 + $0x1a0] sm:$0xff]
    %v238 = vld [vmem:[#allocation3 + $0x1a8] sm:$0xff]
    %v239 = vld [vmem:[#allocation3 + $0x1b0] sm:$0xff]
    %v240 = vld [vmem:[#allocation3 + $0x1b8] sm:$0xff]
    %v241 = vld [vmem:[#allocation3 + $0x1c0] sm:$0xff]
    %v242 = vld [vmem:[#allocation3 + $0x1c8] sm:$0xff]
    %v243 = vld [vmem:[#allocation3 + $0x1d0] sm:$0xff]
    %v244 = vld [vmem:[#allocation3 + $0x1d8] sm:$0xff]
    %v245 = vld [vmem:[#allocation3 + $0x1e0] sm:$0xff]
    %v246 = vld [vmem:[#allocation3 + $0x1e8] sm:$0xff]
    %v247 = vld [vmem:[#allocation3 + $0x1f0] sm:$0xff]
    %v248 = vld [vmem:[#allocation3 + $0x1f8] sm:$0xff]
    %v249 = vld [vmem:[#allocation3 + $0x200] sm:$0xff]
    %v250 = vld [vmem:[#allocation3 + $0x208] sm:$0xff]
    %v251 = vld [vmem:[#allocation3 + $0x210] sm:$0xff]
    %v252 = vld [vmem:[#allocation3 + $0x218] sm:$0xff]
    %v253 = vld [vmem:[#allocation3 + $0x220] sm:$0xff]
    %v254 = vld [vmem:[#allocation3 + $0x228] sm:$0xff]
    %v255 = vld [vmem:[#allocation3 + $0x230] sm:$0xff]
    %v256 = vld [vmem:[#allocation3 + $0x238] sm:$0xff]
    %v257 = vld [vmem:[#allocation3 + $0x240] sm:$0xff]
    %v258 = vld [vmem:[#allocation3 + $0x248] sm:$0xff]
    %v259 = vld [vmem:[#allocation3 + $0x250] sm:$0xff]
    %v260 = vld [vmem:[#allocation3 + $0x258] sm:$0xff]
    %v261 = vld [vmem:[#allocation3 + $0x260] sm:$0xff]
    %v262 = vld [vmem:[#allocation3 + $0x268] sm:$0xff]
    %v263 = vld [vmem:[#allocation3 + $0x270] sm:$0xff]
    %v264 = vld [vmem:[#allocation3 + $0x278] sm:$0xff]
    %v265 = vld [vmem:[#allocation3 + $0x280] sm:$0xff]
    %v266 = vld [vmem:[#allocation3 + $0x288] sm:$0xff]
    %v267 = vld [vmem:[#allocation3 + $0x290] sm:$0xff]
    %v268 = vld [vmem:[#allocation3 + $0x298] sm:$0xff]
    %v269 = vld [vmem:[#allocation3 + $0x2a0] sm:$0xff]
    %v270 = vld [vmem:[#allocation3 + $0x2a8] sm:$0xff]
    %v271 = vld [vmem:[#allocation3 + $0x2b0] sm:$0xff]
    %v272 = vld [vmem:[#allocation3 + $0x2b8] sm:$0xff]
    %v273 = vld [vmem:[#allocation3 + $0x2c0] sm:$0xff]
    %v274 = vld [vmem:[#allocation3 + $0x2c8] sm:$0xff]
    %v275 = vld [vmem:[#allocation3 + $0x2d0] sm:$0xff]
    %v276 = vld [vmem:[#allocation3 + $0x2d8] sm:$0xff]
    %v277 = vld [vmem:[#allocation3 + $0x2e0] sm:$0xff]
    %v278 = vld [vmem:[#allocation3 + $0x2e8] sm:$0xff]
    %v279 = vld [vmem:[#allocation3 + $0x2f0] sm:$0xff]
    %v280 = vld [vmem:[#allocation3 + $0x2f8] sm:$0xff]
    %v281 = vld [vmem:[#allocation3 + $0x300] sm:$0xff]
    %v282 = vld [vmem:[#allocation3 + $0x308] sm:$0xff]
    %v283 = vld [vmem:[#allocation3 + $0x310] sm:$0xff]
    %v284 = vld [vmem:[#allocation3 + $0x318] sm:$0xff]
    %v285 = vld [vmem:[#allocation3 + $0x320] sm:$0xff]
    %v286 = vld [vmem:[#allocation3 + $0x328] sm:$0xff]
    %v287 = vld [vmem:[#allocation3 + $0x330] sm:$0xff]
    %v288 = vld [vmem:[#allocation3 + $0x338] sm:$0xff]
    %v289 = vld [vmem:[#allocation3 + $0x340] sm:$0xff]
    %v290 = vld [vmem:[#allocation3 + $0x348] sm:$0xff]
    %v291 = vld [vmem:[#allocation3 + $0x350] sm:$0xff]
    %v292 = vld [vmem:[#allocation3 + $0x358] sm:$0xff]
    %v293 = vld [vmem:[#allocation3 + $0x360] sm:$0xff]
    %v294 = vld [vmem:[#allocation3 + $0x368] sm:$0xff]
    %v295 = vld [vmem:[#allocation3 + $0x370] sm:$0xff]
    %v296 = vld [vmem:[#allocation3 + $0x378] sm:$0xff]
    %v297 = vld [vmem:[#allocation3 + $0x380] sm:$0xff]
    %v298 = vld [vmem:[#allocation3 + $0x388] sm:$0xff]
    %v299 = vld [vmem:[#allocation3 + $0x390] sm:$0xff]
    %v300 = vld [vmem:[#allocation3 + $0x398] sm:$0xff]
    %v301 = vld [vmem:[#allocation3 + $0x3a0] sm:$0xff]
    %v302 = vld [vmem:[#allocation3 + $0x3a8] sm:$0xff]
    %v303 = vld [vmem:[#allocation3 + $0x3b0] sm:$0xff]
    %v304 = vld [vmem:[#allocation3 + $0x3b8] sm:$0xff]
    %v305 = vld [vmem:[#allocation3 + $0x3c0] sm:$0xff]
    %v306 = vld [vmem:[#allocation3 + $0x3c8] sm:$0xff]
    %v307 = vld [vmem:[#allocation3 + $0x3d0] sm:$0xff]
    %v308 = vld [vmem:[#allocation3 + $0x3d8] sm:$0xff]
    %v309 = vld [vmem:[#allocation3 + $0x3e0] sm:$0xff]
    %v310 = vld [vmem:[#allocation3 + $0x3e8] sm:$0xff]
    %v311 = vld [vmem:[#allocation3 + $0x3f0] sm:$0xff]
    %v312 = vld [vmem:[#allocation3 + $0x3f8] sm:$0xff]
    %v313 = vld [vmem:[#allocation3 + $0x400] sm:$0xff]
    %v314 = vld [vmem:[#allocation3 + $0x408] sm:$0xff]
    %v315 = vld [vmem:[#allocation3 + $0x410] sm:$0xff]
    %v316 = vld [vmem:[#allocation3 + $0x418] sm:$0xff]
    %v317 = vld [vmem:[#allocation3 + $0x420] sm:$0xff]
    %v318 = vld [vmem:[#allocation3 + $0x428] sm:$0xff]
    %v319 = vld [vmem:[#allocation3 + $0x430] sm:$0xff]
    %v320 = vld [vmem:[#allocation3 + $0x438] sm:$0xff]
    %v321 = vld [vmem:[#allocation3 + $0x440] sm:$0xff]
    %v322 = vld [vmem:[#allocation3 + $0x448] sm:$0xff]
    %v323 = vld [vmem:[#allocation3 + $0x450] sm:$0xff]
    %v324 = vld [vmem:[#allocation3 + $0x458] sm:$0xff]
    %v325 = vld [vmem:[#allocation3 + $0x460] sm:$0xff]
    %v326 = vld [vmem:[#allocation3 + $0x468] sm:$0xff]
    %v327 = vld [vmem:[#allocation3 + $0x470] sm:$0xff]
    %v328 = vld [vmem:[#allocation3 + $0x478] sm:$0xff]
    %v329 = vld [vmem:[#allocation3 + $0x480] sm:$0xff]
    %v330 = vld [vmem:[#allocation3 + $0x488] sm:$0xff]
    %v331 = vld [vmem:[#allocation3 + $0x490] sm:$0xff]
    %v332 = vld [vmem:[#allocation3 + $0x498] sm:$0xff]
    %v333 = vld [vmem:[#allocation3 + $0x4a0] sm:$0xff]
    %v334 = vld [vmem:[#allocation3 + $0x4a8] sm:$0xff]
    %v335 = vld [vmem:[#allocation3 + $0x4b0] sm:$0xff]
    %v336 = vld [vmem:[#allocation3 + $0x4b8] sm:$0xff]
    %v337 = vld [vmem:[#allocation3 + $0x4c0] sm:$0xff]
    %v338 = vld [vmem:[#allocation3 + $0x4c8] sm:$0xff]
    %v339 = vld [vmem:[#allocation3 + $0x4d0] sm:$0xff]
    %v340 = vld [vmem:[#allocation3 + $0x4d8] sm:$0xff]
    %v341 = vld [vmem:[#allocation3 + $0x4e0] sm:$0xff]
    %v342 = vld [vmem:[#allocation3 + $0x4e8] sm:$0xff]
    %v343 = vld [vmem:[#allocation3 + $0x4f0] sm:$0xff]
    %v344 = vld [vmem:[#allocation3 + $0x4f8] sm:$0xff]
    %v345 = vld [vmem:[#allocation3 + $0x500] sm:$0xff]
    %v346 = vld [vmem:[#allocation3 + $0x508] sm:$0xff]
    %v347 = vld [vmem:[#allocation3 + $0x510] sm:$0xff]
    %v348 = vld [vmem:[#allocation3 + $0x518] sm:$0xff]
    %v349 = vld [vmem:[#allocation3 + $0x520] sm:$0xff]
    %v350 = vld [vmem:[#allocation3 + $0x528] sm:$0xff]
    %v351 = vld [vmem:[#allocation3 + $0x530] sm:$0xff]
    %v352 = vld [vmem:[#allocation3 + $0x538] sm:$0xff]
    %v353 = vld [vmem:[#allocation3 + $0x540] sm:$0xff]
    %v354 = vld [vmem:[#allocation3 + $0x548] sm:$0xff]
    %v355 = vld [vmem:[#allocation3 + $0x550] sm:$0xff]
    %v356 = vld [vmem:[#allocation3 + $0x558] sm:$0xff]
    %v357 = vld [vmem:[#allocation3 + $0x560] sm:$0xff]
    %v358 = vld [vmem:[#allocation3 + $0x568] sm:$0xff]
    %v359 = vld [vmem:[#allocation3 + $0x570] sm:$0xff]
    %v360 = vld [vmem:[#allocation3 + $0x578] sm:$0xff]
    %v361 = vld [vmem:[#allocation3 + $0x580] sm:$0xff]
    %v362 = vld [vmem:[#allocation3 + $0x588] sm:$0xff]
    %v363 = vld [vmem:[#allocation3 + $0x590] sm:$0xff]
    %v364 = vld [vmem:[#allocation3 + $0x598] sm:$0xff]
    %v365 = vld [vmem:[#allocation3 + $0x5a0] sm:$0xff]
    %v366 = vld [vmem:[#allocation3 + $0x5a8] sm:$0xff]
    %v367 = vld [vmem:[#allocation3 + $0x5b0] sm:$0xff]
    %v368 = vld [vmem:[#allocation3 + $0x5b8] sm:$0xff]
    %v369 = vld [vmem:[#allocation3 + $0x5c0] sm:$0xff]
    %v370 = vld [vmem:[#allocation3 + $0x5c8] sm:$0xff]
    %v371 = vld [vmem:[#allocation3 + $0x5d0] sm:$0xff]
    %v372 = vld [vmem:[#allocation3 + $0x5d8] sm:$0xff]
    %v373 = vld [vmem:[#allocation3 + $0x5e0] sm:$0xff]
    %v374 = vld [vmem:[#allocation3 + $0x5e8] sm:$0xff]
    %v375 = vld [vmem:[#allocation3 + $0x5f0] sm:$0xff]
    %v376 = vld [vmem:[#allocation3 + $0x5f8] sm:$0xff]
    %v377 = vld [vmem:[#allocation3 + $0x600] sm:$0xff]
    %v378 = vld [vmem:[#allocation3 + $0x608] sm:$0xff]
    %v379 = vld [vmem:[#allocation3 + $0x610] sm:$0xff]
    %v380 = vld [vmem:[#allocation3 + $0x618] sm:$0xff]
    %v381 = vld [vmem:[#allocation3 + $0x620] sm:$0xff]
    %v382 = vld [vmem:[#allocation3 + $0x628] sm:$0xff]
    %v383 = vld [vmem:[#allocation3 + $0x630] sm:$0xff]
    %v384 = vld [vmem:[#allocation3 + $0x638] sm:$0xff]
    %v385 = vld [vmem:[#allocation3 + $0x640] sm:$0xff]
    %v386 = vld [vmem:[#allocation3 + $0x648] sm:$0xff]
    %v387 = vld [vmem:[#allocation3 + $0x650] sm:$0xff]
    %v388 = vld [vmem:[#allocation3 + $0x658] sm:$0xff]
    %v389 = vld [vmem:[#allocation3 + $0x660] sm:$0xff]
    %v390 = vld [vmem:[#allocation3 + $0x668] sm:$0xff]
    %v391 = vld [vmem:[#allocation3 + $0x670] sm:$0xff]
    %v392 = vld [vmem:[#allocation3 + $0x678] sm:$0xff]
    %v393 = vld [vmem:[#allocation3 + $0x680] sm:$0xff]
    %v394 = vld [vmem:[#allocation3 + $0x688] sm:$0xff]
    %v395 = vld [vmem:[#allocation3 + $0x690] sm:$0xff]
    %v396 = vld [vmem:[#allocation3 + $0x698] sm:$0xff]
    %v397 = vld [vmem:[#allocation3 + $0x6a0] sm:$0xff]
    %v398 = vld [vmem:[#allocation3 + $0x6a8] sm:$0xff]
    %v399 = vld [vmem:[#allocation3 + $0x6b0] sm:$0xff]
    %v400 = vld [vmem:[#allocation3 + $0x6b8] sm:$0xff]
    %v401 = vld [vmem:[#allocation3 + $0x6c0] sm:$0xff]
    %v402 = vld [vmem:[#allocation3 + $0x6c8] sm:$0xff]
    %v403 = vld [vmem:[#allocation3 + $0x6d0] sm:$0xff]
    %v404 = vld [vmem:[#allocation3 + $0x6d8] sm:$0xff]
    %v405 = vld [vmem:[#allocation3 + $0x6e0] sm:$0xff]
    %v406 = vld [vmem:[#allocation3 + $0x6e8] sm:$0xff]
    %v407 = vld [vmem:[#allocation3 + $0x6f0] sm:$0xff]
    %v408 = vld [vmem:[#allocation3 + $0x6f8] sm:$0xff]
    %v409 = vld [vmem:[#allocation3 + $0x700] sm:$0xff]
    %v410 = vld [vmem:[#allocation3 + $0x708] sm:$0xff]
    %v411 = vld [vmem:[#allocation3 + $0x710] sm:$0xff]
    %v412 = vld [vmem:[#allocation3 + $0x718] sm:$0xff]
    %v413 = vld [vmem:[#allocation3 + $0x720] sm:$0xff]
    %v414 = vld [vmem:[#allocation3 + $0x728] sm:$0xff]
    %v415 = vld [vmem:[#allocation3 + $0x730] sm:$0xff]
    %v416 = vld [vmem:[#allocation3 + $0x738] sm:$0xff]
    %v417 = vld [vmem:[#allocation3 + $0x740] sm:$0xff]
    %v418 = vld [vmem:[#allocation3 + $0x748] sm:$0xff]
    %v419 = vld [vmem:[#allocation3 + $0x750] sm:$0xff]
    %v420 = vld [vmem:[#allocation3 + $0x758] sm:$0xff]
    %v421 = vld [vmem:[#allocation3 + $0x760] sm:$0xff]
    %v422 = vld [vmem:[#allocation3 + $0x768] sm:$0xff]
    %v423 = vld [vmem:[#allocation3 + $0x770] sm:$0xff]
    %v424 = vld [vmem:[#allocation3 + $0x778] sm:$0xff]
    %v425 = vld [vmem:[#allocation3 + $0x780] sm:$0xff]
    %v426 = vld [vmem:[#allocation3 + $0x788] sm:$0xff]
    %v427 = vld [vmem:[#allocation3 + $0x790] sm:$0xff]
    %v428 = vld [vmem:[#allocation3 + $0x798] sm:$0xff]
    %v429 = vld [vmem:[#allocation3 + $0x7a0] sm:$0xff]
    %v430 = vld [vmem:[#allocation3 + $0x7a8] sm:$0xff]
    %v431 = vld [vmem:[#allocation3 + $0x7b0] sm:$0xff]
    %v432 = vld [vmem:[#allocation3 + $0x7b8] sm:$0xff]
    %v433 = vld [vmem:[#allocation3 + $0x7c0] sm:$0xff]
    %v434 = vld [vmem:[#allocation3 + $0x7c8] sm:$0xff]
    %v435 = vld [vmem:[#allocation3 + $0x7d0] sm:$0xff]
    %v436 = vld [vmem:[#allocation3 + $0x7d8] sm:$0xff]
    %v437 = vld [vmem:[#allocation3 + $0x7e0] sm:$0xff]
    %v438 = vld [vmem:[#allocation3 + $0x7e8] sm:$0xff]
    %v439 = vld [vmem:[#allocation3 + $0x7f0] sm:$0xff]
    %v440 = vld [vmem:[#allocation3 + $0x7f8] sm:$0xff]
    %v441 = vld [vmem:[#allocation3 + $0x800] sm:$0xff]
    %v442 = vld [vmem:[#allocation3 + $0x808] sm:$0xff]
    %v443 = vld [vmem:[#allocation3 + $0x810] sm:$0xff]
    %v444 = vld [vmem:[#allocation3 + $0x818] sm:$0xff]
    %v445 = vld [vmem:[#allocation3 + $0x820] sm:$0xff]
    %v446 = vld [vmem:[#allocation3 + $0x828] sm:$0xff]
    %v447 = vld [vmem:[#allocation3 + $0x830] sm:$0xff]
    %v448 = vld [vmem:[#allocation3 + $0x838] sm:$0xff]
    %v449 = vld [vmem:[#allocation3 + $0x840] sm:$0xff]
    %v450 = vld [vmem:[#allocation3 + $0x848] sm:$0xff]
    %v451 = vld [vmem:[#allocation3 + $0x850] sm:$0xff]
    %v452 = vld [vmem:[#allocation3 + $0x858] sm:$0xff]
    %v453 = vld [vmem:[#allocation3 + $0x860] sm:$0xff]
    %v454 = vld [vmem:[#allocation3 + $0x868] sm:$0xff]
    %v455 = vld [vmem:[#allocation3 + $0x870] sm:$0xff]
    %v456 = vld [vmem:[#allocation3 + $0x878] sm:$0xff]
    %v457 = vld [vmem:[#allocation3 + $0x880] sm:$0xff]
    %v458 = vld [vmem:[#allocation3 + $0x888] sm:$0xff]
    %v459 = vld [vmem:[#allocation3 + $0x890] sm:$0xff]
    %v460 = vld [vmem:[#allocation3 + $0x898] sm:$0xff]
    %v461 = vld [vmem:[#allocation3 + $0x8a0] sm:$0xff]
    %v462 = vld [vmem:[#allocation3 + $0x8a8] sm:$0xff]
    %v463 = vld [vmem:[#allocation3 + $0x8b0] sm:$0xff]
    %v464 = vld [vmem:[#allocation3 + $0x8b8] sm:$0xff]
    %v465 = vld [vmem:[#allocation3 + $0x8c0] sm:$0xff]
    %v466 = vld [vmem:[#allocation3 + $0x8c8] sm:$0xff]
    %v467 = vld [vmem:[#allocation3 + $0x8d0] sm:$0xff]
    %v468 = vld [vmem:[#allocation3 + $0x8d8] sm:$0xff]
    %v469 = vld [vmem:[#allocation3 + $0x8e0] sm:$0xff]
    %v470 = vld [vmem:[#allocation3 + $0x8e8] sm:$0xff]
    %v471 = vld [vmem:[#allocation3 + $0x8f0] sm:$0xff]
    %v472 = vld [vmem:[#allocation3 + $0x8f8] sm:$0xff]
    %v473 = vld [vmem:[#allocation3 + $0x900] sm:$0xff]
    %v474 = vld [vmem:[#allocation3 + $0x908] sm:$0xff]
    %v475 = vld [vmem:[#allocation3 + $0x910] sm:$0xff]
    %v476 = vld [vmem:[#allocation3 + $0x918] sm:$0xff]
    %v477 = vld [vmem:[#allocation3 + $0x920] sm:$0xff]
    %v478 = vld [vmem:[#allocation3 + $0x928] sm:$0xff]
    %v479 = vld [vmem:[#allocation3 + $0x930] sm:$0xff]
    %v480 = vld [vmem:[#allocation3 + $0x938] sm:$0xff]
    %v481 = vld [vmem:[#allocation3 + $0x940] sm:$0xff]
    %v482 = vld [vmem:[#allocation3 + $0x948] sm:$0xff]
    %v483 = vld [vmem:[#allocation3 + $0x950] sm:$0xff]
    %v484 = vld [vmem:[#allocation3 + $0x958] sm:$0xff]
    %v485 = vld [vmem:[#allocation3 + $0x960] sm:$0xff]
    %v486 = vld [vmem:[#allocation3 + $0x968] sm:$0xff]
    %v487 = vld [vmem:[#allocation3 + $0x970] sm:$0xff]
    %v488 = vld [vmem:[#allocation3 + $0x978] sm:$0xff]
    %v489 = vld [vmem:[#allocation3 + $0x980] sm:$0xff]
    %v490 = vld [vmem:[#allocation3 + $0x988] sm:$0xff]
    %v491 = vld [vmem:[#allocation3 + $0x990] sm:$0xff]
    %v492 = vld [vmem:[#allocation3 + $0x998] sm:$0xff]
    %v493 = vld [vmem:[#allocation3 + $0x9a0] sm:$0xff]
    %v494 = vld [vmem:[#allocation3 + $0x9a8] sm:$0xff]
    %v495 = vld [vmem:[#allocation3 + $0x9b0] sm:$0xff]
    %v496 = vld [vmem:[#allocation3 + $0x9b8] sm:$0xff]
    %v497 = vld [vmem:[#allocation3 + $0x9c0] sm:$0xff]
    %v498 = vld [vmem:[#allocation3 + $0x9c8] sm:$0xff]
    %v499 = vld [vmem:[#allocation3 + $0x9d0] sm:$0xff]
    %v500 = vld [vmem:[#allocation3 + $0x9d8] sm:$0xff]
    %v501 = vld [vmem:[#allocation3 + $0x9e0] sm:$0xff]
    %v502 = vld [vmem:[#allocation3 + $0x9e8] sm:$0xff]
    %v503 = vld [vmem:[#allocation3 + $0x9f0] sm:$0xff]
    %v504 = vld [vmem:[#allocation3 + $0x9f8] sm:$0xff]
    %v505 = vld [vmem:[#allocation3 + $0xa00] sm:$0xff]
    %v506 = vld [vmem:[#allocation3 + $0xa08] sm:$0xff]
    %v507 = vld [vmem:[#allocation3 + $0xa10] sm:$0xff]
    %v508 = vld [vmem:[#allocation3 + $0xa18] sm:$0xff]
    %v509 = vld [vmem:[#allocation3 + $0xa20] sm:$0xff]
    %v510 = vld [vmem:[#allocation3 + $0xa28] sm:$0xff]
    %v511 = vld [vmem:[#allocation3 + $0xa30] sm:$0xff]
    %v512 = vld [vmem:[#allocation3 + $0xa38] sm:$0xff]
    %v513 = vld [vmem:[#allocation3 + $0xa40] sm:$0xff]
    %v514 = vld [vmem:[#allocation3 + $0xa48] sm:$0xff]
    %v515 = vld [vmem:[#allocation3 + $0xa50] sm:$0xff]
    %v516 = vld [vmem:[#allocation3 + $0xa58] sm:$0xff]
    %v517 = vld [vmem:[#allocation3 + $0xa60] sm:$0xff]
    %v518 = vld [vmem:[#allocation3 + $0xa68] sm:$0xff]
    %v519 = vld [vmem:[#allocation3 + $0xa70] sm:$0xff]
    %v520 = vld [vmem:[#allocation3 + $0xa78] sm:$0xff]
    %v521 = vld [vmem:[#allocation3 + $0xa80] sm:$0xff]
    %v522 = vld [vmem:[#allocation3 + $0xa88] sm:$0xff]
    %v523 = vld [vmem:[#allocation3 + $0xa90] sm:$0xff]
    %v524 = vld [vmem:[#allocation3 + $0xa98] sm:$0xff]
    %v525 = vld [vmem:[#allocation3 + $0xaa0] sm:$0xff]
    %v526 = vld [vmem:[#allocation3 + $0xaa8] sm:$0xff]
    %v527 = vld [vmem:[#allocation3 + $0xab0] sm:$0xff]
    %v528 = vld [vmem:[#allocation3 + $0xab8] sm:$0xff]
    %v529 = vld [vmem:[#allocation3 + $0xac0] sm:$0xff]
    %v530 = vld [vmem:[#allocation3 + $0xac8] sm:$0xff]
    %v531 = vld [vmem:[#allocation3 + $0xad0] sm:$0xff]
    %v532 = vld [vmem:[#allocation3 + $0xad8] sm:$0xff]
    %v533 = vld [vmem:[#allocation3 + $0xae0] sm:$0xff]
    %v534 = vld [vmem:[#allocation3 + $0xae8] sm:$0xff]
    %v535 = vld [vmem:[#allocation3 + $0xaf0] sm:$0xff]
    %v536 = vld [vmem:[#allocation3 + $0xaf8] sm:$0xff]
    %v537 = vld [vmem:[#allocation3 + $0xb00] sm:$0xff]
    %v538 = vld [vmem:[#allocation3 + $0xb08] sm:$0xff]
    %v539 = vld [vmem:[#allocation3 + $0xb10] sm:$0xff]
    %v540 = vld [vmem:[#allocation3 + $0xb18] sm:$0xff]
    %v541 = vld [vmem:[#allocation3 + $0xb20] sm:$0xff]
    %v542 = vld [vmem:[#allocation3 + $0xb28] sm:$0xff]
    %v543 = vld [vmem:[#allocation3 + $0xb30] sm:$0xff]
    %v544 = vld [vmem:[#allocation3 + $0xb38] sm:$0xff]
    %v545 = vld [vmem:[#allocation3 + $0xb40] sm:$0xff]
    %v546 = vld [vmem:[#allocation3 + $0xb48] sm:$0xff]
    %v547 = vld [vmem:[#allocation3 + $0xb50] sm:$0xff]
    %v548 = vld [vmem:[#allocation3 + $0xb58] sm:$0xff]
    %v549 = vld [vmem:[#allocation3 + $0xb60] sm:$0xff]
    %v550 = vld [vmem:[#allocation3 + $0xb68] sm:$0xff]
    %v551 = vld [vmem:[#allocation3 + $0xb70] sm:$0xff]
    %v552 = vld [vmem:[#allocation3 + $0xb78] sm:$0xff]
    %v553 = vld [vmem:[#allocation3 + $0xb80] sm:$0xff]
    %v554 = vld [vmem:[#allocation3 + $0xb88] sm:$0xff]
    %v555 = vld [vmem:[#allocation3 + $0xb90] sm:$0xff]
    %v556 = vld [vmem:[#allocation3 + $0xb98] sm:$0xff]
    %v557 = vld [vmem:[#allocation3 + $0xba0] sm:$0xff]
    %v558 = vld [vmem:[#allocation3 + $0xba8] sm:$0xff]
    %v559 = vld [vmem:[#allocation3 + $0xbb0] sm:$0xff]
    %v560 = vld [vmem:[#allocation3 + $0xbb8] sm:$0xff]
    %v561 = vld [vmem:[#allocation3 + $0xbc0] sm:$0xff]
    %v562 = vld [vmem:[#allocation3 + $0xbc8] sm:$0xff]
    %v563 = vld [vmem:[#allocation3 + $0xbd0] sm:$0xff]
    %v564 = vld [vmem:[#allocation3 + $0xbd8] sm:$0xff]
    %v565 = vld [vmem:[#allocation3 + $0xbe0] sm:$0xff]
    %v566 = vld [vmem:[#allocation3 + $0xbe8] sm:$0xff]
    %v567 = vld [vmem:[#allocation3 + $0xbf0] sm:$0xff]
    %v568 = vld [vmem:[#allocation3 + $0xbf8] sm:$0xff]
    %v569 = vld [vmem:[#allocation3 + $0xc00] sm:$0xff]
    %v570 = vld [vmem:[#allocation3 + $0xc08] sm:$0xff]
    %v571 = vld [vmem:[#allocation3 + $0xc10] sm:$0xff]
    %v572 = vld [vmem:[#allocation3 + $0xc18] sm:$0xff]
    %v573 = vld [vmem:[#allocation3 + $0xc20] sm:$0xff]
    %v574 = vld [vmem:[#allocation3 + $0xc28] sm:$0xff]
    %v575 = vld [vmem:[#allocation3 + $0xc30] sm:$0xff]
    %v576 = vld [vmem:[#allocation3 + $0xc38] sm:$0xff]
    %v577 = vld [vmem:[#allocation3 + $0xc40] sm:$0xff]
    %v578 = vld [vmem:[#allocation3 + $0xc48] sm:$0xff]
    %v579 = vld [vmem:[#allocation3 + $0xc50] sm:$0xff]
    %v580 = vld [vmem:[#allocation3 + $0xc58] sm:$0xff]
    %v581 = vld [vmem:[#allocation3 + $0xc60] sm:$0xff]
    %v582 = vld [vmem:[#allocation3 + $0xc68] sm:$0xff]
    %v583 = vld [vmem:[#allocation3 + $0xc70] sm:$0xff]
    %v584 = vld [vmem:[#allocation3 + $0xc78] sm:$0xff]
    %v585 = vld [vmem:[#allocation3 + $0xc80] sm:$0xff]
    %v586 = vld [vmem:[#allocation3 + $0xc88] sm:$0xff]
    %v587 = vld [vmem:[#allocation3 + $0xc90] sm:$0xff]
    %v588 = vld [vmem:[#allocation3 + $0xc98] sm:$0xff]
    %v589 = vld [vmem:[#allocation3 + $0xca0] sm:$0xff]
    %v590 = vld [vmem:[#allocation3 + $0xca8] sm:$0xff]
    %v591 = vld [vmem:[#allocation3 + $0xcb0] sm:$0xff]
    %v592 = vld [vmem:[#allocation3 + $0xcb8] sm:$0xff]
    %v593 = vld [vmem:[#allocation3 + $0xcc0] sm:$0xff]
    %v594 = vld [vmem:[#allocation3 + $0xcc8] sm:$0xff]
    %v595 = vld [vmem:[#allocation3 + $0xcd0] sm:$0xff]
    %v596 = vld [vmem:[#allocation3 + $0xcd8] sm:$0xff]
    %v597 = vld [vmem:[#allocation3 + $0xce0] sm:$0xff]
    %v598 = vld [vmem:[#allocation3 + $0xce8] sm:$0xff]
    %v599 = vld [vmem:[#allocation3 + $0xcf0] sm:$0xff]
    %v600 = vld [vmem:[#allocation3 + $0xcf8] sm:$0xff]
    %v601 = vld [vmem:[#allocation3 + $0xd00] sm:$0xff]
    %v602 = vld [vmem:[#allocation3 + $0xd08] sm:$0xff]
    %v603 = vld [vmem:[#allocation3 + $0xd10] sm:$0xff]
    %v604 = vld [vmem:[#allocation3 + $0xd18] sm:$0xff]
    %v605 = vld [vmem:[#allocation3 + $0xd20] sm:$0xff]
    %v606 = vld [vmem:[#allocation3 + $0xd28] sm:$0xff]
    %v607 = vld [vmem:[#allocation3 + $0xd30] sm:$0xff]
    %v608 = vld [vmem:[#allocation3 + $0xd38] sm:$0xff]
    %v609 = vld [vmem:[#allocation3 + $0xd40] sm:$0xff]
    %v610 = vld [vmem:[#allocation3 + $0xd48] sm:$0xff]
    %v611 = vld [vmem:[#allocation3 + $0xd50] sm:$0xff]
    %v612 = vld [vmem:[#allocation3 + $0xd58] sm:$0xff]
    %v613 = vld [vmem:[#allocation3 + $0xd60] sm:$0xff]
    %v614 = vld [vmem:[#allocation3 + $0xd68] sm:$0xff]
    %v615 = vld [vmem:[#allocation3 + $0xd70] sm:$0xff]
    %v616 = vld [vmem:[#allocation3 + $0xd78] sm:$0xff]
    %v617 = vld [vmem:[#allocation3 + $0xd80] sm:$0xff]
    %v618 = vld [vmem:[#allocation3 + $0xd88] sm:$0xff]
    %v619 = vld [vmem:[#allocation3 + $0xd90] sm:$0xff]
    %v620 = vld [vmem:[#allocation3 + $0xd98] sm:$0xff]
    %v621 = vld [vmem:[#allocation3 + $0xda0] sm:$0xff]
    %v622 = vld [vmem:[#allocation3 + $0xda8] sm:$0xff]
    %v623 = vld [vmem:[#allocation3 + $0xdb0] sm:$0xff]
    %v624 = vld [vmem:[#allocation3 + $0xdb8] sm:$0xff]
    %v625 = vld [vmem:[#allocation3 + $0xdc0] sm:$0xff]
    %v626 = vld [vmem:[#allocation3 + $0xdc8] sm:$0xff]
    %v627 = vld [vmem:[#allocation3 + $0xdd0] sm:$0xff]
    %v628 = vld [vmem:[#allocation3 + $0xdd8] sm:$0xff]
    %v629 = vld [vmem:[#allocation3 + $0xde0] sm:$0xff]
    %v630 = vld [vmem:[#allocation3 + $0xde8] sm:$0xff]
    %v631 = vld [vmem:[#allocation3 + $0xdf0] sm:$0xff]
    %v632 = vld [vmem:[#allocation3 + $0xdf8] sm:$0xff]
    %v633 = vld [vmem:[#allocation3 + $0xe00] sm:$0xff]
    %v634 = vld [vmem:[#allocation3 + $0xe08] sm:$0xff]
    %v635 = vld [vmem:[#allocation3 + $0xe10] sm:$0xff]
    %v636 = vld [vmem:[#allocation3 + $0xe18] sm:$0xff]
    %v637 = vld [vmem:[#allocation3 + $0xe20] sm:$0xff]
    %v638 = vld [vmem:[#allocation3 + $0xe28] sm:$0xff]
    %v639 = vld [vmem:[#allocation3 + $0xe30] sm:$0xff]
    %v640 = vld [vmem:[#allocation3 + $0xe38] sm:$0xff]
    %v641 = vld [vmem:[#allocation3 + $0xe40] sm:$0xff]
    %v642 = vld [vmem:[#allocation3 + $0xe48] sm:$0xff]
    %v643 = vld [vmem:[#allocation3 + $0xe50] sm:$0xff]
    %v644 = vld [vmem:[#allocation3 + $0xe58] sm:$0xff]
    %v645 = vld [vmem:[#allocation3 + $0xe60] sm:$0xff]
    %v646 = vld [vmem:[#allocation3 + $0xe68] sm:$0xff]
    %v647 = vld [vmem:[#allocation3 + $0xe70] sm:$0xff]
    %v648 = vld [vmem:[#allocation3 + $0xe78] sm:$0xff]
    %v649 = vld [vmem:[#allocation3 + $0xe80] sm:$0xff]
    %v650 = vld [vmem:[#allocation3 + $0xe88] sm:$0xff]
    %v651 = vld [vmem:[#allocation3 + $0xe90] sm:$0xff]
    %v652 = vld [vmem:[#allocation3 + $0xe98] sm:$0xff]
    %v653 = vld [vmem:[#allocation3 + $0xea0] sm:$0xff]
    %v654 = vld [vmem:[#allocation3 + $0xea8] sm:$0xff]
    %v655 = vld [vmem:[#allocation3 + $0xeb0] sm:$0xff]
    %v656 = vld [vmem:[#allocation3 + $0xeb8] sm:$0xff]
    %v657 = vld [vmem:[#allocation3 + $0xec0] sm:$0xff]
    %v658 = vld [vmem:[#allocation3 + $0xec8] sm:$0xff]
    %v659 = vld [vmem:[#allocation3 + $0xed0] sm:$0xff]
    %v660 = vld [vmem:[#allocation3 + $0xed8] sm:$0xff]
    %v661 = vld [vmem:[#allocation3 + $0xee0] sm:$0xff]
    %v662 = vld [vmem:[#allocation3 + $0xee8] sm:$0xff]
    %v663 = vld [vmem:[#allocation3 + $0xef0] sm:$0xff]
    %v664 = vld [vmem:[#allocation3 + $0xef8] sm:$0xff]
    %v665 = vld [vmem:[#allocation3 + $0xf00] sm:$0xff]
    %v666 = vld [vmem:[#allocation3 + $0xf08] sm:$0xff]
    %v667 = vld [vmem:[#allocation3 + $0xf10] sm:$0xff]
    %v668 = vld [vmem:[#allocation3 + $0xf18] sm:$0xff]
    %v669 = vld [vmem:[#allocation3 + $0xf20] sm:$0xff]
    %v670 = vld [vmem:[#allocation3 + $0xf28] sm:$0xff]
    %v671 = vld [vmem:[#allocation3 + $0xf30] sm:$0xff]
    %v672 = vld [vmem:[#allocation3 + $0xf38] sm:$0xff]
    %v673 = vld [vmem:[#allocation3 + $0xf40] sm:$0xff]
    %v674 = vld [vmem:[#allocation3 + $0xf48] sm:$0xff]
    %v675 = vld [vmem:[#allocation3 + $0xf50] sm:$0xff]
    %v676 = vld [vmem:[#allocation3 + $0xf58] sm:$0xff]
    %v677 = vld [vmem:[#allocation3 + $0xf60] sm:$0xff]
    %v678 = vld [vmem:[#allocation3 + $0xf68] sm:$0xff]
    %v679 = vld [vmem:[#allocation3 + $0xf70] sm:$0xff]
    %v680 = vld [vmem:[#allocation3 + $0xf78] sm:$0xff]
    %v681 = vld [vmem:[#allocation3 + $0xf80] sm:$0xff]
    %v682 = vld [vmem:[#allocation3 + $0xf88] sm:$0xff]
    %v683 = vld [vmem:[#allocation3 + $0xf90] sm:$0xff]
    %v684 = vld [vmem:[#allocation3 + $0xf98] sm:$0xff]
    %v685 = vld [vmem:[#allocation3 + $0xfa0] sm:$0xff]
    %v686 = vld [vmem:[#allocation3 + $0xfa8] sm:$0xff]
    %v687 = vld [vmem:[#allocation3 + $0xfb0] sm:$0xff]
    %v688 = vld [vmem:[#allocation3 + $0xfb8] sm:$0xff]
    %v689 = vld [vmem:[#allocation3 + $0xfc0] sm:$0xff]
    %v690 = vld [vmem:[#allocation3 + $0xfc8] sm:$0xff]
    %v691 = vld [vmem:[#allocation3 + $0xfd0] sm:$0xff]
    %v692 = vld [vmem:[#allocation3 + $0xfd8] sm:$0xff]
    %v693 = vld [vmem:[#allocation3 + $0xfe0] sm:$0xff]
    %v694 = vld [vmem:[#allocation3 + $0xfe8] sm:$0xff]
    %v695 = vld [vmem:[#allocation3 + $0xff0] sm:$0xff]
    %v696 = vld [vmem:[#allocation3 + $0xff8] sm:$0xff]
    %v713 = vunpack.c.l.b16 %v169
    %v714 = vunpack.c.h.b16 %v169
    %v715 = vunpack.c.l.b16 %v170
    %v716 = vunpack.c.h.b16 %v170
    %v717 = vunpack.c.l.b16 %v171
    %v718 = vunpack.c.h.b16 %v171
    %v719 = vunpack.c.l.b16 %v172
    %v720 = vunpack.c.h.b16 %v172
    %v721 = vunpack.c.l.b16 %v173
    %v722 = vunpack.c.h.b16 %v173
    %v723 = vunpack.c.l.b16 %v174
    %v724 = vunpack.c.h.b16 %v174
    %v725 = vunpack.c.l.b16 %v175
    %v726 = vunpack.c.h.b16 %v175
    %v727 = vunpack.c.l.b16 %v176
    %v728 = vunpack.c.h.b16 %v176
    %v729 = vunpack.c.l.b16 %v177
    %v730 = vunpack.c.h.b16 %v177
    %v731 = vunpack.c.l.b16 %v178
    %v732 = vunpack.c.h.b16 %v178
    %v733 = vunpack.c.l.b16 %v179
    %v734 = vunpack.c.h.b16 %v179
    %v735 = vunpack.c.l.b16 %v180
    %v736 = vunpack.c.h.b16 %v180
    %v737 = vunpack.c.l.b16 %v181
    %v738 = vunpack.c.h.b16 %v181
    %v739 = vunpack.c.l.b16 %v182
    %v740 = vunpack.c.h.b16 %v182
    %v741 = vunpack.c.l.b16 %v183
    %v742 = vunpack.c.h.b16 %v183
    %v743 = vunpack.c.l.b16 %v184
    %v744 = vunpack.c.h.b16 %v184
    %v745 = vpack.c.b16 %v729, %v713
    %v746 = vpack.c.b16 %v730, %v714
    %v747 = vpack.c.b16 %v731, %v715
    %v748 = vpack.c.b16 %v732, %v716
    %v749 = vpack.c.b16 %v733, %v717
    %v750 = vpack.c.b16 %v734, %v718
    %v751 = vpack.c.b16 %v735, %v719
    %v752 = vpack.c.b16 %v736, %v720
    %v753 = vpack.c.b16 %v737, %v721
    %v754 = vpack.c.b16 %v738, %v722
    %v755 = vpack.c.b16 %v739, %v723
    %v756 = vpack.c.b16 %v740, %v724
    %v757 = vpack.c.b16 %v741, %v725
    %v758 = vpack.c.b16 %v742, %v726
    %v759 = vpack.c.b16 %v743, %v727
    %v760 = vpack.c.b16 %v744, %v728
    %v1289 = vunpack.c.l.b16 %v185
    %v1290 = vunpack.c.h.b16 %v185
    %v1291 = vunpack.c.l.b16 %v186
    %v1292 = vunpack.c.h.b16 %v186
    %v1293 = vunpack.c.l.b16 %v187
    %v1294 = vunpack.c.h.b16 %v187
    %v1295 = vunpack.c.l.b16 %v188
    %v1296 = vunpack.c.h.b16 %v188
    %v1297 = vunpack.c.l.b16 %v189
    %v1298 = vunpack.c.h.b16 %v189
    %v1299 = vunpack.c.l.b16 %v190
    %v1300 = vunpack.c.h.b16 %v190
    %v1301 = vunpack.c.l.b16 %v191
    %v1302 = vunpack.c.h.b16 %v191
    %v1303 = vunpack.c.l.b16 %v192
    %v1304 = vunpack.c.h.b16 %v192
    %v1305 = vunpack.c.l.b16 %v193
    %v1306 = vunpack.c.h.b16 %v193
    %v1307 = vunpack.c.l.b16 %v194
    %v1308 = vunpack.c.h.b16 %v194
    %v1309 = vunpack.c.l.b16 %v195
    %v1310 = vunpack.c.h.b16 %v195
    %v1311 = vunpack.c.l.b16 %v196
    %v1312 = vunpack.c.h.b16 %v196
    %v1313 = vunpack.c.l.b16 %v197
    %v1314 = vunpack.c.h.b16 %v197
    %v1315 = vunpack.c.l.b16 %v198
    %v1316 = vunpack.c.h.b16 %v198
    %v1317 = vunpack.c.l.b16 %v199
    %v1318 = vunpack.c.h.b16 %v199
    %v1319 = vunpack.c.l.b16 %v200
    %v1320 = vunpack.c.h.b16 %v200
    %v1321 = vunpack.c.l.b16 %v201
    %v1322 = vunpack.c.h.b16 %v201
    %v1323 = vunpack.c.l.b16 %v202
    %v1324 = vunpack.c.h.b16 %v202
    %v1325 = vunpack.c.l.b16 %v203
    %v1326 = vunpack.c.h.b16 %v203
    %v1327 = vunpack.c.l.b16 %v204
    %v1328 = vunpack.c.h.b16 %v204
    %v1329 = vunpack.c.l.b16 %v205
    %v1330 = vunpack.c.h.b16 %v205
    %v1331 = vunpack.c.l.b16 %v206
    %v1332 = vunpack.c.h.b16 %v206
    %v1333 = vunpack.c.l.b16 %v207
    %v1334 = vunpack.c.h.b16 %v207
    %v1335 = vunpack.c.l.b16 %v208
    %v1336 = vunpack.c.h.b16 %v208
    %v1337 = vunpack.c.l.b16 %v209
    %v1338 = vunpack.c.h.b16 %v209
    %v1339 = vunpack.c.l.b16 %v210
    %v1340 = vunpack.c.h.b16 %v210
    %v1341 = vunpack.c.l.b16 %v211
    %v1342 = vunpack.c.h.b16 %v211
    %v1343 = vunpack.c.l.b16 %v212
    %v1344 = vunpack.c.h.b16 %v212
    %v1345 = vunpack.c.l.b16 %v213
    %v1346 = vunpack.c.h.b16 %v213
    %v1347 = vunpack.c.l.b16 %v214
    %v1348 = vunpack.c.h.b16 %v214
    %v1349 = vunpack.c.l.b16 %v215
    %v1350 = vunpack.c.h.b16 %v215
    %v1351 = vunpack.c.l.b16 %v216
    %v1352 = vunpack.c.h.b16 %v216
    %v1353 = vunpack.c.l.b16 %v217
    %v1354 = vunpack.c.h.b16 %v217
    %v1355 = vunpack.c.l.b16 %v218
    %v1356 = vunpack.c.h.b16 %v218
    %v1357 = vunpack.c.l.b16 %v219
    %v1358 = vunpack.c.h.b16 %v219
    %v1359 = vunpack.c.l.b16 %v220
    %v1360 = vunpack.c.h.b16 %v220
    %v1361 = vunpack.c.l.b16 %v221
    %v1362 = vunpack.c.h.b16 %v221
    %v1363 = vunpack.c.l.b16 %v222
    %v1364 = vunpack.c.h.b16 %v222
    %v1365 = vunpack.c.l.b16 %v223
    %v1366 = vunpack.c.h.b16 %v223
    %v1367 = vunpack.c.l.b16 %v224
    %v1368 = vunpack.c.h.b16 %v224
    %v1369 = vunpack.c.l.b16 %v225
    %v1370 = vunpack.c.h.b16 %v225
    %v1371 = vunpack.c.l.b16 %v226
    %v1372 = vunpack.c.h.b16 %v226
    %v1373 = vunpack.c.l.b16 %v227
    %v1374 = vunpack.c.h.b16 %v227
    %v1375 = vunpack.c.l.b16 %v228
    %v1376 = vunpack.c.h.b16 %v228
    %v1377 = vunpack.c.l.b16 %v229
    %v1378 = vunpack.c.h.b16 %v229
    %v1379 = vunpack.c.l.b16 %v230
    %v1380 = vunpack.c.h.b16 %v230
    %v1381 = vunpack.c.l.b16 %v231
    %v1382 = vunpack.c.h.b16 %v231
    %v1383 = vunpack.c.l.b16 %v232
    %v1384 = vunpack.c.h.b16 %v232
    %v1385 = vunpack.c.l.b16 %v233
    %v1386 = vunpack.c.h.b16 %v233
    %v1387 = vunpack.c.l.b16 %v234
    %v1388 = vunpack.c.h.b16 %v234
    %v1389 = vunpack.c.l.b16 %v235
    %v1390 = vunpack.c.h.b16 %v235
    %v1391 = vunpack.c.l.b16 %v236
    %v1392 = vunpack.c.h.b16 %v236
    %v1393 = vunpack.c.l.b16 %v237
    %v1394 = vunpack.c.h.b16 %v237
    %v1395 = vunpack.c.l.b16 %v238
    %v1396 = vunpack.c.h.b16 %v238
    %v1397 = vunpack.c.l.b16 %v239
    %v1398 = vunpack.c.h.b16 %v239
    %v1399 = vunpack.c.l.b16 %v240
    %v1400 = vunpack.c.h.b16 %v240
    %v1401 = vunpack.c.l.b16 %v241
    %v1402 = vunpack.c.h.b16 %v241
    %v1403 = vunpack.c.l.b16 %v242
    %v1404 = vunpack.c.h.b16 %v242
    %v1405 = vunpack.c.l.b16 %v243
    %v1406 = vunpack.c.h.b16 %v243
    %v1407 = vunpack.c.l.b16 %v244
    %v1408 = vunpack.c.h.b16 %v244
    %v1409 = vunpack.c.l.b16 %v245
    %v1410 = vunpack.c.h.b16 %v245
    %v1411 = vunpack.c.l.b16 %v246
    %v1412 = vunpack.c.h.b16 %v246
    %v1413 = vunpack.c.l.b16 %v247
    %v1414 = vunpack.c.h.b16 %v247
    %v1415 = vunpack.c.l.b16 %v248
    %v1416 = vunpack.c.h.b16 %v248
    %v1417 = vunpack.c.l.b16 %v249
    %v1418 = vunpack.c.h.b16 %v249
    %v1419 = vunpack.c.l.b16 %v250
    %v1420 = vunpack.c.h.b16 %v250
    %v1421 = vunpack.c.l.b16 %v251
    %v1422 = vunpack.c.h.b16 %v251
    %v1423 = vunpack.c.l.b16 %v252
    %v1424 = vunpack.c.h.b16 %v252
    %v1425 = vunpack.c.l.b16 %v253
    %v1426 = vunpack.c.h.b16 %v253
    %v1427 = vunpack.c.l.b16 %v254
    %v1428 = vunpack.c.h.b16 %v254
    %v1429 = vunpack.c.l.b16 %v255
    %v1430 = vunpack.c.h.b16 %v255
    %v1431 = vunpack.c.l.b16 %v256
    %v1432 = vunpack.c.h.b16 %v256
    %v1433 = vunpack.c.l.b16 %v257
    %v1434 = vunpack.c.h.b16 %v257
    %v1435 = vunpack.c.l.b16 %v258
    %v1436 = vunpack.c.h.b16 %v258
    %v1437 = vunpack.c.l.b16 %v259
    %v1438 = vunpack.c.h.b16 %v259
    %v1439 = vunpack.c.l.b16 %v260
    %v1440 = vunpack.c.h.b16 %v260
    %v1441 = vunpack.c.l.b16 %v261
    %v1442 = vunpack.c.h.b16 %v261
    %v1443 = vunpack.c.l.b16 %v262
    %v1444 = vunpack.c.h.b16 %v262
    %v1445 = vunpack.c.l.b16 %v263
    %v1446 = vunpack.c.h.b16 %v263
    %v1447 = vunpack.c.l.b16 %v264
    %v1448 = vunpack.c.h.b16 %v264
    %v1449 = vunpack.c.l.b16 %v265
    %v1450 = vunpack.c.h.b16 %v265
    %v1451 = vunpack.c.l.b16 %v266
    %v1452 = vunpack.c.h.b16 %v266
    %v1453 = vunpack.c.l.b16 %v267
    %v1454 = vunpack.c.h.b16 %v267
    %v1455 = vunpack.c.l.b16 %v268
    %v1456 = vunpack.c.h.b16 %v268
    %v1457 = vunpack.c.l.b16 %v269
    %v1458 = vunpack.c.h.b16 %v269
    %v1459 = vunpack.c.l.b16 %v270
    %v1460 = vunpack.c.h.b16 %v270
    %v1461 = vunpack.c.l.b16 %v271
    %v1462 = vunpack.c.h.b16 %v271
    %v1463 = vunpack.c.l.b16 %v272
    %v1464 = vunpack.c.h.b16 %v272
    %v1465 = vunpack.c.l.b16 %v273
    %v1466 = vunpack.c.h.b16 %v273
    %v1467 = vunpack.c.l.b16 %v274
    %v1468 = vunpack.c.h.b16 %v274
    %v1469 = vunpack.c.l.b16 %v275
    %v1470 = vunpack.c.h.b16 %v275
    %v1471 = vunpack.c.l.b16 %v276
    %v1472 = vunpack.c.h.b16 %v276
    %v1473 = vunpack.c.l.b16 %v277
    %v1474 = vunpack.c.h.b16 %v277
    %v1475 = vunpack.c.l.b16 %v278
    %v1476 = vunpack.c.h.b16 %v278
    %v1477 = vunpack.c.l.b16 %v279
    %v1478 = vunpack.c.h.b16 %v279
    %v1479 = vunpack.c.l.b16 %v280
    %v1480 = vunpack.c.h.b16 %v280
    %v1481 = vunpack.c.l.b16 %v281
    %v1482 = vunpack.c.h.b16 %v281
    %v1483 = vunpack.c.l.b16 %v282
    %v1484 = vunpack.c.h.b16 %v282
    %v1485 = vunpack.c.l.b16 %v283
    %v1486 = vunpack.c.h.b16 %v283
    %v1487 = vunpack.c.l.b16 %v284
    %v1488 = vunpack.c.h.b16 %v284
    %v1489 = vunpack.c.l.b16 %v285
    %v1490 = vunpack.c.h.b16 %v285
    %v1491 = vunpack.c.l.b16 %v286
    %v1492 = vunpack.c.h.b16 %v286
    %v1493 = vunpack.c.l.b16 %v287
    %v1494 = vunpack.c.h.b16 %v287
    %v1495 = vunpack.c.l.b16 %v288
    %v1496 = vunpack.c.h.b16 %v288
    %v1497 = vunpack.c.l.b16 %v289
    %v1498 = vunpack.c.h.b16 %v289
    %v1499 = vunpack.c.l.b16 %v290
    %v1500 = vunpack.c.h.b16 %v290
    %v1501 = vunpack.c.l.b16 %v291
    %v1502 = vunpack.c.h.b16 %v291
    %v1503 = vunpack.c.l.b16 %v292
    %v1504 = vunpack.c.h.b16 %v292
    %v1505 = vunpack.c.l.b16 %v293
    %v1506 = vunpack.c.h.b16 %v293
    %v1507 = vunpack.c.l.b16 %v294
    %v1508 = vunpack.c.h.b16 %v294
    %v1509 = vunpack.c.l.b16 %v295
    %v1510 = vunpack.c.h.b16 %v295
    %v1511 = vunpack.c.l.b16 %v296
    %v1512 = vunpack.c.h.b16 %v296
    %v1513 = vunpack.c.l.b16 %v297
    %v1514 = vunpack.c.h.b16 %v297
    %v1515 = vunpack.c.l.b16 %v298
    %v1516 = vunpack.c.h.b16 %v298
    %v1517 = vunpack.c.l.b16 %v299
    %v1518 = vunpack.c.h.b16 %v299
    %v1519 = vunpack.c.l.b16 %v300
    %v1520 = vunpack.c.h.b16 %v300
    %v1521 = vunpack.c.l.b16 %v301
    %v1522 = vunpack.c.h.b16 %v301
    %v1523 = vunpack.c.l.b16 %v302
    %v1524 = vunpack.c.h.b16 %v302
    %v1525 = vunpack.c.l.b16 %v303
    %v1526 = vunpack.c.h.b16 %v303
    %v1527 = vunpack.c.l.b16 %v304
    %v1528 = vunpack.c.h.b16 %v304
    %v1529 = vunpack.c.l.b16 %v305
    %v1530 = vunpack.c.h.b16 %v305
    %v1531 = vunpack.c.l.b16 %v306
    %v1532 = vunpack.c.h.b16 %v306
    %v1533 = vunpack.c.l.b16 %v307
    %v1534 = vunpack.c.h.b16 %v307
    %v1535 = vunpack.c.l.b16 %v308
    %v1536 = vunpack.c.h.b16 %v308
    %v1537 = vunpack.c.l.b16 %v309
    %v1538 = vunpack.c.h.b16 %v309
    %v1539 = vunpack.c.l.b16 %v310
    %v1540 = vunpack.c.h.b16 %v310
    %v1541 = vunpack.c.l.b16 %v311
    %v1542 = vunpack.c.h.b16 %v311
    %v1543 = vunpack.c.l.b16 %v312
    %v1544 = vunpack.c.h.b16 %v312
    %v1545 = vunpack.c.l.b16 %v313
    %v1546 = vunpack.c.h.b16 %v313
    %v1547 = vunpack.c.l.b16 %v314
    %v1548 = vunpack.c.h.b16 %v314
    %v1549 = vunpack.c.l.b16 %v315
    %v1550 = vunpack.c.h.b16 %v315
    %v1551 = vunpack.c.l.b16 %v316
    %v1552 = vunpack.c.h.b16 %v316
    %v1553 = vunpack.c.l.b16 %v317
    %v1554 = vunpack.c.h.b16 %v317
    %v1555 = vunpack.c.l.b16 %v318
    %v1556 = vunpack.c.h.b16 %v318
    %v1557 = vunpack.c.l.b16 %v319
    %v1558 = vunpack.c.h.b16 %v319
    %v1559 = vunpack.c.l.b16 %v320
    %v1560 = vunpack.c.h.b16 %v320
    %v1561 = vunpack.c.l.b16 %v321
    %v1562 = vunpack.c.h.b16 %v321
    %v1563 = vunpack.c.l.b16 %v322
    %v1564 = vunpack.c.h.b16 %v322
    %v1565 = vunpack.c.l.b16 %v323
    %v1566 = vunpack.c.h.b16 %v323
    %v1567 = vunpack.c.l.b16 %v324
    %v1568 = vunpack.c.h.b16 %v324
    %v1569 = vunpack.c.l.b16 %v325
    %v1570 = vunpack.c.h.b16 %v325
    %v1571 = vunpack.c.l.b16 %v326
    %v1572 = vunpack.c.h.b16 %v326
    %v1573 = vunpack.c.l.b16 %v327
    %v1574 = vunpack.c.h.b16 %v327
    %v1575 = vunpack.c.l.b16 %v328
    %v1576 = vunpack.c.h.b16 %v328
    %v1577 = vunpack.c.l.b16 %v329
    %v1578 = vunpack.c.h.b16 %v329
    %v1579 = vunpack.c.l.b16 %v330
    %v1580 = vunpack.c.h.b16 %v330
    %v1581 = vunpack.c.l.b16 %v331
    %v1582 = vunpack.c.h.b16 %v331
    %v1583 = vunpack.c.l.b16 %v332
    %v1584 = vunpack.c.h.b16 %v332
    %v1585 = vunpack.c.l.b16 %v333
    %v1586 = vunpack.c.h.b16 %v333
    %v1587 = vunpack.c.l.b16 %v334
    %v1588 = vunpack.c.h.b16 %v334
    %v1589 = vunpack.c.l.b16 %v335
    %v1590 = vunpack.c.h.b16 %v335
    %v1591 = vunpack.c.l.b16 %v336
    %v1592 = vunpack.c.h.b16 %v336
    %v1593 = vunpack.c.l.b16 %v337
    %v1594 = vunpack.c.h.b16 %v337
    %v1595 = vunpack.c.l.b16 %v338
    %v1596 = vunpack.c.h.b16 %v338
    %v1597 = vunpack.c.l.b16 %v339
    %v1598 = vunpack.c.h.b16 %v339
    %v1599 = vunpack.c.l.b16 %v340
    %v1600 = vunpack.c.h.b16 %v340
    %v1601 = vunpack.c.l.b16 %v341
    %v1602 = vunpack.c.h.b16 %v341
    %v1603 = vunpack.c.l.b16 %v342
    %v1604 = vunpack.c.h.b16 %v342
    %v1605 = vunpack.c.l.b16 %v343
    %v1606 = vunpack.c.h.b16 %v343
    %v1607 = vunpack.c.l.b16 %v344
    %v1608 = vunpack.c.h.b16 %v344
    %v1609 = vunpack.c.l.b16 %v345
    %v1610 = vunpack.c.h.b16 %v345
    %v1611 = vunpack.c.l.b16 %v346
    %v1612 = vunpack.c.h.b16 %v346
    %v1613 = vunpack.c.l.b16 %v347
    %v1614 = vunpack.c.h.b16 %v347
    %v1615 = vunpack.c.l.b16 %v348
    %v1616 = vunpack.c.h.b16 %v348
    %v1617 = vunpack.c.l.b16 %v349
    %v1618 = vunpack.c.h.b16 %v349
    %v1619 = vunpack.c.l.b16 %v350
    %v1620 = vunpack.c.h.b16 %v350
    %v1621 = vunpack.c.l.b16 %v351
    %v1622 = vunpack.c.h.b16 %v351
    %v1623 = vunpack.c.l.b16 %v352
    %v1624 = vunpack.c.h.b16 %v352
    %v1625 = vunpack.c.l.b16 %v353
    %v1626 = vunpack.c.h.b16 %v353
    %v1627 = vunpack.c.l.b16 %v354
    %v1628 = vunpack.c.h.b16 %v354
    %v1629 = vunpack.c.l.b16 %v355
    %v1630 = vunpack.c.h.b16 %v355
    %v1631 = vunpack.c.l.b16 %v356
    %v1632 = vunpack.c.h.b16 %v356
    %v1633 = vunpack.c.l.b16 %v357
    %v1634 = vunpack.c.h.b16 %v357
    %v1635 = vunpack.c.l.b16 %v358
    %v1636 = vunpack.c.h.b16 %v358
    %v1637 = vunpack.c.l.b16 %v359
    %v1638 = vunpack.c.h.b16 %v359
    %v1639 = vunpack.c.l.b16 %v360
    %v1640 = vunpack.c.h.b16 %v360
    %v1641 = vunpack.c.l.b16 %v361
    %v1642 = vunpack.c.h.b16 %v361
    %v1643 = vunpack.c.l.b16 %v362
    %v1644 = vunpack.c.h.b16 %v362
    %v1645 = vunpack.c.l.b16 %v363
    %v1646 = vunpack.c.h.b16 %v363
    %v1647 = vunpack.c.l.b16 %v364
    %v1648 = vunpack.c.h.b16 %v364
    %v1649 = vunpack.c.l.b16 %v365
    %v1650 = vunpack.c.h.b16 %v365
    %v1651 = vunpack.c.l.b16 %v366
    %v1652 = vunpack.c.h.b16 %v366
    %v1653 = vunpack.c.l.b16 %v367
    %v1654 = vunpack.c.h.b16 %v367
    %v1655 = vunpack.c.l.b16 %v368
    %v1656 = vunpack.c.h.b16 %v368
    %v1657 = vunpack.c.l.b16 %v369
    %v1658 = vunpack.c.h.b16 %v369
    %v1659 = vunpack.c.l.b16 %v370
    %v1660 = vunpack.c.h.b16 %v370
    %v1661 = vunpack.c.l.b16 %v371
    %v1662 = vunpack.c.h.b16 %v371
    %v1663 = vunpack.c.l.b16 %v372
    %v1664 = vunpack.c.h.b16 %v372
    %v1665 = vunpack.c.l.b16 %v373
    %v1666 = vunpack.c.h.b16 %v373
    %v1667 = vunpack.c.l.b16 %v374
    %v1668 = vunpack.c.h.b16 %v374
    %v1669 = vunpack.c.l.b16 %v375
    %v1670 = vunpack.c.h.b16 %v375
    %v1671 = vunpack.c.l.b16 %v376
    %v1672 = vunpack.c.h.b16 %v376
    %v1673 = vunpack.c.l.b16 %v377
    %v1674 = vunpack.c.h.b16 %v377
    %v1675 = vunpack.c.l.b16 %v378
    %v1676 = vunpack.c.h.b16 %v378
    %v1677 = vunpack.c.l.b16 %v379
    %v1678 = vunpack.c.h.b16 %v379
    %v1679 = vunpack.c.l.b16 %v380
    %v1680 = vunpack.c.h.b16 %v380
    %v1681 = vunpack.c.l.b16 %v381
    %v1682 = vunpack.c.h.b16 %v381
    %v1683 = vunpack.c.l.b16 %v382
    %v1684 = vunpack.c.h.b16 %v382
    %v1685 = vunpack.c.l.b16 %v383
    %v1686 = vunpack.c.h.b16 %v383
    %v1687 = vunpack.c.l.b16 %v384
    %v1688 = vunpack.c.h.b16 %v384
    %v1689 = vunpack.c.l.b16 %v385
    %v1690 = vunpack.c.h.b16 %v385
    %v1691 = vunpack.c.l.b16 %v386
    %v1692 = vunpack.c.h.b16 %v386
    %v1693 = vunpack.c.l.b16 %v387
    %v1694 = vunpack.c.h.b16 %v387
    %v1695 = vunpack.c.l.b16 %v388
    %v1696 = vunpack.c.h.b16 %v388
    %v1697 = vunpack.c.l.b16 %v389
    %v1698 = vunpack.c.h.b16 %v389
    %v1699 = vunpack.c.l.b16 %v390
    %v1700 = vunpack.c.h.b16 %v390
    %v1701 = vunpack.c.l.b16 %v391
    %v1702 = vunpack.c.h.b16 %v391
    %v1703 = vunpack.c.l.b16 %v392
    %v1704 = vunpack.c.h.b16 %v392
    %v1705 = vunpack.c.l.b16 %v393
    %v1706 = vunpack.c.h.b16 %v393
    %v1707 = vunpack.c.l.b16 %v394
    %v1708 = vunpack.c.h.b16 %v394
    %v1709 = vunpack.c.l.b16 %v395
    %v1710 = vunpack.c.h.b16 %v395
    %v1711 = vunpack.c.l.b16 %v396
    %v1712 = vunpack.c.h.b16 %v396
    %v1713 = vunpack.c.l.b16 %v397
    %v1714 = vunpack.c.h.b16 %v397
    %v1715 = vunpack.c.l.b16 %v398
    %v1716 = vunpack.c.h.b16 %v398
    %v1717 = vunpack.c.l.b16 %v399
    %v1718 = vunpack.c.h.b16 %v399
    %v1719 = vunpack.c.l.b16 %v400
    %v1720 = vunpack.c.h.b16 %v400
    %v1721 = vunpack.c.l.b16 %v401
    %v1722 = vunpack.c.h.b16 %v401
    %v1723 = vunpack.c.l.b16 %v402
    %v1724 = vunpack.c.h.b16 %v402
    %v1725 = vunpack.c.l.b16 %v403
    %v1726 = vunpack.c.h.b16 %v403
    %v1727 = vunpack.c.l.b16 %v404
    %v1728 = vunpack.c.h.b16 %v404
    %v1729 = vunpack.c.l.b16 %v405
    %v1730 = vunpack.c.h.b16 %v405
    %v1731 = vunpack.c.l.b16 %v406
    %v1732 = vunpack.c.h.b16 %v406
    %v1733 = vunpack.c.l.b16 %v407
    %v1734 = vunpack.c.h.b16 %v407
    %v1735 = vunpack.c.l.b16 %v408
    %v1736 = vunpack.c.h.b16 %v408
    %v1737 = vunpack.c.l.b16 %v409
    %v1738 = vunpack.c.h.b16 %v409
    %v1739 = vunpack.c.l.b16 %v410
    %v1740 = vunpack.c.h.b16 %v410
    %v1741 = vunpack.c.l.b16 %v411
    %v1742 = vunpack.c.h.b16 %v411
    %v1743 = vunpack.c.l.b16 %v412
    %v1744 = vunpack.c.h.b16 %v412
    %v1745 = vunpack.c.l.b16 %v413
    %v1746 = vunpack.c.h.b16 %v413
    %v1747 = vunpack.c.l.b16 %v414
    %v1748 = vunpack.c.h.b16 %v414
    %v1749 = vunpack.c.l.b16 %v415
    %v1750 = vunpack.c.h.b16 %v415
    %v1751 = vunpack.c.l.b16 %v416
    %v1752 = vunpack.c.h.b16 %v416
    %v1753 = vunpack.c.l.b16 %v417
    %v1754 = vunpack.c.h.b16 %v417
    %v1755 = vunpack.c.l.b16 %v418
    %v1756 = vunpack.c.h.b16 %v418
    %v1757 = vunpack.c.l.b16 %v419
    %v1758 = vunpack.c.h.b16 %v419
    %v1759 = vunpack.c.l.b16 %v420
    %v1760 = vunpack.c.h.b16 %v420
    %v1761 = vunpack.c.l.b16 %v421
    %v1762 = vunpack.c.h.b16 %v421
    %v1763 = vunpack.c.l.b16 %v422
    %v1764 = vunpack.c.h.b16 %v422
    %v1765 = vunpack.c.l.b16 %v423
    %v1766 = vunpack.c.h.b16 %v423
    %v1767 = vunpack.c.l.b16 %v424
    %v1768 = vunpack.c.h.b16 %v424
    %v1769 = vunpack.c.l.b16 %v425
    %v1770 = vunpack.c.h.b16 %v425
    %v1771 = vunpack.c.l.b16 %v426
    %v1772 = vunpack.c.h.b16 %v426
    %v1773 = vunpack.c.l.b16 %v427
    %v1774 = vunpack.c.h.b16 %v427
    %v1775 = vunpack.c.l.b16 %v428
    %v1776 = vunpack.c.h.b16 %v428
    %v1777 = vunpack.c.l.b16 %v429
    %v1778 = vunpack.c.h.b16 %v429
    %v1779 = vunpack.c.l.b16 %v430
    %v1780 = vunpack.c.h.b16 %v430
    %v1781 = vunpack.c.l.b16 %v431
    %v1782 = vunpack.c.h.b16 %v431
    %v1783 = vunpack.c.l.b16 %v432
    %v1784 = vunpack.c.h.b16 %v432
    %v1785 = vunpack.c.l.b16 %v433
    %v1786 = vunpack.c.h.b16 %v433
    %v1787 = vunpack.c.l.b16 %v434
    %v1788 = vunpack.c.h.b16 %v434
    %v1789 = vunpack.c.l.b16 %v435
    %v1790 = vunpack.c.h.b16 %v435
    %v1791 = vunpack.c.l.b16 %v436
    %v1792 = vunpack.c.h.b16 %v436
    %v1793 = vunpack.c.l.b16 %v437
    %v1794 = vunpack.c.h.b16 %v437
    %v1795 = vunpack.c.l.b16 %v438
    %v1796 = vunpack.c.h.b16 %v438
    %v1797 = vunpack.c.l.b16 %v439
    %v1798 = vunpack.c.h.b16 %v439
    %v1799 = vunpack.c.l.b16 %v440
    %v1800 = vunpack.c.h.b16 %v440
    %v1801 = vunpack.c.l.b16 %v441
    %v1802 = vunpack.c.h.b16 %v441
    %v1803 = vunpack.c.l.b16 %v442
    %v1804 = vunpack.c.h.b16 %v442
    %v1805 = vunpack.c.l.b16 %v443
    %v1806 = vunpack.c.h.b16 %v443
    %v1807 = vunpack.c.l.b16 %v444
    %v1808 = vunpack.c.h.b16 %v444
    %v1809 = vunpack.c.l.b16 %v445
    %v1810 = vunpack.c.h.b16 %v445
    %v1811 = vunpack.c.l.b16 %v446
    %v1812 = vunpack.c.h.b16 %v446
    %v1813 = vunpack.c.l.b16 %v447
    %v1814 = vunpack.c.h.b16 %v447
    %v1815 = vunpack.c.l.b16 %v448
    %v1816 = vunpack.c.h.b16 %v448
    %v1817 = vunpack.c.l.b16 %v449
    %v1818 = vunpack.c.h.b16 %v449
    %v1819 = vunpack.c.l.b16 %v450
    %v1820 = vunpack.c.h.b16 %v450
    %v1821 = vunpack.c.l.b16 %v451
    %v1822 = vunpack.c.h.b16 %v451
    %v1823 = vunpack.c.l.b16 %v452
    %v1824 = vunpack.c.h.b16 %v452
    %v1825 = vunpack.c.l.b16 %v453
    %v1826 = vunpack.c.h.b16 %v453
    %v1827 = vunpack.c.l.b16 %v454
    %v1828 = vunpack.c.h.b16 %v454
    %v1829 = vunpack.c.l.b16 %v455
    %v1830 = vunpack.c.h.b16 %v455
    %v1831 = vunpack.c.l.b16 %v456
    %v1832 = vunpack.c.h.b16 %v456
    %v1833 = vunpack.c.l.b16 %v457
    %v1834 = vunpack.c.h.b16 %v457
    %v1835 = vunpack.c.l.b16 %v458
    %v1836 = vunpack.c.h.b16 %v458
    %v1837 = vunpack.c.l.b16 %v459
    %v1838 = vunpack.c.h.b16 %v459
    %v1839 = vunpack.c.l.b16 %v460
    %v1840 = vunpack.c.h.b16 %v460
    %v1841 = vunpack.c.l.b16 %v461
    %v1842 = vunpack.c.h.b16 %v461
    %v1843 = vunpack.c.l.b16 %v462
    %v1844 = vunpack.c.h.b16 %v462
    %v1845 = vunpack.c.l.b16 %v463
    %v1846 = vunpack.c.h.b16 %v463
    %v1847 = vunpack.c.l.b16 %v464
    %v1848 = vunpack.c.h.b16 %v464
    %v1849 = vunpack.c.l.b16 %v465
    %v1850 = vunpack.c.h.b16 %v465
    %v1851 = vunpack.c.l.b16 %v466
    %v1852 = vunpack.c.h.b16 %v466
    %v1853 = vunpack.c.l.b16 %v467
    %v1854 = vunpack.c.h.b16 %v467
    %v1855 = vunpack.c.l.b16 %v468
    %v1856 = vunpack.c.h.b16 %v468
    %v1857 = vunpack.c.l.b16 %v469
    %v1858 = vunpack.c.h.b16 %v469
    %v1859 = vunpack.c.l.b16 %v470
    %v1860 = vunpack.c.h.b16 %v470
    %v1861 = vunpack.c.l.b16 %v471
    %v1862 = vunpack.c.h.b16 %v471
    %v1863 = vunpack.c.l.b16 %v472
    %v1864 = vunpack.c.h.b16 %v472
    %v1865 = vunpack.c.l.b16 %v473
    %v1866 = vunpack.c.h.b16 %v473
    %v1867 = vunpack.c.l.b16 %v474
    %v1868 = vunpack.c.h.b16 %v474
    %v1869 = vunpack.c.l.b16 %v475
    %v1870 = vunpack.c.h.b16 %v475
    %v1871 = vunpack.c.l.b16 %v476
    %v1872 = vunpack.c.h.b16 %v476
    %v1873 = vunpack.c.l.b16 %v477
    %v1874 = vunpack.c.h.b16 %v477
    %v1875 = vunpack.c.l.b16 %v478
    %v1876 = vunpack.c.h.b16 %v478
    %v1877 = vunpack.c.l.b16 %v479
    %v1878 = vunpack.c.h.b16 %v479
    %v1879 = vunpack.c.l.b16 %v480
    %v1880 = vunpack.c.h.b16 %v480
    %v1881 = vunpack.c.l.b16 %v481
    %v1882 = vunpack.c.h.b16 %v481
    %v1883 = vunpack.c.l.b16 %v482
    %v1884 = vunpack.c.h.b16 %v482
    %v1885 = vunpack.c.l.b16 %v483
    %v1886 = vunpack.c.h.b16 %v483
    %v1887 = vunpack.c.l.b16 %v484
    %v1888 = vunpack.c.h.b16 %v484
    %v1889 = vunpack.c.l.b16 %v485
    %v1890 = vunpack.c.h.b16 %v485
    %v1891 = vunpack.c.l.b16 %v486
    %v1892 = vunpack.c.h.b16 %v486
    %v1893 = vunpack.c.l.b16 %v487
    %v1894 = vunpack.c.h.b16 %v487
    %v1895 = vunpack.c.l.b16 %v488
    %v1896 = vunpack.c.h.b16 %v488
    %v1897 = vunpack.c.l.b16 %v489
    %v1898 = vunpack.c.h.b16 %v489
    %v1899 = vunpack.c.l.b16 %v490
    %v1900 = vunpack.c.h.b16 %v490
    %v1901 = vunpack.c.l.b16 %v491
    %v1902 = vunpack.c.h.b16 %v491
    %v1903 = vunpack.c.l.b16 %v492
    %v1904 = vunpack.c.h.b16 %v492
    %v1905 = vunpack.c.l.b16 %v493
    %v1906 = vunpack.c.h.b16 %v493
    %v1907 = vunpack.c.l.b16 %v494
    %v1908 = vunpack.c.h.b16 %v494
    %v1909 = vunpack.c.l.b16 %v495
    %v1910 = vunpack.c.h.b16 %v495
    %v1911 = vunpack.c.l.b16 %v496
    %v1912 = vunpack.c.h.b16 %v496
    %v1913 = vunpack.c.l.b16 %v497
    %v1914 = vunpack.c.h.b16 %v497
    %v1915 = vunpack.c.l.b16 %v498
    %v1916 = vunpack.c.h.b16 %v498
    %v1917 = vunpack.c.l.b16 %v499
    %v1918 = vunpack.c.h.b16 %v499
    %v1919 = vunpack.c.l.b16 %v500
    %v1920 = vunpack.c.h.b16 %v500
    %v1921 = vunpack.c.l.b16 %v501
    %v1922 = vunpack.c.h.b16 %v501
    %v1923 = vunpack.c.l.b16 %v502
    %v1924 = vunpack.c.h.b16 %v502
    %v1925 = vunpack.c.l.b16 %v503
    %v1926 = vunpack.c.h.b16 %v503
    %v1927 = vunpack.c.l.b16 %v504
    %v1928 = vunpack.c.h.b16 %v504
    %v1929 = vunpack.c.l.b16 %v505
    %v1930 = vunpack.c.h.b16 %v505
    %v1931 = vunpack.c.l.b16 %v506
    %v1932 = vunpack.c.h.b16 %v506
    %v1933 = vunpack.c.l.b16 %v507
    %v1934 = vunpack.c.h.b16 %v507
    %v1935 = vunpack.c.l.b16 %v508
    %v1936 = vunpack.c.h.b16 %v508
    %v1937 = vunpack.c.l.b16 %v509
    %v1938 = vunpack.c.h.b16 %v509
    %v1939 = vunpack.c.l.b16 %v510
    %v1940 = vunpack.c.h.b16 %v510
    %v1941 = vunpack.c.l.b16 %v511
    %v1942 = vunpack.c.h.b16 %v511
    %v1943 = vunpack.c.l.b16 %v512
    %v1944 = vunpack.c.h.b16 %v512
    %v1945 = vunpack.c.l.b16 %v513
    %v1946 = vunpack.c.h.b16 %v513
    %v1947 = vunpack.c.l.b16 %v514
    %v1948 = vunpack.c.h.b16 %v514
    %v1949 = vunpack.c.l.b16 %v515
    %v1950 = vunpack.c.h.b16 %v515
    %v1951 = vunpack.c.l.b16 %v516
    %v1952 = vunpack.c.h.b16 %v516
    %v1953 = vunpack.c.l.b16 %v517
    %v1954 = vunpack.c.h.b16 %v517
    %v1955 = vunpack.c.l.b16 %v518
    %v1956 = vunpack.c.h.b16 %v518
    %v1957 = vunpack.c.l.b16 %v519
    %v1958 = vunpack.c.h.b16 %v519
    %v1959 = vunpack.c.l.b16 %v520
    %v1960 = vunpack.c.h.b16 %v520
    %v1961 = vunpack.c.l.b16 %v521
    %v1962 = vunpack.c.h.b16 %v521
    %v1963 = vunpack.c.l.b16 %v522
    %v1964 = vunpack.c.h.b16 %v522
    %v1965 = vunpack.c.l.b16 %v523
    %v1966 = vunpack.c.h.b16 %v523
    %v1967 = vunpack.c.l.b16 %v524
    %v1968 = vunpack.c.h.b16 %v524
    %v1969 = vunpack.c.l.b16 %v525
    %v1970 = vunpack.c.h.b16 %v525
    %v1971 = vunpack.c.l.b16 %v526
    %v1972 = vunpack.c.h.b16 %v526
    %v1973 = vunpack.c.l.b16 %v527
    %v1974 = vunpack.c.h.b16 %v527
    %v1975 = vunpack.c.l.b16 %v528
    %v1976 = vunpack.c.h.b16 %v528
    %v1977 = vunpack.c.l.b16 %v529
    %v1978 = vunpack.c.h.b16 %v529
    %v1979 = vunpack.c.l.b16 %v530
    %v1980 = vunpack.c.h.b16 %v530
    %v1981 = vunpack.c.l.b16 %v531
    %v1982 = vunpack.c.h.b16 %v531
    %v1983 = vunpack.c.l.b16 %v532
    %v1984 = vunpack.c.h.b16 %v532
    %v1985 = vunpack.c.l.b16 %v533
    %v1986 = vunpack.c.h.b16 %v533
    %v1987 = vunpack.c.l.b16 %v534
    %v1988 = vunpack.c.h.b16 %v534
    %v1989 = vunpack.c.l.b16 %v535
    %v1990 = vunpack.c.h.b16 %v535
    %v1991 = vunpack.c.l.b16 %v536
    %v1992 = vunpack.c.h.b16 %v536
    %v1993 = vunpack.c.l.b16 %v537
    %v1994 = vunpack.c.h.b16 %v537
    %v1995 = vunpack.c.l.b16 %v538
    %v1996 = vunpack.c.h.b16 %v538
    %v1997 = vunpack.c.l.b16 %v539
    %v1998 = vunpack.c.h.b16 %v539
    %v1999 = vunpack.c.l.b16 %v540
    %v2000 = vunpack.c.h.b16 %v540
    %v2001 = vunpack.c.l.b16 %v541
    %v2002 = vunpack.c.h.b16 %v541
    %v2003 = vunpack.c.l.b16 %v542
    %v2004 = vunpack.c.h.b16 %v542
    %v2005 = vunpack.c.l.b16 %v543
    %v2006 = vunpack.c.h.b16 %v543
    %v2007 = vunpack.c.l.b16 %v544
    %v2008 = vunpack.c.h.b16 %v544
    %v2009 = vunpack.c.l.b16 %v545
    %v2010 = vunpack.c.h.b16 %v545
    %v2011 = vunpack.c.l.b16 %v546
    %v2012 = vunpack.c.h.b16 %v546
    %v2013 = vunpack.c.l.b16 %v547
    %v2014 = vunpack.c.h.b16 %v547
    %v2015 = vunpack.c.l.b16 %v548
    %v2016 = vunpack.c.h.b16 %v548
    %v2017 = vunpack.c.l.b16 %v549
    %v2018 = vunpack.c.h.b16 %v549
    %v2019 = vunpack.c.l.b16 %v550
    %v2020 = vunpack.c.h.b16 %v550
    %v2021 = vunpack.c.l.b16 %v551
    %v2022 = vunpack.c.h.b16 %v551
    %v2023 = vunpack.c.l.b16 %v552
    %v2024 = vunpack.c.h.b16 %v552
    %v2025 = vunpack.c.l.b16 %v553
    %v2026 = vunpack.c.h.b16 %v553
    %v2027 = vunpack.c.l.b16 %v554
    %v2028 = vunpack.c.h.b16 %v554
    %v2029 = vunpack.c.l.b16 %v555
    %v2030 = vunpack.c.h.b16 %v555
    %v2031 = vunpack.c.l.b16 %v556
    %v2032 = vunpack.c.h.b16 %v556
    %v2033 = vunpack.c.l.b16 %v557
    %v2034 = vunpack.c.h.b16 %v557
    %v2035 = vunpack.c.l.b16 %v558
    %v2036 = vunpack.c.h.b16 %v558
    %v2037 = vunpack.c.l.b16 %v559
    %v2038 = vunpack.c.h.b16 %v559
    %v2039 = vunpack.c.l.b16 %v560
    %v2040 = vunpack.c.h.b16 %v560
    %v2041 = vunpack.c.l.b16 %v561
    %v2042 = vunpack.c.h.b16 %v561
    %v2043 = vunpack.c.l.b16 %v562
    %v2044 = vunpack.c.h.b16 %v562
    %v2045 = vunpack.c.l.b16 %v563
    %v2046 = vunpack.c.h.b16 %v563
    %v2047 = vunpack.c.l.b16 %v564
    %v2048 = vunpack.c.h.b16 %v564
    %v2049 = vunpack.c.l.b16 %v565
    %v2050 = vunpack.c.h.b16 %v565
    %v2051 = vunpack.c.l.b16 %v566
    %v2052 = vunpack.c.h.b16 %v566
    %v2053 = vunpack.c.l.b16 %v567
    %v2054 = vunpack.c.h.b16 %v567
    %v2055 = vunpack.c.l.b16 %v568
    %v2056 = vunpack.c.h.b16 %v568
    %v2057 = vunpack.c.l.b16 %v569
    %v2058 = vunpack.c.h.b16 %v569
    %v2059 = vunpack.c.l.b16 %v570
    %v2060 = vunpack.c.h.b16 %v570
    %v2061 = vunpack.c.l.b16 %v571
    %v2062 = vunpack.c.h.b16 %v571
    %v2063 = vunpack.c.l.b16 %v572
    %v2064 = vunpack.c.h.b16 %v572
    %v2065 = vunpack.c.l.b16 %v573
    %v2066 = vunpack.c.h.b16 %v573
    %v2067 = vunpack.c.l.b16 %v574
    %v2068 = vunpack.c.h.b16 %v574
    %v2069 = vunpack.c.l.b16 %v575
    %v2070 = vunpack.c.h.b16 %v575
    %v2071 = vunpack.c.l.b16 %v576
    %v2072 = vunpack.c.h.b16 %v576
    %v2073 = vunpack.c.l.b16 %v577
    %v2074 = vunpack.c.h.b16 %v577
    %v2075 = vunpack.c.l.b16 %v578
    %v2076 = vunpack.c.h.b16 %v578
    %v2077 = vunpack.c.l.b16 %v579
    %v2078 = vunpack.c.h.b16 %v579
    %v2079 = vunpack.c.l.b16 %v580
    %v2080 = vunpack.c.h.b16 %v580
    %v2081 = vunpack.c.l.b16 %v581
    %v2082 = vunpack.c.h.b16 %v581
    %v2083 = vunpack.c.l.b16 %v582
    %v2084 = vunpack.c.h.b16 %v582
    %v2085 = vunpack.c.l.b16 %v583
    %v2086 = vunpack.c.h.b16 %v583
    %v2087 = vunpack.c.l.b16 %v584
    %v2088 = vunpack.c.h.b16 %v584
    %v2089 = vunpack.c.l.b16 %v585
    %v2090 = vunpack.c.h.b16 %v585
    %v2091 = vunpack.c.l.b16 %v586
    %v2092 = vunpack.c.h.b16 %v586
    %v2093 = vunpack.c.l.b16 %v587
    %v2094 = vunpack.c.h.b16 %v587
    %v2095 = vunpack.c.l.b16 %v588
    %v2096 = vunpack.c.h.b16 %v588
    %v2097 = vunpack.c.l.b16 %v589
    %v2098 = vunpack.c.h.b16 %v589
    %v2099 = vunpack.c.l.b16 %v590
    %v2100 = vunpack.c.h.b16 %v590
    %v2101 = vunpack.c.l.b16 %v591
    %v2102 = vunpack.c.h.b16 %v591
    %v2103 = vunpack.c.l.b16 %v592
    %v2104 = vunpack.c.h.b16 %v592
    %v2105 = vunpack.c.l.b16 %v593
    %v2106 = vunpack.c.h.b16 %v593
    %v2107 = vunpack.c.l.b16 %v594
    %v2108 = vunpack.c.h.b16 %v594
    %v2109 = vunpack.c.l.b16 %v595
    %v2110 = vunpack.c.h.b16 %v595
    %v2111 = vunpack.c.l.b16 %v596
    %v2112 = vunpack.c.h.b16 %v596
    %v2113 = vunpack.c.l.b16 %v597
    %v2114 = vunpack.c.h.b16 %v597
    %v2115 = vunpack.c.l.b16 %v598
    %v2116 = vunpack.c.h.b16 %v598
    %v2117 = vunpack.c.l.b16 %v599
    %v2118 = vunpack.c.h.b16 %v599
    %v2119 = vunpack.c.l.b16 %v600
    %v2120 = vunpack.c.h.b16 %v600
    %v2121 = vunpack.c.l.b16 %v601
    %v2122 = vunpack.c.h.b16 %v601
    %v2123 = vunpack.c.l.b16 %v602
    %v2124 = vunpack.c.h.b16 %v602
    %v2125 = vunpack.c.l.b16 %v603
    %v2126 = vunpack.c.h.b16 %v603
    %v2127 = vunpack.c.l.b16 %v604
    %v2128 = vunpack.c.h.b16 %v604
    %v2129 = vunpack.c.l.b16 %v605
    %v2130 = vunpack.c.h.b16 %v605
    %v2131 = vunpack.c.l.b16 %v606
    %v2132 = vunpack.c.h.b16 %v606
    %v2133 = vunpack.c.l.b16 %v607
    %v2134 = vunpack.c.h.b16 %v607
    %v2135 = vunpack.c.l.b16 %v608
    %v2136 = vunpack.c.h.b16 %v608
    %v2137 = vunpack.c.l.b16 %v609
    %v2138 = vunpack.c.h.b16 %v609
    %v2139 = vunpack.c.l.b16 %v610
    %v2140 = vunpack.c.h.b16 %v610
    %v2141 = vunpack.c.l.b16 %v611
    %v2142 = vunpack.c.h.b16 %v611
    %v2143 = vunpack.c.l.b16 %v612
    %v2144 = vunpack.c.h.b16 %v612
    %v2145 = vunpack.c.l.b16 %v613
    %v2146 = vunpack.c.h.b16 %v613
    %v2147 = vunpack.c.l.b16 %v614
    %v2148 = vunpack.c.h.b16 %v614
    %v2149 = vunpack.c.l.b16 %v615
    %v2150 = vunpack.c.h.b16 %v615
    %v2151 = vunpack.c.l.b16 %v616
    %v2152 = vunpack.c.h.b16 %v616
    %v2153 = vunpack.c.l.b16 %v617
    %v2154 = vunpack.c.h.b16 %v617
    %v2155 = vunpack.c.l.b16 %v618
    %v2156 = vunpack.c.h.b16 %v618
    %v2157 = vunpack.c.l.b16 %v619
    %v2158 = vunpack.c.h.b16 %v619
    %v2159 = vunpack.c.l.b16 %v620
    %v2160 = vunpack.c.h.b16 %v620
    %v2161 = vunpack.c.l.b16 %v621
    %v2162 = vunpack.c.h.b16 %v621
    %v2163 = vunpack.c.l.b16 %v622
    %v2164 = vunpack.c.h.b16 %v622
    %v2165 = vunpack.c.l.b16 %v623
    %v2166 = vunpack.c.h.b16 %v623
    %v2167 = vunpack.c.l.b16 %v624
    %v2168 = vunpack.c.h.b16 %v624
    %v2169 = vunpack.c.l.b16 %v625
    %v2170 = vunpack.c.h.b16 %v625
    %v2171 = vunpack.c.l.b16 %v626
    %v2172 = vunpack.c.h.b16 %v626
    %v2173 = vunpack.c.l.b16 %v627
    %v2174 = vunpack.c.h.b16 %v627
    %v2175 = vunpack.c.l.b16 %v628
    %v2176 = vunpack.c.h.b16 %v628
    %v2177 = vunpack.c.l.b16 %v629
    %v2178 = vunpack.c.h.b16 %v629
    %v2179 = vunpack.c.l.b16 %v630
    %v2180 = vunpack.c.h.b16 %v630
    %v2181 = vunpack.c.l.b16 %v631
    %v2182 = vunpack.c.h.b16 %v631
    %v2183 = vunpack.c.l.b16 %v632
    %v2184 = vunpack.c.h.b16 %v632
    %v2185 = vunpack.c.l.b16 %v633
    %v2186 = vunpack.c.h.b16 %v633
    %v2187 = vunpack.c.l.b16 %v634
    %v2188 = vunpack.c.h.b16 %v634
    %v2189 = vunpack.c.l.b16 %v635
    %v2190 = vunpack.c.h.b16 %v635
    %v2191 = vunpack.c.l.b16 %v636
    %v2192 = vunpack.c.h.b16 %v636
    %v2193 = vunpack.c.l.b16 %v637
    %v2194 = vunpack.c.h.b16 %v637
    %v2195 = vunpack.c.l.b16 %v638
    %v2196 = vunpack.c.h.b16 %v638
    %v2197 = vunpack.c.l.b16 %v639
    %v2198 = vunpack.c.h.b16 %v639
    %v2199 = vunpack.c.l.b16 %v640
    %v2200 = vunpack.c.h.b16 %v640
    %v2201 = vunpack.c.l.b16 %v641
    %v2202 = vunpack.c.h.b16 %v641
    %v2203 = vunpack.c.l.b16 %v642
    %v2204 = vunpack.c.h.b16 %v642
    %v2205 = vunpack.c.l.b16 %v643
    %v2206 = vunpack.c.h.b16 %v643
    %v2207 = vunpack.c.l.b16 %v644
    %v2208 = vunpack.c.h.b16 %v644
    %v2209 = vunpack.c.l.b16 %v645
    %v2210 = vunpack.c.h.b16 %v645
    %v2211 = vunpack.c.l.b16 %v646
    %v2212 = vunpack.c.h.b16 %v646
    %v2213 = vunpack.c.l.b16 %v647
    %v2214 = vunpack.c.h.b16 %v647
    %v2215 = vunpack.c.l.b16 %v648
    %v2216 = vunpack.c.h.b16 %v648
    %v2217 = vunpack.c.l.b16 %v649
    %v2218 = vunpack.c.h.b16 %v649
    %v2219 = vunpack.c.l.b16 %v650
    %v2220 = vunpack.c.h.b16 %v650
    %v2221 = vunpack.c.l.b16 %v651
    %v2222 = vunpack.c.h.b16 %v651
    %v2223 = vunpack.c.l.b16 %v652
    %v2224 = vunpack.c.h.b16 %v652
    %v2225 = vunpack.c.l.b16 %v653
    %v2226 = vunpack.c.h.b16 %v653
    %v2227 = vunpack.c.l.b16 %v654
    %v2228 = vunpack.c.h.b16 %v654
    %v2229 = vunpack.c.l.b16 %v655
    %v2230 = vunpack.c.h.b16 %v655
    %v2231 = vunpack.c.l.b16 %v656
    %v2232 = vunpack.c.h.b16 %v656
    %v2233 = vunpack.c.l.b16 %v657
    %v2234 = vunpack.c.h.b16 %v657
    %v2235 = vunpack.c.l.b16 %v658
    %v2236 = vunpack.c.h.b16 %v658
    %v2237 = vunpack.c.l.b16 %v659
    %v2238 = vunpack.c.h.b16 %v659
    %v2239 = vunpack.c.l.b16 %v660
    %v2240 = vunpack.c.h.b16 %v660
    %v2241 = vunpack.c.l.b16 %v661
    %v2242 = vunpack.c.h.b16 %v661
    %v2243 = vunpack.c.l.b16 %v662
    %v2244 = vunpack.c.h.b16 %v662
    %v2245 = vunpack.c.l.b16 %v663
    %v2246 = vunpack.c.h.b16 %v663
    %v2247 = vunpack.c.l.b16 %v664
    %v2248 = vunpack.c.h.b16 %v664
    %v2249 = vunpack.c.l.b16 %v665
    %v2250 = vunpack.c.h.b16 %v665
    %v2251 = vunpack.c.l.b16 %v666
    %v2252 = vunpack.c.h.b16 %v666
    %v2253 = vunpack.c.l.b16 %v667
    %v2254 = vunpack.c.h.b16 %v667
    %v2255 = vunpack.c.l.b16 %v668
    %v2256 = vunpack.c.h.b16 %v668
    %v2257 = vunpack.c.l.b16 %v669
    %v2258 = vunpack.c.h.b16 %v669
    %v2259 = vunpack.c.l.b16 %v670
    %v2260 = vunpack.c.h.b16 %v670
    %v2261 = vunpack.c.l.b16 %v671
    %v2262 = vunpack.c.h.b16 %v671
    %v2263 = vunpack.c.l.b16 %v672
    %v2264 = vunpack.c.h.b16 %v672
    %v2265 = vunpack.c.l.b16 %v673
    %v2266 = vunpack.c.h.b16 %v673
    %v2267 = vunpack.c.l.b16 %v674
    %v2268 = vunpack.c.h.b16 %v674
    %v2269 = vunpack.c.l.b16 %v675
    %v2270 = vunpack.c.h.b16 %v675
    %v2271 = vunpack.c.l.b16 %v676
    %v2272 = vunpack.c.h.b16 %v676
    %v2273 = vunpack.c.l.b16 %v677
    %v2274 = vunpack.c.h.b16 %v677
    %v2275 = vunpack.c.l.b16 %v678
    %v2276 = vunpack.c.h.b16 %v678
    %v2277 = vunpack.c.l.b16 %v679
    %v2278 = vunpack.c.h.b16 %v679
    %v2279 = vunpack.c.l.b16 %v680
    %v2280 = vunpack.c.h.b16 %v680
    %v2281 = vunpack.c.l.b16 %v681
    %v2282 = vunpack.c.h.b16 %v681
    %v2283 = vunpack.c.l.b16 %v682
    %v2284 = vunpack.c.h.b16 %v682
    %v2285 = vunpack.c.l.b16 %v683
    %v2286 = vunpack.c.h.b16 %v683
    %v2287 = vunpack.c.l.b16 %v684
    %v2288 = vunpack.c.h.b16 %v684
    %v2289 = vunpack.c.l.b16 %v685
    %v2290 = vunpack.c.h.b16 %v685
    %v2291 = vunpack.c.l.b16 %v686
    %v2292 = vunpack.c.h.b16 %v686
    %v2293 = vunpack.c.l.b16 %v687
    %v2294 = vunpack.c.h.b16 %v687
    %v2295 = vunpack.c.l.b16 %v688
    %v2296 = vunpack.c.h.b16 %v688
    %v2297 = vunpack.c.l.b16 %v689
    %v2298 = vunpack.c.h.b16 %v689
    %v2299 = vunpack.c.l.b16 %v690
    %v2300 = vunpack.c.h.b16 %v690
    %v2301 = vunpack.c.l.b16 %v691
    %v2302 = vunpack.c.h.b16 %v691
    %v2303 = vunpack.c.l.b16 %v692
    %v2304 = vunpack.c.h.b16 %v692
    %v2305 = vunpack.c.l.b16 %v693
    %v2306 = vunpack.c.h.b16 %v693
    %v2307 = vunpack.c.l.b16 %v694
    %v2308 = vunpack.c.h.b16 %v694
    %v2309 = vunpack.c.l.b16 %v695
    %v2310 = vunpack.c.h.b16 %v695
    %v2311 = vunpack.c.l.b16 %v696
    %v2312 = vunpack.c.h.b16 %v696
    %v2313 = vpack.c.b16 %v1293, %v1289
    %v2314 = vpack.c.b16 %v1294, %v1290
    %v2315 = vpack.c.b16 %v1295, %v1291
    %v2316 = vpack.c.b16 %v1296, %v1292
    %v2317 = vpack.c.b16 %v1301, %v1297
    %v2318 = vpack.c.b16 %v1302, %v1298
    %v2319 = vpack.c.b16 %v1303, %v1299
    %v2320 = vpack.c.b16 %v1304, %v1300
    %v2321 = vpack.c.b16 %v1309, %v1305
    %v2322 = vpack.c.b16 %v1310, %v1306
    %v2323 = vpack.c.b16 %v1311, %v1307
    %v2324 = vpack.c.b16 %v1312, %v1308
    %v2325 = vpack.c.b16 %v1317, %v1313
    %v2326 = vpack.c.b16 %v1318, %v1314
    %v2327 = vpack.c.b16 %v1319, %v1315
    %v2328 = vpack.c.b16 %v1320, %v1316
    %v2329 = vpack.c.b16 %v1325, %v1321
    %v2330 = vpack.c.b16 %v1326, %v1322
    %v2331 = vpack.c.b16 %v1327, %v1323
    %v2332 = vpack.c.b16 %v1328, %v1324
    %v2333 = vpack.c.b16 %v1333, %v1329
    %v2334 = vpack.c.b16 %v1334, %v1330
    %v2335 = vpack.c.b16 %v1335, %v1331
    %v2336 = vpack.c.b16 %v1336, %v1332
    %v2337 = vpack.c.b16 %v1341, %v1337
    %v2338 = vpack.c.b16 %v1342, %v1338
    %v2339 = vpack.c.b16 %v1343, %v1339
    %v2340 = vpack.c.b16 %v1344, %v1340
    %v2341 = vpack.c.b16 %v1349, %v1345
    %v2342 = vpack.c.b16 %v1350, %v1346
    %v2343 = vpack.c.b16 %v1351, %v1347
    %v2344 = vpack.c.b16 %v1352, %v1348
    %v2345 = vpack.c.b16 %v1357, %v1353
    %v2346 = vpack.c.b16 %v1358, %v1354
    %v2347 = vpack.c.b16 %v1359, %v1355
    %v2348 = vpack.c.b16 %v1360, %v1356
    %v2349 = vpack.c.b16 %v1365, %v1361
    %v2350 = vpack.c.b16 %v1366, %v1362
    %v2351 = vpack.c.b16 %v1367, %v1363
    %v2352 = vpack.c.b16 %v1368, %v1364
    %v2353 = vpack.c.b16 %v1373, %v1369
    %v2354 = vpack.c.b16 %v1374, %v1370
    %v2355 = vpack.c.b16 %v1375, %v1371
    %v2356 = vpack.c.b16 %v1376, %v1372
    %v2357 = vpack.c.b16 %v1381, %v1377
    %v2358 = vpack.c.b16 %v1382, %v1378
    %v2359 = vpack.c.b16 %v1383, %v1379
    %v2360 = vpack.c.b16 %v1384, %v1380
    %v2361 = vpack.c.b16 %v1389, %v1385
    %v2362 = vpack.c.b16 %v1390, %v1386
    %v2363 = vpack.c.b16 %v1391, %v1387
    %v2364 = vpack.c.b16 %v1392, %v1388
    %v2365 = vpack.c.b16 %v1397, %v1393
    %v2366 = vpack.c.b16 %v1398, %v1394
    %v2367 = vpack.c.b16 %v1399, %v1395
    %v2368 = vpack.c.b16 %v1400, %v1396
    %v2369 = vpack.c.b16 %v1405, %v1401
    %v2370 = vpack.c.b16 %v1406, %v1402
    %v2371 = vpack.c.b16 %v1407, %v1403
    %v2372 = vpack.c.b16 %v1408, %v1404
    %v2373 = vpack.c.b16 %v1413, %v1409
    %v2374 = vpack.c.b16 %v1414, %v1410
    %v2375 = vpack.c.b16 %v1415, %v1411
    %v2376 = vpack.c.b16 %v1416, %v1412
    %v2377 = vpack.c.b16 %v1421, %v1417
    %v2378 = vpack.c.b16 %v1422, %v1418
    %v2379 = vpack.c.b16 %v1423, %v1419
    %v2380 = vpack.c.b16 %v1424, %v1420
    %v2381 = vpack.c.b16 %v1429, %v1425
    %v2382 = vpack.c.b16 %v1430, %v1426
    %v2383 = vpack.c.b16 %v1431, %v1427
    %v2384 = vpack.c.b16 %v1432, %v1428
    %v2385 = vpack.c.b16 %v1437, %v1433
    %v2386 = vpack.c.b16 %v1438, %v1434
    %v2387 = vpack.c.b16 %v1439, %v1435
    %v2388 = vpack.c.b16 %v1440, %v1436
    %v2389 = vpack.c.b16 %v1445, %v1441
    %v2390 = vpack.c.b16 %v1446, %v1442
    %v2391 = vpack.c.b16 %v1447, %v1443
    %v2392 = vpack.c.b16 %v1448, %v1444
    %v2393 = vpack.c.b16 %v1453, %v1449
    %v2394 = vpack.c.b16 %v1454, %v1450
    %v2395 = vpack.c.b16 %v1455, %v1451
    %v2396 = vpack.c.b16 %v1456, %v1452
    %v2397 = vpack.c.b16 %v1461, %v1457
    %v2398 = vpack.c.b16 %v1462, %v1458
    %v2399 = vpack.c.b16 %v1463, %v1459
    %v2400 = vpack.c.b16 %v1464, %v1460
    %v2401 = vpack.c.b16 %v1469, %v1465
    %v2402 = vpack.c.b16 %v1470, %v1466
    %v2403 = vpack.c.b16 %v1471, %v1467
    %v2404 = vpack.c.b16 %v1472, %v1468
    %v2405 = vpack.c.b16 %v1477, %v1473
    %v2406 = vpack.c.b16 %v1478, %v1474
    %v2407 = vpack.c.b16 %v1479, %v1475
    %v2408 = vpack.c.b16 %v1480, %v1476
    %v2409 = vpack.c.b16 %v1485, %v1481
    %v2410 = vpack.c.b16 %v1486, %v1482
    %v2411 = vpack.c.b16 %v1487, %v1483
    %v2412 = vpack.c.b16 %v1488, %v1484
    %v2413 = vpack.c.b16 %v1493, %v1489
    %v2414 = vpack.c.b16 %v1494, %v1490
    %v2415 = vpack.c.b16 %v1495, %v1491
    %v2416 = vpack.c.b16 %v1496, %v1492
    %v2417 = vpack.c.b16 %v1501, %v1497
    %v2418 = vpack.c.b16 %v1502, %v1498
    %v2419 = vpack.c.b16 %v1503, %v1499
    %v2420 = vpack.c.b16 %v1504, %v1500
    %v2421 = vpack.c.b16 %v1509, %v1505
    %v2422 = vpack.c.b16 %v1510, %v1506
    %v2423 = vpack.c.b16 %v1511, %v1507
    %v2424 = vpack.c.b16 %v1512, %v1508
    %v2425 = vpack.c.b16 %v1517, %v1513
    %v2426 = vpack.c.b16 %v1518, %v1514
    %v2427 = vpack.c.b16 %v1519, %v1515
    %v2428 = vpack.c.b16 %v1520, %v1516
    %v2429 = vpack.c.b16 %v1525, %v1521
    %v2430 = vpack.c.b16 %v1526, %v1522
    %v2431 = vpack.c.b16 %v1527, %v1523
    %v2432 = vpack.c.b16 %v1528, %v1524
    %v2433 = vpack.c.b16 %v1533, %v1529
    %v2434 = vpack.c.b16 %v1534, %v1530
    %v2435 = vpack.c.b16 %v1535, %v1531
    %v2436 = vpack.c.b16 %v1536, %v1532
    %v2437 = vpack.c.b16 %v1541, %v1537
    %v2438 = vpack.c.b16 %v1542, %v1538
    %v2439 = vpack.c.b16 %v1543, %v1539
    %v2440 = vpack.c.b16 %v1544, %v1540
    %v2441 = vpack.c.b16 %v1549, %v1545
    %v2442 = vpack.c.b16 %v1550, %v1546
    %v2443 = vpack.c.b16 %v1551, %v1547
    %v2444 = vpack.c.b16 %v1552, %v1548
    %v2445 = vpack.c.b16 %v1557, %v1553
    %v2446 = vpack.c.b16 %v1558, %v1554
    %v2447 = vpack.c.b16 %v1559, %v1555
    %v2448 = vpack.c.b16 %v1560, %v1556
    %v2449 = vpack.c.b16 %v1565, %v1561
    %v2450 = vpack.c.b16 %v1566, %v1562
    %v2451 = vpack.c.b16 %v1567, %v1563
    %v2452 = vpack.c.b16 %v1568, %v1564
    %v2453 = vpack.c.b16 %v1573, %v1569
    %v2454 = vpack.c.b16 %v1574, %v1570
    %v2455 = vpack.c.b16 %v1575, %v1571
    %v2456 = vpack.c.b16 %v1576, %v1572
    %v2457 = vpack.c.b16 %v1581, %v1577
    %v2458 = vpack.c.b16 %v1582, %v1578
    %v2459 = vpack.c.b16 %v1583, %v1579
    %v2460 = vpack.c.b16 %v1584, %v1580
    %v2461 = vpack.c.b16 %v1589, %v1585
    %v2462 = vpack.c.b16 %v1590, %v1586
    %v2463 = vpack.c.b16 %v1591, %v1587
    %v2464 = vpack.c.b16 %v1592, %v1588
    %v2465 = vpack.c.b16 %v1597, %v1593
    %v2466 = vpack.c.b16 %v1598, %v1594
    %v2467 = vpack.c.b16 %v1599, %v1595
    %v2468 = vpack.c.b16 %v1600, %v1596
    %v2469 = vpack.c.b16 %v1605, %v1601
    %v2470 = vpack.c.b16 %v1606, %v1602
    %v2471 = vpack.c.b16 %v1607, %v1603
    %v2472 = vpack.c.b16 %v1608, %v1604
    %v2473 = vpack.c.b16 %v1613, %v1609
    %v2474 = vpack.c.b16 %v1614, %v1610
    %v2475 = vpack.c.b16 %v1615, %v1611
    %v2476 = vpack.c.b16 %v1616, %v1612
    %v2477 = vpack.c.b16 %v1621, %v1617
    %v2478 = vpack.c.b16 %v1622, %v1618
    %v2479 = vpack.c.b16 %v1623, %v1619
    %v2480 = vpack.c.b16 %v1624, %v1620
    %v2481 = vpack.c.b16 %v1629, %v1625
    %v2482 = vpack.c.b16 %v1630, %v1626
    %v2483 = vpack.c.b16 %v1631, %v1627
    %v2484 = vpack.c.b16 %v1632, %v1628
    %v2485 = vpack.c.b16 %v1637, %v1633
    %v2486 = vpack.c.b16 %v1638, %v1634
    %v2487 = vpack.c.b16 %v1639, %v1635
    %v2488 = vpack.c.b16 %v1640, %v1636
    %v2489 = vpack.c.b16 %v1645, %v1641
    %v2490 = vpack.c.b16 %v1646, %v1642
    %v2491 = vpack.c.b16 %v1647, %v1643
    %v2492 = vpack.c.b16 %v1648, %v1644
    %v2493 = vpack.c.b16 %v1653, %v1649
    %v2494 = vpack.c.b16 %v1654, %v1650
    %v2495 = vpack.c.b16 %v1655, %v1651
    %v2496 = vpack.c.b16 %v1656, %v1652
    %v2497 = vpack.c.b16 %v1661, %v1657
    %v2498 = vpack.c.b16 %v1662, %v1658
    %v2499 = vpack.c.b16 %v1663, %v1659
    %v2500 = vpack.c.b16 %v1664, %v1660
    %v2501 = vpack.c.b16 %v1669, %v1665
    %v2502 = vpack.c.b16 %v1670, %v1666
    %v2503 = vpack.c.b16 %v1671, %v1667
    %v2504 = vpack.c.b16 %v1672, %v1668
    %v2505 = vpack.c.b16 %v1677, %v1673
    %v2506 = vpack.c.b16 %v1678, %v1674
    %v2507 = vpack.c.b16 %v1679, %v1675
    %v2508 = vpack.c.b16 %v1680, %v1676
    %v2509 = vpack.c.b16 %v1685, %v1681
    %v2510 = vpack.c.b16 %v1686, %v1682
    %v2511 = vpack.c.b16 %v1687, %v1683
    %v2512 = vpack.c.b16 %v1688, %v1684
    %v2513 = vpack.c.b16 %v1693, %v1689
    %v2514 = vpack.c.b16 %v1694, %v1690
    %v2515 = vpack.c.b16 %v1695, %v1691
    %v2516 = vpack.c.b16 %v1696, %v1692
    %v2517 = vpack.c.b16 %v1701, %v1697
    %v2518 = vpack.c.b16 %v1702, %v1698
    %v2519 = vpack.c.b16 %v1703, %v1699
    %v2520 = vpack.c.b16 %v1704, %v1700
    %v2521 = vpack.c.b16 %v1709, %v1705
    %v2522 = vpack.c.b16 %v1710, %v1706
    %v2523 = vpack.c.b16 %v1711, %v1707
    %v2524 = vpack.c.b16 %v1712, %v1708
    %v2525 = vpack.c.b16 %v1717, %v1713
    %v2526 = vpack.c.b16 %v1718, %v1714
    %v2527 = vpack.c.b16 %v1719, %v1715
    %v2528 = vpack.c.b16 %v1720, %v1716
    %v2529 = vpack.c.b16 %v1725, %v1721
    %v2530 = vpack.c.b16 %v1726, %v1722
    %v2531 = vpack.c.b16 %v1727, %v1723
    %v2532 = vpack.c.b16 %v1728, %v1724
    %v2533 = vpack.c.b16 %v1733, %v1729
    %v2534 = vpack.c.b16 %v1734, %v1730
    %v2535 = vpack.c.b16 %v1735, %v1731
    %v2536 = vpack.c.b16 %v1736, %v1732
    %v2537 = vpack.c.b16 %v1741, %v1737
    %v2538 = vpack.c.b16 %v1742, %v1738
    %v2539 = vpack.c.b16 %v1743, %v1739
    %v2540 = vpack.c.b16 %v1744, %v1740
    %v2541 = vpack.c.b16 %v1749, %v1745
    %v2542 = vpack.c.b16 %v1750, %v1746
    %v2543 = vpack.c.b16 %v1751, %v1747
    %v2544 = vpack.c.b16 %v1752, %v1748
    %v2545 = vpack.c.b16 %v1757, %v1753
    %v2546 = vpack.c.b16 %v1758, %v1754
    %v2547 = vpack.c.b16 %v1759, %v1755
    %v2548 = vpack.c.b16 %v1760, %v1756
    %v2549 = vpack.c.b16 %v1765, %v1761
    %v2550 = vpack.c.b16 %v1766, %v1762
    %v2551 = vpack.c.b16 %v1767, %v1763
    %v2552 = vpack.c.b16 %v1768, %v1764
    %v2553 = vpack.c.b16 %v1773, %v1769
    %v2554 = vpack.c.b16 %v1774, %v1770
    %v2555 = vpack.c.b16 %v1775, %v1771
    %v2556 = vpack.c.b16 %v1776, %v1772
    %v2557 = vpack.c.b16 %v1781, %v1777
    %v2558 = vpack.c.b16 %v1782, %v1778
    %v2559 = vpack.c.b16 %v1783, %v1779
    %v2560 = vpack.c.b16 %v1784, %v1780
    %v2561 = vpack.c.b16 %v1789, %v1785
    %v2562 = vpack.c.b16 %v1790, %v1786
    %v2563 = vpack.c.b16 %v1791, %v1787
    %v2564 = vpack.c.b16 %v1792, %v1788
    %v2565 = vpack.c.b16 %v1797, %v1793
    %v2566 = vpack.c.b16 %v1798, %v1794
    %v2567 = vpack.c.b16 %v1799, %v1795
    %v2568 = vpack.c.b16 %v1800, %v1796
    %v2569 = vpack.c.b16 %v1805, %v1801
    %v2570 = vpack.c.b16 %v1806, %v1802
    %v2571 = vpack.c.b16 %v1807, %v1803
    %v2572 = vpack.c.b16 %v1808, %v1804
    %v2573 = vpack.c.b16 %v1813, %v1809
    %v2574 = vpack.c.b16 %v1814, %v1810
    %v2575 = vpack.c.b16 %v1815, %v1811
    %v2576 = vpack.c.b16 %v1816, %v1812
    %v2577 = vpack.c.b16 %v1821, %v1817
    %v2578 = vpack.c.b16 %v1822, %v1818
    %v2579 = vpack.c.b16 %v1823, %v1819
    %v2580 = vpack.c.b16 %v1824, %v1820
    %v2581 = vpack.c.b16 %v1829, %v1825
    %v2582 = vpack.c.b16 %v1830, %v1826
    %v2583 = vpack.c.b16 %v1831, %v1827
    %v2584 = vpack.c.b16 %v1832, %v1828
    %v2585 = vpack.c.b16 %v1837, %v1833
    %v2586 = vpack.c.b16 %v1838, %v1834
    %v2587 = vpack.c.b16 %v1839, %v1835
    %v2588 = vpack.c.b16 %v1840, %v1836
    %v2589 = vpack.c.b16 %v1845, %v1841
    %v2590 = vpack.c.b16 %v1846, %v1842
    %v2591 = vpack.c.b16 %v1847, %v1843
    %v2592 = vpack.c.b16 %v1848, %v1844
    %v2593 = vpack.c.b16 %v1853, %v1849
    %v2594 = vpack.c.b16 %v1854, %v1850
    %v2595 = vpack.c.b16 %v1855, %v1851
    %v2596 = vpack.c.b16 %v1856, %v1852
    %v2597 = vpack.c.b16 %v1861, %v1857
    %v2598 = vpack.c.b16 %v1862, %v1858
    %v2599 = vpack.c.b16 %v1863, %v1859
    %v2600 = vpack.c.b16 %v1864, %v1860
    %v2601 = vpack.c.b16 %v1869, %v1865
    %v2602 = vpack.c.b16 %v1870, %v1866
    %v2603 = vpack.c.b16 %v1871, %v1867
    %v2604 = vpack.c.b16 %v1872, %v1868
    %v2605 = vpack.c.b16 %v1877, %v1873
    %v2606 = vpack.c.b16 %v1878, %v1874
    %v2607 = vpack.c.b16 %v1879, %v1875
    %v2608 = vpack.c.b16 %v1880, %v1876
    %v2609 = vpack.c.b16 %v1885, %v1881
    %v2610 = vpack.c.b16 %v1886, %v1882
    %v2611 = vpack.c.b16 %v1887, %v1883
    %v2612 = vpack.c.b16 %v1888, %v1884
    %v2613 = vpack.c.b16 %v1893, %v1889
    %v2614 = vpack.c.b16 %v1894, %v1890
    %v2615 = vpack.c.b16 %v1895, %v1891
    %v2616 = vpack.c.b16 %v1896, %v1892
    %v2617 = vpack.c.b16 %v1901, %v1897
    %v2618 = vpack.c.b16 %v1902, %v1898
    %v2619 = vpack.c.b16 %v1903, %v1899
    %v2620 = vpack.c.b16 %v1904, %v1900
    %v2621 = vpack.c.b16 %v1909, %v1905
    %v2622 = vpack.c.b16 %v1910, %v1906
    %v2623 = vpack.c.b16 %v1911, %v1907
    %v2624 = vpack.c.b16 %v1912, %v1908
    %v2625 = vpack.c.b16 %v1917, %v1913
    %v2626 = vpack.c.b16 %v1918, %v1914
    %v2627 = vpack.c.b16 %v1919, %v1915
    %v2628 = vpack.c.b16 %v1920, %v1916
    %v2629 = vpack.c.b16 %v1925, %v1921
    %v2630 = vpack.c.b16 %v1926, %v1922
    %v2631 = vpack.c.b16 %v1927, %v1923
    %v2632 = vpack.c.b16 %v1928, %v1924
    %v2633 = vpack.c.b16 %v1933, %v1929
    %v2634 = vpack.c.b16 %v1934, %v1930
    %v2635 = vpack.c.b16 %v1935, %v1931
    %v2636 = vpack.c.b16 %v1936, %v1932
    %v2637 = vpack.c.b16 %v1941, %v1937
    %v2638 = vpack.c.b16 %v1942, %v1938
    %v2639 = vpack.c.b16 %v1943, %v1939
    %v2640 = vpack.c.b16 %v1944, %v1940
    %v2641 = vpack.c.b16 %v1949, %v1945
    %v2642 = vpack.c.b16 %v1950, %v1946
    %v2643 = vpack.c.b16 %v1951, %v1947
    %v2644 = vpack.c.b16 %v1952, %v1948
    %v2645 = vpack.c.b16 %v1957, %v1953
    %v2646 = vpack.c.b16 %v1958, %v1954
    %v2647 = vpack.c.b16 %v1959, %v1955
    %v2648 = vpack.c.b16 %v1960, %v1956
    %v2649 = vpack.c.b16 %v1965, %v1961
    %v2650 = vpack.c.b16 %v1966, %v1962
    %v2651 = vpack.c.b16 %v1967, %v1963
    %v2652 = vpack.c.b16 %v1968, %v1964
    %v2653 = vpack.c.b16 %v1973, %v1969
    %v2654 = vpack.c.b16 %v1974, %v1970
    %v2655 = vpack.c.b16 %v1975, %v1971
    %v2656 = vpack.c.b16 %v1976, %v1972
    %v2657 = vpack.c.b16 %v1981, %v1977
    %v2658 = vpack.c.b16 %v1982, %v1978
    %v2659 = vpack.c.b16 %v1983, %v1979
    %v2660 = vpack.c.b16 %v1984, %v1980
    %v2661 = vpack.c.b16 %v1989, %v1985
    %v2662 = vpack.c.b16 %v1990, %v1986
    %v2663 = vpack.c.b16 %v1991, %v1987
    %v2664 = vpack.c.b16 %v1992, %v1988
    %v2665 = vpack.c.b16 %v1997, %v1993
    %v2666 = vpack.c.b16 %v1998, %v1994
    %v2667 = vpack.c.b16 %v1999, %v1995
    %v2668 = vpack.c.b16 %v2000, %v1996
    %v2669 = vpack.c.b16 %v2005, %v2001
    %v2670 = vpack.c.b16 %v2006, %v2002
    %v2671 = vpack.c.b16 %v2007, %v2003
    %v2672 = vpack.c.b16 %v2008, %v2004
    %v2673 = vpack.c.b16 %v2013, %v2009
    %v2674 = vpack.c.b16 %v2014, %v2010
    %v2675 = vpack.c.b16 %v2015, %v2011
    %v2676 = vpack.c.b16 %v2016, %v2012
    %v2677 = vpack.c.b16 %v2021, %v2017
    %v2678 = vpack.c.b16 %v2022, %v2018
    %v2679 = vpack.c.b16 %v2023, %v2019
    %v2680 = vpack.c.b16 %v2024, %v2020
    %v2681 = vpack.c.b16 %v2029, %v2025
    %v2682 = vpack.c.b16 %v2030, %v2026
    %v2683 = vpack.c.b16 %v2031, %v2027
    %v2684 = vpack.c.b16 %v2032, %v2028
    %v2685 = vpack.c.b16 %v2037, %v2033
    %v2686 = vpack.c.b16 %v2038, %v2034
    %v2687 = vpack.c.b16 %v2039, %v2035
    %v2688 = vpack.c.b16 %v2040, %v2036
    %v2689 = vpack.c.b16 %v2045, %v2041
    %v2690 = vpack.c.b16 %v2046, %v2042
    %v2691 = vpack.c.b16 %v2047, %v2043
    %v2692 = vpack.c.b16 %v2048, %v2044
    %v2693 = vpack.c.b16 %v2053, %v2049
    %v2694 = vpack.c.b16 %v2054, %v2050
    %v2695 = vpack.c.b16 %v2055, %v2051
    %v2696 = vpack.c.b16 %v2056, %v2052
    %v2697 = vpack.c.b16 %v2061, %v2057
    %v2698 = vpack.c.b16 %v2062, %v2058
    %v2699 = vpack.c.b16 %v2063, %v2059
    %v2700 = vpack.c.b16 %v2064, %v2060
    %v2701 = vpack.c.b16 %v2069, %v2065
    %v2702 = vpack.c.b16 %v2070, %v2066
    %v2703 = vpack.c.b16 %v2071, %v2067
    %v2704 = vpack.c.b16 %v2072, %v2068
    %v2705 = vpack.c.b16 %v2077, %v2073
    %v2706 = vpack.c.b16 %v2078, %v2074
    %v2707 = vpack.c.b16 %v2079, %v2075
    %v2708 = vpack.c.b16 %v2080, %v2076
    %v2709 = vpack.c.b16 %v2085, %v2081
    %v2710 = vpack.c.b16 %v2086, %v2082
    %v2711 = vpack.c.b16 %v2087, %v2083
    %v2712 = vpack.c.b16 %v2088, %v2084
    %v2713 = vpack.c.b16 %v2093, %v2089
    %v2714 = vpack.c.b16 %v2094, %v2090
    %v2715 = vpack.c.b16 %v2095, %v2091
    %v2716 = vpack.c.b16 %v2096, %v2092
    %v2717 = vpack.c.b16 %v2101, %v2097
    %v2718 = vpack.c.b16 %v2102, %v2098
    %v2719 = vpack.c.b16 %v2103, %v2099
    %v2720 = vpack.c.b16 %v2104, %v2100
    %v2721 = vpack.c.b16 %v2109, %v2105
    %v2722 = vpack.c.b16 %v2110, %v2106
    %v2723 = vpack.c.b16 %v2111, %v2107
    %v2724 = vpack.c.b16 %v2112, %v2108
    %v2725 = vpack.c.b16 %v2117, %v2113
    %v2726 = vpack.c.b16 %v2118, %v2114
    %v2727 = vpack.c.b16 %v2119, %v2115
    %v2728 = vpack.c.b16 %v2120, %v2116
    %v2729 = vpack.c.b16 %v2125, %v2121
    %v2730 = vpack.c.b16 %v2126, %v2122
    %v2731 = vpack.c.b16 %v2127, %v2123
    %v2732 = vpack.c.b16 %v2128, %v2124
    %v2733 = vpack.c.b16 %v2133, %v2129
    %v2734 = vpack.c.b16 %v2134, %v2130
    %v2735 = vpack.c.b16 %v2135, %v2131
    %v2736 = vpack.c.b16 %v2136, %v2132
    %v2737 = vpack.c.b16 %v2141, %v2137
    %v2738 = vpack.c.b16 %v2142, %v2138
    %v2739 = vpack.c.b16 %v2143, %v2139
    %v2740 = vpack.c.b16 %v2144, %v2140
    %v2741 = vpack.c.b16 %v2149, %v2145
    %v2742 = vpack.c.b16 %v2150, %v2146
    %v2743 = vpack.c.b16 %v2151, %v2147
    %v2744 = vpack.c.b16 %v2152, %v2148
    %v2745 = vpack.c.b16 %v2157, %v2153
    %v2746 = vpack.c.b16 %v2158, %v2154
    %v2747 = vpack.c.b16 %v2159, %v2155
    %v2748 = vpack.c.b16 %v2160, %v2156
    %v2749 = vpack.c.b16 %v2165, %v2161
    %v2750 = vpack.c.b16 %v2166, %v2162
    %v2751 = vpack.c.b16 %v2167, %v2163
    %v2752 = vpack.c.b16 %v2168, %v2164
    %v2753 = vpack.c.b16 %v2173, %v2169
    %v2754 = vpack.c.b16 %v2174, %v2170
    %v2755 = vpack.c.b16 %v2175, %v2171
    %v2756 = vpack.c.b16 %v2176, %v2172
    %v2757 = vpack.c.b16 %v2181, %v2177
    %v2758 = vpack.c.b16 %v2182, %v2178
    %v2759 = vpack.c.b16 %v2183, %v2179
    %v2760 = vpack.c.b16 %v2184, %v2180
    %v2761 = vpack.c.b16 %v2189, %v2185
    %v2762 = vpack.c.b16 %v2190, %v2186
    %v2763 = vpack.c.b16 %v2191, %v2187
    %v2764 = vpack.c.b16 %v2192, %v2188
    %v2765 = vpack.c.b16 %v2197, %v2193
    %v2766 = vpack.c.b16 %v2198, %v2194
    %v2767 = vpack.c.b16 %v2199, %v2195
    %v2768 = vpack.c.b16 %v2200, %v2196
    %v2769 = vpack.c.b16 %v2205, %v2201
    %v2770 = vpack.c.b16 %v2206, %v2202
    %v2771 = vpack.c.b16 %v2207, %v2203
    %v2772 = vpack.c.b16 %v2208, %v2204
    %v2773 = vpack.c.b16 %v2213, %v2209
    %v2774 = vpack.c.b16 %v2214, %v2210
    %v2775 = vpack.c.b16 %v2215, %v2211
    %v2776 = vpack.c.b16 %v2216, %v2212
    %v2777 = vpack.c.b16 %v2221, %v2217
    %v2778 = vpack.c.b16 %v2222, %v2218
    %v2779 = vpack.c.b16 %v2223, %v2219
    %v2780 = vpack.c.b16 %v2224, %v2220
    %v2781 = vpack.c.b16 %v2229, %v2225
    %v2782 = vpack.c.b16 %v2230, %v2226
    %v2783 = vpack.c.b16 %v2231, %v2227
    %v2784 = vpack.c.b16 %v2232, %v2228
    %v2785 = vpack.c.b16 %v2237, %v2233
    %v2786 = vpack.c.b16 %v2238, %v2234
    %v2787 = vpack.c.b16 %v2239, %v2235
    %v2788 = vpack.c.b16 %v2240, %v2236
    %v2789 = vpack.c.b16 %v2245, %v2241
    %v2790 = vpack.c.b16 %v2246, %v2242
    %v2791 = vpack.c.b16 %v2247, %v2243
    %v2792 = vpack.c.b16 %v2248, %v2244
    %v2793 = vpack.c.b16 %v2253, %v2249
    %v2794 = vpack.c.b16 %v2254, %v2250
    %v2795 = vpack.c.b16 %v2255, %v2251
    %v2796 = vpack.c.b16 %v2256, %v2252
    %v2797 = vpack.c.b16 %v2261, %v2257
    %v2798 = vpack.c.b16 %v2262, %v2258
    %v2799 = vpack.c.b16 %v2263, %v2259
    %v2800 = vpack.c.b16 %v2264, %v2260
    %v2801 = vpack.c.b16 %v2269, %v2265
    %v2802 = vpack.c.b16 %v2270, %v2266
    %v2803 = vpack.c.b16 %v2271, %v2267
    %v2804 = vpack.c.b16 %v2272, %v2268
    %v2805 = vpack.c.b16 %v2277, %v2273
    %v2806 = vpack.c.b16 %v2278, %v2274
    %v2807 = vpack.c.b16 %v2279, %v2275
    %v2808 = vpack.c.b16 %v2280, %v2276
    %v2809 = vpack.c.b16 %v2285, %v2281
    %v2810 = vpack.c.b16 %v2286, %v2282
    %v2811 = vpack.c.b16 %v2287, %v2283
    %v2812 = vpack.c.b16 %v2288, %v2284
    %v2813 = vpack.c.b16 %v2293, %v2289
    %v2814 = vpack.c.b16 %v2294, %v2290
    %v2815 = vpack.c.b16 %v2295, %v2291
    %v2816 = vpack.c.b16 %v2296, %v2292
    %v2817 = vpack.c.b16 %v2301, %v2297
    %v2818 = vpack.c.b16 %v2302, %v2298
    %v2819 = vpack.c.b16 %v2303, %v2299
    %v2820 = vpack.c.b16 %v2304, %v2300
    %v2821 = vpack.c.b16 %v2309, %v2305
    %v2822 = vpack.c.b16 %v2310, %v2306
    %v2823 = vpack.c.b16 %v2311, %v2307
    %v2824 = vpack.c.b16 %v2312, %v2308
    %3337 = vmatpush.bf16.msra.mxu0 %v2341
    %3338 = vmatpush.bf16.msra.mxu0 %v2337
    %3339 = vmatpush.bf16.msra.mxu0 %v2333
    %3340 = vmatpush.bf16.msra.mxu0 %v2329
    %3341 = vmatpush.bf16.msra.mxu0 %v2325
    %3342 = vmatpush.bf16.msra.mxu0 %v2321
    %3343 = vmatpush.bf16.msra.mxu0 %v2317
    %3344 = vmatpush.bf16.msra.mxu0 %v2313
    %3345 = vmatmul.bf16.gmra.mxu0 %v745
    %v3346 = vpop.f32.mrf.mxu0
    %v3347 = vadd.f32 0.0, %v3346
    %v3348 = vpop.f32.mrf.mxu0
    %v3349 = vadd.f32 0.0, %v3348
    %3350 = vdwg.mxu0
    %3351 = vmatpush.bf16.msra.mxu0 %v2373
    %3352 = vmatpush.bf16.msra.mxu0 %v2369
    %3353 = vmatpush.bf16.msra.mxu0 %v2365
    %3354 = vmatpush.bf16.msra.mxu0 %v2361
    %3355 = vmatpush.bf16.msra.mxu0 %v2357
    %3356 = vmatpush.bf16.msra.mxu0 %v2353
    %3357 = vmatpush.bf16.msra.mxu0 %v2349
    %3358 = vmatpush.bf16.msra.mxu0 %v2345
    %3359 = vmatmul.bf16.gmra.mxu0 %v746
    %v3360 = vpop.f32.mrf.mxu0
    %v3361 = vadd.f32 %v3347, %v3360
    %v3362 = vpop.f32.mrf.mxu0
    %v3363 = vadd.f32 %v3349, %v3362
    %3364 = vdwg.mxu0
    %3365 = vmatpush.bf16.msra.mxu0 %v2405
    %3366 = vmatpush.bf16.msra.mxu0 %v2401
    %3367 = vmatpush.bf16.msra.mxu0 %v2397
    %3368 = vmatpush.bf16.msra.mxu0 %v2393
    %3369 = vmatpush.bf16.msra.mxu0 %v2389
    %3370 = vmatpush.bf16.msra.mxu0 %v2385
    %3371 = vmatpush.bf16.msra.mxu0 %v2381
    %3372 = vmatpush.bf16.msra.mxu0 %v2377
    %3373 = vmatmul.bf16.gmra.mxu0 %v747
    %v3374 = vpop.f32.mrf.mxu0
    %v3375 = vadd.f32 %v3361, %v3374
    %v3376 = vpop.f32.mrf.mxu0
    %v3377 = vadd.f32 %v3363, %v3376
    %3378 = vdwg.mxu0
    %3379 = vmatpush.bf16.msra.mxu0 %v2437
    %3380 = vmatpush.bf16.msra.mxu0 %v2433
    %3381 = vmatpush.bf16.msra.mxu0 %v2429
    %3382 = vmatpush.bf16.msra.mxu0 %v2425
    %3383 = vmatpush.bf16.msra.mxu0 %v2421
    %3384 = vmatpush.bf16.msra.mxu0 %v2417
    %3385 = vmatpush.bf16.msra.mxu0 %v2413
    %3386 = vmatpush.bf16.msra.mxu0 %v2409
    %3387 = vmatmul.bf16.gmra.mxu0 %v748
    %v3388 = vpop.f32.mrf.mxu0
    %v3389 = vadd.f32 %v3375, %v3388
    %v3390 = vpop.f32.mrf.mxu0
    %v3391 = vadd.f32 %v3377, %v3390
    %3392 = vdwg.mxu0
    %3393 = vmatpush.bf16.msra.mxu0 %v2469
    %3394 = vmatpush.bf16.msra.mxu0 %v2465
    %3395 = vmatpush.bf16.msra.mxu0 %v2461
    %3396 = vmatpush.bf16.msra.mxu0 %v2457
    %3397 = vmatpush.bf16.msra.mxu0 %v2453
    %3398 = vmatpush.bf16.msra.mxu0 %v2449
    %3399 = vmatpush.bf16.msra.mxu0 %v2445
    %3400 = vmatpush.bf16.msra.mxu0 %v2441
    %3401 = vmatmul.bf16.gmra.mxu0 %v749
    %v3402 = vpop.f32.mrf.mxu0
    %v3403 = vadd.f32 %v3389, %v3402
    %v3404 = vpop.f32.mrf.mxu0
    %v3405 = vadd.f32 %v3391, %v3404
    %3406 = vdwg.mxu0
    %3407 = vmatpush.bf16.msra.mxu0 %v2501
    %3408 = vmatpush.bf16.msra.mxu0 %v2497
    %3409 = vmatpush.bf16.msra.mxu0 %v2493
    %3410 = vmatpush.bf16.msra.mxu0 %v2489
    %3411 = vmatpush.bf16.msra.mxu0 %v2485
    %3412 = vmatpush.bf16.msra.mxu0 %v2481
    %3413 = vmatpush.bf16.msra.mxu0 %v2477
    %3414 = vmatpush.bf16.msra.mxu0 %v2473
    %3415 = vmatmul.bf16.gmra.mxu0 %v750
    %v3416 = vpop.f32.mrf.mxu0
    %v3417 = vadd.f32 %v3403, %v3416
    %v3418 = vpop.f32.mrf.mxu0
    %v3419 = vadd.f32 %v3405, %v3418
    %3420 = vdwg.mxu0
    %3421 = vmatpush.bf16.msra.mxu0 %v2533
    %3422 = vmatpush.bf16.msra.mxu0 %v2529
    %3423 = vmatpush.bf16.msra.mxu0 %v2525
    %3424 = vmatpush.bf16.msra.mxu0 %v2521
    %3425 = vmatpush.bf16.msra.mxu0 %v2517
    %3426 = vmatpush.bf16.msra.mxu0 %v2513
    %3427 = vmatpush.bf16.msra.mxu0 %v2509
    %3428 = vmatpush.bf16.msra.mxu0 %v2505
    %3429 = vmatmul.bf16.gmra.mxu0 %v751
    %v3430 = vpop.f32.mrf.mxu0
    %v3431 = vadd.f32 %v3417, %v3430
    %v3432 = vpop.f32.mrf.mxu0
    %v3433 = vadd.f32 %v3419, %v3432
    %3434 = vdwg.mxu0
    %3435 = vmatpush.bf16.msra.mxu0 %v2565
    %3436 = vmatpush.bf16.msra.mxu0 %v2561
    %3437 = vmatpush.bf16.msra.mxu0 %v2557
    %3438 = vmatpush.bf16.msra.mxu0 %v2553
    %3439 = vmatpush.bf16.msra.mxu0 %v2549
    %3440 = vmatpush.bf16.msra.mxu0 %v2545
    %3441 = vmatpush.bf16.msra.mxu0 %v2541
    %3442 = vmatpush.bf16.msra.mxu0 %v2537
    %3443 = vmatmul.bf16.gmra.mxu0 %v752
    %v3444 = vpop.f32.mrf.mxu0
    %v3445 = vadd.f32 %v3431, %v3444
    %v3446 = vpop.f32.mrf.mxu0
    %v3447 = vadd.f32 %v3433, %v3446
    %3448 = vdwg.mxu0
    %3449 = vmatpush.bf16.msra.mxu0 %v2597
    %3450 = vmatpush.bf16.msra.mxu0 %v2593
    %3451 = vmatpush.bf16.msra.mxu0 %v2589
    %3452 = vmatpush.bf16.msra.mxu0 %v2585
    %3453 = vmatpush.bf16.msra.mxu0 %v2581
    %3454 = vmatpush.bf16.msra.mxu0 %v2577
    %3455 = vmatpush.bf16.msra.mxu0 %v2573
    %3456 = vmatpush.bf16.msra.mxu0 %v2569
    %3457 = vmatmul.bf16.gmra.mxu0 %v753
    %v3458 = vpop.f32.mrf.mxu0
    %v3459 = vadd.f32 %v3445, %v3458
    %v3460 = vpop.f32.mrf.mxu0
    %v3461 = vadd.f32 %v3447, %v3460
    %3462 = vdwg.mxu0
    %3463 = vmatpush.bf16.msra.mxu0 %v2629
    %3464 = vmatpush.bf16.msra.mxu0 %v2625
    %3465 = vmatpush.bf16.msra.mxu0 %v2621
    %3466 = vmatpush.bf16.msra.mxu0 %v2617
    %3467 = vmatpush.bf16.msra.mxu0 %v2613
    %3468 = vmatpush.bf16.msra.mxu0 %v2609
    %3469 = vmatpush.bf16.msra.mxu0 %v2605
    %3470 = vmatpush.bf16.msra.mxu0 %v2601
    %3471 = vmatmul.bf16.gmra.mxu0 %v754
    %v3472 = vpop.f32.mrf.mxu0
    %v3473 = vadd.f32 %v3459, %v3472
    %v3474 = vpop.f32.mrf.mxu0
    %v3475 = vadd.f32 %v3461, %v3474
    %3476 = vdwg.mxu0
    %3477 = vmatpush.bf16.msra.mxu0 %v2661
    %3478 = vmatpush.bf16.msra.mxu0 %v2657
    %3479 = vmatpush.bf16.msra.mxu0 %v2653
    %3480 = vmatpush.bf16.msra.mxu0 %v2649
    %3481 = vmatpush.bf16.msra.mxu0 %v2645
    %3482 = vmatpush.bf16.msra.mxu0 %v2641
    %3483 = vmatpush.bf16.msra.mxu0 %v2637
    %3484 = vmatpush.bf16.msra.mxu0 %v2633
    %3485 = vmatmul.bf16.gmra.mxu0 %v755
    %v3486 = vpop.f32.mrf.mxu0
    %v3487 = vadd.f32 %v3473, %v3486
    %v3488 = vpop.f32.mrf.mxu0
    %v3489 = vadd.f32 %v3475, %v3488
    %3490 = vdwg.mxu0
    %3491 = vmatpush.bf16.msra.mxu0 %v2693
    %3492 = vmatpush.bf16.msra.mxu0 %v2689
    %3493 = vmatpush.bf16.msra.mxu0 %v2685
    %3494 = vmatpush.bf16.msra.mxu0 %v2681
    %3495 = vmatpush.bf16.msra.mxu0 %v2677
    %3496 = vmatpush.bf16.msra.mxu0 %v2673
    %3497 = vmatpush.bf16.msra.mxu0 %v2669
    %3498 = vmatpush.bf16.msra.mxu0 %v2665
    %3499 = vmatmul.bf16.gmra.mxu0 %v756
    %v3500 = vpop.f32.mrf.mxu0
    %v3501 = vadd.f32 %v3487, %v3500
    %v3502 = vpop.f32.mrf.mxu0
    %v3503 = vadd.f32 %v3489, %v3502
    %3504 = vdwg.mxu0
    %3505 = vmatpush.bf16.msra.mxu0 %v2725
    %3506 = vmatpush.bf16.msra.mxu0 %v2721
    %3507 = vmatpush.bf16.msra.mxu0 %v2717
    %3508 = vmatpush.bf16.msra.mxu0 %v2713
    %3509 = vmatpush.bf16.msra.mxu0 %v2709
    %3510 = vmatpush.bf16.msra.mxu0 %v2705
    %3511 = vmatpush.bf16.msra.mxu0 %v2701
    %3512 = vmatpush.bf16.msra.mxu0 %v2697
    %3513 = vmatmul.bf16.gmra.mxu0 %v757
    %v3514 = vpop.f32.mrf.mxu0
    %v3515 = vadd.f32 %v3501, %v3514
    %v3516 = vpop.f32.mrf.mxu0
    %v3517 = vadd.f32 %v3503, %v3516
    %3518 = vdwg.mxu0
    %3519 = vmatpush.bf16.msra.mxu0 %v2757
    %3520 = vmatpush.bf16.msra.mxu0 %v2753
    %3521 = vmatpush.bf16.msra.mxu0 %v2749
    %3522 = vmatpush.bf16.msra.mxu0 %v2745
    %3523 = vmatpush.bf16.msra.mxu0 %v2741
    %3524 = vmatpush.bf16.msra.mxu0 %v2737
    %3525 = vmatpush.bf16.msra.mxu0 %v2733
    %3526 = vmatpush.bf16.msra.mxu0 %v2729
    %3527 = vmatmul.bf16.gmra.mxu0 %v758
    %v3528 = vpop.f32.mrf.mxu0
    %v3529 = vadd.f32 %v3515, %v3528
    %v3530 = vpop.f32.mrf.mxu0
    %v3531 = vadd.f32 %v3517, %v3530
    %3532 = vdwg.mxu0
    %3533 = vmatpush.bf16.msra.mxu0 %v2789
    %3534 = vmatpush.bf16.msra.mxu0 %v2785
    %3535 = vmatpush.bf16.msra.mxu0 %v2781
    %3536 = vmatpush.bf16.msra.mxu0 %v2777
    %3537 = vmatpush.bf16.msra.mxu0 %v2773
    %3538 = vmatpush.bf16.msra.mxu0 %v2769
    %3539 = vmatpush.bf16.msra.mxu0 %v2765
    %3540 = vmatpush.bf16.msra.mxu0 %v2761
    %3541 = vmatmul.bf16.gmra.mxu0 %v759
    %v3542 = vpop.f32.mrf.mxu0
    %v3543 = vadd.f32 %v3529, %v3542
    %v3544 = vpop.f32.mrf.mxu0
    %v3545 = vadd.f32 %v3531, %v3544
    %3546 = vdwg.mxu0
    %3547 = vmatpush.bf16.msra.mxu0 %v2821
    %3548 = vmatpush.bf16.msra.mxu0 %v2817
    %3549 = vmatpush.bf16.msra.mxu0 %v2813
    %3550 = vmatpush.bf16.msra.mxu0 %v2809
    %3551 = vmatpush.bf16.msra.mxu0 %v2805
    %3552 = vmatpush.bf16.msra.mxu0 %v2801
    %3553 = vmatpush.bf16.msra.mxu0 %v2797
    %3554 = vmatpush.bf16.msra.mxu0 %v2793
    %3555 = vmatmul.bf16.gmra.mxu0 %v760
    %v3556 = vpop.f32.mrf.mxu0
    %v3557 = vadd.f32 %v3543, %v3556
    %v3558 = vpop.f32.mrf.mxu0
    %v3559 = vadd.f32 %v3545, %v3558
    %3560 = vdwg.mxu0
    %3561 = vmatpush.bf16.msra.mxu0 %v2342
    %3562 = vmatpush.bf16.msra.mxu0 %v2338
    %3563 = vmatpush.bf16.msra.mxu0 %v2334
    %3564 = vmatpush.bf16.msra.mxu0 %v2330
    %3565 = vmatpush.bf16.msra.mxu0 %v2326
    %3566 = vmatpush.bf16.msra.mxu0 %v2322
    %3567 = vmatpush.bf16.msra.mxu0 %v2318
    %3568 = vmatpush.bf16.msra.mxu0 %v2314
    %3569 = vmatmul.bf16.gmra.mxu0 %v745
    %v3570 = vpop.f32.mrf.mxu0
    %v3571 = vadd.f32 0.0, %v3570
    %v3572 = vpop.f32.mrf.mxu0
    %v3573 = vadd.f32 0.0, %v3572
    %3574 = vdwg.mxu0
    %3575 = vmatpush.bf16.msra.mxu0 %v2374
    %3576 = vmatpush.bf16.msra.mxu0 %v2370
    %3577 = vmatpush.bf16.msra.mxu0 %v2366
    %3578 = vmatpush.bf16.msra.mxu0 %v2362
    %3579 = vmatpush.bf16.msra.mxu0 %v2358
    %3580 = vmatpush.bf16.msra.mxu0 %v2354
    %3581 = vmatpush.bf16.msra.mxu0 %v2350
    %3582 = vmatpush.bf16.msra.mxu0 %v2346
    %3583 = vmatmul.bf16.gmra.mxu0 %v746
    %v3584 = vpop.f32.mrf.mxu0
    %v3585 = vadd.f32 %v3571, %v3584
    %v3586 = vpop.f32.mrf.mxu0
    %v3587 = vadd.f32 %v3573, %v3586
    %3588 = vdwg.mxu0
    %3589 = vmatpush.bf16.msra.mxu0 %v2406
    %3590 = vmatpush.bf16.msra.mxu0 %v2402
    %3591 = vmatpush.bf16.msra.mxu0 %v2398
    %3592 = vmatpush.bf16.msra.mxu0 %v2394
    %3593 = vmatpush.bf16.msra.mxu0 %v2390
    %3594 = vmatpush.bf16.msra.mxu0 %v2386
    %3595 = vmatpush.bf16.msra.mxu0 %v2382
    %3596 = vmatpush.bf16.msra.mxu0 %v2378
    %3597 = vmatmul.bf16.gmra.mxu0 %v747
    %v3598 = vpop.f32.mrf.mxu0
    %v3599 = vadd.f32 %v3585, %v3598
    %v3600 = vpop.f32.mrf.mxu0
    %v3601 = vadd.f32 %v3587, %v3600
    %3602 = vdwg.mxu0
    %3603 = vmatpush.bf16.msra.mxu0 %v2438
    %3604 = vmatpush.bf16.msra.mxu0 %v2434
    %3605 = vmatpush.bf16.msra.mxu0 %v2430
    %3606 = vmatpush.bf16.msra.mxu0 %v2426
    %3607 = vmatpush.bf16.msra.mxu0 %v2422
    %3608 = vmatpush.bf16.msra.mxu0 %v2418
    %3609 = vmatpush.bf16.msra.mxu0 %v2414
    %3610 = vmatpush.bf16.msra.mxu0 %v2410
    %3611 = vmatmul.bf16.gmra.mxu0 %v748
    %v3612 = vpop.f32.mrf.mxu0
    %v3613 = vadd.f32 %v3599, %v3612
    %v3614 = vpop.f32.mrf.mxu0
    %v3615 = vadd.f32 %v3601, %v3614
    %3616 = vdwg.mxu0
    %3617 = vmatpush.bf16.msra.mxu0 %v2470
    %3618 = vmatpush.bf16.msra.mxu0 %v2466
    %3619 = vmatpush.bf16.msra.mxu0 %v2462
    %3620 = vmatpush.bf16.msra.mxu0 %v2458
    %3621 = vmatpush.bf16.msra.mxu0 %v2454
    %3622 = vmatpush.bf16.msra.mxu0 %v2450
    %3623 = vmatpush.bf16.msra.mxu0 %v2446
    %3624 = vmatpush.bf16.msra.mxu0 %v2442
    %3625 = vmatmul.bf16.gmra.mxu0 %v749
    %v3626 = vpop.f32.mrf.mxu0
    %v3627 = vadd.f32 %v3613, %v3626
    %v3628 = vpop.f32.mrf.mxu0
    %v3629 = vadd.f32 %v3615, %v3628
    %3630 = vdwg.mxu0
    %3631 = vmatpush.bf16.msra.mxu0 %v2502
    %3632 = vmatpush.bf16.msra.mxu0 %v2498
    %3633 = vmatpush.bf16.msra.mxu0 %v2494
    %3634 = vmatpush.bf16.msra.mxu0 %v2490
    %3635 = vmatpush.bf16.msra.mxu0 %v2486
    %3636 = vmatpush.bf16.msra.mxu0 %v2482
    %3637 = vmatpush.bf16.msra.mxu0 %v2478
    %3638 = vmatpush.bf16.msra.mxu0 %v2474
    %3639 = vmatmul.bf16.gmra.mxu0 %v750
    %v3640 = vpop.f32.mrf.mxu0
    %v3641 = vadd.f32 %v3627, %v3640
    %v3642 = vpop.f32.mrf.mxu0
    %v3643 = vadd.f32 %v3629, %v3642
    %3644 = vdwg.mxu0
    %3645 = vmatpush.bf16.msra.mxu0 %v2534
    %3646 = vmatpush.bf16.msra.mxu0 %v2530
    %3647 = vmatpush.bf16.msra.mxu0 %v2526
    %3648 = vmatpush.bf16.msra.mxu0 %v2522
    %3649 = vmatpush.bf16.msra.mxu0 %v2518
    %3650 = vmatpush.bf16.msra.mxu0 %v2514
    %3651 = vmatpush.bf16.msra.mxu0 %v2510
    %3652 = vmatpush.bf16.msra.mxu0 %v2506
    %3653 = vmatmul.bf16.gmra.mxu0 %v751
    %v3654 = vpop.f32.mrf.mxu0
    %v3655 = vadd.f32 %v3641, %v3654
    %v3656 = vpop.f32.mrf.mxu0
    %v3657 = vadd.f32 %v3643, %v3656
    %3658 = vdwg.mxu0
    %3659 = vmatpush.bf16.msra.mxu0 %v2566
    %3660 = vmatpush.bf16.msra.mxu0 %v2562
    %3661 = vmatpush.bf16.msra.mxu0 %v2558
    %3662 = vmatpush.bf16.msra.mxu0 %v2554
    %3663 = vmatpush.bf16.msra.mxu0 %v2550
    %3664 = vmatpush.bf16.msra.mxu0 %v2546
    %3665 = vmatpush.bf16.msra.mxu0 %v2542
    %3666 = vmatpush.bf16.msra.mxu0 %v2538
    %3667 = vmatmul.bf16.gmra.mxu0 %v752
    %v3668 = vpop.f32.mrf.mxu0
    %v3669 = vadd.f32 %v3655, %v3668
    %v3670 = vpop.f32.mrf.mxu0
    %v3671 = vadd.f32 %v3657, %v3670
    %3672 = vdwg.mxu0
    %3673 = vmatpush.bf16.msra.mxu0 %v2598
    %3674 = vmatpush.bf16.msra.mxu0 %v2594
    %3675 = vmatpush.bf16.msra.mxu0 %v2590
    %3676 = vmatpush.bf16.msra.mxu0 %v2586
    %3677 = vmatpush.bf16.msra.mxu0 %v2582
    %3678 = vmatpush.bf16.msra.mxu0 %v2578
    %3679 = vmatpush.bf16.msra.mxu0 %v2574
    %3680 = vmatpush.bf16.msra.mxu0 %v2570
    %3681 = vmatmul.bf16.gmra.mxu0 %v753
    %v3682 = vpop.f32.mrf.mxu0
    %v3683 = vadd.f32 %v3669, %v3682
    %v3684 = vpop.f32.mrf.mxu0
    %v3685 = vadd.f32 %v3671, %v3684
    %3686 = vdwg.mxu0
    %3687 = vmatpush.bf16.msra.mxu0 %v2630
    %3688 = vmatpush.bf16.msra.mxu0 %v2626
    %3689 = vmatpush.bf16.msra.mxu0 %v2622
    %3690 = vmatpush.bf16.msra.mxu0 %v2618
    %3691 = vmatpush.bf16.msra.mxu0 %v2614
    %3692 = vmatpush.bf16.msra.mxu0 %v2610
    %3693 = vmatpush.bf16.msra.mxu0 %v2606
    %3694 = vmatpush.bf16.msra.mxu0 %v2602
    %3695 = vmatmul.bf16.gmra.mxu0 %v754
    %v3696 = vpop.f32.mrf.mxu0
    %v3697 = vadd.f32 %v3683, %v3696
    %v3698 = vpop.f32.mrf.mxu0
    %v3699 = vadd.f32 %v3685, %v3698
    %3700 = vdwg.mxu0
    %3701 = vmatpush.bf16.msra.mxu0 %v2662
    %3702 = vmatpush.bf16.msra.mxu0 %v2658
    %3703 = vmatpush.bf16.msra.mxu0 %v2654
    %3704 = vmatpush.bf16.msra.mxu0 %v2650
    %3705 = vmatpush.bf16.msra.mxu0 %v2646
    %3706 = vmatpush.bf16.msra.mxu0 %v2642
    %3707 = vmatpush.bf16.msra.mxu0 %v2638
    %3708 = vmatpush.bf16.msra.mxu0 %v2634
    %3709 = vmatmul.bf16.gmra.mxu0 %v755
    %v3710 = vpop.f32.mrf.mxu0
    %v3711 = vadd.f32 %v3697, %v3710
    %v3712 = vpop.f32.mrf.mxu0
    %v3713 = vadd.f32 %v3699, %v3712
    %3714 = vdwg.mxu0
    %3715 = vmatpush.bf16.msra.mxu0 %v2694
    %3716 = vmatpush.bf16.msra.mxu0 %v2690
    %3717 = vmatpush.bf16.msra.mxu0 %v2686
    %3718 = vmatpush.bf16.msra.mxu0 %v2682
    %3719 = vmatpush.bf16.msra.mxu0 %v2678
    %3720 = vmatpush.bf16.msra.mxu0 %v2674
    %3721 = vmatpush.bf16.msra.mxu0 %v2670
    %3722 = vmatpush.bf16.msra.mxu0 %v2666
    %3723 = vmatmul.bf16.gmra.mxu0 %v756
    %v3724 = vpop.f32.mrf.mxu0
    %v3725 = vadd.f32 %v3711, %v3724
    %v3726 = vpop.f32.mrf.mxu0
    %v3727 = vadd.f32 %v3713, %v3726
    %3728 = vdwg.mxu0
    %3729 = vmatpush.bf16.msra.mxu0 %v2726
    %3730 = vmatpush.bf16.msra.mxu0 %v2722
    %3731 = vmatpush.bf16.msra.mxu0 %v2718
    %3732 = vmatpush.bf16.msra.mxu0 %v2714
    %3733 = vmatpush.bf16.msra.mxu0 %v2710
    %3734 = vmatpush.bf16.msra.mxu0 %v2706
    %3735 = vmatpush.bf16.msra.mxu0 %v2702
    %3736 = vmatpush.bf16.msra.mxu0 %v2698
    %3737 = vmatmul.bf16.gmra.mxu0 %v757
    %v3738 = vpop.f32.mrf.mxu0
    %v3739 = vadd.f32 %v3725, %v3738
    %v3740 = vpop.f32.mrf.mxu0
    %v3741 = vadd.f32 %v3727, %v3740
    %3742 = vdwg.mxu0
    %3743 = vmatpush.bf16.msra.mxu0 %v2758
    %3744 = vmatpush.bf16.msra.mxu0 %v2754
    %3745 = vmatpush.bf16.msra.mxu0 %v2750
    %3746 = vmatpush.bf16.msra.mxu0 %v2746
    %3747 = vmatpush.bf16.msra.mxu0 %v2742
    %3748 = vmatpush.bf16.msra.mxu0 %v2738
    %3749 = vmatpush.bf16.msra.mxu0 %v2734
    %3750 = vmatpush.bf16.msra.mxu0 %v2730
    %3751 = vmatmul.bf16.gmra.mxu0 %v758
    %v3752 = vpop.f32.mrf.mxu0
    %v3753 = vadd.f32 %v3739, %v3752
    %v3754 = vpop.f32.mrf.mxu0
    %v3755 = vadd.f32 %v3741, %v3754
    %3756 = vdwg.mxu0
    %3757 = vmatpush.bf16.msra.mxu0 %v2790
    %3758 = vmatpush.bf16.msra.mxu0 %v2786
    %3759 = vmatpush.bf16.msra.mxu0 %v2782
    %3760 = vmatpush.bf16.msra.mxu0 %v2778
    %3761 = vmatpush.bf16.msra.mxu0 %v2774
    %3762 = vmatpush.bf16.msra.mxu0 %v2770
    %3763 = vmatpush.bf16.msra.mxu0 %v2766
    %3764 = vmatpush.bf16.msra.mxu0 %v2762
    %3765 = vmatmul.bf16.gmra.mxu0 %v759
    %v3766 = vpop.f32.mrf.mxu0
    %v3767 = vadd.f32 %v3753, %v3766
    %v3768 = vpop.f32.mrf.mxu0
    %v3769 = vadd.f32 %v3755, %v3768
    %3770 = vdwg.mxu0
    %3771 = vmatpush.bf16.msra.mxu0 %v2822
    %3772 = vmatpush.bf16.msra.mxu0 %v2818
    %3773 = vmatpush.bf16.msra.mxu0 %v2814
    %3774 = vmatpush.bf16.msra.mxu0 %v2810
    %3775 = vmatpush.bf16.msra.mxu0 %v2806
    %3776 = vmatpush.bf16.msra.mxu0 %v2802
    %3777 = vmatpush.bf16.msra.mxu0 %v2798
    %3778 = vmatpush.bf16.msra.mxu0 %v2794
    %3779 = vmatmul.bf16.gmra.mxu0 %v760
    %v3780 = vpop.f32.mrf.mxu0
    %v3781 = vadd.f32 %v3767, %v3780
    %v3782 = vpop.f32.mrf.mxu0
    %v3783 = vadd.f32 %v3769, %v3782
    %3784 = vdwg.mxu0
    %3785 = vmatpush.bf16.msra.mxu0 %v2343
    %3786 = vmatpush.bf16.msra.mxu0 %v2339
    %3787 = vmatpush.bf16.msra.mxu0 %v2335
    %3788 = vmatpush.bf16.msra.mxu0 %v2331
    %3789 = vmatpush.bf16.msra.mxu0 %v2327
    %3790 = vmatpush.bf16.msra.mxu0 %v2323
    %3791 = vmatpush.bf16.msra.mxu0 %v2319
    %3792 = vmatpush.bf16.msra.mxu0 %v2315
    %3793 = vmatmul.bf16.gmra.mxu0 %v745
    %v3794 = vpop.f32.mrf.mxu0
    %v3795 = vadd.f32 0.0, %v3794
    %v3796 = vpop.f32.mrf.mxu0
    %v3797 = vadd.f32 0.0, %v3796
    %3798 = vdwg.mxu0
    %3799 = vmatpush.bf16.msra.mxu0 %v2375
    %3800 = vmatpush.bf16.msra.mxu0 %v2371
    %3801 = vmatpush.bf16.msra.mxu0 %v2367
    %3802 = vmatpush.bf16.msra.mxu0 %v2363
    %3803 = vmatpush.bf16.msra.mxu0 %v2359
    %3804 = vmatpush.bf16.msra.mxu0 %v2355
    %3805 = vmatpush.bf16.msra.mxu0 %v2351
    %3806 = vmatpush.bf16.msra.mxu0 %v2347
    %3807 = vmatmul.bf16.gmra.mxu0 %v746
    %v3808 = vpop.f32.mrf.mxu0
    %v3809 = vadd.f32 %v3795, %v3808
    %v3810 = vpop.f32.mrf.mxu0
    %v3811 = vadd.f32 %v3797, %v3810
    %3812 = vdwg.mxu0
    %3813 = vmatpush.bf16.msra.mxu0 %v2407
    %3814 = vmatpush.bf16.msra.mxu0 %v2403
    %3815 = vmatpush.bf16.msra.mxu0 %v2399
    %3816 = vmatpush.bf16.msra.mxu0 %v2395
    %3817 = vmatpush.bf16.msra.mxu0 %v2391
    %3818 = vmatpush.bf16.msra.mxu0 %v2387
    %3819 = vmatpush.bf16.msra.mxu0 %v2383
    %3820 = vmatpush.bf16.msra.mxu0 %v2379
    %3821 = vmatmul.bf16.gmra.mxu0 %v747
    %v3822 = vpop.f32.mrf.mxu0
    %v3823 = vadd.f32 %v3809, %v3822
    %v3824 = vpop.f32.mrf.mxu0
    %v3825 = vadd.f32 %v3811, %v3824
    %3826 = vdwg.mxu0
    %3827 = vmatpush.bf16.msra.mxu0 %v2439
    %3828 = vmatpush.bf16.msra.mxu0 %v2435
    %3829 = vmatpush.bf16.msra.mxu0 %v2431
    %3830 = vmatpush.bf16.msra.mxu0 %v2427
    %3831 = vmatpush.bf16.msra.mxu0 %v2423
    %3832 = vmatpush.bf16.msra.mxu0 %v2419
    %3833 = vmatpush.bf16.msra.mxu0 %v2415
    %3834 = vmatpush.bf16.msra.mxu0 %v2411
    %3835 = vmatmul.bf16.gmra.mxu0 %v748
    %v3836 = vpop.f32.mrf.mxu0
    %v3837 = vadd.f32 %v3823, %v3836
    %v3838 = vpop.f32.mrf.mxu0
    %v3839 = vadd.f32 %v3825, %v3838
    %3840 = vdwg.mxu0
    %3841 = vmatpush.bf16.msra.mxu0 %v2471
    %3842 = vmatpush.bf16.msra.mxu0 %v2467
    %3843 = vmatpush.bf16.msra.mxu0 %v2463
    %3844 = vmatpush.bf16.msra.mxu0 %v2459
    %3845 = vmatpush.bf16.msra.mxu0 %v2455
    %3846 = vmatpush.bf16.msra.mxu0 %v2451
    %3847 = vmatpush.bf16.msra.mxu0 %v2447
    %3848 = vmatpush.bf16.msra.mxu0 %v2443
    %3849 = vmatmul.bf16.gmra.mxu0 %v749
    %v3850 = vpop.f32.mrf.mxu0
    %v3851 = vadd.f32 %v3837, %v3850
    %v3852 = vpop.f32.mrf.mxu0
    %v3853 = vadd.f32 %v3839, %v3852
    %3854 = vdwg.mxu0
    %3855 = vmatpush.bf16.msra.mxu0 %v2503
    %3856 = vmatpush.bf16.msra.mxu0 %v2499
    %3857 = vmatpush.bf16.msra.mxu0 %v2495
    %3858 = vmatpush.bf16.msra.mxu0 %v2491
    %3859 = vmatpush.bf16.msra.mxu0 %v2487
    %3860 = vmatpush.bf16.msra.mxu0 %v2483
    %3861 = vmatpush.bf16.msra.mxu0 %v2479
    %3862 = vmatpush.bf16.msra.mxu0 %v2475
    %3863 = vmatmul.bf16.gmra.mxu0 %v750
    %v3864 = vpop.f32.mrf.mxu0
    %v3865 = vadd.f32 %v3851, %v3864
    %v3866 = vpop.f32.mrf.mxu0
    %v3867 = vadd.f32 %v3853, %v3866
    %3868 = vdwg.mxu0
    %3869 = vmatpush.bf16.msra.mxu0 %v2535
    %3870 = vmatpush.bf16.msra.mxu0 %v2531
    %3871 = vmatpush.bf16.msra.mxu0 %v2527
    %3872 = vmatpush.bf16.msra.mxu0 %v2523
    %3873 = vmatpush.bf16.msra.mxu0 %v2519
    %3874 = vmatpush.bf16.msra.mxu0 %v2515
    %3875 = vmatpush.bf16.msra.mxu0 %v2511
    %3876 = vmatpush.bf16.msra.mxu0 %v2507
    %3877 = vmatmul.bf16.gmra.mxu0 %v751
    %v3878 = vpop.f32.mrf.mxu0
    %v3879 = vadd.f32 %v3865, %v3878
    %v3880 = vpop.f32.mrf.mxu0
    %v3881 = vadd.f32 %v3867, %v3880
    %3882 = vdwg.mxu0
    %3883 = vmatpush.bf16.msra.mxu0 %v2567
    %3884 = vmatpush.bf16.msra.mxu0 %v2563
    %3885 = vmatpush.bf16.msra.mxu0 %v2559
    %3886 = vmatpush.bf16.msra.mxu0 %v2555
    %3887 = vmatpush.bf16.msra.mxu0 %v2551
    %3888 = vmatpush.bf16.msra.mxu0 %v2547
    %3889 = vmatpush.bf16.msra.mxu0 %v2543
    %3890 = vmatpush.bf16.msra.mxu0 %v2539
    %3891 = vmatmul.bf16.gmra.mxu0 %v752
    %v3892 = vpop.f32.mrf.mxu0
    %v3893 = vadd.f32 %v3879, %v3892
    %v3894 = vpop.f32.mrf.mxu0
    %v3895 = vadd.f32 %v3881, %v3894
    %3896 = vdwg.mxu0
    %3897 = vmatpush.bf16.msra.mxu0 %v2599
    %3898 = vmatpush.bf16.msra.mxu0 %v2595
    %3899 = vmatpush.bf16.msra.mxu0 %v2591
    %3900 = vmatpush.bf16.msra.mxu0 %v2587
    %3901 = vmatpush.bf16.msra.mxu0 %v2583
    %3902 = vmatpush.bf16.msra.mxu0 %v2579
    %3903 = vmatpush.bf16.msra.mxu0 %v2575
    %3904 = vmatpush.bf16.msra.mxu0 %v2571
    %3905 = vmatmul.bf16.gmra.mxu0 %v753
    %v3906 = vpop.f32.mrf.mxu0
    %v3907 = vadd.f32 %v3893, %v3906
    %v3908 = vpop.f32.mrf.mxu0
    %v3909 = vadd.f32 %v3895, %v3908
    %3910 = vdwg.mxu0
    %3911 = vmatpush.bf16.msra.mxu0 %v2631
    %3912 = vmatpush.bf16.msra.mxu0 %v2627
    %3913 = vmatpush.bf16.msra.mxu0 %v2623
    %3914 = vmatpush.bf16.msra.mxu0 %v2619
    %3915 = vmatpush.bf16.msra.mxu0 %v2615
    %3916 = vmatpush.bf16.msra.mxu0 %v2611
    %3917 = vmatpush.bf16.msra.mxu0 %v2607
    %3918 = vmatpush.bf16.msra.mxu0 %v2603
    %3919 = vmatmul.bf16.gmra.mxu0 %v754
    %v3920 = vpop.f32.mrf.mxu0
    %v3921 = vadd.f32 %v3907, %v3920
    %v3922 = vpop.f32.mrf.mxu0
    %v3923 = vadd.f32 %v3909, %v3922
    %3924 = vdwg.mxu0
    %3925 = vmatpush.bf16.msra.mxu0 %v2663
    %3926 = vmatpush.bf16.msra.mxu0 %v2659
    %3927 = vmatpush.bf16.msra.mxu0 %v2655
    %3928 = vmatpush.bf16.msra.mxu0 %v2651
    %3929 = vmatpush.bf16.msra.mxu0 %v2647
    %3930 = vmatpush.bf16.msra.mxu0 %v2643
    %3931 = vmatpush.bf16.msra.mxu0 %v2639
    %3932 = vmatpush.bf16.msra.mxu0 %v2635
    %3933 = vmatmul.bf16.gmra.mxu0 %v755
    %v3934 = vpop.f32.mrf.mxu0
    %v3935 = vadd.f32 %v3921, %v3934
    %v3936 = vpop.f32.mrf.mxu0
    %v3937 = vadd.f32 %v3923, %v3936
    %3938 = vdwg.mxu0
    %3939 = vmatpush.bf16.msra.mxu0 %v2695
    %3940 = vmatpush.bf16.msra.mxu0 %v2691
    %3941 = vmatpush.bf16.msra.mxu0 %v2687
    %3942 = vmatpush.bf16.msra.mxu0 %v2683
    %3943 = vmatpush.bf16.msra.mxu0 %v2679
    %3944 = vmatpush.bf16.msra.mxu0 %v2675
    %3945 = vmatpush.bf16.msra.mxu0 %v2671
    %3946 = vmatpush.bf16.msra.mxu0 %v2667
    %3947 = vmatmul.bf16.gmra.mxu0 %v756
    %v3948 = vpop.f32.mrf.mxu0
    %v3949 = vadd.f32 %v3935, %v3948
    %v3950 = vpop.f32.mrf.mxu0
    %v3951 = vadd.f32 %v3937, %v3950
    %3952 = vdwg.mxu0
    %3953 = vmatpush.bf16.msra.mxu0 %v2727
    %3954 = vmatpush.bf16.msra.mxu0 %v2723
    %3955 = vmatpush.bf16.msra.mxu0 %v2719
    %3956 = vmatpush.bf16.msra.mxu0 %v2715
    %3957 = vmatpush.bf16.msra.mxu0 %v2711
    %3958 = vmatpush.bf16.msra.mxu0 %v2707
    %3959 = vmatpush.bf16.msra.mxu0 %v2703
    %3960 = vmatpush.bf16.msra.mxu0 %v2699
    %3961 = vmatmul.bf16.gmra.mxu0 %v757
    %v3962 = vpop.f32.mrf.mxu0
    %v3963 = vadd.f32 %v3949, %v3962
    %v3964 = vpop.f32.mrf.mxu0
    %v3965 = vadd.f32 %v3951, %v3964
    %3966 = vdwg.mxu0
    %3967 = vmatpush.bf16.msra.mxu0 %v2759
    %3968 = vmatpush.bf16.msra.mxu0 %v2755
    %3969 = vmatpush.bf16.msra.mxu0 %v2751
    %3970 = vmatpush.bf16.msra.mxu0 %v2747
    %3971 = vmatpush.bf16.msra.mxu0 %v2743
    %3972 = vmatpush.bf16.msra.mxu0 %v2739
    %3973 = vmatpush.bf16.msra.mxu0 %v2735
    %3974 = vmatpush.bf16.msra.mxu0 %v2731
    %3975 = vmatmul.bf16.gmra.mxu0 %v758
    %v3976 = vpop.f32.mrf.mxu0
    %v3977 = vadd.f32 %v3963, %v3976
    %v3978 = vpop.f32.mrf.mxu0
    %v3979 = vadd.f32 %v3965, %v3978
    %3980 = vdwg.mxu0
    %3981 = vmatpush.bf16.msra.mxu0 %v2791
    %3982 = vmatpush.bf16.msra.mxu0 %v2787
    %3983 = vmatpush.bf16.msra.mxu0 %v2783
    %3984 = vmatpush.bf16.msra.mxu0 %v2779
    %3985 = vmatpush.bf16.msra.mxu0 %v2775
    %3986 = vmatpush.bf16.msra.mxu0 %v2771
    %3987 = vmatpush.bf16.msra.mxu0 %v2767
    %3988 = vmatpush.bf16.msra.mxu0 %v2763
    %3989 = vmatmul.bf16.gmra.mxu0 %v759
    %v3990 = vpop.f32.mrf.mxu0
    %v3991 = vadd.f32 %v3977, %v3990
    %v3992 = vpop.f32.mrf.mxu0
    %v3993 = vadd.f32 %v3979, %v3992
    %3994 = vdwg.mxu0
    %3995 = vmatpush.bf16.msra.mxu0 %v2823
    %3996 = vmatpush.bf16.msra.mxu0 %v2819
    %3997 = vmatpush.bf16.msra.mxu0 %v2815
    %3998 = vmatpush.bf16.msra.mxu0 %v2811
    %3999 = vmatpush.bf16.msra.mxu0 %v2807
    %4000 = vmatpush.bf16.msra.mxu0 %v2803
    %4001 = vmatpush.bf16.msra.mxu0 %v2799
    %4002 = vmatpush.bf16.msra.mxu0 %v2795
    %4003 = vmatmul.bf16.gmra.mxu0 %v760
    %v4004 = vpop.f32.mrf.mxu0
    %v4005 = vadd.f32 %v3991, %v4004
    %v4006 = vpop.f32.mrf.mxu0
    %v4007 = vadd.f32 %v3993, %v4006
    %4008 = vdwg.mxu0
    %4009 = vmatpush.bf16.msra.mxu0 %v2344
    %4010 = vmatpush.bf16.msra.mxu0 %v2340
    %4011 = vmatpush.bf16.msra.mxu0 %v2336
    %4012 = vmatpush.bf16.msra.mxu0 %v2332
    %4013 = vmatpush.bf16.msra.mxu0 %v2328
    %4014 = vmatpush.bf16.msra.mxu0 %v2324
    %4015 = vmatpush.bf16.msra.mxu0 %v2320
    %4016 = vmatpush.bf16.msra.mxu0 %v2316
    %4017 = vmatmul.bf16.gmra.mxu0 %v745
    %v4018 = vpop.f32.mrf.mxu0
    %v4019 = vadd.f32 0.0, %v4018
    %v4020 = vpop.f32.mrf.mxu0
    %v4021 = vadd.f32 0.0, %v4020
    %4022 = vdwg.mxu0
    %4023 = vmatpush.bf16.msra.mxu0 %v2376
    %4024 = vmatpush.bf16.msra.mxu0 %v2372
    %4025 = vmatpush.bf16.msra.mxu0 %v2368
    %4026 = vmatpush.bf16.msra.mxu0 %v2364
    %4027 = vmatpush.bf16.msra.mxu0 %v2360
    %4028 = vmatpush.bf16.msra.mxu0 %v2356
    %4029 = vmatpush.bf16.msra.mxu0 %v2352
    %4030 = vmatpush.bf16.msra.mxu0 %v2348
    %4031 = vmatmul.bf16.gmra.mxu0 %v746
    %v4032 = vpop.f32.mrf.mxu0
    %v4033 = vadd.f32 %v4019, %v4032
    %v4034 = vpop.f32.mrf.mxu0
    %v4035 = vadd.f32 %v4021, %v4034
    %4036 = vdwg.mxu0
    %4037 = vmatpush.bf16.msra.mxu0 %v2408
    %4038 = vmatpush.bf16.msra.mxu0 %v2404
    %4039 = vmatpush.bf16.msra.mxu0 %v2400
    %4040 = vmatpush.bf16.msra.mxu0 %v2396
    %4041 = vmatpush.bf16.msra.mxu0 %v2392
    %4042 = vmatpush.bf16.msra.mxu0 %v2388
    %4043 = vmatpush.bf16.msra.mxu0 %v2384
    %4044 = vmatpush.bf16.msra.mxu0 %v2380
    %4045 = vmatmul.bf16.gmra.mxu0 %v747
    %v4046 = vpop.f32.mrf.mxu0
    %v4047 = vadd.f32 %v4033, %v4046
    %v4048 = vpop.f32.mrf.mxu0
    %v4049 = vadd.f32 %v4035, %v4048
    %4050 = vdwg.mxu0
    %4051 = vmatpush.bf16.msra.mxu0 %v2440
    %4052 = vmatpush.bf16.msra.mxu0 %v2436
    %4053 = vmatpush.bf16.msra.mxu0 %v2432
    %4054 = vmatpush.bf16.msra.mxu0 %v2428
    %4055 = vmatpush.bf16.msra.mxu0 %v2424
    %4056 = vmatpush.bf16.msra.mxu0 %v2420
    %4057 = vmatpush.bf16.msra.mxu0 %v2416
    %4058 = vmatpush.bf16.msra.mxu0 %v2412
    %4059 = vmatmul.bf16.gmra.mxu0 %v748
    %v4060 = vpop.f32.mrf.mxu0
    %v4061 = vadd.f32 %v4047, %v4060
    %v4062 = vpop.f32.mrf.mxu0
    %v4063 = vadd.f32 %v4049, %v4062
    %4064 = vdwg.mxu0
    %4065 = vmatpush.bf16.msra.mxu0 %v2472
    %4066 = vmatpush.bf16.msra.mxu0 %v2468
    %4067 = vmatpush.bf16.msra.mxu0 %v2464
    %4068 = vmatpush.bf16.msra.mxu0 %v2460
    %4069 = vmatpush.bf16.msra.mxu0 %v2456
    %4070 = vmatpush.bf16.msra.mxu0 %v2452
    %4071 = vmatpush.bf16.msra.mxu0 %v2448
    %4072 = vmatpush.bf16.msra.mxu0 %v2444
    %4073 = vmatmul.bf16.gmra.mxu0 %v749
    %v4074 = vpop.f32.mrf.mxu0
    %v4075 = vadd.f32 %v4061, %v4074
    %v4076 = vpop.f32.mrf.mxu0
    %v4077 = vadd.f32 %v4063, %v4076
    %4078 = vdwg.mxu0
    %4079 = vmatpush.bf16.msra.mxu0 %v2504
    %4080 = vmatpush.bf16.msra.mxu0 %v2500
    %4081 = vmatpush.bf16.msra.mxu0 %v2496
    %4082 = vmatpush.bf16.msra.mxu0 %v2492
    %4083 = vmatpush.bf16.msra.mxu0 %v2488
    %4084 = vmatpush.bf16.msra.mxu0 %v2484
    %4085 = vmatpush.bf16.msra.mxu0 %v2480
    %4086 = vmatpush.bf16.msra.mxu0 %v2476
    %4087 = vmatmul.bf16.gmra.mxu0 %v750
    %v4088 = vpop.f32.mrf.mxu0
    %v4089 = vadd.f32 %v4075, %v4088
    %v4090 = vpop.f32.mrf.mxu0
    %v4091 = vadd.f32 %v4077, %v4090
    %4092 = vdwg.mxu0
    %4093 = vmatpush.bf16.msra.mxu0 %v2536
    %4094 = vmatpush.bf16.msra.mxu0 %v2532
    %4095 = vmatpush.bf16.msra.mxu0 %v2528
    %4096 = vmatpush.bf16.msra.mxu0 %v2524
    %4097 = vmatpush.bf16.msra.mxu0 %v2520
    %4098 = vmatpush.bf16.msra.mxu0 %v2516
    %4099 = vmatpush.bf16.msra.mxu0 %v2512
    %4100 = vmatpush.bf16.msra.mxu0 %v2508
    %4101 = vmatmul.bf16.gmra.mxu0 %v751
    %v4102 = vpop.f32.mrf.mxu0
    %v4103 = vadd.f32 %v4089, %v4102
    %v4104 = vpop.f32.mrf.mxu0
    %v4105 = vadd.f32 %v4091, %v4104
    %4106 = vdwg.mxu0
    %4107 = vmatpush.bf16.msra.mxu0 %v2568
    %4108 = vmatpush.bf16.msra.mxu0 %v2564
    %4109 = vmatpush.bf16.msra.mxu0 %v2560
    %4110 = vmatpush.bf16.msra.mxu0 %v2556
    %4111 = vmatpush.bf16.msra.mxu0 %v2552
    %4112 = vmatpush.bf16.msra.mxu0 %v2548
    %4113 = vmatpush.bf16.msra.mxu0 %v2544
    %4114 = vmatpush.bf16.msra.mxu0 %v2540
    %4115 = vmatmul.bf16.gmra.mxu0 %v752
    %v4116 = vpop.f32.mrf.mxu0
    %v4117 = vadd.f32 %v4103, %v4116
    %v4118 = vpop.f32.mrf.mxu0
    %v4119 = vadd.f32 %v4105, %v4118
    %4120 = vdwg.mxu0
    %4121 = vmatpush.bf16.msra.mxu0 %v2600
    %4122 = vmatpush.bf16.msra.mxu0 %v2596
    %4123 = vmatpush.bf16.msra.mxu0 %v2592
    %4124 = vmatpush.bf16.msra.mxu0 %v2588
    %4125 = vmatpush.bf16.msra.mxu0 %v2584
    %4126 = vmatpush.bf16.msra.mxu0 %v2580
    %4127 = vmatpush.bf16.msra.mxu0 %v2576
    %4128 = vmatpush.bf16.msra.mxu0 %v2572
    %4129 = vmatmul.bf16.gmra.mxu0 %v753
    %v4130 = vpop.f32.mrf.mxu0
    %v4131 = vadd.f32 %v4117, %v4130
    %v4132 = vpop.f32.mrf.mxu0
    %v4133 = vadd.f32 %v4119, %v4132
    %4134 = vdwg.mxu0
    %4135 = vmatpush.bf16.msra.mxu0 %v2632
    %4136 = vmatpush.bf16.msra.mxu0 %v2628
    %4137 = vmatpush.bf16.msra.mxu0 %v2624
    %4138 = vmatpush.bf16.msra.mxu0 %v2620
    %4139 = vmatpush.bf16.msra.mxu0 %v2616
    %4140 = vmatpush.bf16.msra.mxu0 %v2612
    %4141 = vmatpush.bf16.msra.mxu0 %v2608
    %4142 = vmatpush.bf16.msra.mxu0 %v2604
    %4143 = vmatmul.bf16.gmra.mxu0 %v754
    %v4144 = vpop.f32.mrf.mxu0
    %v4145 = vadd.f32 %v4131, %v4144
    %v4146 = vpop.f32.mrf.mxu0
    %v4147 = vadd.f32 %v4133, %v4146
    %4148 = vdwg.mxu0
    %4149 = vmatpush.bf16.msra.mxu0 %v2664
    %4150 = vmatpush.bf16.msra.mxu0 %v2660
    %4151 = vmatpush.bf16.msra.mxu0 %v2656
    %4152 = vmatpush.bf16.msra.mxu0 %v2652
    %4153 = vmatpush.bf16.msra.mxu0 %v2648
    %4154 = vmatpush.bf16.msra.mxu0 %v2644
    %4155 = vmatpush.bf16.msra.mxu0 %v2640
    %4156 = vmatpush.bf16.msra.mxu0 %v2636
    %4157 = vmatmul.bf16.gmra.mxu0 %v755
    %v4158 = vpop.f32.mrf.mxu0
    %v4159 = vadd.f32 %v4145, %v4158
    %v4160 = vpop.f32.mrf.mxu0
    %v4161 = vadd.f32 %v4147, %v4160
    %4162 = vdwg.mxu0
    %4163 = vmatpush.bf16.msra.mxu0 %v2696
    %4164 = vmatpush.bf16.msra.mxu0 %v2692
    %4165 = vmatpush.bf16.msra.mxu0 %v2688
    %4166 = vmatpush.bf16.msra.mxu0 %v2684
    %4167 = vmatpush.bf16.msra.mxu0 %v2680
    %4168 = vmatpush.bf16.msra.mxu0 %v2676
    %4169 = vmatpush.bf16.msra.mxu0 %v2672
    %4170 = vmatpush.bf16.msra.mxu0 %v2668
    %4171 = vmatmul.bf16.gmra.mxu0 %v756
    %v4172 = vpop.f32.mrf.mxu0
    %v4173 = vadd.f32 %v4159, %v4172
    %v4174 = vpop.f32.mrf.mxu0
    %v4175 = vadd.f32 %v4161, %v4174
    %4176 = vdwg.mxu0
    %4177 = vmatpush.bf16.msra.mxu0 %v2728
    %4178 = vmatpush.bf16.msra.mxu0 %v2724
    %4179 = vmatpush.bf16.msra.mxu0 %v2720
    %4180 = vmatpush.bf16.msra.mxu0 %v2716
    %4181 = vmatpush.bf16.msra.mxu0 %v2712
    %4182 = vmatpush.bf16.msra.mxu0 %v2708
    %4183 = vmatpush.bf16.msra.mxu0 %v2704
    %4184 = vmatpush.bf16.msra.mxu0 %v2700
    %4185 = vmatmul.bf16.gmra.mxu0 %v757
    %v4186 = vpop.f32.mrf.mxu0
    %v4187 = vadd.f32 %v4173, %v4186
    %v4188 = vpop.f32.mrf.mxu0
    %v4189 = vadd.f32 %v4175, %v4188
    %4190 = vdwg.mxu0
    %4191 = vmatpush.bf16.msra.mxu0 %v2760
    %4192 = vmatpush.bf16.msra.mxu0 %v2756
    %4193 = vmatpush.bf16.msra.mxu0 %v2752
    %4194 = vmatpush.bf16.msra.mxu0 %v2748
    %4195 = vmatpush.bf16.msra.mxu0 %v2744
    %4196 = vmatpush.bf16.msra.mxu0 %v2740
    %4197 = vmatpush.bf16.msra.mxu0 %v2736
    %4198 = vmatpush.bf16.msra.mxu0 %v2732
    %4199 = vmatmul.bf16.gmra.mxu0 %v758
    %v4200 = vpop.f32.mrf.mxu0
    %v4201 = vadd.f32 %v4187, %v4200
    %v4202 = vpop.f32.mrf.mxu0
    %v4203 = vadd.f32 %v4189, %v4202
    %4204 = vdwg.mxu0
    %4205 = vmatpush.bf16.msra.mxu0 %v2792
    %4206 = vmatpush.bf16.msra.mxu0 %v2788
    %4207 = vmatpush.bf16.msra.mxu0 %v2784
    %4208 = vmatpush.bf16.msra.mxu0 %v2780
    %4209 = vmatpush.bf16.msra.mxu0 %v2776
    %4210 = vmatpush.bf16.msra.mxu0 %v2772
    %4211 = vmatpush.bf16.msra.mxu0 %v2768
    %4212 = vmatpush.bf16.msra.mxu0 %v2764
    %4213 = vmatmul.bf16.gmra.mxu0 %v759
    %v4214 = vpop.f32.mrf.mxu0
    %v4215 = vadd.f32 %v4201, %v4214
    %v4216 = vpop.f32.mrf.mxu0
    %v4217 = vadd.f32 %v4203, %v4216
    %4218 = vdwg.mxu0
    %4219 = vmatpush.bf16.msra.mxu0 %v2824
    %4220 = vmatpush.bf16.msra.mxu0 %v2820
    %4221 = vmatpush.bf16.msra.mxu0 %v2816
    %4222 = vmatpush.bf16.msra.mxu0 %v2812
    %4223 = vmatpush.bf16.msra.mxu0 %v2808
    %4224 = vmatpush.bf16.msra.mxu0 %v2804
    %4225 = vmatpush.bf16.msra.mxu0 %v2800
    %4226 = vmatpush.bf16.msra.mxu0 %v2796
    %4227 = vmatmul.bf16.gmra.mxu0 %v760
    %v4228 = vpop.f32.mrf.mxu0
    %v4229 = vadd.f32 %v4215, %v4228
    %v4230 = vpop.f32.mrf.mxu0
    %v4231 = vadd.f32 %v4217, %v4230
    %4232 = vdwg.mxu0
    %v4233 = vadd.f32 %v161, %v3557
    %v4234 = vadd.f32 %v162, %v3781
    %v4235 = vadd.f32 %v163, %v4005
    %v4236 = vadd.f32 %v164, %v4229
    %v4237 = vadd.f32 %v165, %v3559
    %v4238 = vadd.f32 %v166, %v3783
    %v4239 = vadd.f32 %v167, %v4007
    %v4240 = vadd.f32 %v168, %v4231
    %4241 = vst [vmem:[#allocation2] sm:$0xff] %v4233
    %4242 = vst [vmem:[#allocation2 + $0x8] sm:$0xff] %v4234
    %4243 = vst [vmem:[#allocation2 + $0x10] sm:$0xff] %v4235
    %4244 = vst [vmem:[#allocation2 + $0x18] sm:$0xff] %v4236
    %4245 = vst [vmem:[#allocation2 + $0x20] sm:$0xff] %v4237
    %4246 = vst [vmem:[#allocation2 + $0x28] sm:$0xff] %v4238
    %4247 = vst [vmem:[#allocation2 + $0x30] sm:$0xff] %v4239
    %4248 = vst [vmem:[#allocation2 + $0x38] sm:$0xff] %v4240
    // Predicated region
    $region74: #{mlp_forward.1} parent=1 // pred_check
      %p4249 = pneg %p149
    $region75: #{mlp_forward.1} parent=1 // pred_check_branch
      %4251 = sbr.rel (%p4249) target = $region77
    $region76: #{mlp_forward.1} parent=1 // pred_region
      %v4252 = vld [vmem:[#allocation2] sm:$0xff]
      %v4253 = vld [vmem:[#allocation2 + $0x8] sm:$0xff]
      %v4254 = vld [vmem:[#allocation2 + $0x10] sm:$0xff]
      %v4255 = vld [vmem:[#allocation2 + $0x18] sm:$0xff]
      %v4256 = vld [vmem:[#allocation2 + $0x20] sm:$0xff]
      %v4257 = vld [vmem:[#allocation2 + $0x28] sm:$0xff]
      %v4258 = vld [vmem:[#allocation2 + $0x30] sm:$0xff]
      %v4259 = vld [vmem:[#allocation2 + $0x38] sm:$0xff]
      %v4260 = vld [vmem:[#allocation5] sm:$0xf]
      %v4262 = vperm.slane %v4260, 0
      %v4263 = vperm.slane %v4260, 1
      %v4264 = vperm.slane %v4260, 2
      %v4265 = vperm.slane %v4260, 3
      %v4270 = vadd.f32 %v4252, %v4262
      %v4271 = vadd.f32 %v4253, %v4263
      %v4272 = vadd.f32 %v4254, %v4264
      %v4273 = vadd.f32 %v4255, %v4265
      %v4274 = vadd.f32 %v4256, %v4262
      %v4275 = vadd.f32 %v4257, %v4263
      %v4276 = vadd.f32 %v4258, %v4264
      %v4277 = vadd.f32 %v4259, %v4265
      %v4278 = vmul.f32 %v4270, 0.5
      %v4279 = vmul.f32 %v4271, 0.5
      %v4280 = vmul.f32 %v4272, 0.5
      %v4281 = vmul.f32 %v4273, 0.5
      %v4282 = vmul.f32 %v4274, 0.5
      %v4283 = vmul.f32 %v4275, 0.5
      %v4284 = vmul.f32 %v4276, 0.5
      %v4285 = vmul.f32 %v4277, 0.5
      %v4286 = vmul.f32 %v4270, 0.70710677
      %v4287 = vmul.f32 %v4271, 0.70710677
      %v4288 = vmul.f32 %v4272, 0.70710677
      %v4289 = vmul.f32 %v4273, 0.70710677
      %v4290 = vmul.f32 %v4274, 0.70710677
      %v4291 = vmul.f32 %v4275, 0.70710677
      %v4292 = vmul.f32 %v4276, 0.70710677
      %v4293 = vmul.f32 %v4277, 0.70710677
      %vm4294 = vcmp.lt.f32.partialorder %v4286, 0.0
      %vm4295 = vcmp.lt.f32.partialorder %v4287, 0.0
      %vm4296 = vcmp.lt.f32.partialorder %v4288, 0.0
      %vm4297 = vcmp.lt.f32.partialorder %v4289, 0.0
      %vm4298 = vcmp.lt.f32.partialorder %v4290, 0.0
      %vm4299 = vcmp.lt.f32.partialorder %v4291, 0.0
      %vm4300 = vcmp.lt.f32.partialorder %v4292, 0.0
      %vm4301 = vcmp.lt.f32.partialorder %v4293, 0.0
      %v4302 = vsel %vm4294, -1.0, 1.0
      %v4303 = vsel %vm4295, -1.0, 1.0
      %v4304 = vsel %vm4296, -1.0, 1.0
      %v4305 = vsel %vm4297, -1.0, 1.0
      %v4306 = vsel %vm4298, -1.0, 1.0
      %v4307 = vsel %vm4299, -1.0, 1.0
      %v4308 = vsel %vm4300, -1.0, 1.0
      %v4309 = vsel %vm4301, -1.0, 1.0
      %v4310 = vmul.f32 %v4286, %v4302
      %v4311 = vmul.f32 %v4287, %v4303
      %v4312 = vmul.f32 %v4288, %v4304
      %v4313 = vmul.f32 %v4289, %v4305
      %v4314 = vmul.f32 %v4290, %v4306
      %v4315 = vmul.f32 %v4291, %v4307
      %v4316 = vmul.f32 %v4292, %v4308
      %v4317 = vmul.f32 %v4293, %v4309
      %v4318 = vmul.f32 %v4310, 0.3275911
      %v4319 = vmul.f32 %v4311, 0.3275911
      %v4320 = vmul.f32 %v4312, 0.3275911
      %v4321 = vmul.f32 %v4313, 0.3275911
      %v4322 = vmul.f32 %v4314, 0.3275911
      %v4323 = vmul.f32 %v4315, 0.3275911
      %v4324 = vmul.f32 %v4316, 0.3275911
      %v4325 = vmul.f32 %v4317, 0.3275911
      %v4326 = vadd.f32 %v4318, 1.0
      %v4327 = vadd.f32 %v4319, 1.0
      %v4328 = vadd.f32 %v4320, 1.0
      %v4329 = vadd.f32 %v4321, 1.0
      %v4330 = vadd.f32 %v4322, 1.0
      %v4331 = vadd.f32 %v4323, 1.0
      %v4332 = vadd.f32 %v4324, 1.0
      %v4333 = vadd.f32 %v4325, 1.0
      %v4334 = vrcp.pop %v4326
      %v4335 = vmul.f32 %v4326, %v4334
      %v4336 = vsub.f32 1.0, %v4335
      %v4337 = vmul.f32 %v4334, %v4336
      %v4338 = vadd.f32 %v4334, %v4337
      %vm4339 = vweird.f32 %v4326
      %vm4340 = vweird.f32 %v4334
      %vm4341 = vmor %vm4339, %vm4340
      %v4342 = vsel %vm4341, %v4334, %v4338
      %v4343 = vand.u32 2147483647, %v4326
      %vm4344 = vcmp.eq.f32.partialorder %v4343, 8.507059e+37
      %v4345 = vand.u32 %v4326, 2147483648
      %v4346 = vor.u32 1.1754944e-38, %v4345
      %v4347 = vsel %vm4344, %v4346, %v4342
      %v4348 = vmul.f32 1.0, %v4347
      %v4349 = vrcp.pop %v4327
      %v4350 = vmul.f32 %v4327, %v4349
      %v4351 = vsub.f32 1.0, %v4350
      %v4352 = vmul.f32 %v4349, %v4351
      %v4353 = vadd.f32 %v4349, %v4352
      %vm4354 = vweird.f32 %v4327
      %vm4355 = vweird.f32 %v4349
      %vm4356 = vmor %vm4354, %vm4355
      %v4357 = vsel %vm4356, %v4349, %v4353
      %v4358 = vand.u32 2147483647, %v4327
      %vm4359 = vcmp.eq.f32.partialorder %v4358, 8.507059e+37
      %v4360 = vand.u32 %v4327, 2147483648
      %v4361 = vor.u32 1.1754944e-38, %v4360
      %v4362 = vsel %vm4359, %v4361, %v4357
      %v4363 = vmul.f32 1.0, %v4362
      %v4364 = vrcp.pop %v4328
      %v4365 = vmul.f32 %v4328, %v4364
      %v4366 = vsub.f32 1.0, %v4365
      %v4367 = vmul.f32 %v4364, %v4366
      %v4368 = vadd.f32 %v4364, %v4367
      %vm4369 = vweird.f32 %v4328
      %vm4370 = vweird.f32 %v4364
      %vm4371 = vmor %vm4369, %vm4370
      %v4372 = vsel %vm4371, %v4364, %v4368
      %v4373 = vand.u32 2147483647, %v4328
      %vm4374 = vcmp.eq.f32.partialorder %v4373, 8.507059e+37
      %v4375 = vand.u32 %v4328, 2147483648
      %v4376 = vor.u32 1.1754944e-38, %v4375
      %v4377 = vsel %vm4374, %v4376, %v4372
      %v4378 = vmul.f32 1.0, %v4377
      %v4379 = vrcp.pop %v4329
      %v4380 = vmul.f32 %v4329, %v4379
      %v4381 = vsub.f32 1.0, %v4380
      %v4382 = vmul.f32 %v4379, %v4381
      %v4383 = vadd.f32 %v4379, %v4382
      %vm4384 = vweird.f32 %v4329
      %vm4385 = vweird.f32 %v4379
      %vm4386 = vmor %vm4384, %vm4385
      %v4387 = vsel %vm4386, %v4379, %v4383
      %v4388 = vand.u32 2147483647, %v4329
      %vm4389 = vcmp.eq.f32.partialorder %v4388, 8.507059e+37
      %v4390 = vand.u32 %v4329, 2147483648
      %v4391 = vor.u32 1.1754944e-38, %v4390
      %v4392 = vsel %vm4389, %v4391, %v4387
      %v4393 = vmul.f32 1.0, %v4392
      %v4394 = vrcp.pop %v4330
      %v4395 = vmul.f32 %v4330, %v4394
      %v4396 = vsub.f32 1.0, %v4395
      %v4397 = vmul.f32 %v4394, %v4396
      %v4398 = vadd.f32 %v4394, %v4397
      %vm4399 = vweird.f32 %v4330
      %vm4400 = vweird.f32 %v4394
      %vm4401 = vmor %vm4399, %vm4400
      %v4402 = vsel %vm4401, %v4394, %v4398
      %v4403 = vand.u32 2147483647, %v4330
      %vm4404 = vcmp.eq.f32.partialorder %v4403, 8.507059e+37
      %v4405 = vand.u32 %v4330, 2147483648
      %v4406 = vor.u32 1.1754944e-38, %v4405
      %v4407 = vsel %vm4404, %v4406, %v4402
      %v4408 = vmul.f32 1.0, %v4407
      %v4409 = vrcp.pop %v4331
      %v4410 = vmul.f32 %v4331, %v4409
      %v4411 = vsub.f32 1.0, %v4410
      %v4412 = vmul.f32 %v4409, %v4411
      %v4413 = vadd.f32 %v4409, %v4412
      %vm4414 = vweird.f32 %v4331
      %vm4415 = vweird.f32 %v4409
      %vm4416 = vmor %vm4414, %vm4415
      %v4417 = vsel %vm4416, %v4409, %v4413
      %v4418 = vand.u32 2147483647, %v4331
      %vm4419 = vcmp.eq.f32.partialorder %v4418, 8.507059e+37
      %v4420 = vand.u32 %v4331, 2147483648
      %v4421 = vor.u32 1.1754944e-38, %v4420
      %v4422 = vsel %vm4419, %v4421, %v4417
      %v4423 = vmul.f32 1.0, %v4422
      %v4424 = vrcp.pop %v4332
      %v4425 = vmul.f32 %v4332, %v4424
      %v4426 = vsub.f32 1.0, %v4425
      %v4427 = vmul.f32 %v4424, %v4426
      %v4428 = vadd.f32 %v4424, %v4427
      %vm4429 = vweird.f32 %v4332
      %vm4430 = vweird.f32 %v4424
      %vm4431 = vmor %vm4429, %vm4430
      %v4432 = vsel %vm4431, %v4424, %v4428
      %v4433 = vand.u32 2147483647, %v4332
      %vm4434 = vcmp.eq.f32.partialorder %v4433, 8.507059e+37
      %v4435 = vand.u32 %v4332, 2147483648
      %v4436 = vor.u32 1.1754944e-38, %v4435
      %v4437 = vsel %vm4434, %v4436, %v4432
      %v4438 = vmul.f32 1.0, %v4437
      %v4439 = vrcp.pop %v4333
      %v4440 = vmul.f32 %v4333, %v4439
      %v4441 = vsub.f32 1.0, %v4440
      %v4442 = vmul.f32 %v4439, %v4441
      %v4443 = vadd.f32 %v4439, %v4442
      %vm4444 = vweird.f32 %v4333
      %vm4445 = vweird.f32 %v4439
      %vm4446 = vmor %vm4444, %vm4445
      %v4447 = vsel %vm4446, %v4439, %v4443
      %v4448 = vand.u32 2147483647, %v4333
      %vm4449 = vcmp.eq.f32.partialorder %v4448, 8.507059e+37
      %v4450 = vand.u32 %v4333, 2147483648
      %v4451 = vor.u32 1.1754944e-38, %v4450
      %v4452 = vsel %vm4449, %v4451, %v4447
      %v4453 = vmul.f32 1.0, %v4452
      %v4454 = vmul.f32 %v4348, 1.0614054
      %v4455 = vmul.f32 %v4363, 1.0614054
      %v4456 = vmul.f32 %v4378, 1.0614054
      %v4457 = vmul.f32 %v4393, 1.0614054
      %v4458 = vmul.f32 %v4408, 1.0614054
      %v4459 = vmul.f32 %v4423, 1.0614054
      %v4460 = vmul.f32 %v4438, 1.0614054
      %v4461 = vmul.f32 %v4453, 1.0614054
      %v4462 = vadd.f32 %v4454, -1.4531521
      %v4463 = vadd.f32 %v4455, -1.4531521
      %v4464 = vadd.f32 %v4456, -1.4531521
      %v4465 = vadd.f32 %v4457, -1.4531521
      %v4466 = vadd.f32 %v4458, -1.4531521
      %v4467 = vadd.f32 %v4459, -1.4531521
      %v4468 = vadd.f32 %v4460, -1.4531521
      %v4469 = vadd.f32 %v4461, -1.4531521
      %v4470 = vmul.f32 %v4462, %v4348
      %v4471 = vmul.f32 %v4463, %v4363
      %v4472 = vmul.f32 %v4464, %v4378
      %v4473 = vmul.f32 %v4465, %v4393
      %v4474 = vmul.f32 %v4466, %v4408
      %v4475 = vmul.f32 %v4467, %v4423
      %v4476 = vmul.f32 %v4468, %v4438
      %v4477 = vmul.f32 %v4469, %v4453
      %v4478 = vadd.f32 %v4470, 1.4214138
      %v4479 = vadd.f32 %v4471, 1.4214138
      %v4480 = vadd.f32 %v4472, 1.4214138
      %v4481 = vadd.f32 %v4473, 1.4214138
      %v4482 = vadd.f32 %v4474, 1.4214138
      %v4483 = vadd.f32 %v4475, 1.4214138
      %v4484 = vadd.f32 %v4476, 1.4214138
      %v4485 = vadd.f32 %v4477, 1.4214138
      %v4486 = vmul.f32 %v4478, %v4348
      %v4487 = vmul.f32 %v4479, %v4363
      %v4488 = vmul.f32 %v4480, %v4378
      %v4489 = vmul.f32 %v4481, %v4393
      %v4490 = vmul.f32 %v4482, %v4408
      %v4491 = vmul.f32 %v4483, %v4423
      %v4492 = vmul.f32 %v4484, %v4438
      %v4493 = vmul.f32 %v4485, %v4453
      %v4494 = vadd.f32 %v4486, -0.28449672
      %v4495 = vadd.f32 %v4487, -0.28449672
      %v4496 = vadd.f32 %v4488, -0.28449672
      %v4497 = vadd.f32 %v4489, -0.28449672
      %v4498 = vadd.f32 %v4490, -0.28449672
      %v4499 = vadd.f32 %v4491, -0.28449672
      %v4500 = vadd.f32 %v4492, -0.28449672
      %v4501 = vadd.f32 %v4493, -0.28449672
      %v4502 = vmul.f32 %v4494, %v4348
      %v4503 = vmul.f32 %v4495, %v4363
      %v4504 = vmul.f32 %v4496, %v4378
      %v4505 = vmul.f32 %v4497, %v4393
      %v4506 = vmul.f32 %v4498, %v4408
      %v4507 = vmul.f32 %v4499, %v4423
      %v4508 = vmul.f32 %v4500, %v4438
      %v4509 = vmul.f32 %v4501, %v4453
      %v4510 = vadd.f32 %v4502, 0.2548296
      %v4511 = vadd.f32 %v4503, 0.2548296
      %v4512 = vadd.f32 %v4504, 0.2548296
      %v4513 = vadd.f32 %v4505, 0.2548296
      %v4514 = vadd.f32 %v4506, 0.2548296
      %v4515 = vadd.f32 %v4507, 0.2548296
      %v4516 = vadd.f32 %v4508, 0.2548296
      %v4517 = vadd.f32 %v4509, 0.2548296
      %v4518 = vmul.f32 %v4510, %v4348
      %v4519 = vmul.f32 %v4511, %v4363
      %v4520 = vmul.f32 %v4512, %v4378
      %v4521 = vmul.f32 %v4513, %v4393
      %v4522 = vmul.f32 %v4514, %v4408
      %v4523 = vmul.f32 %v4515, %v4423
      %v4524 = vmul.f32 %v4516, %v4438
      %v4525 = vmul.f32 %v4517, %v4453
      %v4526 = vsub.f32 0.0, %v4310
      %v4527 = vsub.f32 0.0, %v4311
      %v4528 = vsub.f32 0.0, %v4312
      %v4529 = vsub.f32 0.0, %v4313
      %v4530 = vsub.f32 0.0, %v4314
      %v4531 = vsub.f32 0.0, %v4315
      %v4532 = vsub.f32 0.0, %v4316
      %v4533 = vsub.f32 0.0, %v4317
      %v4534 = vmul.f32 %v4526, %v4310
      %v4535 = vmul.f32 %v4527, %v4311
      %v4536 = vmul.f32 %v4528, %v4312
      %v4537 = vmul.f32 %v4529, %v4313
      %v4538 = vmul.f32 %v4530, %v4314
      %v4539 = vmul.f32 %v4531, %v4315
      %v4540 = vmul.f32 %v4532, %v4316
      %v4541 = vmul.f32 %v4533, %v4317
      %v4542 = vmul.f32 %v4534, 1.442695
      %v4543 = vpow.pop %v4542
      %v4544 = vmul.f32 %v4535, 1.442695
      %v4545 = vpow.pop %v4544
      %v4546 = vmul.f32 %v4536, 1.442695
      %v4547 = vpow.pop %v4546
      %v4548 = vmul.f32 %v4537, 1.442695
      %v4549 = vpow.pop %v4548
      %v4550 = vmul.f32 %v4538, 1.442695
      %v4551 = vpow.pop %v4550
      %v4552 = vmul.f32 %v4539, 1.442695
      %v4553 = vpow.pop %v4552
      %v4554 = vmul.f32 %v4540, 1.442695
      %v4555 = vpow.pop %v4554
      %v4556 = vmul.f32 %v4541, 1.442695
      %v4557 = vpow.pop %v4556
      %v4558 = vmul.f32 %v4518, %v4543
      %v4559 = vmul.f32 %v4519, %v4545
      %v4560 = vmul.f32 %v4520, %v4547
      %v4561 = vmul.f32 %v4521, %v4549
      %v4562 = vmul.f32 %v4522, %v4551
      %v4563 = vmul.f32 %v4523, %v4553
      %v4564 = vmul.f32 %v4524, %v4555
      %v4565 = vmul.f32 %v4525, %v4557
      %v4566 = vsub.f32 1.0, %v4558
      %v4567 = vsub.f32 1.0, %v4559
      %v4568 = vsub.f32 1.0, %v4560
      %v4569 = vsub.f32 1.0, %v4561
      %v4570 = vsub.f32 1.0, %v4562
      %v4571 = vsub.f32 1.0, %v4563
      %v4572 = vsub.f32 1.0, %v4564
      %v4573 = vsub.f32 1.0, %v4565
      %v4574 = vmul.f32 %v4302, %v4566
      %v4575 = vmul.f32 %v4303, %v4567
      %v4576 = vmul.f32 %v4304, %v4568
      %v4577 = vmul.f32 %v4305, %v4569
      %v4578 = vmul.f32 %v4306, %v4570
      %v4579 = vmul.f32 %v4307, %v4571
      %v4580 = vmul.f32 %v4308, %v4572
      %v4581 = vmul.f32 %v4309, %v4573
      %v4582 = vadd.f32 %v4574, 1.0
      %v4583 = vadd.f32 %v4575, 1.0
      %v4584 = vadd.f32 %v4576, 1.0
      %v4585 = vadd.f32 %v4577, 1.0
      %v4586 = vadd.f32 %v4578, 1.0
      %v4587 = vadd.f32 %v4579, 1.0
      %v4588 = vadd.f32 %v4580, 1.0
      %v4589 = vadd.f32 %v4581, 1.0
      %v4590 = vmul.f32 %v4278, %v4582
      %v4591 = vmul.f32 %v4279, %v4583
      %v4592 = vmul.f32 %v4280, %v4584
      %v4593 = vmul.f32 %v4281, %v4585
      %v4594 = vmul.f32 %v4282, %v4586
      %v4595 = vmul.f32 %v4283, %v4587
      %v4596 = vmul.f32 %v4284, %v4588
      %v4597 = vmul.f32 %v4285, %v4589
      %v4598 = vpack.c.bf16 %v4594, %v4590
      %v4599 = vpack.c.bf16 %v4595, %v4591
      %v4600 = vpack.c.bf16 %v4596, %v4592
      %v4601 = vpack.c.bf16 %v4597, %v4593
      %v4602 = vld [vmem:[#allocation7] sm:$0xff]
      %v4603 = vld [vmem:[#allocation7 + $0x8] sm:$0xff]
      %v4604 = vld [vmem:[#allocation7 + $0x10] sm:$0xff]
      %v4605 = vld [vmem:[#allocation7 + $0x18] sm:$0xff]
      %v4606 = vld [vmem:[#allocation7 + $0x20] sm:$0xff]
      %v4607 = vld [vmem:[#allocation7 + $0x28] sm:$0xff]
      %v4608 = vld [vmem:[#allocation7 + $0x30] sm:$0xff]
      %v4609 = vld [vmem:[#allocation7 + $0x38] sm:$0xff]
      %v4610 = vld [vmem:[#allocation7 + $0x40] sm:$0xff]
      %v4611 = vld [vmem:[#allocation7 + $0x48] sm:$0xff]
      %v4612 = vld [vmem:[#allocation7 + $0x50] sm:$0xff]
      %v4613 = vld [vmem:[#allocation7 + $0x58] sm:$0xff]
      %v4614 = vld [vmem:[#allocation7 + $0x60] sm:$0xff]
      %v4615 = vld [vmem:[#allocation7 + $0x68] sm:$0xff]
      %v4616 = vld [vmem:[#allocation7 + $0x70] sm:$0xff]
      %v4617 = vld [vmem:[#allocation7 + $0x78] sm:$0xff]
      %v4618 = vld [vmem:[#allocation7 + $0x80] sm:$0xff]
      %v4619 = vld [vmem:[#allocation7 + $0x88] sm:$0xff]
      %v4620 = vld [vmem:[#allocation7 + $0x90] sm:$0xff]
      %v4621 = vld [vmem:[#allocation7 + $0x98] sm:$0xff]
      %v4622 = vld [vmem:[#allocation7 + $0xa0] sm:$0xff]
      %v4623 = vld [vmem:[#allocation7 + $0xa8] sm:$0xff]
      %v4624 = vld [vmem:[#allocation7 + $0xb0] sm:$0xff]
      %v4625 = vld [vmem:[#allocation7 + $0xb8] sm:$0xff]
      %v4626 = vld [vmem:[#allocation7 + $0xc0] sm:$0xff]
      %v4627 = vld [vmem:[#allocation7 + $0xc8] sm:$0xff]
      %v4628 = vld [vmem:[#allocation7 + $0xd0] sm:$0xff]
      %v4629 = vld [vmem:[#allocation7 + $0xd8] sm:$0xff]
      %v4630 = vld [vmem:[#allocation7 + $0xe0] sm:$0xff]
      %v4631 = vld [vmem:[#allocation7 + $0xe8] sm:$0xff]
      %v4632 = vld [vmem:[#allocation7 + $0xf0] sm:$0xff]
      %v4633 = vld [vmem:[#allocation7 + $0xf8] sm:$0xff]
      %v4634 = vld [vmem:[#allocation7 + $0x100] sm:$0xff]
      %v4635 = vld [vmem:[#allocation7 + $0x108] sm:$0xff]
      %v4636 = vld [vmem:[#allocation7 + $0x110] sm:$0xff]
      %v4637 = vld [vmem:[#allocation7 + $0x118] sm:$0xff]
      %v4638 = vld [vmem:[#allocation7 + $0x120] sm:$0xff]
      %v4639 = vld [vmem:[#allocation7 + $0x128] sm:$0xff]
      %v4640 = vld [vmem:[#allocation7 + $0x130] sm:$0xff]
      %v4641 = vld [vmem:[#allocation7 + $0x138] sm:$0xff]
      %v4642 = vld [vmem:[#allocation7 + $0x140] sm:$0xff]
      %v4643 = vld [vmem:[#allocation7 + $0x148] sm:$0xff]
      %v4644 = vld [vmem:[#allocation7 + $0x150] sm:$0xff]
      %v4645 = vld [vmem:[#allocation7 + $0x158] sm:$0xff]
      %v4646 = vld [vmem:[#allocation7 + $0x160] sm:$0xff]
      %v4647 = vld [vmem:[#allocation7 + $0x168] sm:$0xff]
      %v4648 = vld [vmem:[#allocation7 + $0x170] sm:$0xff]
      %v4649 = vld [vmem:[#allocation7 + $0x178] sm:$0xff]
      %v4650 = vld [vmem:[#allocation7 + $0x180] sm:$0xff]
      %v4651 = vld [vmem:[#allocation7 + $0x188] sm:$0xff]
      %v4652 = vld [vmem:[#allocation7 + $0x190] sm:$0xff]
      %v4653 = vld [vmem:[#allocation7 + $0x198] sm:$0xff]
      %v4654 = vld [vmem:[#allocation7 + $0x1a0] sm:$0xff]
      %v4655 = vld [vmem:[#allocation7 + $0x1a8] sm:$0xff]
      %v4656 = vld [vmem:[#allocation7 + $0x1b0] sm:$0xff]
      %v4657 = vld [vmem:[#allocation7 + $0x1b8] sm:$0xff]
      %v4658 = vld [vmem:[#allocation7 + $0x1c0] sm:$0xff]
      %v4659 = vld [vmem:[#allocation7 + $0x1c8] sm:$0xff]
      %v4660 = vld [vmem:[#allocation7 + $0x1d0] sm:$0xff]
      %v4661 = vld [vmem:[#allocation7 + $0x1d8] sm:$0xff]
      %v4662 = vld [vmem:[#allocation7 + $0x1e0] sm:$0xff]
      %v4663 = vld [vmem:[#allocation7 + $0x1e8] sm:$0xff]
      %v4664 = vld [vmem:[#allocation7 + $0x1f0] sm:$0xff]
      %v4665 = vld [vmem:[#allocation7 + $0x1f8] sm:$0xff]
      %v4666 = vld [vmem:[#allocation7 + $0x200] sm:$0xff]
      %v4667 = vld [vmem:[#allocation7 + $0x208] sm:$0xff]
      %v4668 = vld [vmem:[#allocation7 + $0x210] sm:$0xff]
      %v4669 = vld [vmem:[#allocation7 + $0x218] sm:$0xff]
      %v4670 = vld [vmem:[#allocation7 + $0x220] sm:$0xff]
      %v4671 = vld [vmem:[#allocation7 + $0x228] sm:$0xff]
      %v4672 = vld [vmem:[#allocation7 + $0x230] sm:$0xff]
      %v4673 = vld [vmem:[#allocation7 + $0x238] sm:$0xff]
      %v4674 = vld [vmem:[#allocation7 + $0x240] sm:$0xff]
      %v4675 = vld [vmem:[#allocation7 + $0x248] sm:$0xff]
      %v4676 = vld [vmem:[#allocation7 + $0x250] sm:$0xff]
      %v4677 = vld [vmem:[#allocation7 + $0x258] sm:$0xff]
      %v4678 = vld [vmem:[#allocation7 + $0x260] sm:$0xff]
      %v4679 = vld [vmem:[#allocation7 + $0x268] sm:$0xff]
      %v4680 = vld [vmem:[#allocation7 + $0x270] sm:$0xff]
      %v4681 = vld [vmem:[#allocation7 + $0x278] sm:$0xff]
      %v4682 = vld [vmem:[#allocation7 + $0x280] sm:$0xff]
      %v4683 = vld [vmem:[#allocation7 + $0x288] sm:$0xff]
      %v4684 = vld [vmem:[#allocation7 + $0x290] sm:$0xff]
      %v4685 = vld [vmem:[#allocation7 + $0x298] sm:$0xff]
      %v4686 = vld [vmem:[#allocation7 + $0x2a0] sm:$0xff]
      %v4687 = vld [vmem:[#allocation7 + $0x2a8] sm:$0xff]
      %v4688 = vld [vmem:[#allocation7 + $0x2b0] sm:$0xff]
      %v4689 = vld [vmem:[#allocation7 + $0x2b8] sm:$0xff]
      %v4690 = vld [vmem:[#allocation7 + $0x2c0] sm:$0xff]
      %v4691 = vld [vmem:[#allocation7 + $0x2c8] sm:$0xff]
      %v4692 = vld [vmem:[#allocation7 + $0x2d0] sm:$0xff]
      %v4693 = vld [vmem:[#allocation7 + $0x2d8] sm:$0xff]
      %v4694 = vld [vmem:[#allocation7 + $0x2e0] sm:$0xff]
      %v4695 = vld [vmem:[#allocation7 + $0x2e8] sm:$0xff]
      %v4696 = vld [vmem:[#allocation7 + $0x2f0] sm:$0xff]
      %v4697 = vld [vmem:[#allocation7 + $0x2f8] sm:$0xff]
      %v4698 = vld [vmem:[#allocation7 + $0x300] sm:$0xff]
      %v4699 = vld [vmem:[#allocation7 + $0x308] sm:$0xff]
      %v4700 = vld [vmem:[#allocation7 + $0x310] sm:$0xff]
      %v4701 = vld [vmem:[#allocation7 + $0x318] sm:$0xff]
      %v4702 = vld [vmem:[#allocation7 + $0x320] sm:$0xff]
      %v4703 = vld [vmem:[#allocation7 + $0x328] sm:$0xff]
      %v4704 = vld [vmem:[#allocation7 + $0x330] sm:$0xff]
      %v4705 = vld [vmem:[#allocation7 + $0x338] sm:$0xff]
      %v4706 = vld [vmem:[#allocation7 + $0x340] sm:$0xff]
      %v4707 = vld [vmem:[#allocation7 + $0x348] sm:$0xff]
      %v4708 = vld [vmem:[#allocation7 + $0x350] sm:$0xff]
      %v4709 = vld [vmem:[#allocation7 + $0x358] sm:$0xff]
      %v4710 = vld [vmem:[#allocation7 + $0x360] sm:$0xff]
      %v4711 = vld [vmem:[#allocation7 + $0x368] sm:$0xff]
      %v4712 = vld [vmem:[#allocation7 + $0x370] sm:$0xff]
      %v4713 = vld [vmem:[#allocation7 + $0x378] sm:$0xff]
      %v4714 = vld [vmem:[#allocation7 + $0x380] sm:$0xff]
      %v4715 = vld [vmem:[#allocation7 + $0x388] sm:$0xff]
      %v4716 = vld [vmem:[#allocation7 + $0x390] sm:$0xff]
      %v4717 = vld [vmem:[#allocation7 + $0x398] sm:$0xff]
      %v4718 = vld [vmem:[#allocation7 + $0x3a0] sm:$0xff]
      %v4719 = vld [vmem:[#allocation7 + $0x3a8] sm:$0xff]
      %v4720 = vld [vmem:[#allocation7 + $0x3b0] sm:$0xff]
      %v4721 = vld [vmem:[#allocation7 + $0x3b8] sm:$0xff]
      %v4722 = vld [vmem:[#allocation7 + $0x3c0] sm:$0xff]
      %v4723 = vld [vmem:[#allocation7 + $0x3c8] sm:$0xff]
      %v4724 = vld [vmem:[#allocation7 + $0x3d0] sm:$0xff]
      %v4725 = vld [vmem:[#allocation7 + $0x3d8] sm:$0xff]
      %v4726 = vld [vmem:[#allocation7 + $0x3e0] sm:$0xff]
      %v4727 = vld [vmem:[#allocation7 + $0x3e8] sm:$0xff]
      %v4728 = vld [vmem:[#allocation7 + $0x3f0] sm:$0xff]
      %v4729 = vld [vmem:[#allocation7 + $0x3f8] sm:$0xff]
      %v4730 = vld [vmem:[#allocation8] sm:$0xf]
      %v4732 = vperm.slane %v4730, 0
      %v4733 = vperm.slane %v4730, 1
      %v4734 = vperm.slane %v4730, 2
      %v4735 = vperm.slane %v4730, 3
      %v4868 = vunpack.c.l.b16 %v4602
      %v4869 = vunpack.c.h.b16 %v4602
      %v4870 = vunpack.c.l.b16 %v4603
      %v4871 = vunpack.c.h.b16 %v4603
      %v4872 = vunpack.c.l.b16 %v4604
      %v4873 = vunpack.c.h.b16 %v4604
      %v4874 = vunpack.c.l.b16 %v4605
      %v4875 = vunpack.c.h.b16 %v4605
      %v4876 = vunpack.c.l.b16 %v4606
      %v4877 = vunpack.c.h.b16 %v4606
      %v4878 = vunpack.c.l.b16 %v4607
      %v4879 = vunpack.c.h.b16 %v4607
      %v4880 = vunpack.c.l.b16 %v4608
      %v4881 = vunpack.c.h.b16 %v4608
      %v4882 = vunpack.c.l.b16 %v4609
      %v4883 = vunpack.c.h.b16 %v4609
      %v4884 = vunpack.c.l.b16 %v4610
      %v4885 = vunpack.c.h.b16 %v4610
      %v4886 = vunpack.c.l.b16 %v4611
      %v4887 = vunpack.c.h.b16 %v4611
      %v4888 = vunpack.c.l.b16 %v4612
      %v4889 = vunpack.c.h.b16 %v4612
      %v4890 = vunpack.c.l.b16 %v4613
      %v4891 = vunpack.c.h.b16 %v4613
      %v4892 = vunpack.c.l.b16 %v4614
      %v4893 = vunpack.c.h.b16 %v4614
      %v4894 = vunpack.c.l.b16 %v4615
      %v4895 = vunpack.c.h.b16 %v4615
      %v4896 = vunpack.c.l.b16 %v4616
      %v4897 = vunpack.c.h.b16 %v4616
      %v4898 = vunpack.c.l.b16 %v4617
      %v4899 = vunpack.c.h.b16 %v4617
      %v4900 = vunpack.c.l.b16 %v4618
      %v4901 = vunpack.c.h.b16 %v4618
      %v4902 = vunpack.c.l.b16 %v4619
      %v4903 = vunpack.c.h.b16 %v4619
      %v4904 = vunpack.c.l.b16 %v4620
      %v4905 = vunpack.c.h.b16 %v4620
      %v4906 = vunpack.c.l.b16 %v4621
      %v4907 = vunpack.c.h.b16 %v4621
      %v4908 = vunpack.c.l.b16 %v4622
      %v4909 = vunpack.c.h.b16 %v4622
      %v4910 = vunpack.c.l.b16 %v4623
      %v4911 = vunpack.c.h.b16 %v4623
      %v4912 = vunpack.c.l.b16 %v4624
      %v4913 = vunpack.c.h.b16 %v4624
      %v4914 = vunpack.c.l.b16 %v4625
      %v4915 = vunpack.c.h.b16 %v4625
      %v4916 = vunpack.c.l.b16 %v4626
      %v4917 = vunpack.c.h.b16 %v4626
      %v4918 = vunpack.c.l.b16 %v4627
      %v4919 = vunpack.c.h.b16 %v4627
      %v4920 = vunpack.c.l.b16 %v4628
      %v4921 = vunpack.c.h.b16 %v4628
      %v4922 = vunpack.c.l.b16 %v4629
      %v4923 = vunpack.c.h.b16 %v4629
      %v4924 = vunpack.c.l.b16 %v4630
      %v4925 = vunpack.c.h.b16 %v4630
      %v4926 = vunpack.c.l.b16 %v4631
      %v4927 = vunpack.c.h.b16 %v4631
      %v4928 = vunpack.c.l.b16 %v4632
      %v4929 = vunpack.c.h.b16 %v4632
      %v4930 = vunpack.c.l.b16 %v4633
      %v4931 = vunpack.c.h.b16 %v4633
      %v4932 = vunpack.c.l.b16 %v4634
      %v4933 = vunpack.c.h.b16 %v4634
      %v4934 = vunpack.c.l.b16 %v4635
      %v4935 = vunpack.c.h.b16 %v4635
      %v4936 = vunpack.c.l.b16 %v4636
      %v4937 = vunpack.c.h.b16 %v4636
      %v4938 = vunpack.c.l.b16 %v4637
      %v4939 = vunpack.c.h.b16 %v4637
      %v4940 = vunpack.c.l.b16 %v4638
      %v4941 = vunpack.c.h.b16 %v4638
      %v4942 = vunpack.c.l.b16 %v4639
      %v4943 = vunpack.c.h.b16 %v4639
      %v4944 = vunpack.c.l.b16 %v4640
      %v4945 = vunpack.c.h.b16 %v4640
      %v4946 = vunpack.c.l.b16 %v4641
      %v4947 = vunpack.c.h.b16 %v4641
      %v4948 = vunpack.c.l.b16 %v4642
      %v4949 = vunpack.c.h.b16 %v4642
      %v4950 = vunpack.c.l.b16 %v4643
      %v4951 = vunpack.c.h.b16 %v4643
      %v4952 = vunpack.c.l.b16 %v4644
      %v4953 = vunpack.c.h.b16 %v4644
      %v4954 = vunpack.c.l.b16 %v4645
      %v4955 = vunpack.c.h.b16 %v4645
      %v4956 = vunpack.c.l.b16 %v4646
      %v4957 = vunpack.c.h.b16 %v4646
      %v4958 = vunpack.c.l.b16 %v4647
      %v4959 = vunpack.c.h.b16 %v4647
      %v4960 = vunpack.c.l.b16 %v4648
      %v4961 = vunpack.c.h.b16 %v4648
      %v4962 = vunpack.c.l.b16 %v4649
      %v4963 = vunpack.c.h.b16 %v4649
      %v4964 = vunpack.c.l.b16 %v4650
      %v4965 = vunpack.c.h.b16 %v4650
      %v4966 = vunpack.c.l.b16 %v4651
      %v4967 = vunpack.c.h.b16 %v4651
      %v4968 = vunpack.c.l.b16 %v4652
      %v4969 = vunpack.c.h.b16 %v4652
      %v4970 = vunpack.c.l.b16 %v4653
      %v4971 = vunpack.c.h.b16 %v4653
      %v4972 = vunpack.c.l.b16 %v4654
      %v4973 = vunpack.c.h.b16 %v4654
      %v4974 = vunpack.c.l.b16 %v4655
      %v4975 = vunpack.c.h.b16 %v4655
      %v4976 = vunpack.c.l.b16 %v4656
      %v4977 = vunpack.c.h.b16 %v4656
      %v4978 = vunpack.c.l.b16 %v4657
      %v4979 = vunpack.c.h.b16 %v4657
      %v4980 = vunpack.c.l.b16 %v4658
      %v4981 = vunpack.c.h.b16 %v4658
      %v4982 = vunpack.c.l.b16 %v4659
      %v4983 = vunpack.c.h.b16 %v4659
      %v4984 = vunpack.c.l.b16 %v4660
      %v4985 = vunpack.c.h.b16 %v4660
      %v4986 = vunpack.c.l.b16 %v4661
      %v4987 = vunpack.c.h.b16 %v4661
      %v4988 = vunpack.c.l.b16 %v4662
      %v4989 = vunpack.c.h.b16 %v4662
      %v4990 = vunpack.c.l.b16 %v4663
      %v4991 = vunpack.c.h.b16 %v4663
      %v4992 = vunpack.c.l.b16 %v4664
      %v4993 = vunpack.c.h.b16 %v4664
      %v4994 = vunpack.c.l.b16 %v4665
      %v4995 = vunpack.c.h.b16 %v4665
      %v4996 = vunpack.c.l.b16 %v4666
      %v4997 = vunpack.c.h.b16 %v4666
      %v4998 = vunpack.c.l.b16 %v4667
      %v4999 = vunpack.c.h.b16 %v4667
      %v5000 = vunpack.c.l.b16 %v4668
      %v5001 = vunpack.c.h.b16 %v4668
      %v5002 = vunpack.c.l.b16 %v4669
      %v5003 = vunpack.c.h.b16 %v4669
      %v5004 = vunpack.c.l.b16 %v4670
      %v5005 = vunpack.c.h.b16 %v4670
      %v5006 = vunpack.c.l.b16 %v4671
      %v5007 = vunpack.c.h.b16 %v4671
      %v5008 = vunpack.c.l.b16 %v4672
      %v5009 = vunpack.c.h.b16 %v4672
      %v5010 = vunpack.c.l.b16 %v4673
      %v5011 = vunpack.c.h.b16 %v4673
      %v5012 = vunpack.c.l.b16 %v4674
      %v5013 = vunpack.c.h.b16 %v4674
      %v5014 = vunpack.c.l.b16 %v4675
      %v5015 = vunpack.c.h.b16 %v4675
      %v5016 = vunpack.c.l.b16 %v4676
      %v5017 = vunpack.c.h.b16 %v4676
      %v5018 = vunpack.c.l.b16 %v4677
      %v5019 = vunpack.c.h.b16 %v4677
      %v5020 = vunpack.c.l.b16 %v4678
      %v5021 = vunpack.c.h.b16 %v4678
      %v5022 = vunpack.c.l.b16 %v4679
      %v5023 = vunpack.c.h.b16 %v4679
      %v5024 = vunpack.c.l.b16 %v4680
      %v5025 = vunpack.c.h.b16 %v4680
      %v5026 = vunpack.c.l.b16 %v4681
      %v5027 = vunpack.c.h.b16 %v4681
      %v5028 = vunpack.c.l.b16 %v4682
      %v5029 = vunpack.c.h.b16 %v4682
      %v5030 = vunpack.c.l.b16 %v4683
      %v5031 = vunpack.c.h.b16 %v4683
      %v5032 = vunpack.c.l.b16 %v4684
      %v5033 = vunpack.c.h.b16 %v4684
      %v5034 = vunpack.c.l.b16 %v4685
      %v5035 = vunpack.c.h.b16 %v4685
      %v5036 = vunpack.c.l.b16 %v4686
      %v5037 = vunpack.c.h.b16 %v4686
      %v5038 = vunpack.c.l.b16 %v4687
      %v5039 = vunpack.c.h.b16 %v4687
      %v5040 = vunpack.c.l.b16 %v4688
      %v5041 = vunpack.c.h.b16 %v4688
      %v5042 = vunpack.c.l.b16 %v4689
      %v5043 = vunpack.c.h.b16 %v4689
      %v5044 = vunpack.c.l.b16 %v4690
      %v5045 = vunpack.c.h.b16 %v4690
      %v5046 = vunpack.c.l.b16 %v4691
      %v5047 = vunpack.c.h.b16 %v4691
      %v5048 = vunpack.c.l.b16 %v4692
      %v5049 = vunpack.c.h.b16 %v4692
      %v5050 = vunpack.c.l.b16 %v4693
      %v5051 = vunpack.c.h.b16 %v4693
      %v5052 = vunpack.c.l.b16 %v4694
      %v5053 = vunpack.c.h.b16 %v4694
      %v5054 = vunpack.c.l.b16 %v4695
      %v5055 = vunpack.c.h.b16 %v4695
      %v5056 = vunpack.c.l.b16 %v4696
      %v5057 = vunpack.c.h.b16 %v4696
      %v5058 = vunpack.c.l.b16 %v4697
      %v5059 = vunpack.c.h.b16 %v4697
      %v5060 = vunpack.c.l.b16 %v4698
      %v5061 = vunpack.c.h.b16 %v4698
      %v5062 = vunpack.c.l.b16 %v4699
      %v5063 = vunpack.c.h.b16 %v4699
      %v5064 = vunpack.c.l.b16 %v4700
      %v5065 = vunpack.c.h.b16 %v4700
      %v5066 = vunpack.c.l.b16 %v4701
      %v5067 = vunpack.c.h.b16 %v4701
      %v5068 = vunpack.c.l.b16 %v4702
      %v5069 = vunpack.c.h.b16 %v4702
      %v5070 = vunpack.c.l.b16 %v4703
      %v5071 = vunpack.c.h.b16 %v4703
      %v5072 = vunpack.c.l.b16 %v4704
      %v5073 = vunpack.c.h.b16 %v4704
      %v5074 = vunpack.c.l.b16 %v4705
      %v5075 = vunpack.c.h.b16 %v4705
      %v5076 = vunpack.c.l.b16 %v4706
      %v5077 = vunpack.c.h.b16 %v4706
      %v5078 = vunpack.c.l.b16 %v4707
      %v5079 = vunpack.c.h.b16 %v4707
      %v5080 = vunpack.c.l.b16 %v4708
      %v5081 = vunpack.c.h.b16 %v4708
      %v5082 = vunpack.c.l.b16 %v4709
      %v5083 = vunpack.c.h.b16 %v4709
      %v5084 = vunpack.c.l.b16 %v4710
      %v5085 = vunpack.c.h.b16 %v4710
      %v5086 = vunpack.c.l.b16 %v4711
      %v5087 = vunpack.c.h.b16 %v4711
      %v5088 = vunpack.c.l.b16 %v4712
      %v5089 = vunpack.c.h.b16 %v4712
      %v5090 = vunpack.c.l.b16 %v4713
      %v5091 = vunpack.c.h.b16 %v4713
      %v5092 = vunpack.c.l.b16 %v4714
      %v5093 = vunpack.c.h.b16 %v4714
      %v5094 = vunpack.c.l.b16 %v4715
      %v5095 = vunpack.c.h.b16 %v4715
      %v5096 = vunpack.c.l.b16 %v4716
      %v5097 = vunpack.c.h.b16 %v4716
      %v5098 = vunpack.c.l.b16 %v4717
      %v5099 = vunpack.c.h.b16 %v4717
      %v5100 = vunpack.c.l.b16 %v4718
      %v5101 = vunpack.c.h.b16 %v4718
      %v5102 = vunpack.c.l.b16 %v4719
      %v5103 = vunpack.c.h.b16 %v4719
      %v5104 = vunpack.c.l.b16 %v4720
      %v5105 = vunpack.c.h.b16 %v4720
      %v5106 = vunpack.c.l.b16 %v4721
      %v5107 = vunpack.c.h.b16 %v4721
      %v5108 = vunpack.c.l.b16 %v4722
      %v5109 = vunpack.c.h.b16 %v4722
      %v5110 = vunpack.c.l.b16 %v4723
      %v5111 = vunpack.c.h.b16 %v4723
      %v5112 = vunpack.c.l.b16 %v4724
      %v5113 = vunpack.c.h.b16 %v4724
      %v5114 = vunpack.c.l.b16 %v4725
      %v5115 = vunpack.c.h.b16 %v4725
      %v5116 = vunpack.c.l.b16 %v4726
      %v5117 = vunpack.c.h.b16 %v4726
      %v5118 = vunpack.c.l.b16 %v4727
      %v5119 = vunpack.c.h.b16 %v4727
      %v5120 = vunpack.c.l.b16 %v4728
      %v5121 = vunpack.c.h.b16 %v4728
      %v5122 = vunpack.c.l.b16 %v4729
      %v5123 = vunpack.c.h.b16 %v4729
      %v5124 = vpack.c.b16 %v4872, %v4868
      %v5125 = vpack.c.b16 %v4873, %v4869
      %v5126 = vpack.c.b16 %v4874, %v4870
      %v5127 = vpack.c.b16 %v4875, %v4871
      %v5128 = vpack.c.b16 %v4880, %v4876
      %v5129 = vpack.c.b16 %v4881, %v4877
      %v5130 = vpack.c.b16 %v4882, %v4878
      %v5131 = vpack.c.b16 %v4883, %v4879
      %v5132 = vpack.c.b16 %v4888, %v4884
      %v5133 = vpack.c.b16 %v4889, %v4885
      %v5134 = vpack.c.b16 %v4890, %v4886
      %v5135 = vpack.c.b16 %v4891, %v4887
      %v5136 = vpack.c.b16 %v4896, %v4892
      %v5137 = vpack.c.b16 %v4897, %v4893
      %v5138 = vpack.c.b16 %v4898, %v4894
      %v5139 = vpack.c.b16 %v4899, %v4895
      %v5140 = vpack.c.b16 %v4904, %v4900
      %v5141 = vpack.c.b16 %v4905, %v4901
      %v5142 = vpack.c.b16 %v4906, %v4902
      %v5143 = vpack.c.b16 %v4907, %v4903
      %v5144 = vpack.c.b16 %v4912, %v4908
      %v5145 = vpack.c.b16 %v4913, %v4909
      %v5146 = vpack.c.b16 %v4914, %v4910
      %v5147 = vpack.c.b16 %v4915, %v4911
      %v5148 = vpack.c.b16 %v4920, %v4916
      %v5149 = vpack.c.b16 %v4921, %v4917
      %v5150 = vpack.c.b16 %v4922, %v4918
      %v5151 = vpack.c.b16 %v4923, %v4919
      %v5152 = vpack.c.b16 %v4928, %v4924
      %v5153 = vpack.c.b16 %v4929, %v4925
      %v5154 = vpack.c.b16 %v4930, %v4926
      %v5155 = vpack.c.b16 %v4931, %v4927
      %v5156 = vpack.c.b16 %v4936, %v4932
      %v5157 = vpack.c.b16 %v4937, %v4933
      %v5158 = vpack.c.b16 %v4938, %v4934
      %v5159 = vpack.c.b16 %v4939, %v4935
      %v5160 = vpack.c.b16 %v4944, %v4940
      %v5161 = vpack.c.b16 %v4945, %v4941
      %v5162 = vpack.c.b16 %v4946, %v4942
      %v5163 = vpack.c.b16 %v4947, %v4943
      %v5164 = vpack.c.b16 %v4952, %v4948
      %v5165 = vpack.c.b16 %v4953, %v4949
      %v5166 = vpack.c.b16 %v4954, %v4950
      %v5167 = vpack.c.b16 %v4955, %v4951
      %v5168 = vpack.c.b16 %v4960, %v4956
      %v5169 = vpack.c.b16 %v4961, %v4957
      %v5170 = vpack.c.b16 %v4962, %v4958
      %v5171 = vpack.c.b16 %v4963, %v4959
      %v5172 = vpack.c.b16 %v4968, %v4964
      %v5173 = vpack.c.b16 %v4969, %v4965
      %v5174 = vpack.c.b16 %v4970, %v4966
      %v5175 = vpack.c.b16 %v4971, %v4967
      %v5176 = vpack.c.b16 %v4976, %v4972
      %v5177 = vpack.c.b16 %v4977, %v4973
      %v5178 = vpack.c.b16 %v4978, %v4974
      %v5179 = vpack.c.b16 %v4979, %v4975
      %v5180 = vpack.c.b16 %v4984, %v4980
      %v5181 = vpack.c.b16 %v4985, %v4981
      %v5182 = vpack.c.b16 %v4986, %v4982
      %v5183 = vpack.c.b16 %v4987, %v4983
      %v5184 = vpack.c.b16 %v4992, %v4988
      %v5185 = vpack.c.b16 %v4993, %v4989
      %v5186 = vpack.c.b16 %v4994, %v4990
      %v5187 = vpack.c.b16 %v4995, %v4991
      %v5188 = vpack.c.b16 %v5000, %v4996
      %v5189 = vpack.c.b16 %v5001, %v4997
      %v5190 = vpack.c.b16 %v5002, %v4998
      %v5191 = vpack.c.b16 %v5003, %v4999
      %v5192 = vpack.c.b16 %v5008, %v5004
      %v5193 = vpack.c.b16 %v5009, %v5005
      %v5194 = vpack.c.b16 %v5010, %v5006
      %v5195 = vpack.c.b16 %v5011, %v5007
      %v5196 = vpack.c.b16 %v5016, %v5012
      %v5197 = vpack.c.b16 %v5017, %v5013
      %v5198 = vpack.c.b16 %v5018, %v5014
      %v5199 = vpack.c.b16 %v5019, %v5015
      %v5200 = vpack.c.b16 %v5024, %v5020
      %v5201 = vpack.c.b16 %v5025, %v5021
      %v5202 = vpack.c.b16 %v5026, %v5022
      %v5203 = vpack.c.b16 %v5027, %v5023
      %v5204 = vpack.c.b16 %v5032, %v5028
      %v5205 = vpack.c.b16 %v5033, %v5029
      %v5206 = vpack.c.b16 %v5034, %v5030
      %v5207 = vpack.c.b16 %v5035, %v5031
      %v5208 = vpack.c.b16 %v5040, %v5036
      %v5209 = vpack.c.b16 %v5041, %v5037
      %v5210 = vpack.c.b16 %v5042, %v5038
      %v5211 = vpack.c.b16 %v5043, %v5039
      %v5212 = vpack.c.b16 %v5048, %v5044
      %v5213 = vpack.c.b16 %v5049, %v5045
      %v5214 = vpack.c.b16 %v5050, %v5046
      %v5215 = vpack.c.b16 %v5051, %v5047
      %v5216 = vpack.c.b16 %v5056, %v5052
      %v5217 = vpack.c.b16 %v5057, %v5053
      %v5218 = vpack.c.b16 %v5058, %v5054
      %v5219 = vpack.c.b16 %v5059, %v5055
      %v5220 = vpack.c.b16 %v5064, %v5060
      %v5221 = vpack.c.b16 %v5065, %v5061
      %v5222 = vpack.c.b16 %v5066, %v5062
      %v5223 = vpack.c.b16 %v5067, %v5063
      %v5224 = vpack.c.b16 %v5072, %v5068
      %v5225 = vpack.c.b16 %v5073, %v5069
      %v5226 = vpack.c.b16 %v5074, %v5070
      %v5227 = vpack.c.b16 %v5075, %v5071
      %v5228 = vpack.c.b16 %v5080, %v5076
      %v5229 = vpack.c.b16 %v5081, %v5077
      %v5230 = vpack.c.b16 %v5082, %v5078
      %v5231 = vpack.c.b16 %v5083, %v5079
      %v5232 = vpack.c.b16 %v5088, %v5084
      %v5233 = vpack.c.b16 %v5089, %v5085
      %v5234 = vpack.c.b16 %v5090, %v5086
      %v5235 = vpack.c.b16 %v5091, %v5087
      %v5236 = vpack.c.b16 %v5096, %v5092
      %v5237 = vpack.c.b16 %v5097, %v5093
      %v5238 = vpack.c.b16 %v5098, %v5094
      %v5239 = vpack.c.b16 %v5099, %v5095
      %v5240 = vpack.c.b16 %v5104, %v5100
      %v5241 = vpack.c.b16 %v5105, %v5101
      %v5242 = vpack.c.b16 %v5106, %v5102
      %v5243 = vpack.c.b16 %v5107, %v5103
      %v5244 = vpack.c.b16 %v5112, %v5108
      %v5245 = vpack.c.b16 %v5113, %v5109
      %v5246 = vpack.c.b16 %v5114, %v5110
      %v5247 = vpack.c.b16 %v5115, %v5111
      %v5248 = vpack.c.b16 %v5120, %v5116
      %v5249 = vpack.c.b16 %v5121, %v5117
      %v5250 = vpack.c.b16 %v5122, %v5118
      %v5251 = vpack.c.b16 %v5123, %v5119
      %5380 = vmatpush.bf16.msra.mxu0 %v5152
      %5381 = vmatpush.bf16.msra.mxu0 %v5148
      %5382 = vmatpush.bf16.msra.mxu0 %v5144
      %5383 = vmatpush.bf16.msra.mxu0 %v5140
      %5384 = vmatpush.bf16.msra.mxu0 %v5136
      %5385 = vmatpush.bf16.msra.mxu0 %v5132
      %5386 = vmatpush.bf16.msra.mxu0 %v5128
      %5387 = vmatpush.bf16.msra.mxu0 %v5124
      %5388 = vmatmul.bf16.gmra.mxu0 %v4598
      %v5389 = vpop.f32.mrf.mxu0
      %v5390 = vadd.f32 %v4732, %v5389
      %v5391 = vpop.f32.mrf.mxu0
      %v5392 = vadd.f32 %v4732, %v5391
      %5393 = vdwg.mxu0
      %5394 = vmatpush.bf16.msra.mxu0 %v5184
      %5395 = vmatpush.bf16.msra.mxu0 %v5180
      %5396 = vmatpush.bf16.msra.mxu0 %v5176
      %5397 = vmatpush.bf16.msra.mxu0 %v5172
      %5398 = vmatpush.bf16.msra.mxu0 %v5168
      %5399 = vmatpush.bf16.msra.mxu0 %v5164
      %5400 = vmatpush.bf16.msra.mxu0 %v5160
      %5401 = vmatpush.bf16.msra.mxu0 %v5156
      %5402 = vmatmul.bf16.gmra.mxu0 %v4599
      %v5403 = vpop.f32.mrf.mxu0
      %v5404 = vadd.f32 %v5390, %v5403
      %v5405 = vpop.f32.mrf.mxu0
      %v5406 = vadd.f32 %v5392, %v5405
      %5407 = vdwg.mxu0
      %5408 = vmatpush.bf16.msra.mxu0 %v5216
      %5409 = vmatpush.bf16.msra.mxu0 %v5212
      %5410 = vmatpush.bf16.msra.mxu0 %v5208
      %5411 = vmatpush.bf16.msra.mxu0 %v5204
      %5412 = vmatpush.bf16.msra.mxu0 %v5200
      %5413 = vmatpush.bf16.msra.mxu0 %v5196
      %5414 = vmatpush.bf16.msra.mxu0 %v5192
      %5415 = vmatpush.bf16.msra.mxu0 %v5188
      %5416 = vmatmul.bf16.gmra.mxu0 %v4600
      %v5417 = vpop.f32.mrf.mxu0
      %v5418 = vadd.f32 %v5404, %v5417
      %v5419 = vpop.f32.mrf.mxu0
      %v5420 = vadd.f32 %v5406, %v5419
      %5421 = vdwg.mxu0
      %5422 = vmatpush.bf16.msra.mxu0 %v5248
      %5423 = vmatpush.bf16.msra.mxu0 %v5244
      %5424 = vmatpush.bf16.msra.mxu0 %v5240
      %5425 = vmatpush.bf16.msra.mxu0 %v5236
      %5426 = vmatpush.bf16.msra.mxu0 %v5232
      %5427 = vmatpush.bf16.msra.mxu0 %v5228
      %5428 = vmatpush.bf16.msra.mxu0 %v5224
      %5429 = vmatpush.bf16.msra.mxu0 %v5220
      %5430 = vmatmul.bf16.gmra.mxu0 %v4601
      %v5431 = vpop.f32.mrf.mxu0
      %v5432 = vadd.f32 %v5418, %v5431
      %v5433 = vpop.f32.mrf.mxu0
      %v5434 = vadd.f32 %v5420, %v5433
      %5435 = vdwg.mxu0
      %5436 = vmatpush.bf16.msra.mxu0 %v5153
      %5437 = vmatpush.bf16.msra.mxu0 %v5149
      %5438 = vmatpush.bf16.msra.mxu0 %v5145
      %5439 = vmatpush.bf16.msra.mxu0 %v5141
      %5440 = vmatpush.bf16.msra.mxu0 %v5137
      %5441 = vmatpush.bf16.msra.mxu0 %v5133
      %5442 = vmatpush.bf16.msra.mxu0 %v5129
      %5443 = vmatpush.bf16.msra.mxu0 %v5125
      %5444 = vmatmul.bf16.gmra.mxu0 %v4598
      %v5445 = vpop.f32.mrf.mxu0
      %v5446 = vadd.f32 %v4733, %v5445
      %v5447 = vpop.f32.mrf.mxu0
      %v5448 = vadd.f32 %v4733, %v5447
      %5449 = vdwg.mxu0
      %5450 = vmatpush.bf16.msra.mxu0 %v5185
      %5451 = vmatpush.bf16.msra.mxu0 %v5181
      %5452 = vmatpush.bf16.msra.mxu0 %v5177
      %5453 = vmatpush.bf16.msra.mxu0 %v5173
      %5454 = vmatpush.bf16.msra.mxu0 %v5169
      %5455 = vmatpush.bf16.msra.mxu0 %v5165
      %5456 = vmatpush.bf16.msra.mxu0 %v5161
      %5457 = vmatpush.bf16.msra.mxu0 %v5157
      %5458 = vmatmul.bf16.gmra.mxu0 %v4599
      %v5459 = vpop.f32.mrf.mxu0
      %v5460 = vadd.f32 %v5446, %v5459
      %v5461 = vpop.f32.mrf.mxu0
      %v5462 = vadd.f32 %v5448, %v5461
      %5463 = vdwg.mxu0
      %5464 = vmatpush.bf16.msra.mxu0 %v5217
      %5465 = vmatpush.bf16.msra.mxu0 %v5213
      %5466 = vmatpush.bf16.msra.mxu0 %v5209
      %5467 = vmatpush.bf16.msra.mxu0 %v5205
      %5468 = vmatpush.bf16.msra.mxu0 %v5201
      %5469 = vmatpush.bf16.msra.mxu0 %v5197
      %5470 = vmatpush.bf16.msra.mxu0 %v5193
      %5471 = vmatpush.bf16.msra.mxu0 %v5189
      %5472 = vmatmul.bf16.gmra.mxu0 %v4600
      %v5473 = vpop.f32.mrf.mxu0
      %v5474 = vadd.f32 %v5460, %v5473
      %v5475 = vpop.f32.mrf.mxu0
      %v5476 = vadd.f32 %v5462, %v5475
      %5477 = vdwg.mxu0
      %5478 = vmatpush.bf16.msra.mxu0 %v5249
      %5479 = vmatpush.bf16.msra.mxu0 %v5245
      %5480 = vmatpush.bf16.msra.mxu0 %v5241
      %5481 = vmatpush.bf16.msra.mxu0 %v5237
      %5482 = vmatpush.bf16.msra.mxu0 %v5233
      %5483 = vmatpush.bf16.msra.mxu0 %v5229
      %5484 = vmatpush.bf16.msra.mxu0 %v5225
      %5485 = vmatpush.bf16.msra.mxu0 %v5221
      %5486 = vmatmul.bf16.gmra.mxu0 %v4601
      %v5487 = vpop.f32.mrf.mxu0
      %v5488 = vadd.f32 %v5474, %v5487
      %v5489 = vpop.f32.mrf.mxu0
      %v5490 = vadd.f32 %v5476, %v5489
      %5491 = vdwg.mxu0
      %5492 = vmatpush.bf16.msra.mxu0 %v5154
      %5493 = vmatpush.bf16.msra.mxu0 %v5150
      %5494 = vmatpush.bf16.msra.mxu0 %v5146
      %5495 = vmatpush.bf16.msra.mxu0 %v5142
      %5496 = vmatpush.bf16.msra.mxu0 %v5138
      %5497 = vmatpush.bf16.msra.mxu0 %v5134
      %5498 = vmatpush.bf16.msra.mxu0 %v5130
      %5499 = vmatpush.bf16.msra.mxu0 %v5126
      %5500 = vmatmul.bf16.gmra.mxu0 %v4598
      %v5501 = vpop.f32.mrf.mxu0
      %v5502 = vadd.f32 %v4734, %v5501
      %v5503 = vpop.f32.mrf.mxu0
      %v5504 = vadd.f32 %v4734, %v5503
      %5505 = vdwg.mxu0
      %5506 = vmatpush.bf16.msra.mxu0 %v5186
      %5507 = vmatpush.bf16.msra.mxu0 %v5182
      %5508 = vmatpush.bf16.msra.mxu0 %v5178
      %5509 = vmatpush.bf16.msra.mxu0 %v5174
      %5510 = vmatpush.bf16.msra.mxu0 %v5170
      %5511 = vmatpush.bf16.msra.mxu0 %v5166
      %5512 = vmatpush.bf16.msra.mxu0 %v5162
      %5513 = vmatpush.bf16.msra.mxu0 %v5158
      %5514 = vmatmul.bf16.gmra.mxu0 %v4599
      %v5515 = vpop.f32.mrf.mxu0
      %v5516 = vadd.f32 %v5502, %v5515
      %v5517 = vpop.f32.mrf.mxu0
      %v5518 = vadd.f32 %v5504, %v5517
      %5519 = vdwg.mxu0
      %5520 = vmatpush.bf16.msra.mxu0 %v5218
      %5521 = vmatpush.bf16.msra.mxu0 %v5214
      %5522 = vmatpush.bf16.msra.mxu0 %v5210
      %5523 = vmatpush.bf16.msra.mxu0 %v5206
      %5524 = vmatpush.bf16.msra.mxu0 %v5202
      %5525 = vmatpush.bf16.msra.mxu0 %v5198
      %5526 = vmatpush.bf16.msra.mxu0 %v5194
      %5527 = vmatpush.bf16.msra.mxu0 %v5190
      %5528 = vmatmul.bf16.gmra.mxu0 %v4600
      %v5529 = vpop.f32.mrf.mxu0
      %v5530 = vadd.f32 %v5516, %v5529
      %v5531 = vpop.f32.mrf.mxu0
      %v5532 = vadd.f32 %v5518, %v5531
      %5533 = vdwg.mxu0
      %5534 = vmatpush.bf16.msra.mxu0 %v5250
      %5535 = vmatpush.bf16.msra.mxu0 %v5246
      %5536 = vmatpush.bf16.msra.mxu0 %v5242
      %5537 = vmatpush.bf16.msra.mxu0 %v5238
      %5538 = vmatpush.bf16.msra.mxu0 %v5234
      %5539 = vmatpush.bf16.msra.mxu0 %v5230
      %5540 = vmatpush.bf16.msra.mxu0 %v5226
      %5541 = vmatpush.bf16.msra.mxu0 %v5222
      %5542 = vmatmul.bf16.gmra.mxu0 %v4601
      %v5543 = vpop.f32.mrf.mxu0
      %v5544 = vadd.f32 %v5530, %v5543
      %v5545 = vpop.f32.mrf.mxu0
      %v5546 = vadd.f32 %v5532, %v5545
      %5547 = vdwg.mxu0
      %5548 = vmatpush.bf16.msra.mxu0 %v5155
      %5549 = vmatpush.bf16.msra.mxu0 %v5151
      %5550 = vmatpush.bf16.msra.mxu0 %v5147
      %5551 = vmatpush.bf16.msra.mxu0 %v5143
      %5552 = vmatpush.bf16.msra.mxu0 %v5139
      %5553 = vmatpush.bf16.msra.mxu0 %v5135
      %5554 = vmatpush.bf16.msra.mxu0 %v5131
      %5555 = vmatpush.bf16.msra.mxu0 %v5127
      %5556 = vmatmul.bf16.gmra.mxu0 %v4598
      %v5557 = vpop.f32.mrf.mxu0
      %v5558 = vadd.f32 %v4735, %v5557
      %v5559 = vpop.f32.mrf.mxu0
      %v5560 = vadd.f32 %v4735, %v5559
      %5561 = vdwg.mxu0
      %5562 = vmatpush.bf16.msra.mxu0 %v5187
      %5563 = vmatpush.bf16.msra.mxu0 %v5183
      %5564 = vmatpush.bf16.msra.mxu0 %v5179
      %5565 = vmatpush.bf16.msra.mxu0 %v5175
      %5566 = vmatpush.bf16.msra.mxu0 %v5171
      %5567 = vmatpush.bf16.msra.mxu0 %v5167
      %5568 = vmatpush.bf16.msra.mxu0 %v5163
      %5569 = vmatpush.bf16.msra.mxu0 %v5159
      %5570 = vmatmul.bf16.gmra.mxu0 %v4599
      %v5571 = vpop.f32.mrf.mxu0
      %v5572 = vadd.f32 %v5558, %v5571
      %v5573 = vpop.f32.mrf.mxu0
      %v5574 = vadd.f32 %v5560, %v5573
      %5575 = vdwg.mxu0
      %5576 = vmatpush.bf16.msra.mxu0 %v5219
      %5577 = vmatpush.bf16.msra.mxu0 %v5215
      %5578 = vmatpush.bf16.msra.mxu0 %v5211
      %5579 = vmatpush.bf16.msra.mxu0 %v5207
      %5580 = vmatpush.bf16.msra.mxu0 %v5203
      %5581 = vmatpush.bf16.msra.mxu0 %v5199
      %5582 = vmatpush.bf16.msra.mxu0 %v5195
      %5583 = vmatpush.bf16.msra.mxu0 %v5191
      %5584 = vmatmul.bf16.gmra.mxu0 %v4600
      %v5585 = vpop.f32.mrf.mxu0
      %v5586 = vadd.f32 %v5572, %v5585
      %v5587 = vpop.f32.mrf.mxu0
      %v5588 = vadd.f32 %v5574, %v5587
      %5589 = vdwg.mxu0
      %5590 = vmatpush.bf16.msra.mxu0 %v5251
      %5591 = vmatpush.bf16.msra.mxu0 %v5247
      %5592 = vmatpush.bf16.msra.mxu0 %v5243
      %5593 = vmatpush.bf16.msra.mxu0 %v5239
      %5594 = vmatpush.bf16.msra.mxu0 %v5235
      %5595 = vmatpush.bf16.msra.mxu0 %v5231
      %5596 = vmatpush.bf16.msra.mxu0 %v5227
      %5597 = vmatpush.bf16.msra.mxu0 %v5223
      %5598 = vmatmul.bf16.gmra.mxu0 %v4601
      %v5599 = vpop.f32.mrf.mxu0
      %v5600 = vadd.f32 %v5586, %v5599
      %v5601 = vpop.f32.mrf.mxu0
      %v5602 = vadd.f32 %v5588, %v5601
      %5603 = vdwg.mxu0
      %v5604 = vmul.f32 %v5432, 0.5
      %v5605 = vmul.f32 %v5488, 0.5
      %v5606 = vmul.f32 %v5544, 0.5
      %v5607 = vmul.f32 %v5600, 0.5
      %v5608 = vmul.f32 %v5434, 0.5
      %v5609 = vmul.f32 %v5490, 0.5
      %v5610 = vmul.f32 %v5546, 0.5
      %v5611 = vmul.f32 %v5602, 0.5
      %v5612 = vmul.f32 %v5432, 0.70710677
      %v5613 = vmul.f32 %v5488, 0.70710677
      %v5614 = vmul.f32 %v5544, 0.70710677
      %v5615 = vmul.f32 %v5600, 0.70710677
      %v5616 = vmul.f32 %v5434, 0.70710677
      %v5617 = vmul.f32 %v5490, 0.70710677
      %v5618 = vmul.f32 %v5546, 0.70710677
      %v5619 = vmul.f32 %v5602, 0.70710677
      %vm5620 = vcmp.lt.f32.partialorder %v5612, 0.0
      %vm5621 = vcmp.lt.f32.partialorder %v5613, 0.0
      %vm5622 = vcmp.lt.f32.partialorder %v5614, 0.0
      %vm5623 = vcmp.lt.f32.partialorder %v5615, 0.0
      %vm5624 = vcmp.lt.f32.partialorder %v5616, 0.0
      %vm5625 = vcmp.lt.f32.partialorder %v5617, 0.0
      %vm5626 = vcmp.lt.f32.partialorder %v5618, 0.0
      %vm5627 = vcmp.lt.f32.partialorder %v5619, 0.0
      %v5628 = vsel %vm5620, -1.0, 1.0
      %v5629 = vsel %vm5621, -1.0, 1.0
      %v5630 = vsel %vm5622, -1.0, 1.0
      %v5631 = vsel %vm5623, -1.0, 1.0
      %v5632 = vsel %vm5624, -1.0, 1.0
      %v5633 = vsel %vm5625, -1.0, 1.0
      %v5634 = vsel %vm5626, -1.0, 1.0
      %v5635 = vsel %vm5627, -1.0, 1.0
      %v5636 = vmul.f32 %v5612, %v5628
      %v5637 = vmul.f32 %v5613, %v5629
      %v5638 = vmul.f32 %v5614, %v5630
      %v5639 = vmul.f32 %v5615, %v5631
      %v5640 = vmul.f32 %v5616, %v5632
      %v5641 = vmul.f32 %v5617, %v5633
      %v5642 = vmul.f32 %v5618, %v5634
      %v5643 = vmul.f32 %v5619, %v5635
      %v5644 = vmul.f32 %v5636, 0.3275911
      %v5645 = vmul.f32 %v5637, 0.3275911
      %v5646 = vmul.f32 %v5638, 0.3275911
      %v5647 = vmul.f32 %v5639, 0.3275911
      %v5648 = vmul.f32 %v5640, 0.3275911
      %v5649 = vmul.f32 %v5641, 0.3275911
      %v5650 = vmul.f32 %v5642, 0.3275911
      %v5651 = vmul.f32 %v5643, 0.3275911
      %v5652 = vadd.f32 %v5644, 1.0
      %v5653 = vadd.f32 %v5645, 1.0
      %v5654 = vadd.f32 %v5646, 1.0
      %v5655 = vadd.f32 %v5647, 1.0
      %v5656 = vadd.f32 %v5648, 1.0
      %v5657 = vadd.f32 %v5649, 1.0
      %v5658 = vadd.f32 %v5650, 1.0
      %v5659 = vadd.f32 %v5651, 1.0
      %v5660 = vrcp.pop %v5652
      %v5661 = vmul.f32 %v5652, %v5660
      %v5662 = vsub.f32 1.0, %v5661
      %v5663 = vmul.f32 %v5660, %v5662
      %v5664 = vadd.f32 %v5660, %v5663
      %vm5665 = vweird.f32 %v5652
      %vm5666 = vweird.f32 %v5660
      %vm5667 = vmor %vm5665, %vm5666
      %v5668 = vsel %vm5667, %v5660, %v5664
      %v5669 = vand.u32 2147483647, %v5652
      %vm5670 = vcmp.eq.f32.partialorder %v5669, 8.507059e+37
      %v5671 = vand.u32 %v5652, 2147483648
      %v5672 = vor.u32 1.1754944e-38, %v5671
      %v5673 = vsel %vm5670, %v5672, %v5668
      %v5674 = vmul.f32 1.0, %v5673
      %v5675 = vrcp.pop %v5653
      %v5676 = vmul.f32 %v5653, %v5675
      %v5677 = vsub.f32 1.0, %v5676
      %v5678 = vmul.f32 %v5675, %v5677
      %v5679 = vadd.f32 %v5675, %v5678
      %vm5680 = vweird.f32 %v5653
      %vm5681 = vweird.f32 %v5675
      %vm5682 = vmor %vm5680, %vm5681
      %v5683 = vsel %vm5682, %v5675, %v5679
      %v5684 = vand.u32 2147483647, %v5653
      %vm5685 = vcmp.eq.f32.partialorder %v5684, 8.507059e+37
      %v5686 = vand.u32 %v5653, 2147483648
      %v5687 = vor.u32 1.1754944e-38, %v5686
      %v5688 = vsel %vm5685, %v5687, %v5683
      %v5689 = vmul.f32 1.0, %v5688
      %v5690 = vrcp.pop %v5654
      %v5691 = vmul.f32 %v5654, %v5690
      %v5692 = vsub.f32 1.0, %v5691
      %v5693 = vmul.f32 %v5690, %v5692
      %v5694 = vadd.f32 %v5690, %v5693
      %vm5695 = vweird.f32 %v5654
      %vm5696 = vweird.f32 %v5690
      %vm5697 = vmor %vm5695, %vm5696
      %v5698 = vsel %vm5697, %v5690, %v5694
      %v5699 = vand.u32 2147483647, %v5654
      %vm5700 = vcmp.eq.f32.partialorder %v5699, 8.507059e+37
      %v5701 = vand.u32 %v5654, 2147483648
      %v5702 = vor.u32 1.1754944e-38, %v5701
      %v5703 = vsel %vm5700, %v5702, %v5698
      %v5704 = vmul.f32 1.0, %v5703
      %v5705 = vrcp.pop %v5655
      %v5706 = vmul.f32 %v5655, %v5705
      %v5707 = vsub.f32 1.0, %v5706
      %v5708 = vmul.f32 %v5705, %v5707
      %v5709 = vadd.f32 %v5705, %v5708
      %vm5710 = vweird.f32 %v5655
      %vm5711 = vweird.f32 %v5705
      %vm5712 = vmor %vm5710, %vm5711
      %v5713 = vsel %vm5712, %v5705, %v5709
      %v5714 = vand.u32 2147483647, %v5655
      %vm5715 = vcmp.eq.f32.partialorder %v5714, 8.507059e+37
      %v5716 = vand.u32 %v5655, 2147483648
      %v5717 = vor.u32 1.1754944e-38, %v5716
      %v5718 = vsel %vm5715, %v5717, %v5713
      %v5719 = vmul.f32 1.0, %v5718
      %v5720 = vrcp.pop %v5656
      %v5721 = vmul.f32 %v5656, %v5720
      %v5722 = vsub.f32 1.0, %v5721
      %v5723 = vmul.f32 %v5720, %v5722
      %v5724 = vadd.f32 %v5720, %v5723
      %vm5725 = vweird.f32 %v5656
      %vm5726 = vweird.f32 %v5720
      %vm5727 = vmor %vm5725, %vm5726
      %v5728 = vsel %vm5727, %v5720, %v5724
      %v5729 = vand.u32 2147483647, %v5656
      %vm5730 = vcmp.eq.f32.partialorder %v5729, 8.507059e+37
      %v5731 = vand.u32 %v5656, 2147483648
      %v5732 = vor.u32 1.1754944e-38, %v5731
      %v5733 = vsel %vm5730, %v5732, %v5728
      %v5734 = vmul.f32 1.0, %v5733
      %v5735 = vrcp.pop %v5657
      %v5736 = vmul.f32 %v5657, %v5735
      %v5737 = vsub.f32 1.0, %v5736
      %v5738 = vmul.f32 %v5735, %v5737
      %v5739 = vadd.f32 %v5735, %v5738
      %vm5740 = vweird.f32 %v5657
      %vm5741 = vweird.f32 %v5735
      %vm5742 = vmor %vm5740, %vm5741
      %v5743 = vsel %vm5742, %v5735, %v5739
      %v5744 = vand.u32 2147483647, %v5657
      %vm5745 = vcmp.eq.f32.partialorder %v5744, 8.507059e+37
      %v5746 = vand.u32 %v5657, 2147483648
      %v5747 = vor.u32 1.1754944e-38, %v5746
      %v5748 = vsel %vm5745, %v5747, %v5743
      %v5749 = vmul.f32 1.0, %v5748
      %v5750 = vrcp.pop %v5658
      %v5751 = vmul.f32 %v5658, %v5750
      %v5752 = vsub.f32 1.0, %v5751
      %v5753 = vmul.f32 %v5750, %v5752
      %v5754 = vadd.f32 %v5750, %v5753
      %vm5755 = vweird.f32 %v5658
      %vm5756 = vweird.f32 %v5750
      %vm5757 = vmor %vm5755, %vm5756
      %v5758 = vsel %vm5757, %v5750, %v5754
      %v5759 = vand.u32 2147483647, %v5658
      %vm5760 = vcmp.eq.f32.partialorder %v5759, 8.507059e+37
      %v5761 = vand.u32 %v5658, 2147483648
      %v5762 = vor.u32 1.1754944e-38, %v5761
      %v5763 = vsel %vm5760, %v5762, %v5758
      %v5764 = vmul.f32 1.0, %v5763
      %v5765 = vrcp.pop %v5659
      %v5766 = vmul.f32 %v5659, %v5765
      %v5767 = vsub.f32 1.0, %v5766
      %v5768 = vmul.f32 %v5765, %v5767
      %v5769 = vadd.f32 %v5765, %v5768
      %vm5770 = vweird.f32 %v5659
      %vm5771 = vweird.f32 %v5765
      %vm5772 = vmor %vm5770, %vm5771
      %v5773 = vsel %vm5772, %v5765, %v5769
      %v5774 = vand.u32 2147483647, %v5659
      %vm5775 = vcmp.eq.f32.partialorder %v5774, 8.507059e+37
      %v5776 = vand.u32 %v5659, 2147483648
      %v5777 = vor.u32 1.1754944e-38, %v5776
      %v5778 = vsel %vm5775, %v5777, %v5773
      %v5779 = vmul.f32 1.0, %v5778
      %v5780 = vmul.f32 %v5674, 1.0614054
      %v5781 = vmul.f32 %v5689, 1.0614054
      %v5782 = vmul.f32 %v5704, 1.0614054
      %v5783 = vmul.f32 %v5719, 1.0614054
      %v5784 = vmul.f32 %v5734, 1.0614054
      %v5785 = vmul.f32 %v5749, 1.0614054
      %v5786 = vmul.f32 %v5764, 1.0614054
      %v5787 = vmul.f32 %v5779, 1.0614054
      %v5788 = vadd.f32 %v5780, -1.4531521
      %v5789 = vadd.f32 %v5781, -1.4531521
      %v5790 = vadd.f32 %v5782, -1.4531521
      %v5791 = vadd.f32 %v5783, -1.4531521
      %v5792 = vadd.f32 %v5784, -1.4531521
      %v5793 = vadd.f32 %v5785, -1.4531521
      %v5794 = vadd.f32 %v5786, -1.4531521
      %v5795 = vadd.f32 %v5787, -1.4531521
      %v5796 = vmul.f32 %v5788, %v5674
      %v5797 = vmul.f32 %v5789, %v5689
      %v5798 = vmul.f32 %v5790, %v5704
      %v5799 = vmul.f32 %v5791, %v5719
      %v5800 = vmul.f32 %v5792, %v5734
      %v5801 = vmul.f32 %v5793, %v5749
      %v5802 = vmul.f32 %v5794, %v5764
      %v5803 = vmul.f32 %v5795, %v5779
      %v5804 = vadd.f32 %v5796, 1.4214138
      %v5805 = vadd.f32 %v5797, 1.4214138
      %v5806 = vadd.f32 %v5798, 1.4214138
      %v5807 = vadd.f32 %v5799, 1.4214138
      %v5808 = vadd.f32 %v5800, 1.4214138
      %v5809 = vadd.f32 %v5801, 1.4214138
      %v5810 = vadd.f32 %v5802, 1.4214138
      %v5811 = vadd.f32 %v5803, 1.4214138
      %v5812 = vmul.f32 %v5804, %v5674
      %v5813 = vmul.f32 %v5805, %v5689
      %v5814 = vmul.f32 %v5806, %v5704
      %v5815 = vmul.f32 %v5807, %v5719
      %v5816 = vmul.f32 %v5808, %v5734
      %v5817 = vmul.f32 %v5809, %v5749
      %v5818 = vmul.f32 %v5810, %v5764
      %v5819 = vmul.f32 %v5811, %v5779
      %v5820 = vadd.f32 %v5812, -0.28449672
      %v5821 = vadd.f32 %v5813, -0.28449672
      %v5822 = vadd.f32 %v5814, -0.28449672
      %v5823 = vadd.f32 %v5815, -0.28449672
      %v5824 = vadd.f32 %v5816, -0.28449672
      %v5825 = vadd.f32 %v5817, -0.28449672
      %v5826 = vadd.f32 %v5818, -0.28449672
      %v5827 = vadd.f32 %v5819, -0.28449672
      %v5828 = vmul.f32 %v5820, %v5674
      %v5829 = vmul.f32 %v5821, %v5689
      %v5830 = vmul.f32 %v5822, %v5704
      %v5831 = vmul.f32 %v5823, %v5719
      %v5832 = vmul.f32 %v5824, %v5734
      %v5833 = vmul.f32 %v5825, %v5749
      %v5834 = vmul.f32 %v5826, %v5764
      %v5835 = vmul.f32 %v5827, %v5779
      %v5836 = vadd.f32 %v5828, 0.2548296
      %v5837 = vadd.f32 %v5829, 0.2548296
      %v5838 = vadd.f32 %v5830, 0.2548296
      %v5839 = vadd.f32 %v5831, 0.2548296
      %v5840 = vadd.f32 %v5832, 0.2548296
      %v5841 = vadd.f32 %v5833, 0.2548296
      %v5842 = vadd.f32 %v5834, 0.2548296
      %v5843 = vadd.f32 %v5835, 0.2548296
      %v5844 = vmul.f32 %v5836, %v5674
      %v5845 = vmul.f32 %v5837, %v5689
      %v5846 = vmul.f32 %v5838, %v5704
      %v5847 = vmul.f32 %v5839, %v5719
      %v5848 = vmul.f32 %v5840, %v5734
      %v5849 = vmul.f32 %v5841, %v5749
      %v5850 = vmul.f32 %v5842, %v5764
      %v5851 = vmul.f32 %v5843, %v5779
      %v5852 = vsub.f32 0.0, %v5636
      %v5853 = vsub.f32 0.0, %v5637
      %v5854 = vsub.f32 0.0, %v5638
      %v5855 = vsub.f32 0.0, %v5639
      %v5856 = vsub.f32 0.0, %v5640
      %v5857 = vsub.f32 0.0, %v5641
      %v5858 = vsub.f32 0.0, %v5642
      %v5859 = vsub.f32 0.0, %v5643
      %v5860 = vmul.f32 %v5852, %v5636
      %v5861 = vmul.f32 %v5853, %v5637
      %v5862 = vmul.f32 %v5854, %v5638
      %v5863 = vmul.f32 %v5855, %v5639
      %v5864 = vmul.f32 %v5856, %v5640
      %v5865 = vmul.f32 %v5857, %v5641
      %v5866 = vmul.f32 %v5858, %v5642
      %v5867 = vmul.f32 %v5859, %v5643
      %v5868 = vmul.f32 %v5860, 1.442695
      %v5869 = vpow.pop %v5868
      %v5870 = vmul.f32 %v5861, 1.442695
      %v5871 = vpow.pop %v5870
      %v5872 = vmul.f32 %v5862, 1.442695
      %v5873 = vpow.pop %v5872
      %v5874 = vmul.f32 %v5863, 1.442695
      %v5875 = vpow.pop %v5874
      %v5876 = vmul.f32 %v5864, 1.442695
      %v5877 = vpow.pop %v5876
      %v5878 = vmul.f32 %v5865, 1.442695
      %v5879 = vpow.pop %v5878
      %v5880 = vmul.f32 %v5866, 1.442695
      %v5881 = vpow.pop %v5880
      %v5882 = vmul.f32 %v5867, 1.442695
      %v5883 = vpow.pop %v5882
      %v5884 = vmul.f32 %v5844, %v5869
      %v5885 = vmul.f32 %v5845, %v5871
      %v5886 = vmul.f32 %v5846, %v5873
      %v5887 = vmul.f32 %v5847, %v5875
      %v5888 = vmul.f32 %v5848, %v5877
      %v5889 = vmul.f32 %v5849, %v5879
      %v5890 = vmul.f32 %v5850, %v5881
      %v5891 = vmul.f32 %v5851, %v5883
      %v5892 = vsub.f32 1.0, %v5884
      %v5893 = vsub.f32 1.0, %v5885
      %v5894 = vsub.f32 1.0, %v5886
      %v5895 = vsub.f32 1.0, %v5887
      %v5896 = vsub.f32 1.0, %v5888
      %v5897 = vsub.f32 1.0, %v5889
      %v5898 = vsub.f32 1.0, %v5890
      %v5899 = vsub.f32 1.0, %v5891
      %v5900 = vmul.f32 %v5628, %v5892
      %v5901 = vmul.f32 %v5629, %v5893
      %v5902 = vmul.f32 %v5630, %v5894
      %v5903 = vmul.f32 %v5631, %v5895
      %v5904 = vmul.f32 %v5632, %v5896
      %v5905 = vmul.f32 %v5633, %v5897
      %v5906 = vmul.f32 %v5634, %v5898
      %v5907 = vmul.f32 %v5635, %v5899
      %v5908 = vadd.f32 %v5900, 1.0
      %v5909 = vadd.f32 %v5901, 1.0
      %v5910 = vadd.f32 %v5902, 1.0
      %v5911 = vadd.f32 %v5903, 1.0
      %v5912 = vadd.f32 %v5904, 1.0
      %v5913 = vadd.f32 %v5905, 1.0
      %v5914 = vadd.f32 %v5906, 1.0
      %v5915 = vadd.f32 %v5907, 1.0
      %v5916 = vmul.f32 %v5604, %v5908
      %v5917 = vmul.f32 %v5605, %v5909
      %v5918 = vmul.f32 %v5606, %v5910
      %v5919 = vmul.f32 %v5607, %v5911
      %v5920 = vmul.f32 %v5608, %v5912
      %v5921 = vmul.f32 %v5609, %v5913
      %v5922 = vmul.f32 %v5610, %v5914
      %v5923 = vmul.f32 %v5611, %v5915
      %v5924 = vpack.c.bf16 %v5920, %v5916
      %v5925 = vpack.c.bf16 %v5921, %v5917
      %v5926 = vpack.c.bf16 %v5922, %v5918
      %v5927 = vpack.c.bf16 %v5923, %v5919
      %v5928 = vld [vmem:[#allocation10] sm:$0xff]
      %v5929 = vld [vmem:[#allocation10 + $0x8] sm:$0xff]
      %v5930 = vld [vmem:[#allocation10 + $0x10] sm:$0xff]
      %v5931 = vld [vmem:[#allocation10 + $0x18] sm:$0xff]
      %v5932 = vld [vmem:[#allocation10 + $0x20] sm:$0xff]
      %v5933 = vld [vmem:[#allocation10 + $0x28] sm:$0xff]
      %v5934 = vld [vmem:[#allocation10 + $0x30] sm:$0xff]
      %v5935 = vld [vmem:[#allocation10 + $0x38] sm:$0xff]
      %v5936 = vld [vmem:[#allocation10 + $0x40] sm:$0xff]
      %v5937 = vld [vmem:[#allocation10 + $0x48] sm:$0xff]
      %v5938 = vld [vmem:[#allocation10 + $0x50] sm:$0xff]
      %v5939 = vld [vmem:[#allocation10 + $0x58] sm:$0xff]
      %v5940 = vld [vmem:[#allocation10 + $0x60] sm:$0xff]
      %v5941 = vld [vmem:[#allocation10 + $0x68] sm:$0xff]
      %v5942 = vld [vmem:[#allocation10 + $0x70] sm:$0xff]
      %v5943 = vld [vmem:[#allocation10 + $0x78] sm:$0xff]
      %v5944 = vld [vmem:[#allocation10 + $0x80] sm:$0xff]
      %v5945 = vld [vmem:[#allocation10 + $0x88] sm:$0xff]
      %v5946 = vld [vmem:[#allocation10 + $0x90] sm:$0xff]
      %v5947 = vld [vmem:[#allocation10 + $0x98] sm:$0xff]
      %v5948 = vld [vmem:[#allocation10 + $0xa0] sm:$0xff]
      %v5949 = vld [vmem:[#allocation10 + $0xa8] sm:$0xff]
      %v5950 = vld [vmem:[#allocation10 + $0xb0] sm:$0xff]
      %v5951 = vld [vmem:[#allocation10 + $0xb8] sm:$0xff]
      %v5952 = vld [vmem:[#allocation10 + $0xc0] sm:$0xff]
      %v5953 = vld [vmem:[#allocation10 + $0xc8] sm:$0xff]
      %v5954 = vld [vmem:[#allocation10 + $0xd0] sm:$0xff]
      %v5955 = vld [vmem:[#allocation10 + $0xd8] sm:$0xff]
      %v5956 = vld [vmem:[#allocation10 + $0xe0] sm:$0xff]
      %v5957 = vld [vmem:[#allocation10 + $0xe8] sm:$0xff]
      %v5958 = vld [vmem:[#allocation10 + $0xf0] sm:$0xff]
      %v5959 = vld [vmem:[#allocation10 + $0xf8] sm:$0xff]
      %v5960 = vld [vmem:[#allocation10 + $0x100] sm:$0xff]
      %v5961 = vld [vmem:[#allocation10 + $0x108] sm:$0xff]
      %v5962 = vld [vmem:[#allocation10 + $0x110] sm:$0xff]
      %v5963 = vld [vmem:[#allocation10 + $0x118] sm:$0xff]
      %v5964 = vld [vmem:[#allocation10 + $0x120] sm:$0xff]
      %v5965 = vld [vmem:[#allocation10 + $0x128] sm:$0xff]
      %v5966 = vld [vmem:[#allocation10 + $0x130] sm:$0xff]
      %v5967 = vld [vmem:[#allocation10 + $0x138] sm:$0xff]
      %v5968 = vld [vmem:[#allocation10 + $0x140] sm:$0xff]
      %v5969 = vld [vmem:[#allocation10 + $0x148] sm:$0xff]
      %v5970 = vld [vmem:[#allocation10 + $0x150] sm:$0xff]
      %v5971 = vld [vmem:[#allocation10 + $0x158] sm:$0xff]
      %v5972 = vld [vmem:[#allocation10 + $0x160] sm:$0xff]
      %v5973 = vld [vmem:[#allocation10 + $0x168] sm:$0xff]
      %v5974 = vld [vmem:[#allocation10 + $0x170] sm:$0xff]
      %v5975 = vld [vmem:[#allocation10 + $0x178] sm:$0xff]
      %v5976 = vld [vmem:[#allocation10 + $0x180] sm:$0xff]
      %v5977 = vld [vmem:[#allocation10 + $0x188] sm:$0xff]
      %v5978 = vld [vmem:[#allocation10 + $0x190] sm:$0xff]
      %v5979 = vld [vmem:[#allocation10 + $0x198] sm:$0xff]
      %v5980 = vld [vmem:[#allocation10 + $0x1a0] sm:$0xff]
      %v5981 = vld [vmem:[#allocation10 + $0x1a8] sm:$0xff]
      %v5982 = vld [vmem:[#allocation10 + $0x1b0] sm:$0xff]
      %v5983 = vld [vmem:[#allocation10 + $0x1b8] sm:$0xff]
      %v5984 = vld [vmem:[#allocation10 + $0x1c0] sm:$0xff]
      %v5985 = vld [vmem:[#allocation10 + $0x1c8] sm:$0xff]
      %v5986 = vld [vmem:[#allocation10 + $0x1d0] sm:$0xff]
      %v5987 = vld [vmem:[#allocation10 + $0x1d8] sm:$0xff]
      %v5988 = vld [vmem:[#allocation10 + $0x1e0] sm:$0xff]
      %v5989 = vld [vmem:[#allocation10 + $0x1e8] sm:$0xff]
      %v5990 = vld [vmem:[#allocation10 + $0x1f0] sm:$0xff]
      %v5991 = vld [vmem:[#allocation10 + $0x1f8] sm:$0xff]
      %v5992 = vld [vmem:[#allocation10 + $0x200] sm:$0xff]
      %v5993 = vld [vmem:[#allocation10 + $0x208] sm:$0xff]
      %v5994 = vld [vmem:[#allocation10 + $0x210] sm:$0xff]
      %v5995 = vld [vmem:[#allocation10 + $0x218] sm:$0xff]
      %v5996 = vld [vmem:[#allocation10 + $0x220] sm:$0xff]
      %v5997 = vld [vmem:[#allocation10 + $0x228] sm:$0xff]
      %v5998 = vld [vmem:[#allocation10 + $0x230] sm:$0xff]
      %v5999 = vld [vmem:[#allocation10 + $0x238] sm:$0xff]
      %v6000 = vld [vmem:[#allocation10 + $0x240] sm:$0xff]
      %v6001 = vld [vmem:[#allocation10 + $0x248] sm:$0xff]
      %v6002 = vld [vmem:[#allocation10 + $0x250] sm:$0xff]
      %v6003 = vld [vmem:[#allocation10 + $0x258] sm:$0xff]
      %v6004 = vld [vmem:[#allocation10 + $0x260] sm:$0xff]
      %v6005 = vld [vmem:[#allocation10 + $0x268] sm:$0xff]
      %v6006 = vld [vmem:[#allocation10 + $0x270] sm:$0xff]
      %v6007 = vld [vmem:[#allocation10 + $0x278] sm:$0xff]
      %v6008 = vld [vmem:[#allocation10 + $0x280] sm:$0xff]
      %v6009 = vld [vmem:[#allocation10 + $0x288] sm:$0xff]
      %v6010 = vld [vmem:[#allocation10 + $0x290] sm:$0xff]
      %v6011 = vld [vmem:[#allocation10 + $0x298] sm:$0xff]
      %v6012 = vld [vmem:[#allocation10 + $0x2a0] sm:$0xff]
      %v6013 = vld [vmem:[#allocation10 + $0x2a8] sm:$0xff]
      %v6014 = vld [vmem:[#allocation10 + $0x2b0] sm:$0xff]
      %v6015 = vld [vmem:[#allocation10 + $0x2b8] sm:$0xff]
      %v6016 = vld [vmem:[#allocation10 + $0x2c0] sm:$0xff]
      %v6017 = vld [vmem:[#allocation10 + $0x2c8] sm:$0xff]
      %v6018 = vld [vmem:[#allocation10 + $0x2d0] sm:$0xff]
      %v6019 = vld [vmem:[#allocation10 + $0x2d8] sm:$0xff]
      %v6020 = vld [vmem:[#allocation10 + $0x2e0] sm:$0xff]
      %v6021 = vld [vmem:[#allocation10 + $0x2e8] sm:$0xff]
      %v6022 = vld [vmem:[#allocation10 + $0x2f0] sm:$0xff]
      %v6023 = vld [vmem:[#allocation10 + $0x2f8] sm:$0xff]
      %v6024 = vld [vmem:[#allocation10 + $0x300] sm:$0xff]
      %v6025 = vld [vmem:[#allocation10 + $0x308] sm:$0xff]
      %v6026 = vld [vmem:[#allocation10 + $0x310] sm:$0xff]
      %v6027 = vld [vmem:[#allocation10 + $0x318] sm:$0xff]
      %v6028 = vld [vmem:[#allocation10 + $0x320] sm:$0xff]
      %v6029 = vld [vmem:[#allocation10 + $0x328] sm:$0xff]
      %v6030 = vld [vmem:[#allocation10 + $0x330] sm:$0xff]
      %v6031 = vld [vmem:[#allocation10 + $0x338] sm:$0xff]
      %v6032 = vld [vmem:[#allocation10 + $0x340] sm:$0xff]
      %v6033 = vld [vmem:[#allocation10 + $0x348] sm:$0xff]
      %v6034 = vld [vmem:[#allocation10 + $0x350] sm:$0xff]
      %v6035 = vld [vmem:[#allocation10 + $0x358] sm:$0xff]
      %v6036 = vld [vmem:[#allocation10 + $0x360] sm:$0xff]
      %v6037 = vld [vmem:[#allocation10 + $0x368] sm:$0xff]
      %v6038 = vld [vmem:[#allocation10 + $0x370] sm:$0xff]
      %v6039 = vld [vmem:[#allocation10 + $0x378] sm:$0xff]
      %v6040 = vld [vmem:[#allocation10 + $0x380] sm:$0xff]
      %v6041 = vld [vmem:[#allocation10 + $0x388] sm:$0xff]
      %v6042 = vld [vmem:[#allocation10 + $0x390] sm:$0xff]
      %v6043 = vld [vmem:[#allocation10 + $0x398] sm:$0xff]
      %v6044 = vld [vmem:[#allocation10 + $0x3a0] sm:$0xff]
      %v6045 = vld [vmem:[#allocation10 + $0x3a8] sm:$0xff]
      %v6046 = vld [vmem:[#allocation10 + $0x3b0] sm:$0xff]
      %v6047 = vld [vmem:[#allocation10 + $0x3b8] sm:$0xff]
      %v6048 = vld [vmem:[#allocation10 + $0x3c0] sm:$0xff]
      %v6049 = vld [vmem:[#allocation10 + $0x3c8] sm:$0xff]
      %v6050 = vld [vmem:[#allocation10 + $0x3d0] sm:$0xff]
      %v6051 = vld [vmem:[#allocation10 + $0x3d8] sm:$0xff]
      %v6052 = vld [vmem:[#allocation10 + $0x3e0] sm:$0xff]
      %v6053 = vld [vmem:[#allocation10 + $0x3e8] sm:$0xff]
      %v6054 = vld [vmem:[#allocation10 + $0x3f0] sm:$0xff]
      %v6055 = vld [vmem:[#allocation10 + $0x3f8] sm:$0xff]
      %v6056 = vld [vmem:[#allocation11] sm:$0xf]
      %v6058 = vperm.slane %v6056, 0
      %v6059 = vperm.slane %v6056, 1
      %v6060 = vperm.slane %v6056, 2
      %v6061 = vperm.slane %v6056, 3
      %v6194 = vunpack.c.l.b16 %v5928
      %v6195 = vunpack.c.h.b16 %v5928
      %v6196 = vunpack.c.l.b16 %v5929
      %v6197 = vunpack.c.h.b16 %v5929
      %v6198 = vunpack.c.l.b16 %v5930
      %v6199 = vunpack.c.h.b16 %v5930
      %v6200 = vunpack.c.l.b16 %v5931
      %v6201 = vunpack.c.h.b16 %v5931
      %v6202 = vunpack.c.l.b16 %v5932
      %v6203 = vunpack.c.h.b16 %v5932
      %v6204 = vunpack.c.l.b16 %v5933
      %v6205 = vunpack.c.h.b16 %v5933
      %v6206 = vunpack.c.l.b16 %v5934
      %v6207 = vunpack.c.h.b16 %v5934
      %v6208 = vunpack.c.l.b16 %v5935
      %v6209 = vunpack.c.h.b16 %v5935
      %v6210 = vunpack.c.l.b16 %v5936
      %v6211 = vunpack.c.h.b16 %v5936
      %v6212 = vunpack.c.l.b16 %v5937
      %v6213 = vunpack.c.h.b16 %v5937
      %v6214 = vunpack.c.l.b16 %v5938
      %v6215 = vunpack.c.h.b16 %v5938
      %v6216 = vunpack.c.l.b16 %v5939
      %v6217 = vunpack.c.h.b16 %v5939
      %v6218 = vunpack.c.l.b16 %v5940
      %v6219 = vunpack.c.h.b16 %v5940
      %v6220 = vunpack.c.l.b16 %v5941
      %v6221 = vunpack.c.h.b16 %v5941
      %v6222 = vunpack.c.l.b16 %v5942
      %v6223 = vunpack.c.h.b16 %v5942
      %v6224 = vunpack.c.l.b16 %v5943
      %v6225 = vunpack.c.h.b16 %v5943
      %v6226 = vunpack.c.l.b16 %v5944
      %v6227 = vunpack.c.h.b16 %v5944
      %v6228 = vunpack.c.l.b16 %v5945
      %v6229 = vunpack.c.h.b16 %v5945
      %v6230 = vunpack.c.l.b16 %v5946
      %v6231 = vunpack.c.h.b16 %v5946
      %v6232 = vunpack.c.l.b16 %v5947
      %v6233 = vunpack.c.h.b16 %v5947
      %v6234 = vunpack.c.l.b16 %v5948
      %v6235 = vunpack.c.h.b16 %v5948
      %v6236 = vunpack.c.l.b16 %v5949
      %v6237 = vunpack.c.h.b16 %v5949
      %v6238 = vunpack.c.l.b16 %v5950
      %v6239 = vunpack.c.h.b16 %v5950
      %v6240 = vunpack.c.l.b16 %v5951
      %v6241 = vunpack.c.h.b16 %v5951
      %v6242 = vunpack.c.l.b16 %v5952
      %v6243 = vunpack.c.h.b16 %v5952
      %v6244 = vunpack.c.l.b16 %v5953
      %v6245 = vunpack.c.h.b16 %v5953
      %v6246 = vunpack.c.l.b16 %v5954
      %v6247 = vunpack.c.h.b16 %v5954
      %v6248 = vunpack.c.l.b16 %v5955
      %v6249 = vunpack.c.h.b16 %v5955
      %v6250 = vunpack.c.l.b16 %v5956
      %v6251 = vunpack.c.h.b16 %v5956
      %v6252 = vunpack.c.l.b16 %v5957
      %v6253 = vunpack.c.h.b16 %v5957
      %v6254 = vunpack.c.l.b16 %v5958
      %v6255 = vunpack.c.h.b16 %v5958
      %v6256 = vunpack.c.l.b16 %v5959
      %v6257 = vunpack.c.h.b16 %v5959
      %v6258 = vunpack.c.l.b16 %v5960
      %v6259 = vunpack.c.h.b16 %v5960
      %v6260 = vunpack.c.l.b16 %v5961
      %v6261 = vunpack.c.h.b16 %v5961
      %v6262 = vunpack.c.l.b16 %v5962
      %v6263 = vunpack.c.h.b16 %v5962
      %v6264 = vunpack.c.l.b16 %v5963
      %v6265 = vunpack.c.h.b16 %v5963
      %v6266 = vunpack.c.l.b16 %v5964
      %v6267 = vunpack.c.h.b16 %v5964
      %v6268 = vunpack.c.l.b16 %v5965
      %v6269 = vunpack.c.h.b16 %v5965
      %v6270 = vunpack.c.l.b16 %v5966
      %v6271 = vunpack.c.h.b16 %v5966
      %v6272 = vunpack.c.l.b16 %v5967
      %v6273 = vunpack.c.h.b16 %v5967
      %v6274 = vunpack.c.l.b16 %v5968
      %v6275 = vunpack.c.h.b16 %v5968
      %v6276 = vunpack.c.l.b16 %v5969
      %v6277 = vunpack.c.h.b16 %v5969
      %v6278 = vunpack.c.l.b16 %v5970
      %v6279 = vunpack.c.h.b16 %v5970
      %v6280 = vunpack.c.l.b16 %v5971
      %v6281 = vunpack.c.h.b16 %v5971
      %v6282 = vunpack.c.l.b16 %v5972
      %v6283 = vunpack.c.h.b16 %v5972
      %v6284 = vunpack.c.l.b16 %v5973
      %v6285 = vunpack.c.h.b16 %v5973
      %v6286 = vunpack.c.l.b16 %v5974
      %v6287 = vunpack.c.h.b16 %v5974
      %v6288 = vunpack.c.l.b16 %v5975
      %v6289 = vunpack.c.h.b16 %v5975
      %v6290 = vunpack.c.l.b16 %v5976
      %v6291 = vunpack.c.h.b16 %v5976
      %v6292 = vunpack.c.l.b16 %v5977
      %v6293 = vunpack.c.h.b16 %v5977
      %v6294 = vunpack.c.l.b16 %v5978
      %v6295 = vunpack.c.h.b16 %v5978
      %v6296 = vunpack.c.l.b16 %v5979
      %v6297 = vunpack.c.h.b16 %v5979
      %v6298 = vunpack.c.l.b16 %v5980
      %v6299 = vunpack.c.h.b16 %v5980
      %v6300 = vunpack.c.l.b16 %v5981
      %v6301 = vunpack.c.h.b16 %v5981
      %v6302 = vunpack.c.l.b16 %v5982
      %v6303 = vunpack.c.h.b16 %v5982
      %v6304 = vunpack.c.l.b16 %v5983
      %v6305 = vunpack.c.h.b16 %v5983
      %v6306 = vunpack.c.l.b16 %v5984
      %v6307 = vunpack.c.h.b16 %v5984
      %v6308 = vunpack.c.l.b16 %v5985
      %v6309 = vunpack.c.h.b16 %v5985
      %v6310 = vunpack.c.l.b16 %v5986
      %v6311 = vunpack.c.h.b16 %v5986
      %v6312 = vunpack.c.l.b16 %v5987
      %v6313 = vunpack.c.h.b16 %v5987
      %v6314 = vunpack.c.l.b16 %v5988
      %v6315 = vunpack.c.h.b16 %v5988
      %v6316 = vunpack.c.l.b16 %v5989
      %v6317 = vunpack.c.h.b16 %v5989
      %v6318 = vunpack.c.l.b16 %v5990
      %v6319 = vunpack.c.h.b16 %v5990
      %v6320 = vunpack.c.l.b16 %v5991
      %v6321 = vunpack.c.h.b16 %v5991
      %v6322 = vunpack.c.l.b16 %v5992
      %v6323 = vunpack.c.h.b16 %v5992
      %v6324 = vunpack.c.l.b16 %v5993
      %v6325 = vunpack.c.h.b16 %v5993
      %v6326 = vunpack.c.l.b16 %v5994
      %v6327 = vunpack.c.h.b16 %v5994
      %v6328 = vunpack.c.l.b16 %v5995
      %v6329 = vunpack.c.h.b16 %v5995
      %v6330 = vunpack.c.l.b16 %v5996
      %v6331 = vunpack.c.h.b16 %v5996
      %v6332 = vunpack.c.l.b16 %v5997
      %v6333 = vunpack.c.h.b16 %v5997
      %v6334 = vunpack.c.l.b16 %v5998
      %v6335 = vunpack.c.h.b16 %v5998
      %v6336 = vunpack.c.l.b16 %v5999
      %v6337 = vunpack.c.h.b16 %v5999
      %v6338 = vunpack.c.l.b16 %v6000
      %v6339 = vunpack.c.h.b16 %v6000
      %v6340 = vunpack.c.l.b16 %v6001
      %v6341 = vunpack.c.h.b16 %v6001
      %v6342 = vunpack.c.l.b16 %v6002
      %v6343 = vunpack.c.h.b16 %v6002
      %v6344 = vunpack.c.l.b16 %v6003
      %v6345 = vunpack.c.h.b16 %v6003
      %v6346 = vunpack.c.l.b16 %v6004
      %v6347 = vunpack.c.h.b16 %v6004
      %v6348 = vunpack.c.l.b16 %v6005
      %v6349 = vunpack.c.h.b16 %v6005
      %v6350 = vunpack.c.l.b16 %v6006
      %v6351 = vunpack.c.h.b16 %v6006
      %v6352 = vunpack.c.l.b16 %v6007
      %v6353 = vunpack.c.h.b16 %v6007
      %v6354 = vunpack.c.l.b16 %v6008
      %v6355 = vunpack.c.h.b16 %v6008
      %v6356 = vunpack.c.l.b16 %v6009
      %v6357 = vunpack.c.h.b16 %v6009
      %v6358 = vunpack.c.l.b16 %v6010
      %v6359 = vunpack.c.h.b16 %v6010
      %v6360 = vunpack.c.l.b16 %v6011
      %v6361 = vunpack.c.h.b16 %v6011
      %v6362 = vunpack.c.l.b16 %v6012
      %v6363 = vunpack.c.h.b16 %v6012
      %v6364 = vunpack.c.l.b16 %v6013
      %v6365 = vunpack.c.h.b16 %v6013
      %v6366 = vunpack.c.l.b16 %v6014
      %v6367 = vunpack.c.h.b16 %v6014
      %v6368 = vunpack.c.l.b16 %v6015
      %v6369 = vunpack.c.h.b16 %v6015
      %v6370 = vunpack.c.l.b16 %v6016
      %v6371 = vunpack.c.h.b16 %v6016
      %v6372 = vunpack.c.l.b16 %v6017
      %v6373 = vunpack.c.h.b16 %v6017
      %v6374 = vunpack.c.l.b16 %v6018
      %v6375 = vunpack.c.h.b16 %v6018
      %v6376 = vunpack.c.l.b16 %v6019
      %v6377 = vunpack.c.h.b16 %v6019
      %v6378 = vunpack.c.l.b16 %v6020
      %v6379 = vunpack.c.h.b16 %v6020
      %v6380 = vunpack.c.l.b16 %v6021
      %v6381 = vunpack.c.h.b16 %v6021
      %v6382 = vunpack.c.l.b16 %v6022
      %v6383 = vunpack.c.h.b16 %v6022
      %v6384 = vunpack.c.l.b16 %v6023
      %v6385 = vunpack.c.h.b16 %v6023
      %v6386 = vunpack.c.l.b16 %v6024
      %v6387 = vunpack.c.h.b16 %v6024
      %v6388 = vunpack.c.l.b16 %v6025
      %v6389 = vunpack.c.h.b16 %v6025
      %v6390 = vunpack.c.l.b16 %v6026
      %v6391 = vunpack.c.h.b16 %v6026
      %v6392 = vunpack.c.l.b16 %v6027
      %v6393 = vunpack.c.h.b16 %v6027
      %v6394 = vunpack.c.l.b16 %v6028
      %v6395 = vunpack.c.h.b16 %v6028
      %v6396 = vunpack.c.l.b16 %v6029
      %v6397 = vunpack.c.h.b16 %v6029
      %v6398 = vunpack.c.l.b16 %v6030
      %v6399 = vunpack.c.h.b16 %v6030
      %v6400 = vunpack.c.l.b16 %v6031
      %v6401 = vunpack.c.h.b16 %v6031
      %v6402 = vunpack.c.l.b16 %v6032
      %v6403 = vunpack.c.h.b16 %v6032
      %v6404 = vunpack.c.l.b16 %v6033
      %v6405 = vunpack.c.h.b16 %v6033
      %v6406 = vunpack.c.l.b16 %v6034
      %v6407 = vunpack.c.h.b16 %v6034
      %v6408 = vunpack.c.l.b16 %v6035
      %v6409 = vunpack.c.h.b16 %v6035
      %v6410 = vunpack.c.l.b16 %v6036
      %v6411 = vunpack.c.h.b16 %v6036
      %v6412 = vunpack.c.l.b16 %v6037
      %v6413 = vunpack.c.h.b16 %v6037
      %v6414 = vunpack.c.l.b16 %v6038
      %v6415 = vunpack.c.h.b16 %v6038
      %v6416 = vunpack.c.l.b16 %v6039
      %v6417 = vunpack.c.h.b16 %v6039
      %v6418 = vunpack.c.l.b16 %v6040
      %v6419 = vunpack.c.h.b16 %v6040
      %v6420 = vunpack.c.l.b16 %v6041
      %v6421 = vunpack.c.h.b16 %v6041
      %v6422 = vunpack.c.l.b16 %v6042
      %v6423 = vunpack.c.h.b16 %v6042
      %v6424 = vunpack.c.l.b16 %v6043
      %v6425 = vunpack.c.h.b16 %v6043
      %v6426 = vunpack.c.l.b16 %v6044
      %v6427 = vunpack.c.h.b16 %v6044
      %v6428 = vunpack.c.l.b16 %v6045
      %v6429 = vunpack.c.h.b16 %v6045
      %v6430 = vunpack.c.l.b16 %v6046
      %v6431 = vunpack.c.h.b16 %v6046
      %v6432 = vunpack.c.l.b16 %v6047
      %v6433 = vunpack.c.h.b16 %v6047
      %v6434 = vunpack.c.l.b16 %v6048
      %v6435 = vunpack.c.h.b16 %v6048
      %v6436 = vunpack.c.l.b16 %v6049
      %v6437 = vunpack.c.h.b16 %v6049
      %v6438 = vunpack.c.l.b16 %v6050
      %v6439 = vunpack.c.h.b16 %v6050
      %v6440 = vunpack.c.l.b16 %v6051
      %v6441 = vunpack.c.h.b16 %v6051
      %v6442 = vunpack.c.l.b16 %v6052
      %v6443 = vunpack.c.h.b16 %v6052
      %v6444 = vunpack.c.l.b16 %v6053
      %v6445 = vunpack.c.h.b16 %v6053
      %v6446 = vunpack.c.l.b16 %v6054
      %v6447 = vunpack.c.h.b16 %v6054
      %v6448 = vunpack.c.l.b16 %v6055
      %v6449 = vunpack.c.h.b16 %v6055
      %v6450 = vpack.c.b16 %v6198, %v6194
      %v6451 = vpack.c.b16 %v6199, %v6195
      %v6452 = vpack.c.b16 %v6200, %v6196
      %v6453 = vpack.c.b16 %v6201, %v6197
      %v6454 = vpack.c.b16 %v6206, %v6202
      %v6455 = vpack.c.b16 %v6207, %v6203
      %v6456 = vpack.c.b16 %v6208, %v6204
      %v6457 = vpack.c.b16 %v6209, %v6205
      %v6458 = vpack.c.b16 %v6214, %v6210
      %v6459 = vpack.c.b16 %v6215, %v6211
      %v6460 = vpack.c.b16 %v6216, %v6212
      %v6461 = vpack.c.b16 %v6217, %v6213
      %v6462 = vpack.c.b16 %v6222, %v6218
      %v6463 = vpack.c.b16 %v6223, %v6219
      %v6464 = vpack.c.b16 %v6224, %v6220
      %v6465 = vpack.c.b16 %v6225, %v6221
      %v6466 = vpack.c.b16 %v6230, %v6226
      %v6467 = vpack.c.b16 %v6231, %v6227
      %v6468 = vpack.c.b16 %v6232, %v6228
      %v6469 = vpack.c.b16 %v6233, %v6229
      %v6470 = vpack.c.b16 %v6238, %v6234
      %v6471 = vpack.c.b16 %v6239, %v6235
      %v6472 = vpack.c.b16 %v6240, %v6236
      %v6473 = vpack.c.b16 %v6241, %v6237
      %v6474 = vpack.c.b16 %v6246, %v6242
      %v6475 = vpack.c.b16 %v6247, %v6243
      %v6476 = vpack.c.b16 %v6248, %v6244
      %v6477 = vpack.c.b16 %v6249, %v6245
      %v6478 = vpack.c.b16 %v6254, %v6250
      %v6479 = vpack.c.b16 %v6255, %v6251
      %v6480 = vpack.c.b16 %v6256, %v6252
      %v6481 = vpack.c.b16 %v6257, %v6253
      %v6482 = vpack.c.b16 %v6262, %v6258
      %v6483 = vpack.c.b16 %v6263, %v6259
      %v6484 = vpack.c.b16 %v6264, %v6260
      %v6485 = vpack.c.b16 %v6265, %v6261
      %v6486 = vpack.c.b16 %v6270, %v6266
      %v6487 = vpack.c.b16 %v6271, %v6267
      %v6488 = vpack.c.b16 %v6272, %v6268
      %v6489 = vpack.c.b16 %v6273, %v6269
      %v6490 = vpack.c.b16 %v6278, %v6274
      %v6491 = vpack.c.b16 %v6279, %v6275
      %v6492 = vpack.c.b16 %v6280, %v6276
      %v6493 = vpack.c.b16 %v6281, %v6277
      %v6494 = vpack.c.b16 %v6286, %v6282
      %v6495 = vpack.c.b16 %v6287, %v6283
      %v6496 = vpack.c.b16 %v6288, %v6284
      %v6497 = vpack.c.b16 %v6289, %v6285
      %v6498 = vpack.c.b16 %v6294, %v6290
      %v6499 = vpack.c.b16 %v6295, %v6291
      %v6500 = vpack.c.b16 %v6296, %v6292
      %v6501 = vpack.c.b16 %v6297, %v6293
      %v6502 = vpack.c.b16 %v6302, %v6298
      %v6503 = vpack.c.b16 %v6303, %v6299
      %v6504 = vpack.c.b16 %v6304, %v6300
      %v6505 = vpack.c.b16 %v6305, %v6301
      %v6506 = vpack.c.b16 %v6310, %v6306
      %v6507 = vpack.c.b16 %v6311, %v6307
      %v6508 = vpack.c.b16 %v6312, %v6308
      %v6509 = vpack.c.b16 %v6313, %v6309
      %v6510 = vpack.c.b16 %v6318, %v6314
      %v6511 = vpack.c.b16 %v6319, %v6315
      %v6512 = vpack.c.b16 %v6320, %v6316
      %v6513 = vpack.c.b16 %v6321, %v6317
      %v6514 = vpack.c.b16 %v6326, %v6322
      %v6515 = vpack.c.b16 %v6327, %v6323
      %v6516 = vpack.c.b16 %v6328, %v6324
      %v6517 = vpack.c.b16 %v6329, %v6325
      %v6518 = vpack.c.b16 %v6334, %v6330
      %v6519 = vpack.c.b16 %v6335, %v6331
      %v6520 = vpack.c.b16 %v6336, %v6332
      %v6521 = vpack.c.b16 %v6337, %v6333
      %v6522 = vpack.c.b16 %v6342, %v6338
      %v6523 = vpack.c.b16 %v6343, %v6339
      %v6524 = vpack.c.b16 %v6344, %v6340
      %v6525 = vpack.c.b16 %v6345, %v6341
      %v6526 = vpack.c.b16 %v6350, %v6346
      %v6527 = vpack.c.b16 %v6351, %v6347
      %v6528 = vpack.c.b16 %v6352, %v6348
      %v6529 = vpack.c.b16 %v6353, %v6349
      %v6530 = vpack.c.b16 %v6358, %v6354
      %v6531 = vpack.c.b16 %v6359, %v6355
      %v6532 = vpack.c.b16 %v6360, %v6356
      %v6533 = vpack.c.b16 %v6361, %v6357
      %v6534 = vpack.c.b16 %v6366, %v6362
      %v6535 = vpack.c.b16 %v6367, %v6363
      %v6536 = vpack.c.b16 %v6368, %v6364
      %v6537 = vpack.c.b16 %v6369, %v6365
      %v6538 = vpack.c.b16 %v6374, %v6370
      %v6539 = vpack.c.b16 %v6375, %v6371
      %v6540 = vpack.c.b16 %v6376, %v6372
      %v6541 = vpack.c.b16 %v6377, %v6373
      %v6542 = vpack.c.b16 %v6382, %v6378
      %v6543 = vpack.c.b16 %v6383, %v6379
      %v6544 = vpack.c.b16 %v6384, %v6380
      %v6545 = vpack.c.b16 %v6385, %v6381
      %v6546 = vpack.c.b16 %v6390, %v6386
      %v6547 = vpack.c.b16 %v6391, %v6387
      %v6548 = vpack.c.b16 %v6392, %v6388
      %v6549 = vpack.c.b16 %v6393, %v6389
      %v6550 = vpack.c.b16 %v6398, %v6394
      %v6551 = vpack.c.b16 %v6399, %v6395
      %v6552 = vpack.c.b16 %v6400, %v6396
      %v6553 = vpack.c.b16 %v6401, %v6397
      %v6554 = vpack.c.b16 %v6406, %v6402
      %v6555 = vpack.c.b16 %v6407, %v6403
      %v6556 = vpack.c.b16 %v6408, %v6404
      %v6557 = vpack.c.b16 %v6409, %v6405
      %v6558 = vpack.c.b16 %v6414, %v6410
      %v6559 = vpack.c.b16 %v6415, %v6411
      %v6560 = vpack.c.b16 %v6416, %v6412
      %v6561 = vpack.c.b16 %v6417, %v6413
      %v6562 = vpack.c.b16 %v6422, %v6418
      %v6563 = vpack.c.b16 %v6423, %v6419
      %v6564 = vpack.c.b16 %v6424, %v6420
      %v6565 = vpack.c.b16 %v6425, %v6421
      %v6566 = vpack.c.b16 %v6430, %v6426
      %v6567 = vpack.c.b16 %v6431, %v6427
      %v6568 = vpack.c.b16 %v6432, %v6428
      %v6569 = vpack.c.b16 %v6433, %v6429
      %v6570 = vpack.c.b16 %v6438, %v6434
      %v6571 = vpack.c.b16 %v6439, %v6435
      %v6572 = vpack.c.b16 %v6440, %v6436
      %v6573 = vpack.c.b16 %v6441, %v6437
      %v6574 = vpack.c.b16 %v6446, %v6442
      %v6575 = vpack.c.b16 %v6447, %v6443
      %v6576 = vpack.c.b16 %v6448, %v6444
      %v6577 = vpack.c.b16 %v6449, %v6445
      %6706 = vmatpush.bf16.msra.mxu0 %v6478
      %6707 = vmatpush.bf16.msra.mxu0 %v6474
      %6708 = vmatpush.bf16.msra.mxu0 %v6470
      %6709 = vmatpush.bf16.msra.mxu0 %v6466
      %6710 = vmatpush.bf16.msra.mxu0 %v6462
      %6711 = vmatpush.bf16.msra.mxu0 %v6458
      %6712 = vmatpush.bf16.msra.mxu0 %v6454
      %6713 = vmatpush.bf16.msra.mxu0 %v6450
      %6714 = vmatmul.bf16.gmra.mxu0 %v5924
      %v6715 = vpop.f32.mrf.mxu0
      %v6716 = vadd.f32 %v6058, %v6715
      %v6717 = vpop.f32.mrf.mxu0
      %v6718 = vadd.f32 %v6058, %v6717
      %6719 = vdwg.mxu0
      %6720 = vmatpush.bf16.msra.mxu0 %v6510
      %6721 = vmatpush.bf16.msra.mxu0 %v6506
      %6722 = vmatpush.bf16.msra.mxu0 %v6502
      %6723 = vmatpush.bf16.msra.mxu0 %v6498
      %6724 = vmatpush.bf16.msra.mxu0 %v6494
      %6725 = vmatpush.bf16.msra.mxu0 %v6490
      %6726 = vmatpush.bf16.msra.mxu0 %v6486
      %6727 = vmatpush.bf16.msra.mxu0 %v6482
      %6728 = vmatmul.bf16.gmra.mxu0 %v5925
      %v6729 = vpop.f32.mrf.mxu0
      %v6730 = vadd.f32 %v6716, %v6729
      %v6731 = vpop.f32.mrf.mxu0
      %v6732 = vadd.f32 %v6718, %v6731
      %6733 = vdwg.mxu0
      %6734 = vmatpush.bf16.msra.mxu0 %v6542
      %6735 = vmatpush.bf16.msra.mxu0 %v6538
      %6736 = vmatpush.bf16.msra.mxu0 %v6534
      %6737 = vmatpush.bf16.msra.mxu0 %v6530
      %6738 = vmatpush.bf16.msra.mxu0 %v6526
      %6739 = vmatpush.bf16.msra.mxu0 %v6522
      %6740 = vmatpush.bf16.msra.mxu0 %v6518
      %6741 = vmatpush.bf16.msra.mxu0 %v6514
      %6742 = vmatmul.bf16.gmra.mxu0 %v5926
      %v6743 = vpop.f32.mrf.mxu0
      %v6744 = vadd.f32 %v6730, %v6743
      %v6745 = vpop.f32.mrf.mxu0
      %v6746 = vadd.f32 %v6732, %v6745
      %6747 = vdwg.mxu0
      %6748 = vmatpush.bf16.msra.mxu0 %v6574
      %6749 = vmatpush.bf16.msra.mxu0 %v6570
      %6750 = vmatpush.bf16.msra.mxu0 %v6566
      %6751 = vmatpush.bf16.msra.mxu0 %v6562
      %6752 = vmatpush.bf16.msra.mxu0 %v6558
      %6753 = vmatpush.bf16.msra.mxu0 %v6554
      %6754 = vmatpush.bf16.msra.mxu0 %v6550
      %6755 = vmatpush.bf16.msra.mxu0 %v6546
      %6756 = vmatmul.bf16.gmra.mxu0 %v5927
      %v6757 = vpop.f32.mrf.mxu0
      %v6758 = vadd.f32 %v6744, %v6757
      %v6759 = vpop.f32.mrf.mxu0
      %v6760 = vadd.f32 %v6746, %v6759
      %6761 = vdwg.mxu0
      %6762 = vmatpush.bf16.msra.mxu0 %v6479
      %6763 = vmatpush.bf16.msra.mxu0 %v6475
      %6764 = vmatpush.bf16.msra.mxu0 %v6471
      %6765 = vmatpush.bf16.msra.mxu0 %v6467
      %6766 = vmatpush.bf16.msra.mxu0 %v6463
      %6767 = vmatpush.bf16.msra.mxu0 %v6459
      %6768 = vmatpush.bf16.msra.mxu0 %v6455
      %6769 = vmatpush.bf16.msra.mxu0 %v6451
      %6770 = vmatmul.bf16.gmra.mxu0 %v5924
      %v6771 = vpop.f32.mrf.mxu0
      %v6772 = vadd.f32 %v6059, %v6771
      %v6773 = vpop.f32.mrf.mxu0
      %v6774 = vadd.f32 %v6059, %v6773
      %6775 = vdwg.mxu0
      %6776 = vmatpush.bf16.msra.mxu0 %v6511
      %6777 = vmatpush.bf16.msra.mxu0 %v6507
      %6778 = vmatpush.bf16.msra.mxu0 %v6503
      %6779 = vmatpush.bf16.msra.mxu0 %v6499
      %6780 = vmatpush.bf16.msra.mxu0 %v6495
      %6781 = vmatpush.bf16.msra.mxu0 %v6491
      %6782 = vmatpush.bf16.msra.mxu0 %v6487
      %6783 = vmatpush.bf16.msra.mxu0 %v6483
      %6784 = vmatmul.bf16.gmra.mxu0 %v5925
      %v6785 = vpop.f32.mrf.mxu0
      %v6786 = vadd.f32 %v6772, %v6785
      %v6787 = vpop.f32.mrf.mxu0
      %v6788 = vadd.f32 %v6774, %v6787
      %6789 = vdwg.mxu0
      %6790 = vmatpush.bf16.msra.mxu0 %v6543
      %6791 = vmatpush.bf16.msra.mxu0 %v6539
      %6792 = vmatpush.bf16.msra.mxu0 %v6535
      %6793 = vmatpush.bf16.msra.mxu0 %v6531
      %6794 = vmatpush.bf16.msra.mxu0 %v6527
      %6795 = vmatpush.bf16.msra.mxu0 %v6523
      %6796 = vmatpush.bf16.msra.mxu0 %v6519
      %6797 = vmatpush.bf16.msra.mxu0 %v6515
      %6798 = vmatmul.bf16.gmra.mxu0 %v5926
      %v6799 = vpop.f32.mrf.mxu0
      %v6800 = vadd.f32 %v6786, %v6799
      %v6801 = vpop.f32.mrf.mxu0
      %v6802 = vadd.f32 %v6788, %v6801
      %6803 = vdwg.mxu0
      %6804 = vmatpush.bf16.msra.mxu0 %v6575
      %6805 = vmatpush.bf16.msra.mxu0 %v6571
      %6806 = vmatpush.bf16.msra.mxu0 %v6567
      %6807 = vmatpush.bf16.msra.mxu0 %v6563
      %6808 = vmatpush.bf16.msra.mxu0 %v6559
      %6809 = vmatpush.bf16.msra.mxu0 %v6555
      %6810 = vmatpush.bf16.msra.mxu0 %v6551
      %6811 = vmatpush.bf16.msra.mxu0 %v6547
      %6812 = vmatmul.bf16.gmra.mxu0 %v5927
      %v6813 = vpop.f32.mrf.mxu0
      %v6814 = vadd.f32 %v6800, %v6813
      %v6815 = vpop.f32.mrf.mxu0
      %v6816 = vadd.f32 %v6802, %v6815
      %6817 = vdwg.mxu0
      %6818 = vmatpush.bf16.msra.mxu0 %v6480
      %6819 = vmatpush.bf16.msra.mxu0 %v6476
      %6820 = vmatpush.bf16.msra.mxu0 %v6472
      %6821 = vmatpush.bf16.msra.mxu0 %v6468
      %6822 = vmatpush.bf16.msra.mxu0 %v6464
      %6823 = vmatpush.bf16.msra.mxu0 %v6460
      %6824 = vmatpush.bf16.msra.mxu0 %v6456
      %6825 = vmatpush.bf16.msra.mxu0 %v6452
      %6826 = vmatmul.bf16.gmra.mxu0 %v5924
      %v6827 = vpop.f32.mrf.mxu0
      %v6828 = vadd.f32 %v6060, %v6827
      %v6829 = vpop.f32.mrf.mxu0
      %v6830 = vadd.f32 %v6060, %v6829
      %6831 = vdwg.mxu0
      %6832 = vmatpush.bf16.msra.mxu0 %v6512
      %6833 = vmatpush.bf16.msra.mxu0 %v6508
      %6834 = vmatpush.bf16.msra.mxu0 %v6504
      %6835 = vmatpush.bf16.msra.mxu0 %v6500
      %6836 = vmatpush.bf16.msra.mxu0 %v6496
      %6837 = vmatpush.bf16.msra.mxu0 %v6492
      %6838 = vmatpush.bf16.msra.mxu0 %v6488
      %6839 = vmatpush.bf16.msra.mxu0 %v6484
      %6840 = vmatmul.bf16.gmra.mxu0 %v5925
      %v6841 = vpop.f32.mrf.mxu0
      %v6842 = vadd.f32 %v6828, %v6841
      %v6843 = vpop.f32.mrf.mxu0
      %v6844 = vadd.f32 %v6830, %v6843
      %6845 = vdwg.mxu0
      %6846 = vmatpush.bf16.msra.mxu0 %v6544
      %6847 = vmatpush.bf16.msra.mxu0 %v6540
      %6848 = vmatpush.bf16.msra.mxu0 %v6536
      %6849 = vmatpush.bf16.msra.mxu0 %v6532
      %6850 = vmatpush.bf16.msra.mxu0 %v6528
      %6851 = vmatpush.bf16.msra.mxu0 %v6524
      %6852 = vmatpush.bf16.msra.mxu0 %v6520
      %6853 = vmatpush.bf16.msra.mxu0 %v6516
      %6854 = vmatmul.bf16.gmra.mxu0 %v5926
      %v6855 = vpop.f32.mrf.mxu0
      %v6856 = vadd.f32 %v6842, %v6855
      %v6857 = vpop.f32.mrf.mxu0
      %v6858 = vadd.f32 %v6844, %v6857
      %6859 = vdwg.mxu0
      %6860 = vmatpush.bf16.msra.mxu0 %v6576
      %6861 = vmatpush.bf16.msra.mxu0 %v6572
      %6862 = vmatpush.bf16.msra.mxu0 %v6568
      %6863 = vmatpush.bf16.msra.mxu0 %v6564
      %6864 = vmatpush.bf16.msra.mxu0 %v6560
      %6865 = vmatpush.bf16.msra.mxu0 %v6556
      %6866 = vmatpush.bf16.msra.mxu0 %v6552
      %6867 = vmatpush.bf16.msra.mxu0 %v6548
      %6868 = vmatmul.bf16.gmra.mxu0 %v5927
      %v6869 = vpop.f32.mrf.mxu0
      %v6870 = vadd.f32 %v6856, %v6869
      %v6871 = vpop.f32.mrf.mxu0
      %v6872 = vadd.f32 %v6858, %v6871
      %6873 = vdwg.mxu0
      %6874 = vmatpush.bf16.msra.mxu0 %v6481
      %6875 = vmatpush.bf16.msra.mxu0 %v6477
      %6876 = vmatpush.bf16.msra.mxu0 %v6473
      %6877 = vmatpush.bf16.msra.mxu0 %v6469
      %6878 = vmatpush.bf16.msra.mxu0 %v6465
      %6879 = vmatpush.bf16.msra.mxu0 %v6461
      %6880 = vmatpush.bf16.msra.mxu0 %v6457
      %6881 = vmatpush.bf16.msra.mxu0 %v6453
      %6882 = vmatmul.bf16.gmra.mxu0 %v5924
      %v6883 = vpop.f32.mrf.mxu0
      %v6884 = vadd.f32 %v6061, %v6883
      %v6885 = vpop.f32.mrf.mxu0
      %v6886 = vadd.f32 %v6061, %v6885
      %6887 = vdwg.mxu0
      %6888 = vmatpush.bf16.msra.mxu0 %v6513
      %6889 = vmatpush.bf16.msra.mxu0 %v6509
      %6890 = vmatpush.bf16.msra.mxu0 %v6505
      %6891 = vmatpush.bf16.msra.mxu0 %v6501
      %6892 = vmatpush.bf16.msra.mxu0 %v6497
      %6893 = vmatpush.bf16.msra.mxu0 %v6493
      %6894 = vmatpush.bf16.msra.mxu0 %v6489
      %6895 = vmatpush.bf16.msra.mxu0 %v6485
      %6896 = vmatmul.bf16.gmra.mxu0 %v5925
      %v6897 = vpop.f32.mrf.mxu0
      %v6898 = vadd.f32 %v6884, %v6897
      %v6899 = vpop.f32.mrf.mxu0
      %v6900 = vadd.f32 %v6886, %v6899
      %6901 = vdwg.mxu0
      %6902 = vmatpush.bf16.msra.mxu0 %v6545
      %6903 = vmatpush.bf16.msra.mxu0 %v6541
      %6904 = vmatpush.bf16.msra.mxu0 %v6537
      %6905 = vmatpush.bf16.msra.mxu0 %v6533
      %6906 = vmatpush.bf16.msra.mxu0 %v6529
      %6907 = vmatpush.bf16.msra.mxu0 %v6525
      %6908 = vmatpush.bf16.msra.mxu0 %v6521
      %6909 = vmatpush.bf16.msra.mxu0 %v6517
      %6910 = vmatmul.bf16.gmra.mxu0 %v5926
      %v6911 = vpop.f32.mrf.mxu0
      %v6912 = vadd.f32 %v6898, %v6911
      %v6913 = vpop.f32.mrf.mxu0
      %v6914 = vadd.f32 %v6900, %v6913
      %6915 = vdwg.mxu0
      %6916 = vmatpush.bf16.msra.mxu0 %v6577
      %6917 = vmatpush.bf16.msra.mxu0 %v6573
      %6918 = vmatpush.bf16.msra.mxu0 %v6569
      %6919 = vmatpush.bf16.msra.mxu0 %v6565
      %6920 = vmatpush.bf16.msra.mxu0 %v6561
      %6921 = vmatpush.bf16.msra.mxu0 %v6557
      %6922 = vmatpush.bf16.msra.mxu0 %v6553
      %6923 = vmatpush.bf16.msra.mxu0 %v6549
      %6924 = vmatmul.bf16.gmra.mxu0 %v5927
      %v6925 = vpop.f32.mrf.mxu0
      %v6926 = vadd.f32 %v6912, %v6925
      %v6927 = vpop.f32.mrf.mxu0
      %v6928 = vadd.f32 %v6914, %v6927
      %6929 = vdwg.mxu0
      %v6930 = vmul.f32 %v6758, 0.5
      %v6931 = vmul.f32 %v6814, 0.5
      %v6932 = vmul.f32 %v6870, 0.5
      %v6933 = vmul.f32 %v6926, 0.5
      %v6934 = vmul.f32 %v6760, 0.5
      %v6935 = vmul.f32 %v6816, 0.5
      %v6936 = vmul.f32 %v6872, 0.5
      %v6937 = vmul.f32 %v6928, 0.5
      %v6938 = vmul.f32 %v6758, 0.70710677
      %v6939 = vmul.f32 %v6814, 0.70710677
      %v6940 = vmul.f32 %v6870, 0.70710677
      %v6941 = vmul.f32 %v6926, 0.70710677
      %v6942 = vmul.f32 %v6760, 0.70710677
      %v6943 = vmul.f32 %v6816, 0.70710677
      %v6944 = vmul.f32 %v6872, 0.70710677
      %v6945 = vmul.f32 %v6928, 0.70710677
      %vm6946 = vcmp.lt.f32.partialorder %v6938, 0.0
      %vm6947 = vcmp.lt.f32.partialorder %v6939, 0.0
      %vm6948 = vcmp.lt.f32.partialorder %v6940, 0.0
      %vm6949 = vcmp.lt.f32.partialorder %v6941, 0.0
      %vm6950 = vcmp.lt.f32.partialorder %v6942, 0.0
      %vm6951 = vcmp.lt.f32.partialorder %v6943, 0.0
      %vm6952 = vcmp.lt.f32.partialorder %v6944, 0.0
      %vm6953 = vcmp.lt.f32.partialorder %v6945, 0.0
      %v6954 = vsel %vm6946, -1.0, 1.0
      %v6955 = vsel %vm6947, -1.0, 1.0
      %v6956 = vsel %vm6948, -1.0, 1.0
      %v6957 = vsel %vm6949, -1.0, 1.0
      %v6958 = vsel %vm6950, -1.0, 1.0
      %v6959 = vsel %vm6951, -1.0, 1.0
      %v6960 = vsel %vm6952, -1.0, 1.0
      %v6961 = vsel %vm6953, -1.0, 1.0
      %v6962 = vmul.f32 %v6938, %v6954
      %v6963 = vmul.f32 %v6939, %v6955
      %v6964 = vmul.f32 %v6940, %v6956
      %v6965 = vmul.f32 %v6941, %v6957
      %v6966 = vmul.f32 %v6942, %v6958
      %v6967 = vmul.f32 %v6943, %v6959
      %v6968 = vmul.f32 %v6944, %v6960
      %v6969 = vmul.f32 %v6945, %v6961
      %v6970 = vmul.f32 %v6962, 0.3275911
      %v6971 = vmul.f32 %v6963, 0.3275911
      %v6972 = vmul.f32 %v6964, 0.3275911
      %v6973 = vmul.f32 %v6965, 0.3275911
      %v6974 = vmul.f32 %v6966, 0.3275911
      %v6975 = vmul.f32 %v6967, 0.3275911
      %v6976 = vmul.f32 %v6968, 0.3275911
      %v6977 = vmul.f32 %v6969, 0.3275911
      %v6978 = vadd.f32 %v6970, 1.0
      %v6979 = vadd.f32 %v6971, 1.0
      %v6980 = vadd.f32 %v6972, 1.0
      %v6981 = vadd.f32 %v6973, 1.0
      %v6982 = vadd.f32 %v6974, 1.0
      %v6983 = vadd.f32 %v6975, 1.0
      %v6984 = vadd.f32 %v6976, 1.0
      %v6985 = vadd.f32 %v6977, 1.0
      %v6986 = vrcp.pop %v6978
      %v6987 = vmul.f32 %v6978, %v6986
      %v6988 = vsub.f32 1.0, %v6987
      %v6989 = vmul.f32 %v6986, %v6988
      %v6990 = vadd.f32 %v6986, %v6989
      %vm6991 = vweird.f32 %v6978
      %vm6992 = vweird.f32 %v6986
      %vm6993 = vmor %vm6991, %vm6992
      %v6994 = vsel %vm6993, %v6986, %v6990
      %v6995 = vand.u32 2147483647, %v6978
      %vm6996 = vcmp.eq.f32.partialorder %v6995, 8.507059e+37
      %v6997 = vand.u32 %v6978, 2147483648
      %v6998 = vor.u32 1.1754944e-38, %v6997
      %v6999 = vsel %vm6996, %v6998, %v6994
      %v7000 = vmul.f32 1.0, %v6999
      %v7001 = vrcp.pop %v6979
      %v7002 = vmul.f32 %v6979, %v7001
      %v7003 = vsub.f32 1.0, %v7002
      %v7004 = vmul.f32 %v7001, %v7003
      %v7005 = vadd.f32 %v7001, %v7004
      %vm7006 = vweird.f32 %v6979
      %vm7007 = vweird.f32 %v7001
      %vm7008 = vmor %vm7006, %vm7007
      %v7009 = vsel %vm7008, %v7001, %v7005
      %v7010 = vand.u32 2147483647, %v6979
      %vm7011 = vcmp.eq.f32.partialorder %v7010, 8.507059e+37
      %v7012 = vand.u32 %v6979, 2147483648
      %v7013 = vor.u32 1.1754944e-38, %v7012
      %v7014 = vsel %vm7011, %v7013, %v7009
      %v7015 = vmul.f32 1.0, %v7014
      %v7016 = vrcp.pop %v6980
      %v7017 = vmul.f32 %v6980, %v7016
      %v7018 = vsub.f32 1.0, %v7017
      %v7019 = vmul.f32 %v7016, %v7018
      %v7020 = vadd.f32 %v7016, %v7019
      %vm7021 = vweird.f32 %v6980
      %vm7022 = vweird.f32 %v7016
      %vm7023 = vmor %vm7021, %vm7022
      %v7024 = vsel %vm7023, %v7016, %v7020
      %v7025 = vand.u32 2147483647, %v6980
      %vm7026 = vcmp.eq.f32.partialorder %v7025, 8.507059e+37
      %v7027 = vand.u32 %v6980, 2147483648
      %v7028 = vor.u32 1.1754944e-38, %v7027
      %v7029 = vsel %vm7026, %v7028, %v7024
      %v7030 = vmul.f32 1.0, %v7029
      %v7031 = vrcp.pop %v6981
      %v7032 = vmul.f32 %v6981, %v7031
      %v7033 = vsub.f32 1.0, %v7032
      %v7034 = vmul.f32 %v7031, %v7033
      %v7035 = vadd.f32 %v7031, %v7034
      %vm7036 = vweird.f32 %v6981
      %vm7037 = vweird.f32 %v7031
      %vm7038 = vmor %vm7036, %vm7037
      %v7039 = vsel %vm7038, %v7031, %v7035
      %v7040 = vand.u32 2147483647, %v6981
      %vm7041 = vcmp.eq.f32.partialorder %v7040, 8.507059e+37
      %v7042 = vand.u32 %v6981, 2147483648
      %v7043 = vor.u32 1.1754944e-38, %v7042
      %v7044 = vsel %vm7041, %v7043, %v7039
      %v7045 = vmul.f32 1.0, %v7044
      %v7046 = vrcp.pop %v6982
      %v7047 = vmul.f32 %v6982, %v7046
      %v7048 = vsub.f32 1.0, %v7047
      %v7049 = vmul.f32 %v7046, %v7048
      %v7050 = vadd.f32 %v7046, %v7049
      %vm7051 = vweird.f32 %v6982
      %vm7052 = vweird.f32 %v7046
      %vm7053 = vmor %vm7051, %vm7052
      %v7054 = vsel %vm7053, %v7046, %v7050
      %v7055 = vand.u32 2147483647, %v6982
      %vm7056 = vcmp.eq.f32.partialorder %v7055, 8.507059e+37
      %v7057 = vand.u32 %v6982, 2147483648
      %v7058 = vor.u32 1.1754944e-38, %v7057
      %v7059 = vsel %vm7056, %v7058, %v7054
      %v7060 = vmul.f32 1.0, %v7059
      %v7061 = vrcp.pop %v6983
      %v7062 = vmul.f32 %v6983, %v7061
      %v7063 = vsub.f32 1.0, %v7062
      %v7064 = vmul.f32 %v7061, %v7063
      %v7065 = vadd.f32 %v7061, %v7064
      %vm7066 = vweird.f32 %v6983
      %vm7067 = vweird.f32 %v7061
      %vm7068 = vmor %vm7066, %vm7067
      %v7069 = vsel %vm7068, %v7061, %v7065
      %v7070 = vand.u32 2147483647, %v6983
      %vm7071 = vcmp.eq.f32.partialorder %v7070, 8.507059e+37
      %v7072 = vand.u32 %v6983, 2147483648
      %v7073 = vor.u32 1.1754944e-38, %v7072
      %v7074 = vsel %vm7071, %v7073, %v7069
      %v7075 = vmul.f32 1.0, %v7074
      %v7076 = vrcp.pop %v6984
      %v7077 = vmul.f32 %v6984, %v7076
      %v7078 = vsub.f32 1.0, %v7077
      %v7079 = vmul.f32 %v7076, %v7078
      %v7080 = vadd.f32 %v7076, %v7079
      %vm7081 = vweird.f32 %v6984
      %vm7082 = vweird.f32 %v7076
      %vm7083 = vmor %vm7081, %vm7082
      %v7084 = vsel %vm7083, %v7076, %v7080
      %v7085 = vand.u32 2147483647, %v6984
      %vm7086 = vcmp.eq.f32.partialorder %v7085, 8.507059e+37
      %v7087 = vand.u32 %v6984, 2147483648
      %v7088 = vor.u32 1.1754944e-38, %v7087
      %v7089 = vsel %vm7086, %v7088, %v7084
      %v7090 = vmul.f32 1.0, %v7089
      %v7091 = vrcp.pop %v6985
      %v7092 = vmul.f32 %v6985, %v7091
      %v7093 = vsub.f32 1.0, %v7092
      %v7094 = vmul.f32 %v7091, %v7093
      %v7095 = vadd.f32 %v7091, %v7094
      %vm7096 = vweird.f32 %v6985
      %vm7097 = vweird.f32 %v7091
      %vm7098 = vmor %vm7096, %vm7097
      %v7099 = vsel %vm7098, %v7091, %v7095
      %v7100 = vand.u32 2147483647, %v6985
      %vm7101 = vcmp.eq.f32.partialorder %v7100, 8.507059e+37
      %v7102 = vand.u32 %v6985, 2147483648
      %v7103 = vor.u32 1.1754944e-38, %v7102
      %v7104 = vsel %vm7101, %v7103, %v7099
      %v7105 = vmul.f32 1.0, %v7104
      %v7106 = vmul.f32 %v7000, 1.0614054
      %v7107 = vmul.f32 %v7015, 1.0614054
      %v7108 = vmul.f32 %v7030, 1.0614054
      %v7109 = vmul.f32 %v7045, 1.0614054
      %v7110 = vmul.f32 %v7060, 1.0614054
      %v7111 = vmul.f32 %v7075, 1.0614054
      %v7112 = vmul.f32 %v7090, 1.0614054
      %v7113 = vmul.f32 %v7105, 1.0614054
      %v7114 = vadd.f32 %v7106, -1.4531521
      %v7115 = vadd.f32 %v7107, -1.4531521
      %v7116 = vadd.f32 %v7108, -1.4531521
      %v7117 = vadd.f32 %v7109, -1.4531521
      %v7118 = vadd.f32 %v7110, -1.4531521
      %v7119 = vadd.f32 %v7111, -1.4531521
      %v7120 = vadd.f32 %v7112, -1.4531521
      %v7121 = vadd.f32 %v7113, -1.4531521
      %v7122 = vmul.f32 %v7114, %v7000
      %v7123 = vmul.f32 %v7115, %v7015
      %v7124 = vmul.f32 %v7116, %v7030
      %v7125 = vmul.f32 %v7117, %v7045
      %v7126 = vmul.f32 %v7118, %v7060
      %v7127 = vmul.f32 %v7119, %v7075
      %v7128 = vmul.f32 %v7120, %v7090
      %v7129 = vmul.f32 %v7121, %v7105
      %v7130 = vadd.f32 %v7122, 1.4214138
      %v7131 = vadd.f32 %v7123, 1.4214138
      %v7132 = vadd.f32 %v7124, 1.4214138
      %v7133 = vadd.f32 %v7125, 1.4214138
      %v7134 = vadd.f32 %v7126, 1.4214138
      %v7135 = vadd.f32 %v7127, 1.4214138
      %v7136 = vadd.f32 %v7128, 1.4214138
      %v7137 = vadd.f32 %v7129, 1.4214138
      %v7138 = vmul.f32 %v7130, %v7000
      %v7139 = vmul.f32 %v7131, %v7015
      %v7140 = vmul.f32 %v7132, %v7030
      %v7141 = vmul.f32 %v7133, %v7045
      %v7142 = vmul.f32 %v7134, %v7060
      %v7143 = vmul.f32 %v7135, %v7075
      %v7144 = vmul.f32 %v7136, %v7090
      %v7145 = vmul.f32 %v7137, %v7105
      %v7146 = vadd.f32 %v7138, -0.28449672
      %v7147 = vadd.f32 %v7139, -0.28449672
      %v7148 = vadd.f32 %v7140, -0.28449672
      %v7149 = vadd.f32 %v7141, -0.28449672
      %v7150 = vadd.f32 %v7142, -0.28449672
      %v7151 = vadd.f32 %v7143, -0.28449672
      %v7152 = vadd.f32 %v7144, -0.28449672
      %v7153 = vadd.f32 %v7145, -0.28449672
      %v7154 = vmul.f32 %v7146, %v7000
      %v7155 = vmul.f32 %v7147, %v7015
      %v7156 = vmul.f32 %v7148, %v7030
      %v7157 = vmul.f32 %v7149, %v7045
      %v7158 = vmul.f32 %v7150, %v7060
      %v7159 = vmul.f32 %v7151, %v7075
      %v7160 = vmul.f32 %v7152, %v7090
      %v7161 = vmul.f32 %v7153, %v7105
      %v7162 = vadd.f32 %v7154, 0.2548296
      %v7163 = vadd.f32 %v7155, 0.2548296
      %v7164 = vadd.f32 %v7156, 0.2548296
      %v7165 = vadd.f32 %v7157, 0.2548296
      %v7166 = vadd.f32 %v7158, 0.2548296
      %v7167 = vadd.f32 %v7159, 0.2548296
      %v7168 = vadd.f32 %v7160, 0.2548296
      %v7169 = vadd.f32 %v7161, 0.2548296
      %v7170 = vmul.f32 %v7162, %v7000
      %v7171 = vmul.f32 %v7163, %v7015
      %v7172 = vmul.f32 %v7164, %v7030
      %v7173 = vmul.f32 %v7165, %v7045
      %v7174 = vmul.f32 %v7166, %v7060
      %v7175 = vmul.f32 %v7167, %v7075
      %v7176 = vmul.f32 %v7168, %v7090
      %v7177 = vmul.f32 %v7169, %v7105
      %v7178 = vsub.f32 0.0, %v6962
      %v7179 = vsub.f32 0.0, %v6963
      %v7180 = vsub.f32 0.0, %v6964
      %v7181 = vsub.f32 0.0, %v6965
      %v7182 = vsub.f32 0.0, %v6966
      %v7183 = vsub.f32 0.0, %v6967
      %v7184 = vsub.f32 0.0, %v6968
      %v7185 = vsub.f32 0.0, %v6969
      %v7186 = vmul.f32 %v7178, %v6962
      %v7187 = vmul.f32 %v7179, %v6963
      %v7188 = vmul.f32 %v7180, %v6964
      %v7189 = vmul.f32 %v7181, %v6965
      %v7190 = vmul.f32 %v7182, %v6966
      %v7191 = vmul.f32 %v7183, %v6967
      %v7192 = vmul.f32 %v7184, %v6968
      %v7193 = vmul.f32 %v7185, %v6969
      %v7194 = vmul.f32 %v7186, 1.442695
      %v7195 = vpow.pop %v7194
      %v7196 = vmul.f32 %v7187, 1.442695
      %v7197 = vpow.pop %v7196
      %v7198 = vmul.f32 %v7188, 1.442695
      %v7199 = vpow.pop %v7198
      %v7200 = vmul.f32 %v7189, 1.442695
      %v7201 = vpow.pop %v7200
      %v7202 = vmul.f32 %v7190, 1.442695
      %v7203 = vpow.pop %v7202
      %v7204 = vmul.f32 %v7191, 1.442695
      %v7205 = vpow.pop %v7204
      %v7206 = vmul.f32 %v7192, 1.442695
      %v7207 = vpow.pop %v7206
      %v7208 = vmul.f32 %v7193, 1.442695
      %v7209 = vpow.pop %v7208
      %v7210 = vmul.f32 %v7170, %v7195
      %v7211 = vmul.f32 %v7171, %v7197
      %v7212 = vmul.f32 %v7172, %v7199
      %v7213 = vmul.f32 %v7173, %v7201
      %v7214 = vmul.f32 %v7174, %v7203
      %v7215 = vmul.f32 %v7175, %v7205
      %v7216 = vmul.f32 %v7176, %v7207
      %v7217 = vmul.f32 %v7177, %v7209
      %v7218 = vsub.f32 1.0, %v7210
      %v7219 = vsub.f32 1.0, %v7211
      %v7220 = vsub.f32 1.0, %v7212
      %v7221 = vsub.f32 1.0, %v7213
      %v7222 = vsub.f32 1.0, %v7214
      %v7223 = vsub.f32 1.0, %v7215
      %v7224 = vsub.f32 1.0, %v7216
      %v7225 = vsub.f32 1.0, %v7217
      %v7226 = vmul.f32 %v6954, %v7218
      %v7227 = vmul.f32 %v6955, %v7219
      %v7228 = vmul.f32 %v6956, %v7220
      %v7229 = vmul.f32 %v6957, %v7221
      %v7230 = vmul.f32 %v6958, %v7222
      %v7231 = vmul.f32 %v6959, %v7223
      %v7232 = vmul.f32 %v6960, %v7224
      %v7233 = vmul.f32 %v6961, %v7225
      %v7234 = vadd.f32 %v7226, 1.0
      %v7235 = vadd.f32 %v7227, 1.0
      %v7236 = vadd.f32 %v7228, 1.0
      %v7237 = vadd.f32 %v7229, 1.0
      %v7238 = vadd.f32 %v7230, 1.0
      %v7239 = vadd.f32 %v7231, 1.0
      %v7240 = vadd.f32 %v7232, 1.0
      %v7241 = vadd.f32 %v7233, 1.0
      %v7242 = vmul.f32 %v6930, %v7234
      %v7243 = vmul.f32 %v6931, %v7235
      %v7244 = vmul.f32 %v6932, %v7236
      %v7245 = vmul.f32 %v6933, %v7237
      %v7246 = vmul.f32 %v6934, %v7238
      %v7247 = vmul.f32 %v6935, %v7239
      %v7248 = vmul.f32 %v6936, %v7240
      %v7249 = vmul.f32 %v6937, %v7241
      %v7250 = vadd.f32 %v7242, %v4590
      %v7251 = vadd.f32 %v7243, %v4591
      %v7252 = vadd.f32 %v7244, %v4592
      %v7253 = vadd.f32 %v7245, %v4593
      %v7254 = vadd.f32 %v7246, %v4594
      %v7255 = vadd.f32 %v7247, %v4595
      %v7256 = vadd.f32 %v7248, %v4596
      %v7257 = vadd.f32 %v7249, %v4597
      %v7258 = vpack.c.bf16 %v7254, %v7250
      %v7259 = vpack.c.bf16 %v7255, %v7251
      %v7260 = vpack.c.bf16 %v7256, %v7252
      %v7261 = vpack.c.bf16 %v7257, %v7253
      %v7262 = vld [vmem:[#allocation13] sm:$0xf]
      %v7263 = vld [vmem:[#allocation13 + $0x4] sm:$0xf]
      %v7264 = vld [vmem:[#allocation13 + $0x8] sm:$0xf]
      %v7265 = vld [vmem:[#allocation13 + $0xc] sm:$0xf]
      %v7266 = vld [vmem:[#allocation13 + $0x10] sm:$0xf]
      %v7267 = vld [vmem:[#allocation13 + $0x14] sm:$0xf]
      %v7268 = vld [vmem:[#allocation13 + $0x18] sm:$0xf]
      %v7269 = vld [vmem:[#allocation13 + $0x1c] sm:$0xf]
      %v7270 = vld [vmem:[#allocation13 + $0x20] sm:$0xf]
      %v7271 = vld [vmem:[#allocation13 + $0x24] sm:$0xf]
      %v7272 = vld [vmem:[#allocation13 + $0x28] sm:$0xf]
      %v7273 = vld [vmem:[#allocation13 + $0x2c] sm:$0xf]
      %v7274 = vld [vmem:[#allocation13 + $0x30] sm:$0xf]
      %v7275 = vld [vmem:[#allocation13 + $0x34] sm:$0xf]
      %v7276 = vld [vmem:[#allocation13 + $0x38] sm:$0xf]
      %v7277 = vld [vmem:[#allocation13 + $0x3c] sm:$0xf]
      %v7278 = vld [vmem:[#allocation13 + $0x40] sm:$0xf]
      %v7279 = vld [vmem:[#allocation13 + $0x44] sm:$0xf]
      %v7280 = vld [vmem:[#allocation13 + $0x48] sm:$0xf]
      %v7281 = vld [vmem:[#allocation13 + $0x4c] sm:$0xf]
      %v7282 = vld [vmem:[#allocation13 + $0x50] sm:$0xf]
      %v7283 = vld [vmem:[#allocation13 + $0x54] sm:$0xf]
      %v7284 = vld [vmem:[#allocation13 + $0x58] sm:$0xf]
      %v7285 = vld [vmem:[#allocation13 + $0x5c] sm:$0xf]
      %v7286 = vld [vmem:[#allocation13 + $0x60] sm:$0xf]
      %v7287 = vld [vmem:[#allocation13 + $0x64] sm:$0xf]
      %v7288 = vld [vmem:[#allocation13 + $0x68] sm:$0xf]
      %v7289 = vld [vmem:[#allocation13 + $0x6c] sm:$0xf]
      %v7290 = vld [vmem:[#allocation13 + $0x70] sm:$0xf]
      %v7291 = vld [vmem:[#allocation13 + $0x74] sm:$0xf]
      %v7292 = vld [vmem:[#allocation13 + $0x78] sm:$0xf]
      %v7293 = vld [vmem:[#allocation13 + $0x7c] sm:$0xf]
      %v7294 = vld [vmem:[#allocation13 + $0x80] sm:$0xf]
      %v7295 = vld [vmem:[#allocation13 + $0x84] sm:$0xf]
      %v7296 = vld [vmem:[#allocation13 + $0x88] sm:$0xf]
      %v7297 = vld [vmem:[#allocation13 + $0x8c] sm:$0xf]
      %v7298 = vld [vmem:[#allocation13 + $0x90] sm:$0xf]
      %v7299 = vld [vmem:[#allocation13 + $0x94] sm:$0xf]
      %v7300 = vld [vmem:[#allocation13 + $0x98] sm:$0xf]
      %v7301 = vld [vmem:[#allocation13 + $0x9c] sm:$0xf]
      %v7302 = vld [vmem:[#allocation13 + $0xa0] sm:$0xf]
      %v7303 = vld [vmem:[#allocation13 + $0xa4] sm:$0xf]
      %v7304 = vld [vmem:[#allocation13 + $0xa8] sm:$0xf]
      %v7305 = vld [vmem:[#allocation13 + $0xac] sm:$0xf]
      %v7306 = vld [vmem:[#allocation13 + $0xb0] sm:$0xf]
      %v7307 = vld [vmem:[#allocation13 + $0xb4] sm:$0xf]
      %v7308 = vld [vmem:[#allocation13 + $0xb8] sm:$0xf]
      %v7309 = vld [vmem:[#allocation13 + $0xbc] sm:$0xf]
      %v7310 = vld [vmem:[#allocation13 + $0xc0] sm:$0xf]
      %v7311 = vld [vmem:[#allocation13 + $0xc4] sm:$0xf]
      %v7312 = vld [vmem:[#allocation13 + $0xc8] sm:$0xf]
      %v7313 = vld [vmem:[#allocation13 + $0xcc] sm:$0xf]
      %v7314 = vld [vmem:[#allocation13 + $0xd0] sm:$0xf]
      %v7315 = vld [vmem:[#allocation13 + $0xd4] sm:$0xf]
      %v7316 = vld [vmem:[#allocation13 + $0xd8] sm:$0xf]
      %v7317 = vld [vmem:[#allocation13 + $0xdc] sm:$0xf]
      %v7318 = vld [vmem:[#allocation13 + $0xe0] sm:$0xf]
      %v7319 = vld [vmem:[#allocation13 + $0xe4] sm:$0xf]
      %v7320 = vld [vmem:[#allocation13 + $0xe8] sm:$0xf]
      %v7321 = vld [vmem:[#allocation13 + $0xec] sm:$0xf]
      %v7322 = vld [vmem:[#allocation13 + $0xf0] sm:$0xf]
      %v7323 = vld [vmem:[#allocation13 + $0xf4] sm:$0xf]
      %v7324 = vld [vmem:[#allocation13 + $0xf8] sm:$0xf]
      %v7325 = vld [vmem:[#allocation13 + $0xfc] sm:$0xf]
      %v7326 = vld [vmem:[#allocation14] sm:$0x1]
      %v7328 = vperm.slane %v7326, 0
      %v7394 = vunpack.c.l.b16 %v7262
      %v7395 = vunpack.c.l.b16 %v7263
      %v7396 = vunpack.c.l.b16 %v7264
      %v7397 = vunpack.c.l.b16 %v7265
      %v7398 = vunpack.c.l.b16 %v7266
      %v7399 = vunpack.c.l.b16 %v7267
      %v7400 = vunpack.c.l.b16 %v7268
      %v7401 = vunpack.c.l.b16 %v7269
      %v7402 = vunpack.c.l.b16 %v7270
      %v7403 = vunpack.c.l.b16 %v7271
      %v7404 = vunpack.c.l.b16 %v7272
      %v7405 = vunpack.c.l.b16 %v7273
      %v7406 = vunpack.c.l.b16 %v7274
      %v7407 = vunpack.c.l.b16 %v7275
      %v7408 = vunpack.c.l.b16 %v7276
      %v7409 = vunpack.c.l.b16 %v7277
      %v7410 = vunpack.c.l.b16 %v7278
      %v7411 = vunpack.c.l.b16 %v7279
      %v7412 = vunpack.c.l.b16 %v7280
      %v7413 = vunpack.c.l.b16 %v7281
      %v7414 = vunpack.c.l.b16 %v7282
      %v7415 = vunpack.c.l.b16 %v7283
      %v7416 = vunpack.c.l.b16 %v7284
      %v7417 = vunpack.c.l.b16 %v7285
      %v7418 = vunpack.c.l.b16 %v7286
      %v7419 = vunpack.c.l.b16 %v7287
      %v7420 = vunpack.c.l.b16 %v7288
      %v7421 = vunpack.c.l.b16 %v7289
      %v7422 = vunpack.c.l.b16 %v7290
      %v7423 = vunpack.c.l.b16 %v7291
      %v7424 = vunpack.c.l.b16 %v7292
      %v7425 = vunpack.c.l.b16 %v7293
      %v7426 = vunpack.c.l.b16 %v7294
      %v7427 = vunpack.c.l.b16 %v7295
      %v7428 = vunpack.c.l.b16 %v7296
      %v7429 = vunpack.c.l.b16 %v7297
      %v7430 = vunpack.c.l.b16 %v7298
      %v7431 = vunpack.c.l.b16 %v7299
      %v7432 = vunpack.c.l.b16 %v7300
      %v7433 = vunpack.c.l.b16 %v7301
      %v7434 = vunpack.c.l.b16 %v7302
      %v7435 = vunpack.c.l.b16 %v7303
      %v7436 = vunpack.c.l.b16 %v7304
      %v7437 = vunpack.c.l.b16 %v7305
      %v7438 = vunpack.c.l.b16 %v7306
      %v7439 = vunpack.c.l.b16 %v7307
      %v7440 = vunpack.c.l.b16 %v7308
      %v7441 = vunpack.c.l.b16 %v7309
      %v7442 = vunpack.c.l.b16 %v7310
      %v7443 = vunpack.c.l.b16 %v7311
      %v7444 = vunpack.c.l.b16 %v7312
      %v7445 = vunpack.c.l.b16 %v7313
      %v7446 = vunpack.c.l.b16 %v7314
      %v7447 = vunpack.c.l.b16 %v7315
      %v7448 = vunpack.c.l.b16 %v7316
      %v7449 = vunpack.c.l.b16 %v7317
      %v7450 = vunpack.c.l.b16 %v7318
      %v7451 = vunpack.c.l.b16 %v7319
      %v7452 = vunpack.c.l.b16 %v7320
      %v7453 = vunpack.c.l.b16 %v7321
      %v7454 = vunpack.c.l.b16 %v7322
      %v7455 = vunpack.c.l.b16 %v7323
      %v7456 = vunpack.c.l.b16 %v7324
      %v7457 = vunpack.c.l.b16 %v7325
      %v7458 = vpack.c.b16 %v7395, %v7394
      %v7459 = vpack.c.b16 %v7397, %v7396
      %v7460 = vpack.c.b16 %v7399, %v7398
      %v7461 = vpack.c.b16 %v7401, %v7400
      %v7462 = vpack.c.b16 %v7403, %v7402
      %v7463 = vpack.c.b16 %v7405, %v7404
      %v7464 = vpack.c.b16 %v7407, %v7406
      %v7465 = vpack.c.b16 %v7409, %v7408
      %v7466 = vpack.c.b16 %v7411, %v7410
      %v7467 = vpack.c.b16 %v7413, %v7412
      %v7468 = vpack.c.b16 %v7415, %v7414
      %v7469 = vpack.c.b16 %v7417, %v7416
      %v7470 = vpack.c.b16 %v7419, %v7418
      %v7471 = vpack.c.b16 %v7421, %v7420
      %v7472 = vpack.c.b16 %v7423, %v7422
      %v7473 = vpack.c.b16 %v7425, %v7424
      %v7474 = vpack.c.b16 %v7427, %v7426
      %v7475 = vpack.c.b16 %v7429, %v7428
      %v7476 = vpack.c.b16 %v7431, %v7430
      %v7477 = vpack.c.b16 %v7433, %v7432
      %v7478 = vpack.c.b16 %v7435, %v7434
      %v7479 = vpack.c.b16 %v7437, %v7436
      %v7480 = vpack.c.b16 %v7439, %v7438
      %v7481 = vpack.c.b16 %v7441, %v7440
      %v7482 = vpack.c.b16 %v7443, %v7442
      %v7483 = vpack.c.b16 %v7445, %v7444
      %v7484 = vpack.c.b16 %v7447, %v7446
      %v7485 = vpack.c.b16 %v7449, %v7448
      %v7486 = vpack.c.b16 %v7451, %v7450
      %v7487 = vpack.c.b16 %v7453, %v7452
      %v7488 = vpack.c.b16 %v7455, %v7454
      %v7489 = vpack.c.b16 %v7457, %v7456
      %7522 = vmatpush.bf16.msra.mxu0 %v7465
      %7523 = vmatpush.bf16.msra.mxu0 %v7464
      %7524 = vmatpush.bf16.msra.mxu0 %v7463
      %7525 = vmatpush.bf16.msra.mxu0 %v7462
      %7526 = vmatpush.bf16.msra.mxu0 %v7461
      %7527 = vmatpush.bf16.msra.mxu0 %v7460
      %7528 = vmatpush.bf16.msra.mxu0 %v7459
      %7529 = vmatpush.bf16.msra.mxu0 %v7458
      %7530 = vmatmul.bf16.gmra.mxu0 %v7258
      %v7531 = vpop.f32.mrf.mxu0
      %v7532 = vadd.f32 %v7328, %v7531
      %v7533 = vpop.f32.mrf.mxu0
      %v7534 = vadd.f32 %v7328, %v7533
      %7535 = vdwg.mxu0
      %7536 = vmatpush.bf16.msra.mxu0 %v7473
      %7537 = vmatpush.bf16.msra.mxu0 %v7472
      %7538 = vmatpush.bf16.msra.mxu0 %v7471
      %7539 = vmatpush.bf16.msra.mxu0 %v7470
      %7540 = vmatpush.bf16.msra.mxu0 %v7469
      %7541 = vmatpush.bf16.msra.mxu0 %v7468
      %7542 = vmatpush.bf16.msra.mxu0 %v7467
      %7543 = vmatpush.bf16.msra.mxu0 %v7466
      %7544 = vmatmul.bf16.gmra.mxu0 %v7259
      %v7545 = vpop.f32.mrf.mxu0
      %v7546 = vadd.f32 %v7532, %v7545
      %v7547 = vpop.f32.mrf.mxu0
      %v7548 = vadd.f32 %v7534, %v7547
      %7549 = vdwg.mxu0
      %7550 = vmatpush.bf16.msra.mxu0 %v7481
      %7551 = vmatpush.bf16.msra.mxu0 %v7480
      %7552 = vmatpush.bf16.msra.mxu0 %v7479
      %7553 = vmatpush.bf16.msra.mxu0 %v7478
      %7554 = vmatpush.bf16.msra.mxu0 %v7477
      %7555 = vmatpush.bf16.msra.mxu0 %v7476
      %7556 = vmatpush.bf16.msra.mxu0 %v7475
      %7557 = vmatpush.bf16.msra.mxu0 %v7474
      %7558 = vmatmul.bf16.gmra.mxu0 %v7260
      %v7559 = vpop.f32.mrf.mxu0
      %v7560 = vadd.f32 %v7546, %v7559
      %v7561 = vpop.f32.mrf.mxu0
      %v7562 = vadd.f32 %v7548, %v7561
      %7563 = vdwg.mxu0
      %7564 = vmatpush.bf16.msra.mxu0 %v7489
      %7565 = vmatpush.bf16.msra.mxu0 %v7488
      %7566 = vmatpush.bf16.msra.mxu0 %v7487
      %7567 = vmatpush.bf16.msra.mxu0 %v7486
      %7568 = vmatpush.bf16.msra.mxu0 %v7485
      %7569 = vmatpush.bf16.msra.mxu0 %v7484
      %7570 = vmatpush.bf16.msra.mxu0 %v7483
      %7571 = vmatpush.bf16.msra.mxu0 %v7482
      %7572 = vmatmul.bf16.gmra.mxu0 %v7261
      %v7573 = vpop.f32.mrf.mxu0
      %v7574 = vadd.f32 %v7560, %v7573
      %v7575 = vpop.f32.mrf.mxu0
      %v7576 = vadd.f32 %v7562, %v7575
      %7577 = vdwg.mxu0
      %7578 = vst [vmem:[%s9] sm:$0xff] %v7574
      %7579 = vst [vmem:[%s9 + $0x8] sm:$0xff] %v7576
    $region77: #{mlp_forward.1} parent=1 // pred_fallthru
      _
    // Predicated region
    $region78: #{mlp_forward.1} parent=1 // pred_check
      _
    $region79: #{mlp_forward.1} parent=1 // pred_check_branch
      %7581 = sbr.rel (0) target = $region81
    $region80: #{mlp_forward.1} parent=1 // pred_region
      _
    $region81: #{mlp_forward.1} parent=1 // pred_fallthru
      _
    // Predicated region
    $region82: #{mlp_forward.1} parent=1 // pred_check
      _
    $region83: #{mlp_forward.1} parent=1 // pred_check_branch
      %7583 = sbr.rel (0) target = $region85
    $region84: #{mlp_forward.1} parent=1 // pred_region
      _
    $region85: #{mlp_forward.1} parent=1 // pred_fallthru
      _
    %7584 = vsyncpa [#allocation4], 1
    %7585 = vsyncpa [#allocation6], 1
    %7586 = vsyncpa [#allocation9], 1
    %7587 = vsyncpa [#allocation12], 1
    %7588 = vsyncpa [#allocation15], 1

</llo_original>
